<compile_context>
chip_gen: v7x
topology: tpu7x:2x2x1
jax: 0.10.0
libtpu: 0.0.40
codegen_flags: <defaults>
</compile_context>

<pallas_src>
import numpy as np
import jax
import jax.numpy as jnp
from jax import lax
from jax.experimental import pallas as pl
from jax.experimental.pallas import tpu as pltpu

NUM_CLASSES = 21
BN_EPS = 1e-5


# ---------------------------------------------------------------------------
# Pallas kernels
# ---------------------------------------------------------------------------
def _conv_bn_relu_kernel(x_ref, w_ref, scale_ref, bias_ref, o_ref):
    # (tm, K) bf16 @ (K, Cout) bf16 on the MXU with f32 accumulation,
    # then fused inference-BN affine + ReLU on the VPU; store bf16.
    acc = jnp.dot(x_ref[...], w_ref[...], preferred_element_type=jnp.float32)
    y = jnp.maximum(acc * scale_ref[...] + bias_ref[...], 0.0)
    o_ref[...] = y.astype(o_ref.dtype)


def conv_bn_relu_matmul(patches, w, scale, bias, tm=1024):
    # patches: (M, K) bf16, w: (K, Cout) bf16, scale/bias: (Cout,) f32
    M, K = patches.shape
    Cout = w.shape[1]
    tm = min(tm, ((M + 7) // 8) * 8)  # keep second-minor 8-aligned
    return pl.pallas_call(
        _conv_bn_relu_kernel,
        out_shape=jax.ShapeDtypeStruct((M, Cout), jnp.bfloat16),
        grid_spec=pltpu.PrefetchScalarGridSpec(
            num_scalar_prefetch=0,
            grid=(pl.cdiv(M, tm),),
            in_specs=[
                pl.BlockSpec((tm, K), lambda i: (i, 0)),
                pl.BlockSpec((K, Cout), lambda i: (0, 0)),
                pl.BlockSpec((1, Cout), lambda i: (0, 0)),
                pl.BlockSpec((1, Cout), lambda i: (0, 0)),
            ],
            out_specs=pl.BlockSpec((tm, Cout), lambda i: (i, 0)),
        ),
        compiler_params=pltpu.CompilerParams(dimension_semantics=("parallel",)),
    )(patches, w, scale.reshape(1, Cout), bias.reshape(1, Cout))


def _conv_pool_cls_kernel(x_ref, w_ref, scale_ref, bias_ref, pool_ref,
                          wc_ref, bc_ref, o_ref):
    # conv3 (as matmul) + folded BN + ReLU
    acc = jnp.dot(x_ref[...], w_ref[...], preferred_element_type=jnp.float32)
    y = jnp.maximum(acc * scale_ref[...] + bias_ref[...], 0.0)       # (M, 128) f32
    # AdaptiveAvgPool2d((7,7)) as a matmul with a constant 0 / 1/(fh*fw) matrix
    pooled = jnp.dot(pool_ref[...], y.astype(jnp.bfloat16),
                     preferred_element_type=jnp.float32)             # (Mp, 128)
    # 1x1-conv classifier: (Mp, 128) @ (128, num_classes) + bias
    o_ref[...] = jnp.dot(pooled.astype(jnp.bfloat16), wc_ref[...],
                         preferred_element_type=jnp.float32) + bc_ref[...]


def conv_pool_classifier(patches, w, scale, bias, pool_mat, wc, bc):
    # patches: (M, K) bf16, w: (K, C) bf16, pool_mat: (Mp, M) bf16,
    # wc: (C, num_classes) bf16, scale/bias/bc: f32
    M, K = patches.shape
    C = w.shape[1]
    Mp = pool_mat.shape[0]
    Cout = wc.shape[1]
    return pl.pallas_call(
        _conv_pool_cls_kernel,
        out_shape=jax.ShapeDtypeStruct((Mp, Cout), jnp.float32),
        grid_spec=pltpu.PrefetchScalarGridSpec(
            num_scalar_prefetch=0,
            grid=(1,),
            in_specs=[
                pl.BlockSpec((M, K), lambda i: (0, 0)),
                pl.BlockSpec((K, C), lambda i: (0, 0)),
                pl.BlockSpec((1, C), lambda i: (0, 0)),
                pl.BlockSpec((1, C), lambda i: (0, 0)),
                pl.BlockSpec((Mp, M), lambda i: (0, 0)),
                pl.BlockSpec((C, Cout), lambda i: (0, 0)),
                pl.BlockSpec((1, Cout), lambda i: (0, 0)),
            ],
            out_specs=pl.BlockSpec((Mp, Cout), lambda i: (0, 0)),
        ),
    )(patches, w, scale.reshape(1, C), bias.reshape(1, C),
      pool_mat, wc, bc.reshape(1, Cout))


# ---------------------------------------------------------------------------
# Glue: layout rearrangement only (no heavy compute)
# ---------------------------------------------------------------------------
def im2col(x, ksize=3, stride=2, pad=1):
    # x: NHWC (bf16) -> patches (N*Ho*Wo, ksize*ksize*Cin), tap ordering (kh, kw, cin)
    N, H, W, C = x.shape
    xp = jnp.pad(x, ((0, 0), (pad, pad), (pad, pad), (0, 0)))
    Ho = (H + 2 * pad - ksize) // stride + 1
    Wo = (W + 2 * pad - ksize) // stride + 1
    cols = []
    for kh in range(ksize):
        for kw in range(ksize):
            cols.append(xp[:, kh:kh + stride * Ho:stride,
                           kw:kw + stride * Wo:stride, :])
    patches = jnp.stack(cols, axis=3)  # (N, Ho, Wo, 9, C)
    return patches.reshape(N * Ho * Wo, ksize * ksize * C), Ho, Wo


def make_pool_matrix(N, H, W, out_hw=7):
    # Constant (N*49, N*H*W) matrix implementing AdaptiveAvgPool2d((7,7)) on rows
    # ordered (n, h, w).  Assumes H, W divisible by 7 (true for the 112->14 path).
    fh, fw = H // out_hw, W // out_hw
    M = N * H * W
    Mp = N * out_hw * out_hw
    rows = np.arange(M)
    n = rows // (H * W)
    r = (rows % (H * W)) // W
    c = rows % W
    win = n * (out_hw * out_hw) + (r // fh) * out_hw + (c // fw)
    P = np.zeros((Mp, M), np.float32)
    P[win, rows] = 1.0 / (fh * fw)
    return jnp.asarray(P, jnp.bfloat16)


# ---------------------------------------------------------------------------
# Model
# ---------------------------------------------------------------------------
def init_params(key):
    conv_cfgs = [(3, 32), (32, 64), (64, 128)]
    params = {"convs": []}
    for cin, cout in conv_cfgs:
        key, kw_, kb, kg, kbe, km, kv = jax.random.split(key, 7)
        params["convs"].append(dict(
            w=0.1 * jax.random.normal(kw_, (cout, cin, 3, 3), jnp.float32),
            b=0.05 * jax.random.normal(kb, (cout,), jnp.float32),
            gamma=1.0 + 0.1 * jax.random.normal(kg, (cout,), jnp.float32),
            beta=0.05 * jax.random.normal(kbe, (cout,), jnp.float32),
            mean=0.1 * jax.random.normal(km, (cout,), jnp.float32),
            var=0.9 + 0.1 * jnp.abs(jax.random.normal(kv, (cout,), jnp.float32)),
        ))
    key, kc, kcb = jax.random.split(key, 3)
    params["cls_w"] = 0.1 * jax.random.normal(kc, (NUM_CLASSES, 128, 1, 1), jnp.float32)
    params["cls_b"] = 0.05 * jax.random.normal(kcb, (NUM_CLASSES,), jnp.float32)
    return params


def simple_mobilenet_pallas(x_nchw, params):
    x = jnp.transpose(x_nchw, (0, 2, 3, 1)).astype(jnp.bfloat16)  # NHWC bf16
    N = x.shape[0]

    # Fold conv bias + inference BatchNorm into per-channel scale/bias (f32);
    # conv weights go to the MXU in bf16.
    folded = []
    for layer in params["convs"]:
        cout, cin = layer["w"].shape[0], layer["w"].shape[1]
        wk = jnp.transpose(layer["w"], (2, 3, 1, 0)).reshape(9 * cin, cout)
        wk = wk.astype(jnp.bfloat16)
        scale = layer["gamma"] / jnp.sqrt(layer["var"] + BN_EPS)
        bias = (layer["b"] - layer["mean"]) * scale + layer["beta"]
        folded.append((wk, scale, bias, cout))

    # Layers 1 & 2: tiled im2col-matmul with fused BN + ReLU, bf16 activations.
    for wk, scale, bias, cout in folded[:2]:
        patches, Ho, Wo = im2col(x)
        y = conv_bn_relu_matmul(patches, wk, scale, bias)
        x = y.reshape(N, Ho, Wo, cout)

    # Layer 3 + AdaptiveAvgPool2d((7,7)) + 1x1-conv classifier in one fused kernel.
    wk3, scale3, bias3, cout3 = folded[2]
    patches3, Ho3, Wo3 = im2col(x)
    pool_mat = make_pool_matrix(N, Ho3, Wo3)
    wc = jnp.transpose(params["cls_w"].reshape(NUM_CLASSES, cout3)).astype(jnp.bfloat16)
    out = conv_pool_classifier(patches3, wk3, scale3, bias3, pool_mat,
                               wc, params["cls_b"])                   # (N*49, 21)
    return out.reshape(N, 7, 7, NUM_CLASSES).transpose(0, 3, 1, 2)    # NCHW


def simple_mobilenet_ref(x, params):
    dn = ("NCHW", "OIHW", "NCHW")
    for layer in params["convs"]:
        x = lax.conv_general_dilated(x, layer["w"], (2, 2),
                                     [(1, 1), (1, 1)], dimension_numbers=dn)
        x = x + layer["b"][None, :, None, None]
        scale = layer["gamma"] / jnp.sqrt(layer["var"] + BN_EPS)
        x = (x - layer["mean"][None, :, None, None]) * scale[None, :, None, None] \
            + layer["beta"][None, :, None, None]
        x = jnp.maximum(x, 0.0)
    N, C, H, W = x.shape
    x = x.reshape(N, C, 7, H // 7, 7, W // 7).mean(axis=(3, 5))
    x = lax.conv_general_dilated(x, params["cls_w"], (1, 1),
                                 [(0, 0), (0, 0)], dimension_numbers=dn)
    return x + params["cls_b"][None, :, None, None]


if __name__ == "__main__":
    key = jax.random.PRNGKey(0)
    kparam, kx = jax.random.split(key)
    params = init_params(kparam)
    # small-but-meaningful shape: 112 -> 56 -> 28 -> 14 -> adaptive-pool -> 7
    x = jax.random.normal(kx, (2, 3, 112, 112), jnp.float32)

    out = jax.jit(simple_mobilenet_pallas)(x, params)
    out = jax.block_until_ready(out)
    assert out.shape == (2, NUM_CLASSES, 7, 7), out.shape

    ref = simple_mobilenet_ref(x, params)
    err = float(jnp.max(jnp.abs(out - ref)))
    assert err < 5e-2, f"max abs err {err}"
    print("KERNEL_OK")
</pallas_src>

<mosaic_0001>
module attributes {stable_mosaic.version = 11 : i64} {
  func.func @_conv_bn_relu_kernel(%arg0: i32, %arg1: memref<1024x27xbf16, #tpu.memory_space<vmem>>, %arg2: memref<27x32xbf16, #tpu.memory_space<vmem>>, %arg3: memref<1x32xf32, #tpu.memory_space<vmem>>, %arg4: memref<1x32xf32, #tpu.memory_space<vmem>>, %arg5: memref<1024x32xbf16, #tpu.memory_space<vmem>>) attributes {dimension_semantics = [#tpu.dimension_semantics<parallel>], iteration_bounds = array<i64: 7>, scalar_prefetch = 0 : i64, scratch_operands = 0 : i64, tpu.core_type = #tpu.core_type<tc>, window_params = [{transform_indices = @transform_0, window_bounds = array<i64: 1024, 27>}, {pipeline_mode = #tpu.pipeline_mode<synchronous>, transform_indices = @transform_1, window_bounds = array<i64: 27, 32>}, {pipeline_mode = #tpu.pipeline_mode<synchronous>, transform_indices = @transform_2, window_bounds = array<i64: 1, 32>}, {pipeline_mode = #tpu.pipeline_mode<synchronous>, transform_indices = @transform_3, window_bounds = array<i64: 1, 32>}, {transform_indices = @transform_4, window_bounds = array<i64: 1024, 32>}]} {
    %c0 = arith.constant 0 : index
    %c0_0 = arith.constant 0 : index
    %0 = vector.load %arg1[%c0, %c0_0] : memref<1024x27xbf16, #tpu.memory_space<vmem>>, vector<1024x27xbf16>
    %c0_1 = arith.constant 0 : index
    %c0_2 = arith.constant 0 : index
    %1 = vector.load %arg2[%c0_1, %c0_2] : memref<27x32xbf16, #tpu.memory_space<vmem>>, vector<27x32xbf16>
    %cst = arith.constant dense<0.000000e+00> : vector<1024x32xf32>
    %2 = tpu.matmul %0, %1, %cst {dimension_numbers = #tpu.dot_dimension_numbers<[1], [0], [0], [1], [0, 0, 1, 1], [], []>} : vector<1024x27xbf16>, vector<27x32xbf16>, vector<1024x32xf32> -> vector<1024x32xf32>
    %c0_3 = arith.constant 0 : index
    %c0_4 = arith.constant 0 : index
    %3 = vector.load %arg3[%c0_3, %c0_4] : memref<1x32xf32, #tpu.memory_space<vmem>>, vector<1x32xf32>
    %4 = vector.broadcast %3 : vector<1x32xf32> to vector<1024x32xf32>
    %5 = arith.mulf %2, %4 : vector<1024x32xf32>
    %c0_5 = arith.constant 0 : index
    %c0_6 = arith.constant 0 : index
    %6 = vector.load %arg4[%c0_5, %c0_6] : memref<1x32xf32, #tpu.memory_space<vmem>>, vector<1x32xf32>
    %7 = vector.broadcast %6 : vector<1x32xf32> to vector<1024x32xf32>
    %8 = arith.addf %5, %7 : vector<1024x32xf32>
    %cst_7 = arith.constant 0.000000e+00 : f32
    %9 = vector.broadcast %cst_7 : f32 to vector<1024x32xf32>
    %10 = arith.maximumf %8, %9 : vector<1024x32xf32>
    %11 = arith.truncf %10 : vector<1024x32xf32> to vector<1024x32xbf16>
    %c0_8 = arith.constant 0 : index
    %c0_9 = arith.constant 0 : index
    %12 = vector.load %arg5[%c0_8, %c0_9] : memref<1024x32xbf16, #tpu.memory_space<vmem>>, vector<1024x32xbf16>
    tpu.vector_store %arg5[%c0_8, %c0_9], %11 {strides = array<i32>} : memref<1024x32xbf16, #tpu.memory_space<vmem>>, vector<1024x32xbf16>,
    return
  }
  func.func @transform_0(%arg0: i32) -> (i32, i32) {
    %c0_i32 = arith.constant 0 : i32
    %c0_i32_0 = arith.constant 0 : i32
    return %arg0, %c0_i32 : i32, i32
  }
  func.func @transform_1(%arg0: i32) -> (i32, i32) {
    %c0_i32 = arith.constant 0 : i32
    %c0_i32_0 = arith.constant 0 : i32
    %c0_i32_1 = arith.constant 0 : i32
    return %c0_i32, %c0_i32_0 : i32, i32
  }
  func.func @transform_2(%arg0: i32) -> (i32, i32) {
    %c0_i32 = arith.constant 0 : i32
    %c0_i32_0 = arith.constant 0 : i32
    %c0_i32_1 = arith.constant 0 : i32
    return %c0_i32, %c0_i32_0 : i32, i32
  }
  func.func @transform_3(%arg0: i32) -> (i32, i32) {
    %c0_i32 = arith.constant 0 : i32
    %c0_i32_0 = arith.constant 0 : i32
    %c0_i32_1 = arith.constant 0 : i32
    return %c0_i32, %c0_i32_0 : i32, i32
  }
  func.func @transform_4(%arg0: i32) -> (i32, i32) {
    %c0_i32 = arith.constant 0 : i32
    %c0_i32_0 = arith.constant 0 : i32
    return %arg0, %c0_i32 : i32, i32
  }
}

module attributes {stable_mosaic.version = 11 : i64} {
  func.func @_conv_bn_relu_kernel(%arg0: i32, %arg1: memref<1024x288xbf16, #tpu.memory_space<vmem>>, %arg2: memref<288x64xbf16, #tpu.memory_space<vmem>>, %arg3: memref<1x64xf32, #tpu.memory_space<vmem>>, %arg4: memref<1x64xf32, #tpu.memory_space<vmem>>, %arg5: memref<1024x64xbf16, #tpu.memory_space<vmem>>) attributes {dimension_semantics = [#tpu.dimension_semantics<parallel>], iteration_bounds = array<i64: 2>, scalar_prefetch = 0 : i64, scratch_operands = 0 : i64, tpu.core_type = #tpu.core_type<tc>, window_params = [{transform_indices = @transform_0, window_bounds = array<i64: 1024, 288>}, {pipeline_mode = #tpu.pipeline_mode<synchronous>, transform_indices = @transform_1, window_bounds = array<i64: 288, 64>}, {pipeline_mode = #tpu.pipeline_mode<synchronous>, transform_indices = @transform_2, window_bounds = array<i64: 1, 64>}, {pipeline_mode = #tpu.pipeline_mode<synchronous>, transform_indices = @transform_3, window_bounds = array<i64: 1, 64>}, {transform_indices = @transform_4, window_bounds = array<i64: 1024, 64>}]} {
    %c0 = arith.constant 0 : index
    %c0_0 = arith.constant 0 : index
    %0 = vector.load %arg1[%c0, %c0_0] : memref<1024x288xbf16, #tpu.memory_space<vmem>>, vector<1024x288xbf16>
    %c0_1 = arith.constant 0 : index
    %c0_2 = arith.constant 0 : index
    %1 = vector.load %arg2[%c0_1, %c0_2] : memref<288x64xbf16, #tpu.memory_space<vmem>>, vector<288x64xbf16>
    %cst = arith.constant dense<0.000000e+00> : vector<1024x64xf32>
    %2 = tpu.matmul %0, %1, %cst {dimension_numbers = #tpu.dot_dimension_numbers<[1], [0], [0], [1], [0, 0, 1, 1], [], []>} : vector<1024x288xbf16>, vector<288x64xbf16>, vector<1024x64xf32> -> vector<1024x64xf32>
    %c0_3 = arith.constant 0 : index
    %c0_4 = arith.constant 0 : index
    %3 = vector.load %arg3[%c0_3, %c0_4] : memref<1x64xf32, #tpu.memory_space<vmem>>, vector<1x64xf32>
    %4 = vector.broadcast %3 : vector<1x64xf32> to vector<1024x64xf32>
    %5 = arith.mulf %2, %4 : vector<1024x64xf32>
    %c0_5 = arith.constant 0 : index
    %c0_6 = arith.constant 0 : index
    %6 = vector.load %arg4[%c0_5, %c0_6] : memref<1x64xf32, #tpu.memory_space<vmem>>, vector<1x64xf32>
    %7 = vector.broadcast %6 : vector<1x64xf32> to vector<1024x64xf32>
    %8 = arith.addf %5, %7 : vector<1024x64xf32>
    %cst_7 = arith.constant 0.000000e+00 : f32
    %9 = vector.broadcast %cst_7 : f32 to vector<1024x64xf32>
    %10 = arith.maximumf %8, %9 : vector<1024x64xf32>
    %11 = arith.truncf %10 : vector<1024x64xf32> to vector<1024x64xbf16>
    %c0_8 = arith.constant 0 : index
    %c0_9 = arith.constant 0 : index
    %12 = vector.load %arg5[%c0_8, %c0_9] : memref<1024x64xbf16, #tpu.memory_space<vmem>>, vector<1024x64xbf16>
    tpu.vector_store %arg5[%c0_8, %c0_9], %11 {strides = array<i32>} : memref<1024x64xbf16, #tpu.memory_space<vmem>>, vector<1024x64xbf16>,
    return
  }
  func.func @transform_0(%arg0: i32) -> (i32, i32) {
    %c0_i32 = arith.constant 0 : i32
    %c0_i32_0 = arith.constant 0 : i32
    return %arg0, %c0_i32 : i32, i32
  }
  func.func @transform_1(%arg0: i32) -> (i32, i32) {
    %c0_i32 = arith.constant 0 : i32
    %c0_i32_0 = arith.constant 0 : i32
    %c0_i32_1 = arith.constant 0 : i32
    return %c0_i32, %c0_i32_0 : i32, i32
  }
  func.func @transform_2(%arg0: i32) -> (i32, i32) {
    %c0_i32 = arith.constant 0 : i32
    %c0_i32_0 = arith.constant 0 : i32
    %c0_i32_1 = arith.constant 0 : i32
    return %c0_i32, %c0_i32_0 : i32, i32
  }
  func.func @transform_3(%arg0: i32) -> (i32, i32) {
    %c0_i32 = arith.constant 0 : i32
    %c0_i32_0 = arith.constant 0 : i32
    %c0_i32_1 = arith.constant 0 : i32
    return %c0_i32, %c0_i32_0 : i32, i32
  }
  func.func @transform_4(%arg0: i32) -> (i32, i32) {
    %c0_i32 = arith.constant 0 : i32
    %c0_i32_0 = arith.constant 0 : i32
    return %arg0, %c0_i32 : i32, i32
  }
}

module attributes {stable_mosaic.version = 11 : i64} {
  func.func @_conv_pool_cls_kernel(%arg0: i32, %arg1: memref<392x576xbf16, #tpu.memory_space<vmem>>, %arg2: memref<576x128xbf16, #tpu.memory_space<vmem>>, %arg3: memref<1x128xf32, #tpu.memory_space<vmem>>, %arg4: memref<1x128xf32, #tpu.memory_space<vmem>>, %arg5: memref<98x392xbf16, #tpu.memory_space<vmem>>, %arg6: memref<128x21xbf16, #tpu.memory_space<vmem>>, %arg7: memref<1x21xf32, #tpu.memory_space<vmem>>, %arg8: memref<98x21xf32, #tpu.memory_space<vmem>>) attributes {dimension_semantics = [#tpu.dimension_semantics<arbitrary>], iteration_bounds = array<i64: 1>, scalar_prefetch = 0 : i64, scratch_operands = 0 : i64, tpu.core_type = #tpu.core_type<tc>, window_params = [{pipeline_mode = #tpu.pipeline_mode<synchronous>, transform_indices = @transform_0, window_bounds = array<i64: 392, 576>}, {pipeline_mode = #tpu.pipeline_mode<synchronous>, transform_indices = @transform_1, window_bounds = array<i64: 576, 128>}, {pipeline_mode = #tpu.pipeline_mode<synchronous>, transform_indices = @transform_2, window_bounds = array<i64: 1, 128>}, {pipeline_mode = #tpu.pipeline_mode<synchronous>, transform_indices = @transform_3, window_bounds = array<i64: 1, 128>}, {pipeline_mode = #tpu.pipeline_mode<synchronous>, transform_indices = @transform_4, window_bounds = array<i64: 98, 392>}, {pipeline_mode = #tpu.pipeline_mode<synchronous>, transform_indices = @transform_5, window_bounds = array<i64: 128, 21>}, {pipeline_mode = #tpu.pipeline_mode<synchronous>, transform_indices = @transform_6, window_bounds = array<i64: 1, 21>}, {pipeline_mode = #tpu.pipeline_mode<synchronous>, transform_indices = @transform_7, window_bounds = array<i64: 98, 21>}]} {
    %c0 = arith.constant 0 : index
    %c0_0 = arith.constant 0 : index
    %0 = vector.load %arg1[%c0, %c0_0] : memref<392x576xbf16, #tpu.memory_space<vmem>>, vector<392x576xbf16>
    %c0_1 = arith.constant 0 : index
    %c0_2 = arith.constant 0 : index
    %1 = vector.load %arg2[%c0_1, %c0_2] : memref<576x128xbf16, #tpu.memory_space<vmem>>, vector<576x128xbf16>
    %cst = arith.constant dense<0.000000e+00> : vector<392x128xf32>
    %2 = tpu.matmul %0, %1, %cst {dimension_numbers = #tpu.dot_dimension_numbers<[1], [0], [0], [1], [0, 0, 1, 1], [], []>} : vector<392x576xbf16>, vector<576x128xbf16>, vector<392x128xf32> -> vector<392x128xf32>
    %c0_3 = arith.constant 0 : index
    %c0_4 = arith.constant 0 : index
    %3 = vector.load %arg3[%c0_3, %c0_4] : memref<1x128xf32, #tpu.memory_space<vmem>>, vector<1x128xf32>
    %4 = vector.broadcast %3 : vector<1x128xf32> to vector<392x128xf32>
    %5 = arith.mulf %2, %4 : vector<392x128xf32>
    %c0_5 = arith.constant 0 : index
    %c0_6 = arith.constant 0 : index
    %6 = vector.load %arg4[%c0_5, %c0_6] : memref<1x128xf32, #tpu.memory_space<vmem>>, vector<1x128xf32>
    %7 = vector.broadcast %6 : vector<1x128xf32> to vector<392x128xf32>
    %8 = arith.addf %5, %7 : vector<392x128xf32>
    %cst_7 = arith.constant 0.000000e+00 : f32
    %9 = vector.broadcast %cst_7 : f32 to vector<392x128xf32>
    %10 = arith.maximumf %8, %9 : vector<392x128xf32>
    %c0_8 = arith.constant 0 : index
    %c0_9 = arith.constant 0 : index
    %11 = vector.load %arg5[%c0_8, %c0_9] : memref<98x392xbf16, #tpu.memory_space<vmem>>, vector<98x392xbf16>
    %12 = arith.truncf %10 : vector<392x128xf32> to vector<392x128xbf16>
    %cst_10 = arith.constant dense<0.000000e+00> : vector<98x128xf32>
    %13 = tpu.matmul %11, %12, %cst_10 {dimension_numbers = #tpu.dot_dimension_numbers<[1], [0], [0], [1], [0, 0, 1, 1], [], []>} : vector<98x392xbf16>, vector<392x128xbf16>, vector<98x128xf32> -> vector<98x128xf32>
    %14 = arith.truncf %13 : vector<98x128xf32> to vector<98x128xbf16>
    %c0_11 = arith.constant 0 : index
    %c0_12 = arith.constant 0 : index
    %15 = vector.load %arg6[%c0_11, %c0_12] : memref<128x21xbf16, #tpu.memory_space<vmem>>, vector<128x21xbf16>
    %cst_13 = arith.constant dense<0.000000e+00> : vector<98x21xf32>
    %16 = tpu.matmul %14, %15, %cst_13 {dimension_numbers = #tpu.dot_dimension_numbers<[1], [0], [0], [1], [0, 0, 1, 1], [], []>} : vector<98x128xbf16>, vector<128x21xbf16>, vector<98x21xf32> -> vector<98x21xf32>
    %c0_14 = arith.constant 0 : index
    %c0_15 = arith.constant 0 : index
    %17 = vector.load %arg7[%c0_14, %c0_15] : memref<1x21xf32, #tpu.memory_space<vmem>>, vector<1x21xf32>
    %18 = vector.broadcast %17 : vector<1x21xf32> to vector<98x21xf32>
    %19 = arith.addf %16, %18 : vector<98x21xf32>
    %c0_16 = arith.constant 0 : index
    %c0_17 = arith.constant 0 : index
    %20 = vector.load %arg8[%c0_16, %c0_17] : memref<98x21xf32, #tpu.memory_space<vmem>>, vector<98x21xf32>
    tpu.vector_store %arg8[%c0_16, %c0_17], %19 {strides = array<i32>} : memref<98x21xf32, #tpu.memory_space<vmem>>, vector<98x21xf32>,
    return
  }
  func.func @transform_0(%arg0: i32) -> (i32, i32) {
    %c0_i32 = arith.constant 0 : i32
    %c0_i32_0 = arith.constant 0 : i32
    %c0_i32_1 = arith.constant 0 : i32
    return %c0_i32, %c0_i32_0 : i32, i32
  }
  func.func @transform_1(%arg0: i32) -> (i32, i32) {
    %c0_i32 = arith.constant 0 : i32
    %c0_i32_0 = arith.constant 0 : i32
    %c0_i32_1 = arith.constant 0 : i32
    return %c0_i32, %c0_i32_0 : i32, i32
  }
  func.func @transform_2(%arg0: i32) -> (i32, i32) {
    %c0_i32 = arith.constant 0 : i32
    %c0_i32_0 = arith.constant 0 : i32
    %c0_i32_1 = arith.constant 0 : i32
    return %c0_i32, %c0_i32_0 : i32, i32
  }
  func.func @transform_3(%arg0: i32) -> (i32, i32) {
    %c0_i32 = arith.constant 0 : i32
    %c0_i32_0 = arith.constant 0 : i32
    %c0_i32_1 = arith.constant 0 : i32
    return %c0_i32, %c0_i32_0 : i32, i32
  }
  func.func @transform_4(%arg0: i32) -> (i32, i32) {
    %c0_i32 = arith.constant 0 : i32
    %c0_i32_0 = arith.constant 0 : i32
    %c0_i32_1 = arith.constant 0 : i32
    return %c0_i32, %c0_i32_0 : i32, i32
  }
  func.func @transform_5(%arg0: i32) -> (i32, i32) {
    %c0_i32 = arith.constant 0 : i32
    %c0_i32_0 = arith.constant 0 : i32
    %c0_i32_1 = arith.constant 0 : i32
    return %c0_i32, %c0_i32_0 : i32, i32
  }
  func.func @transform_6(%arg0: i32) -> (i32, i32) {
    %c0_i32 = arith.constant 0 : i32
    %c0_i32_0 = arith.constant 0 : i32
    %c0_i32_1 = arith.constant 0 : i32
    return %c0_i32, %c0_i32_0 : i32, i32
  }
  func.func @transform_7(%arg0: i32) -> (i32, i32) {
    %c0_i32 = arith.constant 0 : i32
    %c0_i32_0 = arith.constant 0 : i32
    %c0_i32_1 = arith.constant 0 : i32
    return %c0_i32, %c0_i32_0 : i32, i32
  }
}

</mosaic_0001>

<llo_original>
// kernel: simple_mobilenet_pallas.3
$region0: #{simple_mobilenet_pallas.3}
  #allocation0 [shape = 'u32[]', space=smem, size = 0x4, offset = 0x4, fixed_abs, tag = 'smem constant byte address 0x4 - core index']
  #allocation1 [shape = 'u32[144,128]{1,0:T(1,128)}', space=vmem, size = 0x12000, scoped, tag = 'internal scratch']
  %s0 = inlined_call_operand.vmem [shape: bf16[6272,27], index: 0, kind: input, shape index: {}]
  %s1 = inlined_call_operand.vmem [shape: bf16[27,32], index: 1, kind: input, shape index: {}]
  %s2 = inlined_call_operand.vmem [shape: f32[1,32], index: 2, kind: input, shape index: {}]
  %s3 = inlined_call_operand.vmem [shape: f32[1,32], index: 3, kind: input, shape index: {}]
  %s4 = inlined_call_operand.vmem [shape: bf16[6272,32], index: 4, kind: output, shape index: {}]
  %s5 = sld [smem:[#allocation0]]
  $region93: #{simple_mobilenet_pallas.3} parent=0
    _
  %s7 = ssub.s32 1, %s5
  %s8 = scalar_select 0, %s7, %s5
  $region1: #{simple_mobilenet_pallas.3} parent=0
    #allocation2 [shape = 'u8[524288]{0}', space=vmem, size = 0x80000, scoped, tag = 'output window, operand 0']
    loop: start=0, step=1, limit=9
    $region2: #{simple_mobilenet_pallas.3} parent=1 // loop_pre_header
      _
    $region3: #{simple_mobilenet_pallas.3} parent=1 // loop_header
      %s10 = sphi 0, %s14
      %p11 = scmp.ge.s32.totalorder %s10, 9
      %s20 = sphi 0, %s22
      %s23 = sphi 0, %s20
      %s24 = sphi 0, %s23
      %s40 = sphi 0, %s24
      %s44 = sphi 0, %s44
      %s46 = sphi 0, %s44
      %s47 = sphi 0, %s46
      %s61 = sphi 0, %s47
      %s65 = sphi 0, %s65
      %s67 = sphi 0, %s65
      %s68 = sphi 0, %s67
      %s82 = sphi 0, %s68
      %s86 = sphi 0, %s86
      %s88 = sphi 0, %s86
      %s89 = sphi 0, %s88
      %s103 = sphi 0, %s89
      %s109 = sphi 0, %s111
      %s112 = sphi 0, %s109
      %s113 = sphi 0, %s112
      %s129 = sphi 0, %s113
    $region4: #{simple_mobilenet_pallas.3} parent=1 // loop_header_branch
      %13 = sbr.rel (%p11) target = $region8
    $region5: #{simple_mobilenet_pallas.3} parent=1 // loop_body
      %s15 = ssub.s32 %s10, 1
      %s16 = ssub.s32 %s10, 2
      %s17 = sadd.s32 %s10, 1
      %s18 = ssub.s32 %s10, %s17
      %p19 = scmp.eq.s32.totalorder %s18, 0
      %s21 = sadd.s32 %s20, 1
      %s22 = scalar_select %p19, %s20, %s21
      %p25 = pneg %p19
      %p26 = scmp.eq.s32.totalorder %s10, 6
      %p27 = por %p25, %p26
      %p28 = scmp.ne.s32.totalorder %s20, %s23
      %p29 = scmp.eq.s32.totalorder %s10, 0
      %p30 = por %p28, %p29
      %p31 = scmp.ne.s32.totalorder %s20, %s23
      %p32 = scmp.eq.s32.totalorder %s15, 6
      %p33 = por %p31, %p32
      %p34 = scmp.ne.s32.totalorder %s23, %s24
      %p35 = scmp.eq.s32.totalorder %s15, 0
      %p36 = por %p34, %p35
      %p37 = scmp.ne.s32.totalorder %s23, %s24
      %p38 = scmp.eq.s32.totalorder %s16, 6
      %p39 = por %p37, %p38
      %p41 = scmp.ne.s32.totalorder %s24, %s40
      %p42 = scmp.eq.s32.totalorder %s16, 0
      %p43 = por %p41, %p42
      %s45 = sadd.s32 %s44, 1
      %p48 = scmp.eq.s32.totalorder %s10, 6
      %p49 = scmp.ne.s32.totalorder %s44, %s46
      %p50 = scmp.eq.s32.totalorder %s10, 0
      %p51 = por %p49, %p50
      %p52 = scmp.ne.s32.totalorder %s44, %s46
      %p53 = scmp.eq.s32.totalorder %s15, 6
      %p54 = por %p52, %p53
      %p55 = scmp.ne.s32.totalorder %s46, %s47
      %p56 = scmp.eq.s32.totalorder %s15, 0
      %p57 = por %p55, %p56
      %p58 = scmp.ne.s32.totalorder %s46, %s47
      %p59 = scmp.eq.s32.totalorder %s16, 6
      %p60 = por %p58, %p59
      %p62 = scmp.ne.s32.totalorder %s47, %s61
      %p63 = scmp.eq.s32.totalorder %s16, 0
      %p64 = por %p62, %p63
      %s66 = sadd.s32 %s65, 1
      %p69 = scmp.eq.s32.totalorder %s10, 6
      %p70 = scmp.ne.s32.totalorder %s65, %s67
      %p71 = scmp.eq.s32.totalorder %s10, 0
      %p72 = por %p70, %p71
      %p73 = scmp.ne.s32.totalorder %s65, %s67
      %p74 = scmp.eq.s32.totalorder %s15, 6
      %p75 = por %p73, %p74
      %p76 = scmp.ne.s32.totalorder %s67, %s68
      %p77 = scmp.eq.s32.totalorder %s15, 0
      %p78 = por %p76, %p77
      %p79 = scmp.ne.s32.totalorder %s67, %s68
      %p80 = scmp.eq.s32.totalorder %s16, 6
      %p81 = por %p79, %p80
      %p83 = scmp.ne.s32.totalorder %s68, %s82
      %p84 = scmp.eq.s32.totalorder %s16, 0
      %p85 = por %p83, %p84
      %s87 = sadd.s32 %s86, 1
      %p90 = scmp.eq.s32.totalorder %s10, 6
      %p91 = scmp.ne.s32.totalorder %s86, %s88
      %p92 = scmp.eq.s32.totalorder %s10, 0
      %p93 = por %p91, %p92
      %p94 = scmp.ne.s32.totalorder %s86, %s88
      %p95 = scmp.eq.s32.totalorder %s15, 6
      %p96 = por %p94, %p95
      %p97 = scmp.ne.s32.totalorder %s88, %s89
      %p98 = scmp.eq.s32.totalorder %s15, 0
      %p99 = por %p97, %p98
      %p100 = scmp.ne.s32.totalorder %s88, %s89
      %p101 = scmp.eq.s32.totalorder %s16, 6
      %p102 = por %p100, %p101
      %p104 = scmp.ne.s32.totalorder %s89, %s103
      %p105 = scmp.eq.s32.totalorder %s16, 0
      %p106 = por %p104, %p105
      %s107 = ssub.s32 %s10, %s17
      %p108 = scmp.eq.s32.totalorder %s107, 0
      %s110 = sadd.s32 %s109, 1
      %s111 = scalar_select %p108, %s109, %s110
      %p114 = pneg %p108
      %p115 = scmp.eq.s32.totalorder %s10, 6
      %p116 = por %p114, %p115
      %p117 = scmp.ne.s32.totalorder %s109, %s112
      %p118 = scmp.eq.s32.totalorder %s10, 0
      %p119 = por %p117, %p118
      %p120 = scmp.ne.s32.totalorder %s109, %s112
      %p121 = scmp.eq.s32.totalorder %s15, 6
      %p122 = por %p120, %p121
      %p123 = scmp.ne.s32.totalorder %s112, %s113
      %p124 = scmp.eq.s32.totalorder %s15, 0
      %p125 = por %p123, %p124
      %p126 = scmp.ne.s32.totalorder %s112, %s113
      %p127 = scmp.eq.s32.totalorder %s16, 6
      %p128 = por %p126, %p127
      %p130 = scmp.ne.s32.totalorder %s113, %s129
      %p131 = scmp.eq.s32.totalorder %s16, 0
      %p132 = por %p130, %p131
      %p133 = scmp.le.s32.totalorder 1, %s10
      %p134 = scmp.lt.s32.totalorder %s10, 8
      %p135 = pnand %p133, %p134
      %p136 = pneg %p135
      // Predicated region
      $region9: #{simple_mobilenet_pallas.3} parent=5 // pred_check
        _
      $region10: #{simple_mobilenet_pallas.3} parent=5 // pred_check_branch
        %138 = sbr.rel (%p135) target = $region12
      $region11: #{simple_mobilenet_pallas.3} parent=5 // pred_region
        %s139 = ssub.s32 %s10, 1
        // Predicated region
        $region13: #{simple_mobilenet_pallas.3} parent=11 // pred_check
          %p140 = pneg %p57
        $region14: #{simple_mobilenet_pallas.3} parent=11 // pred_check_branch
          %142 = sbr.rel (%p140) target = $region16
        $region15: #{simple_mobilenet_pallas.3} parent=11 // pred_region
          _
        $region16: #{simple_mobilenet_pallas.3} parent=11 // pred_fallthru
          _
        // Predicated region
        $region17: #{simple_mobilenet_pallas.3} parent=11 // pred_check
          %p143 = pneg %p78
        $region18: #{simple_mobilenet_pallas.3} parent=11 // pred_check_branch
          %145 = sbr.rel (%p143) target = $region20
        $region19: #{simple_mobilenet_pallas.3} parent=11 // pred_region
          _
        $region20: #{simple_mobilenet_pallas.3} parent=11 // pred_fallthru
          _
        // Predicated region
        $region21: #{simple_mobilenet_pallas.3} parent=11 // pred_check
          %p146 = pneg %p99
        $region22: #{simple_mobilenet_pallas.3} parent=11 // pred_check_branch
          %148 = sbr.rel (%p146) target = $region24
        $region23: #{simple_mobilenet_pallas.3} parent=11 // pred_region
          _
        $region24: #{simple_mobilenet_pallas.3} parent=11 // pred_fallthru
          _
      $region12: #{simple_mobilenet_pallas.3} parent=5 // pred_fallthru
        _
      %p149 = scmp.lt.s32.totalorder %s10, 7
      // Predicated region
      $region25: #{simple_mobilenet_pallas.3} parent=5 // pred_check
        %p150 = pneg %p149
      $region26: #{simple_mobilenet_pallas.3} parent=5 // pred_check_branch
        %152 = sbr.rel (%p150) target = $region28
      $region27: #{simple_mobilenet_pallas.3} parent=5 // pred_region
        // Predicated region
        $region29: #{simple_mobilenet_pallas.3} parent=27 // pred_check
          %p153 = pneg %p30
        $region30: #{simple_mobilenet_pallas.3} parent=27 // pred_check_branch
          %155 = sbr.rel (%p153) target = $region32
        $region31: #{simple_mobilenet_pallas.3} parent=27 // pred_region
          %s156 = smul.u32 128, %s10
          %s157 = ssub.s32 784, %s156
          %p158 = scmp.lt.s32.totalorder %s157, 128
          %s159 = scalar_select %p158, %s157, 128
          %s160 = smul.u32 64, %s159
          %p161 = scmp.lt.s32.totalorder %s156, 783
          %s162 = scalar_select %p161, %s156, 783
          %s163 = smul.addr %s162, 4
          %s164 = scalar_lea.vmem %s0, %s163
          %s165 = smul.u32 128, %s10
          %s166 = ssub.s32 784, %s165
          %p167 = scmp.lt.s32.totalorder %s166, 128
          %s168 = scalar_select %p167, %s166, 128
          %s169 = smul.u32 64, %s168
        $region32: #{simple_mobilenet_pallas.3} parent=27 // pred_fallthru
          _
      $region28: #{simple_mobilenet_pallas.3} parent=5 // pred_fallthru
        _
      %p170 = scmp.le.s32.totalorder 1, %s10
      %p171 = scmp.lt.s32.totalorder %s10, 8
      %p172 = pnand %p170, %p171
      %p173 = pneg %p172
      // Predicated region
      $region33: #{simple_mobilenet_pallas.3} parent=5 // pred_check
        _
      $region34: #{simple_mobilenet_pallas.3} parent=5 // pred_check_branch
        %175 = sbr.rel (%p172) target = $region36
      $region35: #{simple_mobilenet_pallas.3} parent=5 // pred_region
        %s176 = ssub.s32 %s10, 1
        %s177 = smul.u32 128, %s15
        %s178 = ssub.s32 784, %s177
        %p179 = scmp.lt.s32.totalorder %s178, 128
        %s180 = scalar_select %p179, %s178, 128
        %s181 = smul.u32 64, %s180
        %p182 = scmp.lt.s32.totalorder %s177, 783
        %s183 = scalar_select %p182, %s177, 783
        %s184 = smul.addr %s183, 4
        %s185 = scalar_lea.vmem %s0, %s184
        %p186 = pneg %p36
        %p187 = pneg %p33
        %p188 = pneg %p57
        %p189 = pneg %p54
        %p190 = pneg %p78
        %p191 = pneg %p75
        %p192 = pneg %p99
        %p193 = pneg %p96
        %p194 = pneg %p125
        %p195 = pneg %p122
        %s196 = sand.u32 %s112, 1
        %s197 = sand.u32 %s112, 1
        %s198 = smul.addr %s197, 512
        %s199 = scalar_lea.vmem [#allocation2], %s198
        %s200 = smul.u32 128, %s15
        %s201 = ssub.s32 784, %s200
        %p202 = scmp.lt.s32.totalorder %s201, 128
        %s203 = scalar_select %p202, %s201, 128
        %s204 = smul.u32 64, %s203
        %p205 = scmp.lt.s32.totalorder %s200, 783
        %s206 = scalar_select %p205, %s200, 783
        %s207 = smul.addr %s206, 4
        %s208 = scalar_lea.vmem %s0, %s207
        %s209 = smul.u32 128, %s15
        %s210 = ssub.s32 784, %s209
        %p211 = scmp.lt.s32.totalorder %s210, 128
        %s212 = scalar_select %p211, %s210, 128
        %s213 = smul.u32 64, %s212
        %s214 = smul.u32 128, %s15
        %s215 = ssub.s32 784, %s214
        %p216 = scmp.lt.s32.totalorder %s215, 128
        %s217 = scalar_select %p216, %s215, 128
        %s218 = smul.u32 64, %s217
        %v220 = vld [vmem:[%s208] sm:$0xf]
        %v221 = vld [vmem:[%s208 + $0x4] sm:$0xf]
        %v222 = vld [vmem:[%s208 + $0x8] sm:$0xf]
        %v223 = vld [vmem:[%s208 + $0xc] sm:$0xf]
        %v224 = vld [vmem:[%s208 + $0x10] sm:$0xf]
        %v225 = vld [vmem:[%s208 + $0x14] sm:$0xf]
        %v226 = vld [vmem:[%s208 + $0x18] sm:$0xf]
        %v227 = vld [vmem:[%s208 + $0x1c] sm:$0xf]
        %v228 = vld [vmem:[%s208 + $0x20] sm:$0xf]
        %v229 = vld [vmem:[%s208 + $0x24] sm:$0xf]
        %v230 = vld [vmem:[%s208 + $0x28] sm:$0xf]
        %v231 = vld [vmem:[%s208 + $0x2c] sm:$0xf]
        %v232 = vld [vmem:[%s208 + $0x30] sm:$0xf]
        %v233 = vld [vmem:[%s208 + $0x34] sm:$0xf]
        %v234 = vld [vmem:[%s208 + $0x38] sm:$0xf]
        %v235 = vld [vmem:[%s208 + $0x3c] sm:$0xf]
        %v236 = vld [vmem:[%s208 + $0x40] sm:$0xf]
        %v237 = vld [vmem:[%s208 + $0x44] sm:$0xf]
        %v238 = vld [vmem:[%s208 + $0x48] sm:$0xf]
        %v239 = vld [vmem:[%s208 + $0x4c] sm:$0xf]
        %v240 = vld [vmem:[%s208 + $0x50] sm:$0xf]
        %v241 = vld [vmem:[%s208 + $0x54] sm:$0xf]
        %v242 = vld [vmem:[%s208 + $0x58] sm:$0xf]
        %v243 = vld [vmem:[%s208 + $0x5c] sm:$0xf]
        %v244 = vld [vmem:[%s208 + $0x60] sm:$0xf]
        %v245 = vld [vmem:[%s208 + $0x64] sm:$0xf]
        %v246 = vld [vmem:[%s208 + $0x68] sm:$0xf]
        %v247 = vld [vmem:[%s208 + $0x6c] sm:$0xf]
        %v248 = vld [vmem:[%s208 + $0x70] sm:$0xf]
        %v249 = vld [vmem:[%s208 + $0x74] sm:$0xf]
        %v250 = vld [vmem:[%s208 + $0x78] sm:$0xf]
        %v251 = vld [vmem:[%s208 + $0x7c] sm:$0xf]
        %v252 = vld [vmem:[%s208 + $0x80] sm:$0xf]
        %v253 = vld [vmem:[%s208 + $0x84] sm:$0xf]
        %v254 = vld [vmem:[%s208 + $0x88] sm:$0xf]
        %v255 = vld [vmem:[%s208 + $0x8c] sm:$0xf]
        %v256 = vld [vmem:[%s208 + $0x90] sm:$0xf]
        %v257 = vld [vmem:[%s208 + $0x94] sm:$0xf]
        %v258 = vld [vmem:[%s208 + $0x98] sm:$0xf]
        %v259 = vld [vmem:[%s208 + $0x9c] sm:$0xf]
        %v260 = vld [vmem:[%s208 + $0xa0] sm:$0xf]
        %v261 = vld [vmem:[%s208 + $0xa4] sm:$0xf]
        %v262 = vld [vmem:[%s208 + $0xa8] sm:$0xf]
        %v263 = vld [vmem:[%s208 + $0xac] sm:$0xf]
        %v264 = vld [vmem:[%s208 + $0xb0] sm:$0xf]
        %v265 = vld [vmem:[%s208 + $0xb4] sm:$0xf]
        %v266 = vld [vmem:[%s208 + $0xb8] sm:$0xf]
        %v267 = vld [vmem:[%s208 + $0xbc] sm:$0xf]
        %v268 = vld [vmem:[%s208 + $0xc0] sm:$0xf]
        %v269 = vld [vmem:[%s208 + $0xc4] sm:$0xf]
        %v270 = vld [vmem:[%s208 + $0xc8] sm:$0xf]
        %v271 = vld [vmem:[%s208 + $0xcc] sm:$0xf]
        %v272 = vld [vmem:[%s208 + $0xd0] sm:$0xf]
        %v273 = vld [vmem:[%s208 + $0xd4] sm:$0xf]
        %v274 = vld [vmem:[%s208 + $0xd8] sm:$0xf]
        %v275 = vld [vmem:[%s208 + $0xdc] sm:$0xf]
        %v276 = vld [vmem:[%s208 + $0xe0] sm:$0xf]
        %v277 = vld [vmem:[%s208 + $0xe4] sm:$0xf]
        %v278 = vld [vmem:[%s208 + $0xe8] sm:$0xf]
        %v279 = vld [vmem:[%s208 + $0xec] sm:$0xf]
        %v280 = vld [vmem:[%s208 + $0xf0] sm:$0xf]
        %v281 = vld [vmem:[%s208 + $0xf4] sm:$0xf]
        %v282 = vld [vmem:[%s208 + $0xf8] sm:$0xf]
        %v283 = vld [vmem:[%s208 + $0xfc] sm:$0xf]
        %v284 = vld [vmem:[%s208 + $0x100] sm:$0xf]
        %v285 = vld [vmem:[%s208 + $0x104] sm:$0xf]
        %v286 = vld [vmem:[%s208 + $0x108] sm:$0xf]
        %v287 = vld [vmem:[%s208 + $0x10c] sm:$0xf]
        %v288 = vld [vmem:[%s208 + $0x110] sm:$0xf]
        %v289 = vld [vmem:[%s208 + $0x114] sm:$0xf]
        %v290 = vld [vmem:[%s208 + $0x118] sm:$0xf]
        %v291 = vld [vmem:[%s208 + $0x11c] sm:$0xf]
        %v292 = vld [vmem:[%s208 + $0x120] sm:$0xf]
        %v293 = vld [vmem:[%s208 + $0x124] sm:$0xf]
        %v294 = vld [vmem:[%s208 + $0x128] sm:$0xf]
        %v295 = vld [vmem:[%s208 + $0x12c] sm:$0xf]
        %v296 = vld [vmem:[%s208 + $0x130] sm:$0xf]
        %v297 = vld [vmem:[%s208 + $0x134] sm:$0xf]
        %v298 = vld [vmem:[%s208 + $0x138] sm:$0xf]
        %v299 = vld [vmem:[%s208 + $0x13c] sm:$0xf]
        %v300 = vld [vmem:[%s208 + $0x140] sm:$0xf]
        %v301 = vld [vmem:[%s208 + $0x144] sm:$0xf]
        %v302 = vld [vmem:[%s208 + $0x148] sm:$0xf]
        %v303 = vld [vmem:[%s208 + $0x14c] sm:$0xf]
        %v304 = vld [vmem:[%s208 + $0x150] sm:$0xf]
        %v305 = vld [vmem:[%s208 + $0x154] sm:$0xf]
        %v306 = vld [vmem:[%s208 + $0x158] sm:$0xf]
        %v307 = vld [vmem:[%s208 + $0x15c] sm:$0xf]
        %v308 = vld [vmem:[%s208 + $0x160] sm:$0xf]
        %v309 = vld [vmem:[%s208 + $0x164] sm:$0xf]
        %v310 = vld [vmem:[%s208 + $0x168] sm:$0xf]
        %v311 = vld [vmem:[%s208 + $0x16c] sm:$0xf]
        %v312 = vld [vmem:[%s208 + $0x170] sm:$0xf]
        %v313 = vld [vmem:[%s208 + $0x174] sm:$0xf]
        %v314 = vld [vmem:[%s208 + $0x178] sm:$0xf]
        %v315 = vld [vmem:[%s208 + $0x17c] sm:$0xf]
        %v316 = vld [vmem:[%s208 + $0x180] sm:$0xf]
        %v317 = vld [vmem:[%s208 + $0x184] sm:$0xf]
        %v318 = vld [vmem:[%s208 + $0x188] sm:$0xf]
        %v319 = vld [vmem:[%s208 + $0x18c] sm:$0xf]
        %v320 = vld [vmem:[%s208 + $0x190] sm:$0xf]
        %v321 = vld [vmem:[%s208 + $0x194] sm:$0xf]
        %v322 = vld [vmem:[%s208 + $0x198] sm:$0xf]
        %v323 = vld [vmem:[%s208 + $0x19c] sm:$0xf]
        %v324 = vld [vmem:[%s208 + $0x1a0] sm:$0xf]
        %v325 = vld [vmem:[%s208 + $0x1a4] sm:$0xf]
        %v326 = vld [vmem:[%s208 + $0x1a8] sm:$0xf]
        %v327 = vld [vmem:[%s208 + $0x1ac] sm:$0xf]
        %v328 = vld [vmem:[%s208 + $0x1b0] sm:$0xf]
        %v329 = vld [vmem:[%s208 + $0x1b4] sm:$0xf]
        %v330 = vld [vmem:[%s208 + $0x1b8] sm:$0xf]
        %v331 = vld [vmem:[%s208 + $0x1bc] sm:$0xf]
        %v332 = vld [vmem:[%s208 + $0x1c0] sm:$0xf]
        %v333 = vld [vmem:[%s208 + $0x1c4] sm:$0xf]
        %v334 = vld [vmem:[%s208 + $0x1c8] sm:$0xf]
        %v335 = vld [vmem:[%s208 + $0x1cc] sm:$0xf]
        %v336 = vld [vmem:[%s208 + $0x1d0] sm:$0xf]
        %v337 = vld [vmem:[%s208 + $0x1d4] sm:$0xf]
        %v338 = vld [vmem:[%s208 + $0x1d8] sm:$0xf]
        %v339 = vld [vmem:[%s208 + $0x1dc] sm:$0xf]
        %v340 = vld [vmem:[%s208 + $0x1e0] sm:$0xf]
        %v341 = vld [vmem:[%s208 + $0x1e4] sm:$0xf]
        %v342 = vld [vmem:[%s208 + $0x1e8] sm:$0xf]
        %v343 = vld [vmem:[%s208 + $0x1ec] sm:$0xf]
        %v344 = vld [vmem:[%s208 + $0x1f0] sm:$0xf]
        %v345 = vld [vmem:[%s208 + $0x1f4] sm:$0xf]
        %v346 = vld [vmem:[%s208 + $0x1f8] sm:$0xf]
        %v347 = vld [vmem:[%s208 + $0x1fc] sm:$0xf]
        %v348 = vld [vmem:[%s1] sm:$0xf]
        %v349 = vld [vmem:[%s1 + $0x4] sm:$0xf]
        %v350 = vld [vmem:[%s1 + $0x8] sm:$0xf]
        %v351 = vld [vmem:[%s1 + $0xc] sm:$0x3]
        %v480 = vunpack.c.l.b16 %v220
        %v481 = vunpack.c.l.b16 %v221
        %v482 = vunpack.c.l.b16 %v222
        %v483 = vunpack.c.l.b16 %v223
        %v484 = vunpack.c.l.b16 %v224
        %v485 = vunpack.c.l.b16 %v225
        %v486 = vunpack.c.l.b16 %v226
        %v487 = vunpack.c.l.b16 %v227
        %v488 = vunpack.c.l.b16 %v228
        %v489 = vunpack.c.l.b16 %v229
        %v490 = vunpack.c.l.b16 %v230
        %v491 = vunpack.c.l.b16 %v231
        %v492 = vunpack.c.l.b16 %v232
        %v493 = vunpack.c.l.b16 %v233
        %v494 = vunpack.c.l.b16 %v234
        %v495 = vunpack.c.l.b16 %v235
        %v496 = vunpack.c.l.b16 %v236
        %v497 = vunpack.c.l.b16 %v237
        %v498 = vunpack.c.l.b16 %v238
        %v499 = vunpack.c.l.b16 %v239
        %v500 = vunpack.c.l.b16 %v240
        %v501 = vunpack.c.l.b16 %v241
        %v502 = vunpack.c.l.b16 %v242
        %v503 = vunpack.c.l.b16 %v243
        %v504 = vunpack.c.l.b16 %v244
        %v505 = vunpack.c.l.b16 %v245
        %v506 = vunpack.c.l.b16 %v246
        %v507 = vunpack.c.l.b16 %v247
        %v508 = vunpack.c.l.b16 %v248
        %v509 = vunpack.c.l.b16 %v249
        %v510 = vunpack.c.l.b16 %v250
        %v511 = vunpack.c.l.b16 %v251
        %v512 = vunpack.c.l.b16 %v252
        %v513 = vunpack.c.l.b16 %v253
        %v514 = vunpack.c.l.b16 %v254
        %v515 = vunpack.c.l.b16 %v255
        %v516 = vunpack.c.l.b16 %v256
        %v517 = vunpack.c.l.b16 %v257
        %v518 = vunpack.c.l.b16 %v258
        %v519 = vunpack.c.l.b16 %v259
        %v520 = vunpack.c.l.b16 %v260
        %v521 = vunpack.c.l.b16 %v261
        %v522 = vunpack.c.l.b16 %v262
        %v523 = vunpack.c.l.b16 %v263
        %v524 = vunpack.c.l.b16 %v264
        %v525 = vunpack.c.l.b16 %v265
        %v526 = vunpack.c.l.b16 %v266
        %v527 = vunpack.c.l.b16 %v267
        %v528 = vunpack.c.l.b16 %v268
        %v529 = vunpack.c.l.b16 %v269
        %v530 = vunpack.c.l.b16 %v270
        %v531 = vunpack.c.l.b16 %v271
        %v532 = vunpack.c.l.b16 %v272
        %v533 = vunpack.c.l.b16 %v273
        %v534 = vunpack.c.l.b16 %v274
        %v535 = vunpack.c.l.b16 %v275
        %v536 = vunpack.c.l.b16 %v276
        %v537 = vunpack.c.l.b16 %v277
        %v538 = vunpack.c.l.b16 %v278
        %v539 = vunpack.c.l.b16 %v279
        %v540 = vunpack.c.l.b16 %v280
        %v541 = vunpack.c.l.b16 %v281
        %v542 = vunpack.c.l.b16 %v282
        %v543 = vunpack.c.l.b16 %v283
        %v544 = vunpack.c.l.b16 %v284
        %v545 = vunpack.c.l.b16 %v285
        %v546 = vunpack.c.l.b16 %v286
        %v547 = vunpack.c.l.b16 %v287
        %v548 = vunpack.c.l.b16 %v288
        %v549 = vunpack.c.l.b16 %v289
        %v550 = vunpack.c.l.b16 %v290
        %v551 = vunpack.c.l.b16 %v291
        %v552 = vunpack.c.l.b16 %v292
        %v553 = vunpack.c.l.b16 %v293
        %v554 = vunpack.c.l.b16 %v294
        %v555 = vunpack.c.l.b16 %v295
        %v556 = vunpack.c.l.b16 %v296
        %v557 = vunpack.c.l.b16 %v297
        %v558 = vunpack.c.l.b16 %v298
        %v559 = vunpack.c.l.b16 %v299
        %v560 = vunpack.c.l.b16 %v300
        %v561 = vunpack.c.l.b16 %v301
        %v562 = vunpack.c.l.b16 %v302
        %v563 = vunpack.c.l.b16 %v303
        %v564 = vunpack.c.l.b16 %v304
        %v565 = vunpack.c.l.b16 %v305
        %v566 = vunpack.c.l.b16 %v306
        %v567 = vunpack.c.l.b16 %v307
        %v568 = vunpack.c.l.b16 %v308
        %v569 = vunpack.c.l.b16 %v309
        %v570 = vunpack.c.l.b16 %v310
        %v571 = vunpack.c.l.b16 %v311
        %v572 = vunpack.c.l.b16 %v312
        %v573 = vunpack.c.l.b16 %v313
        %v574 = vunpack.c.l.b16 %v314
        %v575 = vunpack.c.l.b16 %v315
        %v576 = vunpack.c.l.b16 %v316
        %v577 = vunpack.c.l.b16 %v317
        %v578 = vunpack.c.l.b16 %v318
        %v579 = vunpack.c.l.b16 %v319
        %v580 = vunpack.c.l.b16 %v320
        %v581 = vunpack.c.l.b16 %v321
        %v582 = vunpack.c.l.b16 %v322
        %v583 = vunpack.c.l.b16 %v323
        %v584 = vunpack.c.l.b16 %v324
        %v585 = vunpack.c.l.b16 %v325
        %v586 = vunpack.c.l.b16 %v326
        %v587 = vunpack.c.l.b16 %v327
        %v588 = vunpack.c.l.b16 %v328
        %v589 = vunpack.c.l.b16 %v329
        %v590 = vunpack.c.l.b16 %v330
        %v591 = vunpack.c.l.b16 %v331
        %v592 = vunpack.c.l.b16 %v332
        %v593 = vunpack.c.l.b16 %v333
        %v594 = vunpack.c.l.b16 %v334
        %v595 = vunpack.c.l.b16 %v335
        %v596 = vunpack.c.l.b16 %v336
        %v597 = vunpack.c.l.b16 %v337
        %v598 = vunpack.c.l.b16 %v338
        %v599 = vunpack.c.l.b16 %v339
        %v600 = vunpack.c.l.b16 %v340
        %v601 = vunpack.c.l.b16 %v341
        %v602 = vunpack.c.l.b16 %v342
        %v603 = vunpack.c.l.b16 %v343
        %v604 = vunpack.c.l.b16 %v344
        %v605 = vunpack.c.l.b16 %v345
        %v606 = vunpack.c.l.b16 %v346
        %v607 = vunpack.c.l.b16 %v347
        %v608 = vpack.c.b16 %v481, %v480
        %v609 = vpack.c.b16 %v483, %v482
        %v610 = vpack.c.b16 %v485, %v484
        %v611 = vpack.c.b16 %v487, %v486
        %v612 = vpack.c.b16 %v489, %v488
        %v613 = vpack.c.b16 %v491, %v490
        %v614 = vpack.c.b16 %v493, %v492
        %v615 = vpack.c.b16 %v495, %v494
        %v616 = vpack.c.b16 %v497, %v496
        %v617 = vpack.c.b16 %v499, %v498
        %v618 = vpack.c.b16 %v501, %v500
        %v619 = vpack.c.b16 %v503, %v502
        %v620 = vpack.c.b16 %v505, %v504
        %v621 = vpack.c.b16 %v507, %v506
        %v622 = vpack.c.b16 %v509, %v508
        %v623 = vpack.c.b16 %v511, %v510
        %v624 = vpack.c.b16 %v513, %v512
        %v625 = vpack.c.b16 %v515, %v514
        %v626 = vpack.c.b16 %v517, %v516
        %v627 = vpack.c.b16 %v519, %v518
        %v628 = vpack.c.b16 %v521, %v520
        %v629 = vpack.c.b16 %v523, %v522
        %v630 = vpack.c.b16 %v525, %v524
        %v631 = vpack.c.b16 %v527, %v526
        %v632 = vpack.c.b16 %v529, %v528
        %v633 = vpack.c.b16 %v531, %v530
        %v634 = vpack.c.b16 %v533, %v532
        %v635 = vpack.c.b16 %v535, %v534
        %v636 = vpack.c.b16 %v537, %v536
        %v637 = vpack.c.b16 %v539, %v538
        %v638 = vpack.c.b16 %v541, %v540
        %v639 = vpack.c.b16 %v543, %v542
        %v640 = vpack.c.b16 %v545, %v544
        %v641 = vpack.c.b16 %v547, %v546
        %v642 = vpack.c.b16 %v549, %v548
        %v643 = vpack.c.b16 %v551, %v550
        %v644 = vpack.c.b16 %v553, %v552
        %v645 = vpack.c.b16 %v555, %v554
        %v646 = vpack.c.b16 %v557, %v556
        %v647 = vpack.c.b16 %v559, %v558
        %v648 = vpack.c.b16 %v561, %v560
        %v649 = vpack.c.b16 %v563, %v562
        %v650 = vpack.c.b16 %v565, %v564
        %v651 = vpack.c.b16 %v567, %v566
        %v652 = vpack.c.b16 %v569, %v568
        %v653 = vpack.c.b16 %v571, %v570
        %v654 = vpack.c.b16 %v573, %v572
        %v655 = vpack.c.b16 %v575, %v574
        %v656 = vpack.c.b16 %v577, %v576
        %v657 = vpack.c.b16 %v579, %v578
        %v658 = vpack.c.b16 %v581, %v580
        %v659 = vpack.c.b16 %v583, %v582
        %v660 = vpack.c.b16 %v585, %v584
        %v661 = vpack.c.b16 %v587, %v586
        %v662 = vpack.c.b16 %v589, %v588
        %v663 = vpack.c.b16 %v591, %v590
        %v664 = vpack.c.b16 %v593, %v592
        %v665 = vpack.c.b16 %v595, %v594
        %v666 = vpack.c.b16 %v597, %v596
        %v667 = vpack.c.b16 %v599, %v598
        %v668 = vpack.c.b16 %v601, %v600
        %v669 = vpack.c.b16 %v603, %v602
        %v670 = vpack.c.b16 %v605, %v604
        %v671 = vpack.c.b16 %v607, %v606
        %v676 = vunpack.c.l.b16 %v348
        %v677 = vunpack.c.l.b16 %v349
        %v678 = vunpack.c.l.b16 %v350
        %v679 = vunpack.c.l.b16 %v351
        %v680 = vpack.c.b16 %v677, %v676
        %v681 = vpack.c.b16 %v679, %v678
        %vm683 = vcmask 220160
        %v685 = vsel %vm683, %v608, 0
        %v688 = vsel %vm683, %v609, 0
        %v691 = vsel %vm683, %v610, 0
        %v694 = vsel %vm683, %v611, 0
        %v697 = vsel %vm683, %v612, 0
        %v700 = vsel %vm683, %v613, 0
        %v703 = vsel %vm683, %v614, 0
        %v706 = vsel %vm683, %v615, 0
        %v709 = vsel %vm683, %v616, 0
        %v712 = vsel %vm683, %v617, 0
        %v715 = vsel %vm683, %v618, 0
        %v718 = vsel %vm683, %v619, 0
        %v721 = vsel %vm683, %v620, 0
        %v724 = vsel %vm683, %v621, 0
        %v727 = vsel %vm683, %v622, 0
        %v730 = vsel %vm683, %v623, 0
        %v733 = vsel %vm683, %v624, 0
        %v736 = vsel %vm683, %v625, 0
        %v739 = vsel %vm683, %v626, 0
        %v742 = vsel %vm683, %v627, 0
        %v745 = vsel %vm683, %v628, 0
        %v748 = vsel %vm683, %v629, 0
        %v751 = vsel %vm683, %v630, 0
        %v754 = vsel %vm683, %v631, 0
        %v757 = vsel %vm683, %v632, 0
        %v760 = vsel %vm683, %v633, 0
        %v763 = vsel %vm683, %v634, 0
        %v766 = vsel %vm683, %v635, 0
        %v769 = vsel %vm683, %v636, 0
        %v772 = vsel %vm683, %v637, 0
        %v775 = vsel %vm683, %v638, 0
        %v778 = vsel %vm683, %v639, 0
        %v781 = vsel %vm683, %v640, 0
        %v784 = vsel %vm683, %v641, 0
        %v787 = vsel %vm683, %v642, 0
        %v790 = vsel %vm683, %v643, 0
        %v793 = vsel %vm683, %v644, 0
        %v796 = vsel %vm683, %v645, 0
        %v799 = vsel %vm683, %v646, 0
        %v802 = vsel %vm683, %v647, 0
        %v805 = vsel %vm683, %v648, 0
        %v808 = vsel %vm683, %v649, 0
        %v811 = vsel %vm683, %v650, 0
        %v814 = vsel %vm683, %v651, 0
        %v817 = vsel %vm683, %v652, 0
        %v820 = vsel %vm683, %v653, 0
        %v823 = vsel %vm683, %v654, 0
        %v826 = vsel %vm683, %v655, 0
        %v829 = vsel %vm683, %v656, 0
        %v832 = vsel %vm683, %v657, 0
        %v835 = vsel %vm683, %v658, 0
        %v838 = vsel %vm683, %v659, 0
        %v841 = vsel %vm683, %v660, 0
        %v844 = vsel %vm683, %v661, 0
        %v847 = vsel %vm683, %v662, 0
        %v850 = vsel %vm683, %v663, 0
        %v853 = vsel %vm683, %v664, 0
        %v856 = vsel %vm683, %v665, 0
        %v859 = vsel %vm683, %v666, 0
        %v862 = vsel %vm683, %v667, 0
        %v865 = vsel %vm683, %v668, 0
        %v868 = vsel %vm683, %v669, 0
        %v871 = vsel %vm683, %v670, 0
        %v874 = vsel %vm683, %v671, 0
        %vm876 = vcmask 1044480
        %vm877 = vcmask 1045504
        %v878 = vsel %vm876, 4294967295, 65535
        %v879 = vsel %vm877, %v878, 0
        %v881 = vand.u32 %v681, %v879
        %883 = vmatprep.subr.bf16.mxu0 0
        %884 = vmatpush1.bf16.msra.mxu0 %v680
        %885 = vmatprep.subr.bf16.mxu0 0
        %886 = vmatpush1.bf16.msra.mxu0 %v881
        %887 = vmatprep.subr.bf16.mxu0 0
        %888 = vmatpush1.bf16.msra.mxu0 0
        %889 = vmatprep.subr.bf16.mxu0 0
        %890 = vmatpush1.bf16.msra.mxu0 0
        %891 = vmatprep.subr.bf16.mxu0 0
        %892 = vmatpush1.bf16.msra.mxu0 0
        %893 = vmatprep.subr.bf16.mxu0 0
        %894 = vmatpush1.bf16.msra.mxu0 0
        %895 = vmatprep.subr.bf16.mxu0 0
        %896 = vmatpush1.bf16.msra.mxu0 0
        %897 = vmatprep.subr.bf16.mxu0 0
        %898 = vmatpush1.bf16.msra.mxu0 0
        %899 = vmatprep.subr.bf16.mxu0 0
        %900 = vmatpush1.bf16.msra.mxu0 0
        %901 = vmatprep.subr.bf16.mxu0 0
        %902 = vmatpush1.bf16.msra.mxu0 0
        %903 = vmatprep.subr.bf16.mxu0 0
        %904 = vmatpush1.bf16.msra.mxu0 0
        %905 = vmatprep.subr.bf16.mxu0 0
        %906 = vmatpush1.bf16.msra.mxu0 0
        %907 = vmatprep.subr.bf16.mxu0 0
        %908 = vmatpush1.bf16.msra.mxu0 0
        %909 = vmatprep.subr.bf16.mxu0 0
        %910 = vmatpush1.bf16.msra.mxu0 0
        %911 = vmatprep.subr.bf16.mxu0 0
        %912 = vmatpush1.bf16.msra.mxu0 0
        %913 = vmatprep.subr.bf16.mxu0 0
        %914 = vmatpush1.bf16.msra.mxu0 0
        %915 = vmatprep.mubr.bf16.mxu0 0
        %916 = vmatmul.mubr.bf16.gmra.mrb[0].mxu0 %v685
        %v917 = vpop.f32.mrb[0].mxu0
        %v918 = vadd.f32 0.0, %v917
        %v919 = vpop.f32.mrb[0].mxu0
        %v920 = vpop.f32.mrb[0].mxu0
        %v921 = vadd.f32 0.0, %v920
        %v922 = vpop.f32.mrb[0].mxu0
        %923 = vmatprep.mubr.bf16.mxu0 0
        %924 = vmatmul.mubr.bf16.gmra.mrb[0].mxu0 %v688
        %v925 = vpop.f32.mrb[0].mxu0
        %v926 = vadd.f32 0.0, %v925
        %v927 = vpop.f32.mrb[0].mxu0
        %v928 = vpop.f32.mrb[0].mxu0
        %v929 = vadd.f32 0.0, %v928
        %v930 = vpop.f32.mrb[0].mxu0
        %931 = vmatprep.mubr.bf16.mxu0 0
        %932 = vmatmul.mubr.bf16.gmra.mrb[0].mxu0 %v691
        %v933 = vpop.f32.mrb[0].mxu0
        %v934 = vadd.f32 0.0, %v933
        %v935 = vpop.f32.mrb[0].mxu0
        %v936 = vpop.f32.mrb[0].mxu0
        %v937 = vadd.f32 0.0, %v936
        %v938 = vpop.f32.mrb[0].mxu0
        %939 = vmatprep.mubr.bf16.mxu0 0
        %940 = vmatmul.mubr.bf16.gmra.mrb[0].mxu0 %v694
        %v941 = vpop.f32.mrb[0].mxu0
        %v942 = vadd.f32 0.0, %v941
        %v943 = vpop.f32.mrb[0].mxu0
        %v944 = vpop.f32.mrb[0].mxu0
        %v945 = vadd.f32 0.0, %v944
        %v946 = vpop.f32.mrb[0].mxu0
        %947 = vmatprep.mubr.bf16.mxu0 0
        %948 = vmatmul.mubr.bf16.gmra.mrb[0].mxu0 %v697
        %v949 = vpop.f32.mrb[0].mxu0
        %v950 = vadd.f32 0.0, %v949
        %v951 = vpop.f32.mrb[0].mxu0
        %v952 = vpop.f32.mrb[0].mxu0
        %v953 = vadd.f32 0.0, %v952
        %v954 = vpop.f32.mrb[0].mxu0
        %955 = vmatprep.mubr.bf16.mxu0 0
        %956 = vmatmul.mubr.bf16.gmra.mrb[0].mxu0 %v700
        %v957 = vpop.f32.mrb[0].mxu0
        %v958 = vadd.f32 0.0, %v957
        %v959 = vpop.f32.mrb[0].mxu0
        %v960 = vpop.f32.mrb[0].mxu0
        %v961 = vadd.f32 0.0, %v960
        %v962 = vpop.f32.mrb[0].mxu0
        %963 = vmatprep.mubr.bf16.mxu0 0
        %964 = vmatmul.mubr.bf16.gmra.mrb[0].mxu0 %v703
        %v965 = vpop.f32.mrb[0].mxu0
        %v966 = vadd.f32 0.0, %v965
        %v967 = vpop.f32.mrb[0].mxu0
        %v968 = vpop.f32.mrb[0].mxu0
        %v969 = vadd.f32 0.0, %v968
        %v970 = vpop.f32.mrb[0].mxu0
        %971 = vmatprep.mubr.bf16.mxu0 0
        %972 = vmatmul.mubr.bf16.gmra.mrb[0].mxu0 %v706
        %v973 = vpop.f32.mrb[0].mxu0
        %v974 = vadd.f32 0.0, %v973
        %v975 = vpop.f32.mrb[0].mxu0
        %v976 = vpop.f32.mrb[0].mxu0
        %v977 = vadd.f32 0.0, %v976
        %v978 = vpop.f32.mrb[0].mxu0
        %979 = vmatprep.mubr.bf16.mxu0 0
        %980 = vmatmul.mubr.bf16.gmra.mrb[0].mxu0 %v709
        %v981 = vpop.f32.mrb[0].mxu0
        %v982 = vadd.f32 0.0, %v981
        %v983 = vpop.f32.mrb[0].mxu0
        %v984 = vpop.f32.mrb[0].mxu0
        %v985 = vadd.f32 0.0, %v984
        %v986 = vpop.f32.mrb[0].mxu0
        %987 = vmatprep.mubr.bf16.mxu0 0
        %988 = vmatmul.mubr.bf16.gmra.mrb[0].mxu0 %v712
        %v989 = vpop.f32.mrb[0].mxu0
        %v990 = vadd.f32 0.0, %v989
        %v991 = vpop.f32.mrb[0].mxu0
        %v992 = vpop.f32.mrb[0].mxu0
        %v993 = vadd.f32 0.0, %v992
        %v994 = vpop.f32.mrb[0].mxu0
        %995 = vmatprep.mubr.bf16.mxu0 0
        %996 = vmatmul.mubr.bf16.gmra.mrb[0].mxu0 %v715
        %v997 = vpop.f32.mrb[0].mxu0
        %v998 = vadd.f32 0.0, %v997
        %v999 = vpop.f32.mrb[0].mxu0
        %v1000 = vpop.f32.mrb[0].mxu0
        %v1001 = vadd.f32 0.0, %v1000
        %v1002 = vpop.f32.mrb[0].mxu0
        %1003 = vmatprep.mubr.bf16.mxu0 0
        %1004 = vmatmul.mubr.bf16.gmra.mrb[0].mxu0 %v718
        %v1005 = vpop.f32.mrb[0].mxu0
        %v1006 = vadd.f32 0.0, %v1005
        %v1007 = vpop.f32.mrb[0].mxu0
        %v1008 = vpop.f32.mrb[0].mxu0
        %v1009 = vadd.f32 0.0, %v1008
        %v1010 = vpop.f32.mrb[0].mxu0
        %1011 = vmatprep.mubr.bf16.mxu0 0
        %1012 = vmatmul.mubr.bf16.gmra.mrb[0].mxu0 %v721
        %v1013 = vpop.f32.mrb[0].mxu0
        %v1014 = vadd.f32 0.0, %v1013
        %v1015 = vpop.f32.mrb[0].mxu0
        %v1016 = vpop.f32.mrb[0].mxu0
        %v1017 = vadd.f32 0.0, %v1016
        %v1018 = vpop.f32.mrb[0].mxu0
        %1019 = vmatprep.mubr.bf16.mxu0 0
        %1020 = vmatmul.mubr.bf16.gmra.mrb[0].mxu0 %v724
        %v1021 = vpop.f32.mrb[0].mxu0
        %v1022 = vadd.f32 0.0, %v1021
        %v1023 = vpop.f32.mrb[0].mxu0
        %v1024 = vpop.f32.mrb[0].mxu0
        %v1025 = vadd.f32 0.0, %v1024
        %v1026 = vpop.f32.mrb[0].mxu0
        %1027 = vmatprep.mubr.bf16.mxu0 0
        %1028 = vmatmul.mubr.bf16.gmra.mrb[0].mxu0 %v727
        %v1029 = vpop.f32.mrb[0].mxu0
        %v1030 = vadd.f32 0.0, %v1029
        %v1031 = vpop.f32.mrb[0].mxu0
        %v1032 = vpop.f32.mrb[0].mxu0
        %v1033 = vadd.f32 0.0, %v1032
        %v1034 = vpop.f32.mrb[0].mxu0
        %1035 = vmatprep.mubr.bf16.mxu0 0
        %1036 = vmatmul.mubr.bf16.gmra.mrb[0].mxu0 %v730
        %v1037 = vpop.f32.mrb[0].mxu0
        %v1038 = vadd.f32 0.0, %v1037
        %v1039 = vpop.f32.mrb[0].mxu0
        %v1040 = vpop.f32.mrb[0].mxu0
        %v1041 = vadd.f32 0.0, %v1040
        %v1042 = vpop.f32.mrb[0].mxu0
        %1043 = vmatprep.mubr.bf16.mxu0 0
        %1044 = vmatmul.mubr.bf16.gmra.mrb[0].mxu0 %v733
        %v1045 = vpop.f32.mrb[0].mxu0
        %v1046 = vadd.f32 0.0, %v1045
        %v1047 = vpop.f32.mrb[0].mxu0
        %v1048 = vpop.f32.mrb[0].mxu0
        %v1049 = vadd.f32 0.0, %v1048
        %v1050 = vpop.f32.mrb[0].mxu0
        %1051 = vmatprep.mubr.bf16.mxu0 0
        %1052 = vmatmul.mubr.bf16.gmra.mrb[0].mxu0 %v736
        %v1053 = vpop.f32.mrb[0].mxu0
        %v1054 = vadd.f32 0.0, %v1053
        %v1055 = vpop.f32.mrb[0].mxu0
        %v1056 = vpop.f32.mrb[0].mxu0
        %v1057 = vadd.f32 0.0, %v1056
        %v1058 = vpop.f32.mrb[0].mxu0
        %1059 = vmatprep.mubr.bf16.mxu0 0
        %1060 = vmatmul.mubr.bf16.gmra.mrb[0].mxu0 %v739
        %v1061 = vpop.f32.mrb[0].mxu0
        %v1062 = vadd.f32 0.0, %v1061
        %v1063 = vpop.f32.mrb[0].mxu0
        %v1064 = vpop.f32.mrb[0].mxu0
        %v1065 = vadd.f32 0.0, %v1064
        %v1066 = vpop.f32.mrb[0].mxu0
        %1067 = vmatprep.mubr.bf16.mxu0 0
        %1068 = vmatmul.mubr.bf16.gmra.mrb[0].mxu0 %v742
        %v1069 = vpop.f32.mrb[0].mxu0
        %v1070 = vadd.f32 0.0, %v1069
        %v1071 = vpop.f32.mrb[0].mxu0
        %v1072 = vpop.f32.mrb[0].mxu0
        %v1073 = vadd.f32 0.0, %v1072
        %v1074 = vpop.f32.mrb[0].mxu0
        %1075 = vmatprep.mubr.bf16.mxu0 0
        %1076 = vmatmul.mubr.bf16.gmra.mrb[0].mxu0 %v745
        %v1077 = vpop.f32.mrb[0].mxu0
        %v1078 = vadd.f32 0.0, %v1077
        %v1079 = vpop.f32.mrb[0].mxu0
        %v1080 = vpop.f32.mrb[0].mxu0
        %v1081 = vadd.f32 0.0, %v1080
        %v1082 = vpop.f32.mrb[0].mxu0
        %1083 = vmatprep.mubr.bf16.mxu0 0
        %1084 = vmatmul.mubr.bf16.gmra.mrb[0].mxu0 %v748
        %v1085 = vpop.f32.mrb[0].mxu0
        %v1086 = vadd.f32 0.0, %v1085
        %v1087 = vpop.f32.mrb[0].mxu0
        %v1088 = vpop.f32.mrb[0].mxu0
        %v1089 = vadd.f32 0.0, %v1088
        %v1090 = vpop.f32.mrb[0].mxu0
        %1091 = vmatprep.mubr.bf16.mxu0 0
        %1092 = vmatmul.mubr.bf16.gmra.mrb[0].mxu0 %v751
        %v1093 = vpop.f32.mrb[0].mxu0
        %v1094 = vadd.f32 0.0, %v1093
        %v1095 = vpop.f32.mrb[0].mxu0
        %v1096 = vpop.f32.mrb[0].mxu0
        %v1097 = vadd.f32 0.0, %v1096
        %v1098 = vpop.f32.mrb[0].mxu0
        %1099 = vmatprep.mubr.bf16.mxu0 0
        %1100 = vmatmul.mubr.bf16.gmra.mrb[0].mxu0 %v754
        %v1101 = vpop.f32.mrb[0].mxu0
        %v1102 = vadd.f32 0.0, %v1101
        %v1103 = vpop.f32.mrb[0].mxu0
        %v1104 = vpop.f32.mrb[0].mxu0
        %v1105 = vadd.f32 0.0, %v1104
        %v1106 = vpop.f32.mrb[0].mxu0
        %1107 = vmatprep.mubr.bf16.mxu0 0
        %1108 = vmatmul.mubr.bf16.gmra.mrb[0].mxu0 %v757
        %v1109 = vpop.f32.mrb[0].mxu0
        %v1110 = vadd.f32 0.0, %v1109
        %v1111 = vpop.f32.mrb[0].mxu0
        %v1112 = vpop.f32.mrb[0].mxu0
        %v1113 = vadd.f32 0.0, %v1112
        %v1114 = vpop.f32.mrb[0].mxu0
        %1115 = vmatprep.mubr.bf16.mxu0 0
        %1116 = vmatmul.mubr.bf16.gmra.mrb[0].mxu0 %v760
        %v1117 = vpop.f32.mrb[0].mxu0
        %v1118 = vadd.f32 0.0, %v1117
        %v1119 = vpop.f32.mrb[0].mxu0
        %v1120 = vpop.f32.mrb[0].mxu0
        %v1121 = vadd.f32 0.0, %v1120
        %v1122 = vpop.f32.mrb[0].mxu0
        %1123 = vmatprep.mubr.bf16.mxu0 0
        %1124 = vmatmul.mubr.bf16.gmra.mrb[0].mxu0 %v763
        %v1125 = vpop.f32.mrb[0].mxu0
        %v1126 = vadd.f32 0.0, %v1125
        %v1127 = vpop.f32.mrb[0].mxu0
        %v1128 = vpop.f32.mrb[0].mxu0
        %v1129 = vadd.f32 0.0, %v1128
        %v1130 = vpop.f32.mrb[0].mxu0
        %1131 = vmatprep.mubr.bf16.mxu0 0
        %1132 = vmatmul.mubr.bf16.gmra.mrb[0].mxu0 %v766
        %v1133 = vpop.f32.mrb[0].mxu0
        %v1134 = vadd.f32 0.0, %v1133
        %v1135 = vpop.f32.mrb[0].mxu0
        %v1136 = vpop.f32.mrb[0].mxu0
        %v1137 = vadd.f32 0.0, %v1136
        %v1138 = vpop.f32.mrb[0].mxu0
        %1139 = vmatprep.mubr.bf16.mxu0 0
        %1140 = vmatmul.mubr.bf16.gmra.mrb[0].mxu0 %v769
        %v1141 = vpop.f32.mrb[0].mxu0
        %v1142 = vadd.f32 0.0, %v1141
        %v1143 = vpop.f32.mrb[0].mxu0
        %v1144 = vpop.f32.mrb[0].mxu0
        %v1145 = vadd.f32 0.0, %v1144
        %v1146 = vpop.f32.mrb[0].mxu0
        %1147 = vmatprep.mubr.bf16.mxu0 0
        %1148 = vmatmul.mubr.bf16.gmra.mrb[0].mxu0 %v772
        %v1149 = vpop.f32.mrb[0].mxu0
        %v1150 = vadd.f32 0.0, %v1149
        %v1151 = vpop.f32.mrb[0].mxu0
        %v1152 = vpop.f32.mrb[0].mxu0
        %v1153 = vadd.f32 0.0, %v1152
        %v1154 = vpop.f32.mrb[0].mxu0
        %1155 = vmatprep.mubr.bf16.mxu0 0
        %1156 = vmatmul.mubr.bf16.gmra.mrb[0].mxu0 %v775
        %v1157 = vpop.f32.mrb[0].mxu0
        %v1158 = vadd.f32 0.0, %v1157
        %v1159 = vpop.f32.mrb[0].mxu0
        %v1160 = vpop.f32.mrb[0].mxu0
        %v1161 = vadd.f32 0.0, %v1160
        %v1162 = vpop.f32.mrb[0].mxu0
        %1163 = vmatprep.mubr.bf16.mxu0 0
        %1164 = vmatmul.mubr.bf16.gmra.mrb[0].mxu0 %v778
        %v1165 = vpop.f32.mrb[0].mxu0
        %v1166 = vadd.f32 0.0, %v1165
        %v1167 = vpop.f32.mrb[0].mxu0
        %v1168 = vpop.f32.mrb[0].mxu0
        %v1169 = vadd.f32 0.0, %v1168
        %v1170 = vpop.f32.mrb[0].mxu0
        %1171 = vmatprep.mubr.bf16.mxu0 0
        %1172 = vmatmul.mubr.bf16.gmra.mrb[0].mxu0 %v781
        %v1173 = vpop.f32.mrb[0].mxu0
        %v1174 = vadd.f32 0.0, %v1173
        %v1175 = vpop.f32.mrb[0].mxu0
        %v1176 = vpop.f32.mrb[0].mxu0
        %v1177 = vadd.f32 0.0, %v1176
        %v1178 = vpop.f32.mrb[0].mxu0
        %1179 = vmatprep.mubr.bf16.mxu0 0
        %1180 = vmatmul.mubr.bf16.gmra.mrb[0].mxu0 %v784
        %v1181 = vpop.f32.mrb[0].mxu0
        %v1182 = vadd.f32 0.0, %v1181
        %v1183 = vpop.f32.mrb[0].mxu0
        %v1184 = vpop.f32.mrb[0].mxu0
        %v1185 = vadd.f32 0.0, %v1184
        %v1186 = vpop.f32.mrb[0].mxu0
        %1187 = vmatprep.mubr.bf16.mxu0 0
        %1188 = vmatmul.mubr.bf16.gmra.mrb[0].mxu0 %v787
        %v1189 = vpop.f32.mrb[0].mxu0
        %v1190 = vadd.f32 0.0, %v1189
        %v1191 = vpop.f32.mrb[0].mxu0
        %v1192 = vpop.f32.mrb[0].mxu0
        %v1193 = vadd.f32 0.0, %v1192
        %v1194 = vpop.f32.mrb[0].mxu0
        %1195 = vmatprep.mubr.bf16.mxu0 0
        %1196 = vmatmul.mubr.bf16.gmra.mrb[0].mxu0 %v790
        %v1197 = vpop.f32.mrb[0].mxu0
        %v1198 = vadd.f32 0.0, %v1197
        %v1199 = vpop.f32.mrb[0].mxu0
        %v1200 = vpop.f32.mrb[0].mxu0
        %v1201 = vadd.f32 0.0, %v1200
        %v1202 = vpop.f32.mrb[0].mxu0
        %1203 = vmatprep.mubr.bf16.mxu0 0
        %1204 = vmatmul.mubr.bf16.gmra.mrb[0].mxu0 %v793
        %v1205 = vpop.f32.mrb[0].mxu0
        %v1206 = vadd.f32 0.0, %v1205
        %v1207 = vpop.f32.mrb[0].mxu0
        %v1208 = vpop.f32.mrb[0].mxu0
        %v1209 = vadd.f32 0.0, %v1208
        %v1210 = vpop.f32.mrb[0].mxu0
        %1211 = vmatprep.mubr.bf16.mxu0 0
        %1212 = vmatmul.mubr.bf16.gmra.mrb[0].mxu0 %v796
        %v1213 = vpop.f32.mrb[0].mxu0
        %v1214 = vadd.f32 0.0, %v1213
        %v1215 = vpop.f32.mrb[0].mxu0
        %v1216 = vpop.f32.mrb[0].mxu0
        %v1217 = vadd.f32 0.0, %v1216
        %v1218 = vpop.f32.mrb[0].mxu0
        %1219 = vmatprep.mubr.bf16.mxu0 0
        %1220 = vmatmul.mubr.bf16.gmra.mrb[0].mxu0 %v799
        %v1221 = vpop.f32.mrb[0].mxu0
        %v1222 = vadd.f32 0.0, %v1221
        %v1223 = vpop.f32.mrb[0].mxu0
        %v1224 = vpop.f32.mrb[0].mxu0
        %v1225 = vadd.f32 0.0, %v1224
        %v1226 = vpop.f32.mrb[0].mxu0
        %1227 = vmatprep.mubr.bf16.mxu0 0
        %1228 = vmatmul.mubr.bf16.gmra.mrb[0].mxu0 %v802
        %v1229 = vpop.f32.mrb[0].mxu0
        %v1230 = vadd.f32 0.0, %v1229
        %v1231 = vpop.f32.mrb[0].mxu0
        %v1232 = vpop.f32.mrb[0].mxu0
        %v1233 = vadd.f32 0.0, %v1232
        %v1234 = vpop.f32.mrb[0].mxu0
        %1235 = vmatprep.mubr.bf16.mxu0 0
        %1236 = vmatmul.mubr.bf16.gmra.mrb[0].mxu0 %v805
        %v1237 = vpop.f32.mrb[0].mxu0
        %v1238 = vadd.f32 0.0, %v1237
        %v1239 = vpop.f32.mrb[0].mxu0
        %v1240 = vpop.f32.mrb[0].mxu0
        %v1241 = vadd.f32 0.0, %v1240
        %v1242 = vpop.f32.mrb[0].mxu0
        %1243 = vmatprep.mubr.bf16.mxu0 0
        %1244 = vmatmul.mubr.bf16.gmra.mrb[0].mxu0 %v808
        %v1245 = vpop.f32.mrb[0].mxu0
        %v1246 = vadd.f32 0.0, %v1245
        %v1247 = vpop.f32.mrb[0].mxu0
        %v1248 = vpop.f32.mrb[0].mxu0
        %v1249 = vadd.f32 0.0, %v1248
        %v1250 = vpop.f32.mrb[0].mxu0
        %1251 = vmatprep.mubr.bf16.mxu0 0
        %1252 = vmatmul.mubr.bf16.gmra.mrb[0].mxu0 %v811
        %v1253 = vpop.f32.mrb[0].mxu0
        %v1254 = vadd.f32 0.0, %v1253
        %v1255 = vpop.f32.mrb[0].mxu0
        %v1256 = vpop.f32.mrb[0].mxu0
        %v1257 = vadd.f32 0.0, %v1256
        %v1258 = vpop.f32.mrb[0].mxu0
        %1259 = vmatprep.mubr.bf16.mxu0 0
        %1260 = vmatmul.mubr.bf16.gmra.mrb[0].mxu0 %v814
        %v1261 = vpop.f32.mrb[0].mxu0
        %v1262 = vadd.f32 0.0, %v1261
        %v1263 = vpop.f32.mrb[0].mxu0
        %v1264 = vpop.f32.mrb[0].mxu0
        %v1265 = vadd.f32 0.0, %v1264
        %v1266 = vpop.f32.mrb[0].mxu0
        %1267 = vmatprep.mubr.bf16.mxu0 0
        %1268 = vmatmul.mubr.bf16.gmra.mrb[0].mxu0 %v817
        %v1269 = vpop.f32.mrb[0].mxu0
        %v1270 = vadd.f32 0.0, %v1269
        %v1271 = vpop.f32.mrb[0].mxu0
        %v1272 = vpop.f32.mrb[0].mxu0
        %v1273 = vadd.f32 0.0, %v1272
        %v1274 = vpop.f32.mrb[0].mxu0
        %1275 = vmatprep.mubr.bf16.mxu0 0
        %1276 = vmatmul.mubr.bf16.gmra.mrb[0].mxu0 %v820
        %v1277 = vpop.f32.mrb[0].mxu0
        %v1278 = vadd.f32 0.0, %v1277
        %v1279 = vpop.f32.mrb[0].mxu0
        %v1280 = vpop.f32.mrb[0].mxu0
        %v1281 = vadd.f32 0.0, %v1280
        %v1282 = vpop.f32.mrb[0].mxu0
        %1283 = vmatprep.mubr.bf16.mxu0 0
        %1284 = vmatmul.mubr.bf16.gmra.mrb[0].mxu0 %v823
        %v1285 = vpop.f32.mrb[0].mxu0
        %v1286 = vadd.f32 0.0, %v1285
        %v1287 = vpop.f32.mrb[0].mxu0
        %v1288 = vpop.f32.mrb[0].mxu0
        %v1289 = vadd.f32 0.0, %v1288
        %v1290 = vpop.f32.mrb[0].mxu0
        %1291 = vmatprep.mubr.bf16.mxu0 0
        %1292 = vmatmul.mubr.bf16.gmra.mrb[0].mxu0 %v826
        %v1293 = vpop.f32.mrb[0].mxu0
        %v1294 = vadd.f32 0.0, %v1293
        %v1295 = vpop.f32.mrb[0].mxu0
        %v1296 = vpop.f32.mrb[0].mxu0
        %v1297 = vadd.f32 0.0, %v1296
        %v1298 = vpop.f32.mrb[0].mxu0
        %1299 = vmatprep.mubr.bf16.mxu0 0
        %1300 = vmatmul.mubr.bf16.gmra.mrb[0].mxu0 %v829
        %v1301 = vpop.f32.mrb[0].mxu0
        %v1302 = vadd.f32 0.0, %v1301
        %v1303 = vpop.f32.mrb[0].mxu0
        %v1304 = vpop.f32.mrb[0].mxu0
        %v1305 = vadd.f32 0.0, %v1304
        %v1306 = vpop.f32.mrb[0].mxu0
        %1307 = vmatprep.mubr.bf16.mxu0 0
        %1308 = vmatmul.mubr.bf16.gmra.mrb[0].mxu0 %v832
        %v1309 = vpop.f32.mrb[0].mxu0
        %v1310 = vadd.f32 0.0, %v1309
        %v1311 = vpop.f32.mrb[0].mxu0
        %v1312 = vpop.f32.mrb[0].mxu0
        %v1313 = vadd.f32 0.0, %v1312
        %v1314 = vpop.f32.mrb[0].mxu0
        %1315 = vmatprep.mubr.bf16.mxu0 0
        %1316 = vmatmul.mubr.bf16.gmra.mrb[0].mxu0 %v835
        %v1317 = vpop.f32.mrb[0].mxu0
        %v1318 = vadd.f32 0.0, %v1317
        %v1319 = vpop.f32.mrb[0].mxu0
        %v1320 = vpop.f32.mrb[0].mxu0
        %v1321 = vadd.f32 0.0, %v1320
        %v1322 = vpop.f32.mrb[0].mxu0
        %1323 = vmatprep.mubr.bf16.mxu0 0
        %1324 = vmatmul.mubr.bf16.gmra.mrb[0].mxu0 %v838
        %v1325 = vpop.f32.mrb[0].mxu0
        %v1326 = vadd.f32 0.0, %v1325
        %v1327 = vpop.f32.mrb[0].mxu0
        %v1328 = vpop.f32.mrb[0].mxu0
        %v1329 = vadd.f32 0.0, %v1328
        %v1330 = vpop.f32.mrb[0].mxu0
        %1331 = vmatprep.mubr.bf16.mxu0 0
        %1332 = vmatmul.mubr.bf16.gmra.mrb[0].mxu0 %v841
        %v1333 = vpop.f32.mrb[0].mxu0
        %v1334 = vadd.f32 0.0, %v1333
        %v1335 = vpop.f32.mrb[0].mxu0
        %v1336 = vpop.f32.mrb[0].mxu0
        %v1337 = vadd.f32 0.0, %v1336
        %v1338 = vpop.f32.mrb[0].mxu0
        %1339 = vmatprep.mubr.bf16.mxu0 0
        %1340 = vmatmul.mubr.bf16.gmra.mrb[0].mxu0 %v844
        %v1341 = vpop.f32.mrb[0].mxu0
        %v1342 = vadd.f32 0.0, %v1341
        %v1343 = vpop.f32.mrb[0].mxu0
        %v1344 = vpop.f32.mrb[0].mxu0
        %v1345 = vadd.f32 0.0, %v1344
        %v1346 = vpop.f32.mrb[0].mxu0
        %1347 = vmatprep.mubr.bf16.mxu0 0
        %1348 = vmatmul.mubr.bf16.gmra.mrb[0].mxu0 %v847
        %v1349 = vpop.f32.mrb[0].mxu0
        %v1350 = vadd.f32 0.0, %v1349
        %v1351 = vpop.f32.mrb[0].mxu0
        %v1352 = vpop.f32.mrb[0].mxu0
        %v1353 = vadd.f32 0.0, %v1352
        %v1354 = vpop.f32.mrb[0].mxu0
        %1355 = vmatprep.mubr.bf16.mxu0 0
        %1356 = vmatmul.mubr.bf16.gmra.mrb[0].mxu0 %v850
        %v1357 = vpop.f32.mrb[0].mxu0
        %v1358 = vadd.f32 0.0, %v1357
        %v1359 = vpop.f32.mrb[0].mxu0
        %v1360 = vpop.f32.mrb[0].mxu0
        %v1361 = vadd.f32 0.0, %v1360
        %v1362 = vpop.f32.mrb[0].mxu0
        %1363 = vmatprep.mubr.bf16.mxu0 0
        %1364 = vmatmul.mubr.bf16.gmra.mrb[0].mxu0 %v853
        %v1365 = vpop.f32.mrb[0].mxu0
        %v1366 = vadd.f32 0.0, %v1365
        %v1367 = vpop.f32.mrb[0].mxu0
        %v1368 = vpop.f32.mrb[0].mxu0
        %v1369 = vadd.f32 0.0, %v1368
        %v1370 = vpop.f32.mrb[0].mxu0
        %1371 = vmatprep.mubr.bf16.mxu0 0
        %1372 = vmatmul.mubr.bf16.gmra.mrb[0].mxu0 %v856
        %v1373 = vpop.f32.mrb[0].mxu0
        %v1374 = vadd.f32 0.0, %v1373
        %v1375 = vpop.f32.mrb[0].mxu0
        %v1376 = vpop.f32.mrb[0].mxu0
        %v1377 = vadd.f32 0.0, %v1376
        %v1378 = vpop.f32.mrb[0].mxu0
        %1379 = vmatprep.mubr.bf16.mxu0 0
        %1380 = vmatmul.mubr.bf16.gmra.mrb[0].mxu0 %v859
        %v1381 = vpop.f32.mrb[0].mxu0
        %v1382 = vadd.f32 0.0, %v1381
        %v1383 = vpop.f32.mrb[0].mxu0
        %v1384 = vpop.f32.mrb[0].mxu0
        %v1385 = vadd.f32 0.0, %v1384
        %v1386 = vpop.f32.mrb[0].mxu0
        %1387 = vmatprep.mubr.bf16.mxu0 0
        %1388 = vmatmul.mubr.bf16.gmra.mrb[0].mxu0 %v862
        %v1389 = vpop.f32.mrb[0].mxu0
        %v1390 = vadd.f32 0.0, %v1389
        %v1391 = vpop.f32.mrb[0].mxu0
        %v1392 = vpop.f32.mrb[0].mxu0
        %v1393 = vadd.f32 0.0, %v1392
        %v1394 = vpop.f32.mrb[0].mxu0
        %1395 = vmatprep.mubr.bf16.mxu0 0
        %1396 = vmatmul.mubr.bf16.gmra.mrb[0].mxu0 %v865
        %v1397 = vpop.f32.mrb[0].mxu0
        %v1398 = vadd.f32 0.0, %v1397
        %v1399 = vpop.f32.mrb[0].mxu0
        %v1400 = vpop.f32.mrb[0].mxu0
        %v1401 = vadd.f32 0.0, %v1400
        %v1402 = vpop.f32.mrb[0].mxu0
        %1403 = vmatprep.mubr.bf16.mxu0 0
        %1404 = vmatmul.mubr.bf16.gmra.mrb[0].mxu0 %v868
        %v1405 = vpop.f32.mrb[0].mxu0
        %v1406 = vadd.f32 0.0, %v1405
        %v1407 = vpop.f32.mrb[0].mxu0
        %v1408 = vpop.f32.mrb[0].mxu0
        %v1409 = vadd.f32 0.0, %v1408
        %v1410 = vpop.f32.mrb[0].mxu0
        %1411 = vmatprep.mubr.bf16.mxu0 0
        %1412 = vmatmul.mubr.bf16.gmra.mrb[0].mxu0 %v871
        %v1413 = vpop.f32.mrb[0].mxu0
        %v1414 = vadd.f32 0.0, %v1413
        %v1415 = vpop.f32.mrb[0].mxu0
        %v1416 = vpop.f32.mrb[0].mxu0
        %v1417 = vadd.f32 0.0, %v1416
        %v1418 = vpop.f32.mrb[0].mxu0
        %1419 = vmatprep.mubr.bf16.mxu0 0
        %1420 = vmatmul.mubr.bf16.gmra.mrb[0].mxu0 %v874
        %v1421 = vpop.f32.mrb[0].mxu0
        %v1422 = vadd.f32 0.0, %v1421
        %v1423 = vpop.f32.mrb[0].mxu0
        %v1424 = vpop.f32.mrb[0].mxu0
        %v1425 = vadd.f32 0.0, %v1424
        %v1426 = vpop.f32.mrb[0].mxu0
        %1427 = vdwg.mxu0
        %v1428 = vld [vmem:[%s2] sm:$0x1]
        %v1430 = vlaneseq
        %v1431 = vshrl.u32 %v1430, 7
        %v1432 = vsub.s32 0, %v1431
        %v1433 = vrot.slane %v1428, %v1432
        %v1435 = vmul.f32 %v918, %v1433
        %v1436 = vmul.f32 %v921, %v1433
        %v1437 = vmul.f32 %v926, %v1433
        %v1438 = vmul.f32 %v929, %v1433
        %v1439 = vmul.f32 %v934, %v1433
        %v1440 = vmul.f32 %v937, %v1433
        %v1441 = vmul.f32 %v942, %v1433
        %v1442 = vmul.f32 %v945, %v1433
        %v1443 = vmul.f32 %v950, %v1433
        %v1444 = vmul.f32 %v953, %v1433
        %v1445 = vmul.f32 %v958, %v1433
        %v1446 = vmul.f32 %v961, %v1433
        %v1447 = vmul.f32 %v966, %v1433
        %v1448 = vmul.f32 %v969, %v1433
        %v1449 = vmul.f32 %v974, %v1433
        %v1450 = vmul.f32 %v977, %v1433
        %v1451 = vmul.f32 %v982, %v1433
        %v1452 = vmul.f32 %v985, %v1433
        %v1453 = vmul.f32 %v990, %v1433
        %v1454 = vmul.f32 %v993, %v1433
        %v1455 = vmul.f32 %v998, %v1433
        %v1456 = vmul.f32 %v1001, %v1433
        %v1457 = vmul.f32 %v1006, %v1433
        %v1458 = vmul.f32 %v1009, %v1433
        %v1459 = vmul.f32 %v1014, %v1433
        %v1460 = vmul.f32 %v1017, %v1433
        %v1461 = vmul.f32 %v1022, %v1433
        %v1462 = vmul.f32 %v1025, %v1433
        %v1463 = vmul.f32 %v1030, %v1433
        %v1464 = vmul.f32 %v1033, %v1433
        %v1465 = vmul.f32 %v1038, %v1433
        %v1466 = vmul.f32 %v1041, %v1433
        %v1467 = vmul.f32 %v1046, %v1433
        %v1468 = vmul.f32 %v1049, %v1433
        %v1469 = vmul.f32 %v1054, %v1433
        %v1470 = vmul.f32 %v1057, %v1433
        %v1471 = vmul.f32 %v1062, %v1433
        %v1472 = vmul.f32 %v1065, %v1433
        %v1473 = vmul.f32 %v1070, %v1433
        %v1474 = vmul.f32 %v1073, %v1433
        %v1475 = vmul.f32 %v1078, %v1433
        %v1476 = vmul.f32 %v1081, %v1433
        %v1477 = vmul.f32 %v1086, %v1433
        %v1478 = vmul.f32 %v1089, %v1433
        %v1479 = vmul.f32 %v1094, %v1433
        %v1480 = vmul.f32 %v1097, %v1433
        %v1481 = vmul.f32 %v1102, %v1433
        %v1482 = vmul.f32 %v1105, %v1433
        %v1483 = vmul.f32 %v1110, %v1433
        %v1484 = vmul.f32 %v1113, %v1433
        %v1485 = vmul.f32 %v1118, %v1433
        %v1486 = vmul.f32 %v1121, %v1433
        %v1487 = vmul.f32 %v1126, %v1433
        %v1488 = vmul.f32 %v1129, %v1433
        %v1489 = vmul.f32 %v1134, %v1433
        %v1490 = vmul.f32 %v1137, %v1433
        %v1491 = vmul.f32 %v1142, %v1433
        %v1492 = vmul.f32 %v1145, %v1433
        %v1493 = vmul.f32 %v1150, %v1433
        %v1494 = vmul.f32 %v1153, %v1433
        %v1495 = vmul.f32 %v1158, %v1433
        %v1496 = vmul.f32 %v1161, %v1433
        %v1497 = vmul.f32 %v1166, %v1433
        %v1498 = vmul.f32 %v1169, %v1433
        %v1499 = vmul.f32 %v1174, %v1433
        %v1500 = vmul.f32 %v1177, %v1433
        %v1501 = vmul.f32 %v1182, %v1433
        %v1502 = vmul.f32 %v1185, %v1433
        %v1503 = vmul.f32 %v1190, %v1433
        %v1504 = vmul.f32 %v1193, %v1433
        %v1505 = vmul.f32 %v1198, %v1433
        %v1506 = vmul.f32 %v1201, %v1433
        %v1507 = vmul.f32 %v1206, %v1433
        %v1508 = vmul.f32 %v1209, %v1433
        %v1509 = vmul.f32 %v1214, %v1433
        %v1510 = vmul.f32 %v1217, %v1433
        %v1511 = vmul.f32 %v1222, %v1433
        %v1512 = vmul.f32 %v1225, %v1433
        %v1513 = vmul.f32 %v1230, %v1433
        %v1514 = vmul.f32 %v1233, %v1433
        %v1515 = vmul.f32 %v1238, %v1433
        %v1516 = vmul.f32 %v1241, %v1433
        %v1517 = vmul.f32 %v1246, %v1433
        %v1518 = vmul.f32 %v1249, %v1433
        %v1519 = vmul.f32 %v1254, %v1433
        %v1520 = vmul.f32 %v1257, %v1433
        %v1521 = vmul.f32 %v1262, %v1433
        %v1522 = vmul.f32 %v1265, %v1433
        %v1523 = vmul.f32 %v1270, %v1433
        %v1524 = vmul.f32 %v1273, %v1433
        %v1525 = vmul.f32 %v1278, %v1433
        %v1526 = vmul.f32 %v1281, %v1433
        %v1527 = vmul.f32 %v1286, %v1433
        %v1528 = vmul.f32 %v1289, %v1433
        %v1529 = vmul.f32 %v1294, %v1433
        %v1530 = vmul.f32 %v1297, %v1433
        %v1531 = vmul.f32 %v1302, %v1433
        %v1532 = vmul.f32 %v1305, %v1433
        %v1533 = vmul.f32 %v1310, %v1433
        %v1534 = vmul.f32 %v1313, %v1433
        %v1535 = vmul.f32 %v1318, %v1433
        %v1536 = vmul.f32 %v1321, %v1433
        %v1537 = vmul.f32 %v1326, %v1433
        %v1538 = vmul.f32 %v1329, %v1433
        %v1539 = vmul.f32 %v1334, %v1433
        %v1540 = vmul.f32 %v1337, %v1433
        %v1541 = vmul.f32 %v1342, %v1433
        %v1542 = vmul.f32 %v1345, %v1433
        %v1543 = vmul.f32 %v1350, %v1433
        %v1544 = vmul.f32 %v1353, %v1433
        %v1545 = vmul.f32 %v1358, %v1433
        %v1546 = vmul.f32 %v1361, %v1433
        %v1547 = vmul.f32 %v1366, %v1433
        %v1548 = vmul.f32 %v1369, %v1433
        %v1549 = vmul.f32 %v1374, %v1433
        %v1550 = vmul.f32 %v1377, %v1433
        %v1551 = vmul.f32 %v1382, %v1433
        %v1552 = vmul.f32 %v1385, %v1433
        %v1553 = vmul.f32 %v1390, %v1433
        %v1554 = vmul.f32 %v1393, %v1433
        %v1555 = vmul.f32 %v1398, %v1433
        %v1556 = vmul.f32 %v1401, %v1433
        %v1557 = vmul.f32 %v1406, %v1433
        %v1558 = vmul.f32 %v1409, %v1433
        %v1559 = vmul.f32 %v1414, %v1433
        %v1560 = vmul.f32 %v1417, %v1433
        %v1561 = vmul.f32 %v1422, %v1433
        %v1562 = vmul.f32 %v1425, %v1433
        %v1563 = vld [vmem:[%s3] sm:$0x1]
        %v1565 = vlaneseq
        %v1566 = vshrl.u32 %v1565, 7
        %v1567 = vsub.s32 0, %v1566
        %v1568 = vrot.slane %v1563, %v1567
        %v1570 = vadd.f32 %v1435, %v1568
        %v1571 = vadd.f32 %v1436, %v1568
        %v1572 = vadd.f32 %v1437, %v1568
        %v1573 = vadd.f32 %v1438, %v1568
        %v1574 = vadd.f32 %v1439, %v1568
        %v1575 = vadd.f32 %v1440, %v1568
        %v1576 = vadd.f32 %v1441, %v1568
        %v1577 = vadd.f32 %v1442, %v1568
        %v1578 = vadd.f32 %v1443, %v1568
        %v1579 = vadd.f32 %v1444, %v1568
        %v1580 = vadd.f32 %v1445, %v1568
        %v1581 = vadd.f32 %v1446, %v1568
        %v1582 = vadd.f32 %v1447, %v1568
        %v1583 = vadd.f32 %v1448, %v1568
        %v1584 = vadd.f32 %v1449, %v1568
        %v1585 = vadd.f32 %v1450, %v1568
        %v1586 = vadd.f32 %v1451, %v1568
        %v1587 = vadd.f32 %v1452, %v1568
        %v1588 = vadd.f32 %v1453, %v1568
        %v1589 = vadd.f32 %v1454, %v1568
        %v1590 = vadd.f32 %v1455, %v1568
        %v1591 = vadd.f32 %v1456, %v1568
        %v1592 = vadd.f32 %v1457, %v1568
        %v1593 = vadd.f32 %v1458, %v1568
        %v1594 = vadd.f32 %v1459, %v1568
        %v1595 = vadd.f32 %v1460, %v1568
        %v1596 = vadd.f32 %v1461, %v1568
        %v1597 = vadd.f32 %v1462, %v1568
        %v1598 = vadd.f32 %v1463, %v1568
        %v1599 = vadd.f32 %v1464, %v1568
        %v1600 = vadd.f32 %v1465, %v1568
        %v1601 = vadd.f32 %v1466, %v1568
        %v1602 = vadd.f32 %v1467, %v1568
        %v1603 = vadd.f32 %v1468, %v1568
        %v1604 = vadd.f32 %v1469, %v1568
        %v1605 = vadd.f32 %v1470, %v1568
        %v1606 = vadd.f32 %v1471, %v1568
        %v1607 = vadd.f32 %v1472, %v1568
        %v1608 = vadd.f32 %v1473, %v1568
        %v1609 = vadd.f32 %v1474, %v1568
        %v1610 = vadd.f32 %v1475, %v1568
        %v1611 = vadd.f32 %v1476, %v1568
        %v1612 = vadd.f32 %v1477, %v1568
        %v1613 = vadd.f32 %v1478, %v1568
        %v1614 = vadd.f32 %v1479, %v1568
        %v1615 = vadd.f32 %v1480, %v1568
        %v1616 = vadd.f32 %v1481, %v1568
        %v1617 = vadd.f32 %v1482, %v1568
        %v1618 = vadd.f32 %v1483, %v1568
        %v1619 = vadd.f32 %v1484, %v1568
        %v1620 = vadd.f32 %v1485, %v1568
        %v1621 = vadd.f32 %v1486, %v1568
        %v1622 = vadd.f32 %v1487, %v1568
        %v1623 = vadd.f32 %v1488, %v1568
        %v1624 = vadd.f32 %v1489, %v1568
        %v1625 = vadd.f32 %v1490, %v1568
        %v1626 = vadd.f32 %v1491, %v1568
        %v1627 = vadd.f32 %v1492, %v1568
        %v1628 = vadd.f32 %v1493, %v1568
        %v1629 = vadd.f32 %v1494, %v1568
        %v1630 = vadd.f32 %v1495, %v1568
        %v1631 = vadd.f32 %v1496, %v1568
        %v1632 = vadd.f32 %v1497, %v1568
        %v1633 = vadd.f32 %v1498, %v1568
        %v1634 = vadd.f32 %v1499, %v1568
        %v1635 = vadd.f32 %v1500, %v1568
        %v1636 = vadd.f32 %v1501, %v1568
        %v1637 = vadd.f32 %v1502, %v1568
        %v1638 = vadd.f32 %v1503, %v1568
        %v1639 = vadd.f32 %v1504, %v1568
        %v1640 = vadd.f32 %v1505, %v1568
        %v1641 = vadd.f32 %v1506, %v1568
        %v1642 = vadd.f32 %v1507, %v1568
        %v1643 = vadd.f32 %v1508, %v1568
        %v1644 = vadd.f32 %v1509, %v1568
        %v1645 = vadd.f32 %v1510, %v1568
        %v1646 = vadd.f32 %v1511, %v1568
        %v1647 = vadd.f32 %v1512, %v1568
        %v1648 = vadd.f32 %v1513, %v1568
        %v1649 = vadd.f32 %v1514, %v1568
        %v1650 = vadd.f32 %v1515, %v1568
        %v1651 = vadd.f32 %v1516, %v1568
        %v1652 = vadd.f32 %v1517, %v1568
        %v1653 = vadd.f32 %v1518, %v1568
        %v1654 = vadd.f32 %v1519, %v1568
        %v1655 = vadd.f32 %v1520, %v1568
        %v1656 = vadd.f32 %v1521, %v1568
        %v1657 = vadd.f32 %v1522, %v1568
        %v1658 = vadd.f32 %v1523, %v1568
        %v1659 = vadd.f32 %v1524, %v1568
        %v1660 = vadd.f32 %v1525, %v1568
        %v1661 = vadd.f32 %v1526, %v1568
        %v1662 = vadd.f32 %v1527, %v1568
        %v1663 = vadd.f32 %v1528, %v1568
        %v1664 = vadd.f32 %v1529, %v1568
        %v1665 = vadd.f32 %v1530, %v1568
        %v1666 = vadd.f32 %v1531, %v1568
        %v1667 = vadd.f32 %v1532, %v1568
        %v1668 = vadd.f32 %v1533, %v1568
        %v1669 = vadd.f32 %v1534, %v1568
        %v1670 = vadd.f32 %v1535, %v1568
        %v1671 = vadd.f32 %v1536, %v1568
        %v1672 = vadd.f32 %v1537, %v1568
        %v1673 = vadd.f32 %v1538, %v1568
        %v1674 = vadd.f32 %v1539, %v1568
        %v1675 = vadd.f32 %v1540, %v1568
        %v1676 = vadd.f32 %v1541, %v1568
        %v1677 = vadd.f32 %v1542, %v1568
        %v1678 = vadd.f32 %v1543, %v1568
        %v1679 = vadd.f32 %v1544, %v1568
        %v1680 = vadd.f32 %v1545, %v1568
        %v1681 = vadd.f32 %v1546, %v1568
        %v1682 = vadd.f32 %v1547, %v1568
        %v1683 = vadd.f32 %v1548, %v1568
        %v1684 = vadd.f32 %v1549, %v1568
        %v1685 = vadd.f32 %v1550, %v1568
        %v1686 = vadd.f32 %v1551, %v1568
        %v1687 = vadd.f32 %v1552, %v1568
        %v1688 = vadd.f32 %v1553, %v1568
        %v1689 = vadd.f32 %v1554, %v1568
        %v1690 = vadd.f32 %v1555, %v1568
        %v1691 = vadd.f32 %v1556, %v1568
        %v1692 = vadd.f32 %v1557, %v1568
        %v1693 = vadd.f32 %v1558, %v1568
        %v1694 = vadd.f32 %v1559, %v1568
        %v1695 = vadd.f32 %v1560, %v1568
        %v1696 = vadd.f32 %v1561, %v1568
        %v1697 = vadd.f32 %v1562, %v1568
        %v1698 = vmax.f32 %v1570, 0.0
        %v1699 = vmax.f32 %v1571, 0.0
        %v1700 = vmax.f32 %v1572, 0.0
        %v1701 = vmax.f32 %v1573, 0.0
        %v1702 = vmax.f32 %v1574, 0.0
        %v1703 = vmax.f32 %v1575, 0.0
        %v1704 = vmax.f32 %v1576, 0.0
        %v1705 = vmax.f32 %v1577, 0.0
        %v1706 = vmax.f32 %v1578, 0.0
        %v1707 = vmax.f32 %v1579, 0.0
        %v1708 = vmax.f32 %v1580, 0.0
        %v1709 = vmax.f32 %v1581, 0.0
        %v1710 = vmax.f32 %v1582, 0.0
        %v1711 = vmax.f32 %v1583, 0.0
        %v1712 = vmax.f32 %v1584, 0.0
        %v1713 = vmax.f32 %v1585, 0.0
        %v1714 = vmax.f32 %v1586, 0.0
        %v1715 = vmax.f32 %v1587, 0.0
        %v1716 = vmax.f32 %v1588, 0.0
        %v1717 = vmax.f32 %v1589, 0.0
        %v1718 = vmax.f32 %v1590, 0.0
        %v1719 = vmax.f32 %v1591, 0.0
        %v1720 = vmax.f32 %v1592, 0.0
        %v1721 = vmax.f32 %v1593, 0.0
        %v1722 = vmax.f32 %v1594, 0.0
        %v1723 = vmax.f32 %v1595, 0.0
        %v1724 = vmax.f32 %v1596, 0.0
        %v1725 = vmax.f32 %v1597, 0.0
        %v1726 = vmax.f32 %v1598, 0.0
        %v1727 = vmax.f32 %v1599, 0.0
        %v1728 = vmax.f32 %v1600, 0.0
        %v1729 = vmax.f32 %v1601, 0.0
        %v1730 = vmax.f32 %v1602, 0.0
        %v1731 = vmax.f32 %v1603, 0.0
        %v1732 = vmax.f32 %v1604, 0.0
        %v1733 = vmax.f32 %v1605, 0.0
        %v1734 = vmax.f32 %v1606, 0.0
        %v1735 = vmax.f32 %v1607, 0.0
        %v1736 = vmax.f32 %v1608, 0.0
        %v1737 = vmax.f32 %v1609, 0.0
        %v1738 = vmax.f32 %v1610, 0.0
        %v1739 = vmax.f32 %v1611, 0.0
        %v1740 = vmax.f32 %v1612, 0.0
        %v1741 = vmax.f32 %v1613, 0.0
        %v1742 = vmax.f32 %v1614, 0.0
        %v1743 = vmax.f32 %v1615, 0.0
        %v1744 = vmax.f32 %v1616, 0.0
        %v1745 = vmax.f32 %v1617, 0.0
        %v1746 = vmax.f32 %v1618, 0.0
        %v1747 = vmax.f32 %v1619, 0.0
        %v1748 = vmax.f32 %v1620, 0.0
        %v1749 = vmax.f32 %v1621, 0.0
        %v1750 = vmax.f32 %v1622, 0.0
        %v1751 = vmax.f32 %v1623, 0.0
        %v1752 = vmax.f32 %v1624, 0.0
        %v1753 = vmax.f32 %v1625, 0.0
        %v1754 = vmax.f32 %v1626, 0.0
        %v1755 = vmax.f32 %v1627, 0.0
        %v1756 = vmax.f32 %v1628, 0.0
        %v1757 = vmax.f32 %v1629, 0.0
        %v1758 = vmax.f32 %v1630, 0.0
        %v1759 = vmax.f32 %v1631, 0.0
        %v1760 = vmax.f32 %v1632, 0.0
        %v1761 = vmax.f32 %v1633, 0.0
        %v1762 = vmax.f32 %v1634, 0.0
        %v1763 = vmax.f32 %v1635, 0.0
        %v1764 = vmax.f32 %v1636, 0.0
        %v1765 = vmax.f32 %v1637, 0.0
        %v1766 = vmax.f32 %v1638, 0.0
        %v1767 = vmax.f32 %v1639, 0.0
        %v1768 = vmax.f32 %v1640, 0.0
        %v1769 = vmax.f32 %v1641, 0.0
        %v1770 = vmax.f32 %v1642, 0.0
        %v1771 = vmax.f32 %v1643, 0.0
        %v1772 = vmax.f32 %v1644, 0.0
        %v1773 = vmax.f32 %v1645, 0.0
        %v1774 = vmax.f32 %v1646, 0.0
        %v1775 = vmax.f32 %v1647, 0.0
        %v1776 = vmax.f32 %v1648, 0.0
        %v1777 = vmax.f32 %v1649, 0.0
        %v1778 = vmax.f32 %v1650, 0.0
        %v1779 = vmax.f32 %v1651, 0.0
        %v1780 = vmax.f32 %v1652, 0.0
        %v1781 = vmax.f32 %v1653, 0.0
        %v1782 = vmax.f32 %v1654, 0.0
        %v1783 = vmax.f32 %v1655, 0.0
        %v1784 = vmax.f32 %v1656, 0.0
        %v1785 = vmax.f32 %v1657, 0.0
        %v1786 = vmax.f32 %v1658, 0.0
        %v1787 = vmax.f32 %v1659, 0.0
        %v1788 = vmax.f32 %v1660, 0.0
        %v1789 = vmax.f32 %v1661, 0.0
        %v1790 = vmax.f32 %v1662, 0.0
        %v1791 = vmax.f32 %v1663, 0.0
        %v1792 = vmax.f32 %v1664, 0.0
        %v1793 = vmax.f32 %v1665, 0.0
        %v1794 = vmax.f32 %v1666, 0.0
        %v1795 = vmax.f32 %v1667, 0.0
        %v1796 = vmax.f32 %v1668, 0.0
        %v1797 = vmax.f32 %v1669, 0.0
        %v1798 = vmax.f32 %v1670, 0.0
        %v1799 = vmax.f32 %v1671, 0.0
        %v1800 = vmax.f32 %v1672, 0.0
        %v1801 = vmax.f32 %v1673, 0.0
        %v1802 = vmax.f32 %v1674, 0.0
        %v1803 = vmax.f32 %v1675, 0.0
        %v1804 = vmax.f32 %v1676, 0.0
        %v1805 = vmax.f32 %v1677, 0.0
        %v1806 = vmax.f32 %v1678, 0.0
        %v1807 = vmax.f32 %v1679, 0.0
        %v1808 = vmax.f32 %v1680, 0.0
        %v1809 = vmax.f32 %v1681, 0.0
        %v1810 = vmax.f32 %v1682, 0.0
        %v1811 = vmax.f32 %v1683, 0.0
        %v1812 = vmax.f32 %v1684, 0.0
        %v1813 = vmax.f32 %v1685, 0.0
        %v1814 = vmax.f32 %v1686, 0.0
        %v1815 = vmax.f32 %v1687, 0.0
        %v1816 = vmax.f32 %v1688, 0.0
        %v1817 = vmax.f32 %v1689, 0.0
        %v1818 = vmax.f32 %v1690, 0.0
        %v1819 = vmax.f32 %v1691, 0.0
        %v1820 = vmax.f32 %v1692, 0.0
        %v1821 = vmax.f32 %v1693, 0.0
        %v1822 = vmax.f32 %v1694, 0.0
        %v1823 = vmax.f32 %v1695, 0.0
        %v1824 = vmax.f32 %v1696, 0.0
        %v1825 = vmax.f32 %v1697, 0.0
        %v1826 = vpack.c.bf16 %v1699, %v1698
        %v1827 = vpack.c.bf16 %v1701, %v1700
        %v1828 = vpack.c.bf16 %v1703, %v1702
        %v1829 = vpack.c.bf16 %v1705, %v1704
        %v1830 = vpack.c.bf16 %v1707, %v1706
        %v1831 = vpack.c.bf16 %v1709, %v1708
        %v1832 = vpack.c.bf16 %v1711, %v1710
        %v1833 = vpack.c.bf16 %v1713, %v1712
        %v1834 = vpack.c.bf16 %v1715, %v1714
        %v1835 = vpack.c.bf16 %v1717, %v1716
        %v1836 = vpack.c.bf16 %v1719, %v1718
        %v1837 = vpack.c.bf16 %v1721, %v1720
        %v1838 = vpack.c.bf16 %v1723, %v1722
        %v1839 = vpack.c.bf16 %v1725, %v1724
        %v1840 = vpack.c.bf16 %v1727, %v1726
        %v1841 = vpack.c.bf16 %v1729, %v1728
        %v1842 = vpack.c.bf16 %v1731, %v1730
        %v1843 = vpack.c.bf16 %v1733, %v1732
        %v1844 = vpack.c.bf16 %v1735, %v1734
        %v1845 = vpack.c.bf16 %v1737, %v1736
        %v1846 = vpack.c.bf16 %v1739, %v1738
        %v1847 = vpack.c.bf16 %v1741, %v1740
        %v1848 = vpack.c.bf16 %v1743, %v1742
        %v1849 = vpack.c.bf16 %v1745, %v1744
        %v1850 = vpack.c.bf16 %v1747, %v1746
        %v1851 = vpack.c.bf16 %v1749, %v1748
        %v1852 = vpack.c.bf16 %v1751, %v1750
        %v1853 = vpack.c.bf16 %v1753, %v1752
        %v1854 = vpack.c.bf16 %v1755, %v1754
        %v1855 = vpack.c.bf16 %v1757, %v1756
        %v1856 = vpack.c.bf16 %v1759, %v1758
        %v1857 = vpack.c.bf16 %v1761, %v1760
        %v1858 = vpack.c.bf16 %v1763, %v1762
        %v1859 = vpack.c.bf16 %v1765, %v1764
        %v1860 = vpack.c.bf16 %v1767, %v1766
        %v1861 = vpack.c.bf16 %v1769, %v1768
        %v1862 = vpack.c.bf16 %v1771, %v1770
        %v1863 = vpack.c.bf16 %v1773, %v1772
        %v1864 = vpack.c.bf16 %v1775, %v1774
        %v1865 = vpack.c.bf16 %v1777, %v1776
        %v1866 = vpack.c.bf16 %v1779, %v1778
        %v1867 = vpack.c.bf16 %v1781, %v1780
        %v1868 = vpack.c.bf16 %v1783, %v1782
        %v1869 = vpack.c.bf16 %v1785, %v1784
        %v1870 = vpack.c.bf16 %v1787, %v1786
        %v1871 = vpack.c.bf16 %v1789, %v1788
        %v1872 = vpack.c.bf16 %v1791, %v1790
        %v1873 = vpack.c.bf16 %v1793, %v1792
        %v1874 = vpack.c.bf16 %v1795, %v1794
        %v1875 = vpack.c.bf16 %v1797, %v1796
        %v1876 = vpack.c.bf16 %v1799, %v1798
        %v1877 = vpack.c.bf16 %v1801, %v1800
        %v1878 = vpack.c.bf16 %v1803, %v1802
        %v1879 = vpack.c.bf16 %v1805, %v1804
        %v1880 = vpack.c.bf16 %v1807, %v1806
        %v1881 = vpack.c.bf16 %v1809, %v1808
        %v1882 = vpack.c.bf16 %v1811, %v1810
        %v1883 = vpack.c.bf16 %v1813, %v1812
        %v1884 = vpack.c.bf16 %v1815, %v1814
        %v1885 = vpack.c.bf16 %v1817, %v1816
        %v1886 = vpack.c.bf16 %v1819, %v1818
        %v1887 = vpack.c.bf16 %v1821, %v1820
        %v1888 = vpack.c.bf16 %v1823, %v1822
        %v1889 = vpack.c.bf16 %v1825, %v1824
        %v1954 = vunpack.c.l.b16 %v1826
        %v1955 = vunpack.c.h.b16 %v1826
        %v1956 = vunpack.c.l.b16 %v1827
        %v1957 = vunpack.c.h.b16 %v1827
        %v1958 = vunpack.c.l.b16 %v1828
        %v1959 = vunpack.c.h.b16 %v1828
        %v1960 = vunpack.c.l.b16 %v1829
        %v1961 = vunpack.c.h.b16 %v1829
        %v1962 = vunpack.c.l.b16 %v1830
        %v1963 = vunpack.c.h.b16 %v1830
        %v1964 = vunpack.c.l.b16 %v1831
        %v1965 = vunpack.c.h.b16 %v1831
        %v1966 = vunpack.c.l.b16 %v1832
        %v1967 = vunpack.c.h.b16 %v1832
        %v1968 = vunpack.c.l.b16 %v1833
        %v1969 = vunpack.c.h.b16 %v1833
        %v1970 = vunpack.c.l.b16 %v1834
        %v1971 = vunpack.c.h.b16 %v1834
        %v1972 = vunpack.c.l.b16 %v1835
        %v1973 = vunpack.c.h.b16 %v1835
        %v1974 = vunpack.c.l.b16 %v1836
        %v1975 = vunpack.c.h.b16 %v1836
        %v1976 = vunpack.c.l.b16 %v1837
        %v1977 = vunpack.c.h.b16 %v1837
        %v1978 = vunpack.c.l.b16 %v1838
        %v1979 = vunpack.c.h.b16 %v1838
        %v1980 = vunpack.c.l.b16 %v1839
        %v1981 = vunpack.c.h.b16 %v1839
        %v1982 = vunpack.c.l.b16 %v1840
        %v1983 = vunpack.c.h.b16 %v1840
        %v1984 = vunpack.c.l.b16 %v1841
        %v1985 = vunpack.c.h.b16 %v1841
        %v1986 = vunpack.c.l.b16 %v1842
        %v1987 = vunpack.c.h.b16 %v1842
        %v1988 = vunpack.c.l.b16 %v1843
        %v1989 = vunpack.c.h.b16 %v1843
        %v1990 = vunpack.c.l.b16 %v1844
        %v1991 = vunpack.c.h.b16 %v1844
        %v1992 = vunpack.c.l.b16 %v1845
        %v1993 = vunpack.c.h.b16 %v1845
        %v1994 = vunpack.c.l.b16 %v1846
        %v1995 = vunpack.c.h.b16 %v1846
        %v1996 = vunpack.c.l.b16 %v1847
        %v1997 = vunpack.c.h.b16 %v1847
        %v1998 = vunpack.c.l.b16 %v1848
        %v1999 = vunpack.c.h.b16 %v1848
        %v2000 = vunpack.c.l.b16 %v1849
        %v2001 = vunpack.c.h.b16 %v1849
        %v2002 = vunpack.c.l.b16 %v1850
        %v2003 = vunpack.c.h.b16 %v1850
        %v2004 = vunpack.c.l.b16 %v1851
        %v2005 = vunpack.c.h.b16 %v1851
        %v2006 = vunpack.c.l.b16 %v1852
        %v2007 = vunpack.c.h.b16 %v1852
        %v2008 = vunpack.c.l.b16 %v1853
        %v2009 = vunpack.c.h.b16 %v1853
        %v2010 = vunpack.c.l.b16 %v1854
        %v2011 = vunpack.c.h.b16 %v1854
        %v2012 = vunpack.c.l.b16 %v1855
        %v2013 = vunpack.c.h.b16 %v1855
        %v2014 = vunpack.c.l.b16 %v1856
        %v2015 = vunpack.c.h.b16 %v1856
        %v2016 = vunpack.c.l.b16 %v1857
        %v2017 = vunpack.c.h.b16 %v1857
        %v2018 = vunpack.c.l.b16 %v1858
        %v2019 = vunpack.c.h.b16 %v1858
        %v2020 = vunpack.c.l.b16 %v1859
        %v2021 = vunpack.c.h.b16 %v1859
        %v2022 = vunpack.c.l.b16 %v1860
        %v2023 = vunpack.c.h.b16 %v1860
        %v2024 = vunpack.c.l.b16 %v1861
        %v2025 = vunpack.c.h.b16 %v1861
        %v2026 = vunpack.c.l.b16 %v1862
        %v2027 = vunpack.c.h.b16 %v1862
        %v2028 = vunpack.c.l.b16 %v1863
        %v2029 = vunpack.c.h.b16 %v1863
        %v2030 = vunpack.c.l.b16 %v1864
        %v2031 = vunpack.c.h.b16 %v1864
        %v2032 = vunpack.c.l.b16 %v1865
        %v2033 = vunpack.c.h.b16 %v1865
        %v2034 = vunpack.c.l.b16 %v1866
        %v2035 = vunpack.c.h.b16 %v1866
        %v2036 = vunpack.c.l.b16 %v1867
        %v2037 = vunpack.c.h.b16 %v1867
        %v2038 = vunpack.c.l.b16 %v1868
        %v2039 = vunpack.c.h.b16 %v1868
        %v2040 = vunpack.c.l.b16 %v1869
        %v2041 = vunpack.c.h.b16 %v1869
        %v2042 = vunpack.c.l.b16 %v1870
        %v2043 = vunpack.c.h.b16 %v1870
        %v2044 = vunpack.c.l.b16 %v1871
        %v2045 = vunpack.c.h.b16 %v1871
        %v2046 = vunpack.c.l.b16 %v1872
        %v2047 = vunpack.c.h.b16 %v1872
        %v2048 = vunpack.c.l.b16 %v1873
        %v2049 = vunpack.c.h.b16 %v1873
        %v2050 = vunpack.c.l.b16 %v1874
        %v2051 = vunpack.c.h.b16 %v1874
        %v2052 = vunpack.c.l.b16 %v1875
        %v2053 = vunpack.c.h.b16 %v1875
        %v2054 = vunpack.c.l.b16 %v1876
        %v2055 = vunpack.c.h.b16 %v1876
        %v2056 = vunpack.c.l.b16 %v1877
        %v2057 = vunpack.c.h.b16 %v1877
        %v2058 = vunpack.c.l.b16 %v1878
        %v2059 = vunpack.c.h.b16 %v1878
        %v2060 = vunpack.c.l.b16 %v1879
        %v2061 = vunpack.c.h.b16 %v1879
        %v2062 = vunpack.c.l.b16 %v1880
        %v2063 = vunpack.c.h.b16 %v1880
        %v2064 = vunpack.c.l.b16 %v1881
        %v2065 = vunpack.c.h.b16 %v1881
        %v2066 = vunpack.c.l.b16 %v1882
        %v2067 = vunpack.c.h.b16 %v1882
        %v2068 = vunpack.c.l.b16 %v1883
        %v2069 = vunpack.c.h.b16 %v1883
        %v2070 = vunpack.c.l.b16 %v1884
        %v2071 = vunpack.c.h.b16 %v1884
        %v2072 = vunpack.c.l.b16 %v1885
        %v2073 = vunpack.c.h.b16 %v1885
        %v2074 = vunpack.c.l.b16 %v1886
        %v2075 = vunpack.c.h.b16 %v1886
        %v2076 = vunpack.c.l.b16 %v1887
        %v2077 = vunpack.c.h.b16 %v1887
        %v2078 = vunpack.c.l.b16 %v1888
        %v2079 = vunpack.c.h.b16 %v1888
        %v2080 = vunpack.c.l.b16 %v1889
        %v2081 = vunpack.c.h.b16 %v1889
        %v2082 = vpack.c.b16 %v1954, %v1954
        %v2083 = vpack.c.b16 %v1955, %v1955
        %v2084 = vpack.c.b16 %v1956, %v1956
        %v2085 = vpack.c.b16 %v1957, %v1957
        %v2086 = vpack.c.b16 %v1958, %v1958
        %v2087 = vpack.c.b16 %v1959, %v1959
        %v2088 = vpack.c.b16 %v1960, %v1960
        %v2089 = vpack.c.b16 %v1961, %v1961
        %v2090 = vpack.c.b16 %v1962, %v1962
        %v2091 = vpack.c.b16 %v1963, %v1963
        %v2092 = vpack.c.b16 %v1964, %v1964
        %v2093 = vpack.c.b16 %v1965, %v1965
        %v2094 = vpack.c.b16 %v1966, %v1966
        %v2095 = vpack.c.b16 %v1967, %v1967
        %v2096 = vpack.c.b16 %v1968, %v1968
        %v2097 = vpack.c.b16 %v1969, %v1969
        %v2098 = vpack.c.b16 %v1970, %v1970
        %v2099 = vpack.c.b16 %v1971, %v1971
        %v2100 = vpack.c.b16 %v1972, %v1972
        %v2101 = vpack.c.b16 %v1973, %v1973
        %v2102 = vpack.c.b16 %v1974, %v1974
        %v2103 = vpack.c.b16 %v1975, %v1975
        %v2104 = vpack.c.b16 %v1976, %v1976
        %v2105 = vpack.c.b16 %v1977, %v1977
        %v2106 = vpack.c.b16 %v1978, %v1978
        %v2107 = vpack.c.b16 %v1979, %v1979
        %v2108 = vpack.c.b16 %v1980, %v1980
        %v2109 = vpack.c.b16 %v1981, %v1981
        %v2110 = vpack.c.b16 %v1982, %v1982
        %v2111 = vpack.c.b16 %v1983, %v1983
        %v2112 = vpack.c.b16 %v1984, %v1984
        %v2113 = vpack.c.b16 %v1985, %v1985
        %v2114 = vpack.c.b16 %v1986, %v1986
        %v2115 = vpack.c.b16 %v1987, %v1987
        %v2116 = vpack.c.b16 %v1988, %v1988
        %v2117 = vpack.c.b16 %v1989, %v1989
        %v2118 = vpack.c.b16 %v1990, %v1990
        %v2119 = vpack.c.b16 %v1991, %v1991
        %v2120 = vpack.c.b16 %v1992, %v1992
        %v2121 = vpack.c.b16 %v1993, %v1993
        %v2122 = vpack.c.b16 %v1994, %v1994
        %v2123 = vpack.c.b16 %v1995, %v1995
        %v2124 = vpack.c.b16 %v1996, %v1996
        %v2125 = vpack.c.b16 %v1997, %v1997
        %v2126 = vpack.c.b16 %v1998, %v1998
        %v2127 = vpack.c.b16 %v1999, %v1999
        %v2128 = vpack.c.b16 %v2000, %v2000
        %v2129 = vpack.c.b16 %v2001, %v2001
        %v2130 = vpack.c.b16 %v2002, %v2002
        %v2131 = vpack.c.b16 %v2003, %v2003
        %v2132 = vpack.c.b16 %v2004, %v2004
        %v2133 = vpack.c.b16 %v2005, %v2005
        %v2134 = vpack.c.b16 %v2006, %v2006
        %v2135 = vpack.c.b16 %v2007, %v2007
        %v2136 = vpack.c.b16 %v2008, %v2008
        %v2137 = vpack.c.b16 %v2009, %v2009
        %v2138 = vpack.c.b16 %v2010, %v2010
        %v2139 = vpack.c.b16 %v2011, %v2011
        %v2140 = vpack.c.b16 %v2012, %v2012
        %v2141 = vpack.c.b16 %v2013, %v2013
        %v2142 = vpack.c.b16 %v2014, %v2014
        %v2143 = vpack.c.b16 %v2015, %v2015
        %v2144 = vpack.c.b16 %v2016, %v2016
        %v2145 = vpack.c.b16 %v2017, %v2017
        %v2146 = vpack.c.b16 %v2018, %v2018
        %v2147 = vpack.c.b16 %v2019, %v2019
        %v2148 = vpack.c.b16 %v2020, %v2020
        %v2149 = vpack.c.b16 %v2021, %v2021
        %v2150 = vpack.c.b16 %v2022, %v2022
        %v2151 = vpack.c.b16 %v2023, %v2023
        %v2152 = vpack.c.b16 %v2024, %v2024
        %v2153 = vpack.c.b16 %v2025, %v2025
        %v2154 = vpack.c.b16 %v2026, %v2026
        %v2155 = vpack.c.b16 %v2027, %v2027
        %v2156 = vpack.c.b16 %v2028, %v2028
        %v2157 = vpack.c.b16 %v2029, %v2029
        %v2158 = vpack.c.b16 %v2030, %v2030
        %v2159 = vpack.c.b16 %v2031, %v2031
        %v2160 = vpack.c.b16 %v2032, %v2032
        %v2161 = vpack.c.b16 %v2033, %v2033
        %v2162 = vpack.c.b16 %v2034, %v2034
        %v2163 = vpack.c.b16 %v2035, %v2035
        %v2164 = vpack.c.b16 %v2036, %v2036
        %v2165 = vpack.c.b16 %v2037, %v2037
        %v2166 = vpack.c.b16 %v2038, %v2038
        %v2167 = vpack.c.b16 %v2039, %v2039
        %v2168 = vpack.c.b16 %v2040, %v2040
        %v2169 = vpack.c.b16 %v2041, %v2041
        %v2170 = vpack.c.b16 %v2042, %v2042
        %v2171 = vpack.c.b16 %v2043, %v2043
        %v2172 = vpack.c.b16 %v2044, %v2044
        %v2173 = vpack.c.b16 %v2045, %v2045
        %v2174 = vpack.c.b16 %v2046, %v2046
        %v2175 = vpack.c.b16 %v2047, %v2047
        %v2176 = vpack.c.b16 %v2048, %v2048
        %v2177 = vpack.c.b16 %v2049, %v2049
        %v2178 = vpack.c.b16 %v2050, %v2050
        %v2179 = vpack.c.b16 %v2051, %v2051
        %v2180 = vpack.c.b16 %v2052, %v2052
        %v2181 = vpack.c.b16 %v2053, %v2053
        %v2182 = vpack.c.b16 %v2054, %v2054
        %v2183 = vpack.c.b16 %v2055, %v2055
        %v2184 = vpack.c.b16 %v2056, %v2056
        %v2185 = vpack.c.b16 %v2057, %v2057
        %v2186 = vpack.c.b16 %v2058, %v2058
        %v2187 = vpack.c.b16 %v2059, %v2059
        %v2188 = vpack.c.b16 %v2060, %v2060
        %v2189 = vpack.c.b16 %v2061, %v2061
        %v2190 = vpack.c.b16 %v2062, %v2062
        %v2191 = vpack.c.b16 %v2063, %v2063
        %v2192 = vpack.c.b16 %v2064, %v2064
        %v2193 = vpack.c.b16 %v2065, %v2065
        %v2194 = vpack.c.b16 %v2066, %v2066
        %v2195 = vpack.c.b16 %v2067, %v2067
        %v2196 = vpack.c.b16 %v2068, %v2068
        %v2197 = vpack.c.b16 %v2069, %v2069
        %v2198 = vpack.c.b16 %v2070, %v2070
        %v2199 = vpack.c.b16 %v2071, %v2071
        %v2200 = vpack.c.b16 %v2072, %v2072
        %v2201 = vpack.c.b16 %v2073, %v2073
        %v2202 = vpack.c.b16 %v2074, %v2074
        %v2203 = vpack.c.b16 %v2075, %v2075
        %v2204 = vpack.c.b16 %v2076, %v2076
        %v2205 = vpack.c.b16 %v2077, %v2077
        %v2206 = vpack.c.b16 %v2078, %v2078
        %v2207 = vpack.c.b16 %v2079, %v2079
        %v2208 = vpack.c.b16 %v2080, %v2080
        %v2209 = vpack.c.b16 %v2081, %v2081
        %vm2338 = vcmask 257024
        %2339 = vst.msk [vmem:[%s199] sm:$0xf] %vm2338, %v2082
        %2340 = vst.msk [vmem:[%s199 + $0x4] sm:$0xf] %vm2338, %v2083
        %2341 = vst.msk [vmem:[%s199 + $0x8] sm:$0xf] %vm2338, %v2084
        %2342 = vst.msk [vmem:[%s199 + $0xc] sm:$0xf] %vm2338, %v2085
        %2343 = vst.msk [vmem:[%s199 + $0x10] sm:$0xf] %vm2338, %v2086
        %2344 = vst.msk [vmem:[%s199 + $0x14] sm:$0xf] %vm2338, %v2087
        %2345 = vst.msk [vmem:[%s199 + $0x18] sm:$0xf] %vm2338, %v2088
        %2346 = vst.msk [vmem:[%s199 + $0x1c] sm:$0xf] %vm2338, %v2089
        %2347 = vst.msk [vmem:[%s199 + $0x20] sm:$0xf] %vm2338, %v2090
        %2348 = vst.msk [vmem:[%s199 + $0x24] sm:$0xf] %vm2338, %v2091
        %2349 = vst.msk [vmem:[%s199 + $0x28] sm:$0xf] %vm2338, %v2092
        %2350 = vst.msk [vmem:[%s199 + $0x2c] sm:$0xf] %vm2338, %v2093
        %2351 = vst.msk [vmem:[%s199 + $0x30] sm:$0xf] %vm2338, %v2094
        %2352 = vst.msk [vmem:[%s199 + $0x34] sm:$0xf] %vm2338, %v2095
        %2353 = vst.msk [vmem:[%s199 + $0x38] sm:$0xf] %vm2338, %v2096
        %2354 = vst.msk [vmem:[%s199 + $0x3c] sm:$0xf] %vm2338, %v2097
        %2355 = vst.msk [vmem:[%s199 + $0x40] sm:$0xf] %vm2338, %v2098
        %2356 = vst.msk [vmem:[%s199 + $0x44] sm:$0xf] %vm2338, %v2099
        %2357 = vst.msk [vmem:[%s199 + $0x48] sm:$0xf] %vm2338, %v2100
        %2358 = vst.msk [vmem:[%s199 + $0x4c] sm:$0xf] %vm2338, %v2101
        %2359 = vst.msk [vmem:[%s199 + $0x50] sm:$0xf] %vm2338, %v2102
        %2360 = vst.msk [vmem:[%s199 + $0x54] sm:$0xf] %vm2338, %v2103
        %2361 = vst.msk [vmem:[%s199 + $0x58] sm:$0xf] %vm2338, %v2104
        %2362 = vst.msk [vmem:[%s199 + $0x5c] sm:$0xf] %vm2338, %v2105
        %2363 = vst.msk [vmem:[%s199 + $0x60] sm:$0xf] %vm2338, %v2106
        %2364 = vst.msk [vmem:[%s199 + $0x64] sm:$0xf] %vm2338, %v2107
        %2365 = vst.msk [vmem:[%s199 + $0x68] sm:$0xf] %vm2338, %v2108
        %2366 = vst.msk [vmem:[%s199 + $0x6c] sm:$0xf] %vm2338, %v2109
        %2367 = vst.msk [vmem:[%s199 + $0x70] sm:$0xf] %vm2338, %v2110
        %2368 = vst.msk [vmem:[%s199 + $0x74] sm:$0xf] %vm2338, %v2111
        %2369 = vst.msk [vmem:[%s199 + $0x78] sm:$0xf] %vm2338, %v2112
        %2370 = vst.msk [vmem:[%s199 + $0x7c] sm:$0xf] %vm2338, %v2113
        %2371 = vst.msk [vmem:[%s199 + $0x80] sm:$0xf] %vm2338, %v2114
        %2372 = vst.msk [vmem:[%s199 + $0x84] sm:$0xf] %vm2338, %v2115
        %2373 = vst.msk [vmem:[%s199 + $0x88] sm:$0xf] %vm2338, %v2116
        %2374 = vst.msk [vmem:[%s199 + $0x8c] sm:$0xf] %vm2338, %v2117
        %2375 = vst.msk [vmem:[%s199 + $0x90] sm:$0xf] %vm2338, %v2118
        %2376 = vst.msk [vmem:[%s199 + $0x94] sm:$0xf] %vm2338, %v2119
        %2377 = vst.msk [vmem:[%s199 + $0x98] sm:$0xf] %vm2338, %v2120
        %2378 = vst.msk [vmem:[%s199 + $0x9c] sm:$0xf] %vm2338, %v2121
        %2379 = vst.msk [vmem:[%s199 + $0xa0] sm:$0xf] %vm2338, %v2122
        %2380 = vst.msk [vmem:[%s199 + $0xa4] sm:$0xf] %vm2338, %v2123
        %2381 = vst.msk [vmem:[%s199 + $0xa8] sm:$0xf] %vm2338, %v2124
        %2382 = vst.msk [vmem:[%s199 + $0xac] sm:$0xf] %vm2338, %v2125
        %2383 = vst.msk [vmem:[%s199 + $0xb0] sm:$0xf] %vm2338, %v2126
        %2384 = vst.msk [vmem:[%s199 + $0xb4] sm:$0xf] %vm2338, %v2127
        %2385 = vst.msk [vmem:[%s199 + $0xb8] sm:$0xf] %vm2338, %v2128
        %2386 = vst.msk [vmem:[%s199 + $0xbc] sm:$0xf] %vm2338, %v2129
        %2387 = vst.msk [vmem:[%s199 + $0xc0] sm:$0xf] %vm2338, %v2130
        %2388 = vst.msk [vmem:[%s199 + $0xc4] sm:$0xf] %vm2338, %v2131
        %2389 = vst.msk [vmem:[%s199 + $0xc8] sm:$0xf] %vm2338, %v2132
        %2390 = vst.msk [vmem:[%s199 + $0xcc] sm:$0xf] %vm2338, %v2133
        %2391 = vst.msk [vmem:[%s199 + $0xd0] sm:$0xf] %vm2338, %v2134
        %2392 = vst.msk [vmem:[%s199 + $0xd4] sm:$0xf] %vm2338, %v2135
        %2393 = vst.msk [vmem:[%s199 + $0xd8] sm:$0xf] %vm2338, %v2136
        %2394 = vst.msk [vmem:[%s199 + $0xdc] sm:$0xf] %vm2338, %v2137
        %2395 = vst.msk [vmem:[%s199 + $0xe0] sm:$0xf] %vm2338, %v2138
        %2396 = vst.msk [vmem:[%s199 + $0xe4] sm:$0xf] %vm2338, %v2139
        %2397 = vst.msk [vmem:[%s199 + $0xe8] sm:$0xf] %vm2338, %v2140
        %2398 = vst.msk [vmem:[%s199 + $0xec] sm:$0xf] %vm2338, %v2141
        %2399 = vst.msk [vmem:[%s199 + $0xf0] sm:$0xf] %vm2338, %v2142
        %2400 = vst.msk [vmem:[%s199 + $0xf4] sm:$0xf] %vm2338, %v2143
        %2401 = vst.msk [vmem:[%s199 + $0xf8] sm:$0xf] %vm2338, %v2144
        %2402 = vst.msk [vmem:[%s199 + $0xfc] sm:$0xf] %vm2338, %v2145
        %2403 = vst.msk [vmem:[%s199 + $0x100] sm:$0xf] %vm2338, %v2146
        %2404 = vst.msk [vmem:[%s199 + $0x104] sm:$0xf] %vm2338, %v2147
        %2405 = vst.msk [vmem:[%s199 + $0x108] sm:$0xf] %vm2338, %v2148
        %2406 = vst.msk [vmem:[%s199 + $0x10c] sm:$0xf] %vm2338, %v2149
        %2407 = vst.msk [vmem:[%s199 + $0x110] sm:$0xf] %vm2338, %v2150
        %2408 = vst.msk [vmem:[%s199 + $0x114] sm:$0xf] %vm2338, %v2151
        %2409 = vst.msk [vmem:[%s199 + $0x118] sm:$0xf] %vm2338, %v2152
        %2410 = vst.msk [vmem:[%s199 + $0x11c] sm:$0xf] %vm2338, %v2153
        %2411 = vst.msk [vmem:[%s199 + $0x120] sm:$0xf] %vm2338, %v2154
        %2412 = vst.msk [vmem:[%s199 + $0x124] sm:$0xf] %vm2338, %v2155
        %2413 = vst.msk [vmem:[%s199 + $0x128] sm:$0xf] %vm2338, %v2156
        %2414 = vst.msk [vmem:[%s199 + $0x12c] sm:$0xf] %vm2338, %v2157
        %2415 = vst.msk [vmem:[%s199 + $0x130] sm:$0xf] %vm2338, %v2158
        %2416 = vst.msk [vmem:[%s199 + $0x134] sm:$0xf] %vm2338, %v2159
        %2417 = vst.msk [vmem:[%s199 + $0x138] sm:$0xf] %vm2338, %v2160
        %2418 = vst.msk [vmem:[%s199 + $0x13c] sm:$0xf] %vm2338, %v2161
        %2419 = vst.msk [vmem:[%s199 + $0x140] sm:$0xf] %vm2338, %v2162
        %2420 = vst.msk [vmem:[%s199 + $0x144] sm:$0xf] %vm2338, %v2163
        %2421 = vst.msk [vmem:[%s199 + $0x148] sm:$0xf] %vm2338, %v2164
        %2422 = vst.msk [vmem:[%s199 + $0x14c] sm:$0xf] %vm2338, %v2165
        %2423 = vst.msk [vmem:[%s199 + $0x150] sm:$0xf] %vm2338, %v2166
        %2424 = vst.msk [vmem:[%s199 + $0x154] sm:$0xf] %vm2338, %v2167
        %2425 = vst.msk [vmem:[%s199 + $0x158] sm:$0xf] %vm2338, %v2168
        %2426 = vst.msk [vmem:[%s199 + $0x15c] sm:$0xf] %vm2338, %v2169
        %2427 = vst.msk [vmem:[%s199 + $0x160] sm:$0xf] %vm2338, %v2170
        %2428 = vst.msk [vmem:[%s199 + $0x164] sm:$0xf] %vm2338, %v2171
        %2429 = vst.msk [vmem:[%s199 + $0x168] sm:$0xf] %vm2338, %v2172
        %2430 = vst.msk [vmem:[%s199 + $0x16c] sm:$0xf] %vm2338, %v2173
        %2431 = vst.msk [vmem:[%s199 + $0x170] sm:$0xf] %vm2338, %v2174
        %2432 = vst.msk [vmem:[%s199 + $0x174] sm:$0xf] %vm2338, %v2175
        %2433 = vst.msk [vmem:[%s199 + $0x178] sm:$0xf] %vm2338, %v2176
        %2434 = vst.msk [vmem:[%s199 + $0x17c] sm:$0xf] %vm2338, %v2177
        %2435 = vst.msk [vmem:[%s199 + $0x180] sm:$0xf] %vm2338, %v2178
        %2436 = vst.msk [vmem:[%s199 + $0x184] sm:$0xf] %vm2338, %v2179
        %2437 = vst.msk [vmem:[%s199 + $0x188] sm:$0xf] %vm2338, %v2180
        %2438 = vst.msk [vmem:[%s199 + $0x18c] sm:$0xf] %vm2338, %v2181
        %2439 = vst.msk [vmem:[%s199 + $0x190] sm:$0xf] %vm2338, %v2182
        %2440 = vst.msk [vmem:[%s199 + $0x194] sm:$0xf] %vm2338, %v2183
        %2441 = vst.msk [vmem:[%s199 + $0x198] sm:$0xf] %vm2338, %v2184
        %2442 = vst.msk [vmem:[%s199 + $0x19c] sm:$0xf] %vm2338, %v2185
        %2443 = vst.msk [vmem:[%s199 + $0x1a0] sm:$0xf] %vm2338, %v2186
        %2444 = vst.msk [vmem:[%s199 + $0x1a4] sm:$0xf] %vm2338, %v2187
        %2445 = vst.msk [vmem:[%s199 + $0x1a8] sm:$0xf] %vm2338, %v2188
        %2446 = vst.msk [vmem:[%s199 + $0x1ac] sm:$0xf] %vm2338, %v2189
        %2447 = vst.msk [vmem:[%s199 + $0x1b0] sm:$0xf] %vm2338, %v2190
        %2448 = vst.msk [vmem:[%s199 + $0x1b4] sm:$0xf] %vm2338, %v2191
        %2449 = vst.msk [vmem:[%s199 + $0x1b8] sm:$0xf] %vm2338, %v2192
        %2450 = vst.msk [vmem:[%s199 + $0x1bc] sm:$0xf] %vm2338, %v2193
        %2451 = vst.msk [vmem:[%s199 + $0x1c0] sm:$0xf] %vm2338, %v2194
        %2452 = vst.msk [vmem:[%s199 + $0x1c4] sm:$0xf] %vm2338, %v2195
        %2453 = vst.msk [vmem:[%s199 + $0x1c8] sm:$0xf] %vm2338, %v2196
        %2454 = vst.msk [vmem:[%s199 + $0x1cc] sm:$0xf] %vm2338, %v2197
        %2455 = vst.msk [vmem:[%s199 + $0x1d0] sm:$0xf] %vm2338, %v2198
        %2456 = vst.msk [vmem:[%s199 + $0x1d4] sm:$0xf] %vm2338, %v2199
        %2457 = vst.msk [vmem:[%s199 + $0x1d8] sm:$0xf] %vm2338, %v2200
        %2458 = vst.msk [vmem:[%s199 + $0x1dc] sm:$0xf] %vm2338, %v2201
        %2459 = vst.msk [vmem:[%s199 + $0x1e0] sm:$0xf] %vm2338, %v2202
        %2460 = vst.msk [vmem:[%s199 + $0x1e4] sm:$0xf] %vm2338, %v2203
        %2461 = vst.msk [vmem:[%s199 + $0x1e8] sm:$0xf] %vm2338, %v2204
        %2462 = vst.msk [vmem:[%s199 + $0x1ec] sm:$0xf] %vm2338, %v2205
        %2463 = vst.msk [vmem:[%s199 + $0x1f0] sm:$0xf] %vm2338, %v2206
        %2464 = vst.msk [vmem:[%s199 + $0x1f4] sm:$0xf] %vm2338, %v2207
        %2465 = vst.msk [vmem:[%s199 + $0x1f8] sm:$0xf] %vm2338, %v2208
        %2466 = vst.msk [vmem:[%s199 + $0x1fc] sm:$0xf] %vm2338, %v2209
        %s2467 = sand.u32 %s112, 1
        %s2468 = sand.u32 %s112, 1
        %s2469 = smul.addr %s2468, 512
        %s2470 = scalar_lea.vmem [#allocation2], %s2469
        // Predicated region
        $region37: #{simple_mobilenet_pallas.3} parent=35 // pred_check
          %p2471 = pneg %p122
        $region38: #{simple_mobilenet_pallas.3} parent=35 // pred_check_branch
          %2473 = sbr.rel (%p2471) target = $region40
        $region39: #{simple_mobilenet_pallas.3} parent=35 // pred_region
          %s2474 = smul.u32 128, %s15
          %s2475 = ssub.s32 784, %s2474
          %p2476 = scmp.lt.s32.totalorder %s2475, 128
          %s2477 = scalar_select %p2476, %s2475, 128
          %s2478 = smul.u32 64, %s2477
          %p2479 = scmp.ne.s32.totalorder 0, %s2478
          %s2480 = smul.addr %s2474, 4
          %s2481 = scalar_lea.vmem %s4, %s2480
          // Predicated region
          $region41: #{simple_mobilenet_pallas.3} parent=39 // pred_check
            %p2482 = pneg %p2479
          $region42: #{simple_mobilenet_pallas.3} parent=39 // pred_check_branch
            %2484 = sbr.rel (%p2482) target = $region44
          $region43: #{simple_mobilenet_pallas.3} parent=39 // pred_region
            // Predicated region
            $region45: #{simple_mobilenet_pallas.3} parent=43 // pred_check
              _
            $region46: #{simple_mobilenet_pallas.3} parent=43 // pred_check_branch
              %2486 = sbr.rel target = $region48
            $region47: #{simple_mobilenet_pallas.3} parent=43 // pred_region
              // Predicated region
              $region67: #{simple_mobilenet_pallas.3} parent=47 // pred_check
                _
              $region68: #{simple_mobilenet_pallas.3} parent=47 // pred_check_branch
                %2661 = sbr.rel (0) target = $region70
              $region69: #{simple_mobilenet_pallas.3} parent=47 // pred_region
                %s2663 = sshrl.u32 %s2477, 6
                // While loop
                $region71: #{simple_mobilenet_pallas.3} parent=69 // loop_pre_header
                  _
                $region72: #{simple_mobilenet_pallas.3} parent=69 // loop_header
                  %s2665 = sphi 0, %s2667
                  %p2666 = scmp.ge.s32.totalorder %s2665, %s2663
                  %s2670 = sphi 0, %s2803
                  %s2671 = sphi %s2470, %s2806
                  %s2672 = sphi %s2481, %s2807
                $region73: #{simple_mobilenet_pallas.3} parent=69 // loop_header_branch
                  %2669 = sbr.rel (%p2666) target = $region77
                $region74: #{simple_mobilenet_pallas.3} parent=69 // loop_body
                  %v2673 = vld [vmem:[%s2671] sm:$0xf]
                  %2674 = vst [vmem:[%s2672] sm:$0xf] %v2673
                  %v2675 = vld [vmem:[%s2671 + $0x4] sm:$0xf]
                  %2676 = vst [vmem:[%s2672 + $0x4] sm:$0xf] %v2675
                  %v2677 = vld [vmem:[%s2671 + $0x8] sm:$0xf]
                  %2678 = vst [vmem:[%s2672 + $0x8] sm:$0xf] %v2677
                  %v2679 = vld [vmem:[%s2671 + $0xc] sm:$0xf]
                  %2680 = vst [vmem:[%s2672 + $0xc] sm:$0xf] %v2679
                  %v2681 = vld [vmem:[%s2671 + $0x10] sm:$0xf]
                  %2682 = vst [vmem:[%s2672 + $0x10] sm:$0xf] %v2681
                  %v2683 = vld [vmem:[%s2671 + $0x14] sm:$0xf]
                  %2684 = vst [vmem:[%s2672 + $0x14] sm:$0xf] %v2683
                  %v2685 = vld [vmem:[%s2671 + $0x18] sm:$0xf]
                  %2686 = vst [vmem:[%s2672 + $0x18] sm:$0xf] %v2685
                  %v2687 = vld [vmem:[%s2671 + $0x1c] sm:$0xf]
                  %2688 = vst [vmem:[%s2672 + $0x1c] sm:$0xf] %v2687
                  %v2689 = vld [vmem:[%s2671 + $0x20] sm:$0xf]
                  %2690 = vst [vmem:[%s2672 + $0x20] sm:$0xf] %v2689
                  %v2691 = vld [vmem:[%s2671 + $0x24] sm:$0xf]
                  %2692 = vst [vmem:[%s2672 + $0x24] sm:$0xf] %v2691
                  %v2693 = vld [vmem:[%s2671 + $0x28] sm:$0xf]
                  %2694 = vst [vmem:[%s2672 + $0x28] sm:$0xf] %v2693
                  %v2695 = vld [vmem:[%s2671 + $0x2c] sm:$0xf]
                  %2696 = vst [vmem:[%s2672 + $0x2c] sm:$0xf] %v2695
                  %v2697 = vld [vmem:[%s2671 + $0x30] sm:$0xf]
                  %2698 = vst [vmem:[%s2672 + $0x30] sm:$0xf] %v2697
                  %v2699 = vld [vmem:[%s2671 + $0x34] sm:$0xf]
                  %2700 = vst [vmem:[%s2672 + $0x34] sm:$0xf] %v2699
                  %v2701 = vld [vmem:[%s2671 + $0x38] sm:$0xf]
                  %2702 = vst [vmem:[%s2672 + $0x38] sm:$0xf] %v2701
                  %v2703 = vld [vmem:[%s2671 + $0x3c] sm:$0xf]
                  %2704 = vst [vmem:[%s2672 + $0x3c] sm:$0xf] %v2703
                  %v2705 = vld [vmem:[%s2671 + $0x40] sm:$0xf]
                  %2706 = vst [vmem:[%s2672 + $0x40] sm:$0xf] %v2705
                  %v2707 = vld [vmem:[%s2671 + $0x44] sm:$0xf]
                  %2708 = vst [vmem:[%s2672 + $0x44] sm:$0xf] %v2707
                  %v2709 = vld [vmem:[%s2671 + $0x48] sm:$0xf]
                  %2710 = vst [vmem:[%s2672 + $0x48] sm:$0xf] %v2709
                  %v2711 = vld [vmem:[%s2671 + $0x4c] sm:$0xf]
                  %2712 = vst [vmem:[%s2672 + $0x4c] sm:$0xf] %v2711
                  %v2713 = vld [vmem:[%s2671 + $0x50] sm:$0xf]
                  %2714 = vst [vmem:[%s2672 + $0x50] sm:$0xf] %v2713
                  %v2715 = vld [vmem:[%s2671 + $0x54] sm:$0xf]
                  %2716 = vst [vmem:[%s2672 + $0x54] sm:$0xf] %v2715
                  %v2717 = vld [vmem:[%s2671 + $0x58] sm:$0xf]
                  %2718 = vst [vmem:[%s2672 + $0x58] sm:$0xf] %v2717
                  %v2719 = vld [vmem:[%s2671 + $0x5c] sm:$0xf]
                  %2720 = vst [vmem:[%s2672 + $0x5c] sm:$0xf] %v2719
                  %v2721 = vld [vmem:[%s2671 + $0x60] sm:$0xf]
                  %2722 = vst [vmem:[%s2672 + $0x60] sm:$0xf] %v2721
                  %v2723 = vld [vmem:[%s2671 + $0x64] sm:$0xf]
                  %2724 = vst [vmem:[%s2672 + $0x64] sm:$0xf] %v2723
                  %v2725 = vld [vmem:[%s2671 + $0x68] sm:$0xf]
                  %2726 = vst [vmem:[%s2672 + $0x68] sm:$0xf] %v2725
                  %v2727 = vld [vmem:[%s2671 + $0x6c] sm:$0xf]
                  %2728 = vst [vmem:[%s2672 + $0x6c] sm:$0xf] %v2727
                  %v2729 = vld [vmem:[%s2671 + $0x70] sm:$0xf]
                  %2730 = vst [vmem:[%s2672 + $0x70] sm:$0xf] %v2729
                  %v2731 = vld [vmem:[%s2671 + $0x74] sm:$0xf]
                  %2732 = vst [vmem:[%s2672 + $0x74] sm:$0xf] %v2731
                  %v2733 = vld [vmem:[%s2671 + $0x78] sm:$0xf]
                  %2734 = vst [vmem:[%s2672 + $0x78] sm:$0xf] %v2733
                  %v2735 = vld [vmem:[%s2671 + $0x7c] sm:$0xf]
                  %2736 = vst [vmem:[%s2672 + $0x7c] sm:$0xf] %v2735
                  %v2737 = vld [vmem:[%s2671 + $0x80] sm:$0xf]
                  %2738 = vst [vmem:[%s2672 + $0x80] sm:$0xf] %v2737
                  %v2739 = vld [vmem:[%s2671 + $0x84] sm:$0xf]
                  %2740 = vst [vmem:[%s2672 + $0x84] sm:$0xf] %v2739
                  %v2741 = vld [vmem:[%s2671 + $0x88] sm:$0xf]
                  %2742 = vst [vmem:[%s2672 + $0x88] sm:$0xf] %v2741
                  %v2743 = vld [vmem:[%s2671 + $0x8c] sm:$0xf]
                  %2744 = vst [vmem:[%s2672 + $0x8c] sm:$0xf] %v2743
                  %v2745 = vld [vmem:[%s2671 + $0x90] sm:$0xf]
                  %2746 = vst [vmem:[%s2672 + $0x90] sm:$0xf] %v2745
                  %v2747 = vld [vmem:[%s2671 + $0x94] sm:$0xf]
                  %2748 = vst [vmem:[%s2672 + $0x94] sm:$0xf] %v2747
                  %v2749 = vld [vmem:[%s2671 + $0x98] sm:$0xf]
                  %2750 = vst [vmem:[%s2672 + $0x98] sm:$0xf] %v2749
                  %v2751 = vld [vmem:[%s2671 + $0x9c] sm:$0xf]
                  %2752 = vst [vmem:[%s2672 + $0x9c] sm:$0xf] %v2751
                  %v2753 = vld [vmem:[%s2671 + $0xa0] sm:$0xf]
                  %2754 = vst [vmem:[%s2672 + $0xa0] sm:$0xf] %v2753
                  %v2755 = vld [vmem:[%s2671 + $0xa4] sm:$0xf]
                  %2756 = vst [vmem:[%s2672 + $0xa4] sm:$0xf] %v2755
                  %v2757 = vld [vmem:[%s2671 + $0xa8] sm:$0xf]
                  %2758 = vst [vmem:[%s2672 + $0xa8] sm:$0xf] %v2757
                  %v2759 = vld [vmem:[%s2671 + $0xac] sm:$0xf]
                  %2760 = vst [vmem:[%s2672 + $0xac] sm:$0xf] %v2759
                  %v2761 = vld [vmem:[%s2671 + $0xb0] sm:$0xf]
                  %2762 = vst [vmem:[%s2672 + $0xb0] sm:$0xf] %v2761
                  %v2763 = vld [vmem:[%s2671 + $0xb4] sm:$0xf]
                  %2764 = vst [vmem:[%s2672 + $0xb4] sm:$0xf] %v2763
                  %v2765 = vld [vmem:[%s2671 + $0xb8] sm:$0xf]
                  %2766 = vst [vmem:[%s2672 + $0xb8] sm:$0xf] %v2765
                  %v2767 = vld [vmem:[%s2671 + $0xbc] sm:$0xf]
                  %2768 = vst [vmem:[%s2672 + $0xbc] sm:$0xf] %v2767
                  %v2769 = vld [vmem:[%s2671 + $0xc0] sm:$0xf]
                  %2770 = vst [vmem:[%s2672 + $0xc0] sm:$0xf] %v2769
                  %v2771 = vld [vmem:[%s2671 + $0xc4] sm:$0xf]
                  %2772 = vst [vmem:[%s2672 + $0xc4] sm:$0xf] %v2771
                  %v2773 = vld [vmem:[%s2671 + $0xc8] sm:$0xf]
                  %2774 = vst [vmem:[%s2672 + $0xc8] sm:$0xf] %v2773
                  %v2775 = vld [vmem:[%s2671 + $0xcc] sm:$0xf]
                  %2776 = vst [vmem:[%s2672 + $0xcc] sm:$0xf] %v2775
                  %v2777 = vld [vmem:[%s2671 + $0xd0] sm:$0xf]
                  %2778 = vst [vmem:[%s2672 + $0xd0] sm:$0xf] %v2777
                  %v2779 = vld [vmem:[%s2671 + $0xd4] sm:$0xf]
                  %2780 = vst [vmem:[%s2672 + $0xd4] sm:$0xf] %v2779
                  %v2781 = vld [vmem:[%s2671 + $0xd8] sm:$0xf]
                  %2782 = vst [vmem:[%s2672 + $0xd8] sm:$0xf] %v2781
                  %v2783 = vld [vmem:[%s2671 + $0xdc] sm:$0xf]
                  %2784 = vst [vmem:[%s2672 + $0xdc] sm:$0xf] %v2783
                  %v2785 = vld [vmem:[%s2671 + $0xe0] sm:$0xf]
                  %2786 = vst [vmem:[%s2672 + $0xe0] sm:$0xf] %v2785
                  %v2787 = vld [vmem:[%s2671 + $0xe4] sm:$0xf]
                  %2788 = vst [vmem:[%s2672 + $0xe4] sm:$0xf] %v2787
                  %v2789 = vld [vmem:[%s2671 + $0xe8] sm:$0xf]
                  %2790 = vst [vmem:[%s2672 + $0xe8] sm:$0xf] %v2789
                  %v2791 = vld [vmem:[%s2671 + $0xec] sm:$0xf]
                  %2792 = vst [vmem:[%s2672 + $0xec] sm:$0xf] %v2791
                  %v2793 = vld [vmem:[%s2671 + $0xf0] sm:$0xf]
                  %2794 = vst [vmem:[%s2672 + $0xf0] sm:$0xf] %v2793
                  %v2795 = vld [vmem:[%s2671 + $0xf4] sm:$0xf]
                  %2796 = vst [vmem:[%s2672 + $0xf4] sm:$0xf] %v2795
                  %v2797 = vld [vmem:[%s2671 + $0xf8] sm:$0xf]
                  %2798 = vst [vmem:[%s2672 + $0xf8] sm:$0xf] %v2797
                  %v2799 = vld [vmem:[%s2671 + $0xfc] sm:$0xf]
                  %2800 = vst [vmem:[%s2672 + $0xfc] sm:$0xf] %v2799
                  %s2801 = sadd.s32 1, %s2670
                  %p2802 = scmp.ge.s32.totalorder %s2801, %s2663
                  %s2803 = scalar_select %p2802, 0, %s2801
                  %s2804 = smul.u32 %s2803, 256
                  %s2805 = smul.u32 %s2803, 256
                  %s2806 = scalar_lea.vmem %s2470, %s2804 [#allocation2]
                  %s2807 = scalar_lea.vmem %s2481, %s2805
                $region75: #{simple_mobilenet_pallas.3} parent=69 // loop_footer
                  %s2667 = sadd.s32 %s2665, 1
                $region76: #{simple_mobilenet_pallas.3} parent=69 // loop_footer_branch
                  %2664 = sbr.rel target = $region72
                $region77: #{simple_mobilenet_pallas.3} parent=69 // loop_exit
                  _
                %s2808 = sshrl.u32 %s2477, 6
                %s2809 = sand.u32 %s2477, 63
                %s2810 = smul.u32 %s2808, 64
                %s2811 = smul.u32 4, %s2810
                %s2812 = scalar_lea.vmem %s2470, %s2811 [#allocation2]
                %s2813 = smul.u32 4, %s2810
                %s2814 = scalar_lea.vmem %s2481, %s2813
                // While loop
                $region78: #{simple_mobilenet_pallas.3} parent=69 // loop_pre_header
                  _
                $region79: #{simple_mobilenet_pallas.3} parent=69 // loop_header
                  %s2816 = sphi 0, %s2818
                  %p2817 = scmp.ge.s32.totalorder %s2816, %s2809
                  %s2821 = sphi 0, %s2828
                  %s2822 = sphi %s2812, %s2831
                  %s2823 = sphi %s2814, %s2832
                $region80: #{simple_mobilenet_pallas.3} parent=69 // loop_header_branch
                  %2820 = sbr.rel (%p2817) target = $region84
                $region81: #{simple_mobilenet_pallas.3} parent=69 // loop_body
                  %v2824 = vld [vmem:[%s2822] sm:$0xf]
                  %2825 = vst [vmem:[%s2823] sm:$0xf] %v2824
                  %s2826 = sadd.s32 1, %s2821
                  %p2827 = scmp.ge.s32.totalorder %s2826, %s2809
                  %s2828 = scalar_select %p2827, 0, %s2826
                  %s2829 = smul.u32 %s2828, 4
                  %s2830 = smul.u32 %s2828, 4
                  %s2831 = scalar_lea.vmem %s2812, %s2829 [#allocation2]
                  %s2832 = scalar_lea.vmem %s2814, %s2830
                $region82: #{simple_mobilenet_pallas.3} parent=69 // loop_footer
                  %s2818 = sadd.s32 %s2816, 1
                $region83: #{simple_mobilenet_pallas.3} parent=69 // loop_footer_branch
                  %2815 = sbr.rel target = $region79
                $region84: #{simple_mobilenet_pallas.3} parent=69 // loop_exit
                  _
              $region70: #{simple_mobilenet_pallas.3} parent=47 // pred_fallthru
                _
            $region48: #{simple_mobilenet_pallas.3} parent=43 // pred_fallthru
              _
            // Predicated region
            $region49: #{simple_mobilenet_pallas.3} parent=43 // pred_check
              _
            $region50: #{simple_mobilenet_pallas.3} parent=43 // pred_check_branch
              %2488 = sbr.rel (0) target = $region52
            $region51: #{simple_mobilenet_pallas.3} parent=43 // pred_region
              %s2490 = sshrl.u32 %s2477, 6
              // While loop
              $region53: #{simple_mobilenet_pallas.3} parent=51 // loop_pre_header
                _
              $region54: #{simple_mobilenet_pallas.3} parent=51 // loop_header
                %s2492 = sphi 0, %s2494
                %p2493 = scmp.ge.s32.totalorder %s2492, %s2490
                %s2497 = sphi 0, %s2630
                %s2498 = sphi %s2470, %s2633
                %s2499 = sphi %s2481, %s2634
              $region55: #{simple_mobilenet_pallas.3} parent=51 // loop_header_branch
                %2496 = sbr.rel (%p2493) target = $region59
              $region56: #{simple_mobilenet_pallas.3} parent=51 // loop_body
                %v2500 = vld [vmem:[%s2498] sm:$0xf]
                %2501 = vst [vmem:[%s2499] sm:$0xf] %v2500
                %v2502 = vld [vmem:[%s2498 + $0x4] sm:$0xf]
                %2503 = vst [vmem:[%s2499 + $0x4] sm:$0xf] %v2502
                %v2504 = vld [vmem:[%s2498 + $0x8] sm:$0xf]
                %2505 = vst [vmem:[%s2499 + $0x8] sm:$0xf] %v2504
                %v2506 = vld [vmem:[%s2498 + $0xc] sm:$0xf]
                %2507 = vst [vmem:[%s2499 + $0xc] sm:$0xf] %v2506
                %v2508 = vld [vmem:[%s2498 + $0x10] sm:$0xf]
                %2509 = vst [vmem:[%s2499 + $0x10] sm:$0xf] %v2508
                %v2510 = vld [vmem:[%s2498 + $0x14] sm:$0xf]
                %2511 = vst [vmem:[%s2499 + $0x14] sm:$0xf] %v2510
                %v2512 = vld [vmem:[%s2498 + $0x18] sm:$0xf]
                %2513 = vst [vmem:[%s2499 + $0x18] sm:$0xf] %v2512
                %v2514 = vld [vmem:[%s2498 + $0x1c] sm:$0xf]
                %2515 = vst [vmem:[%s2499 + $0x1c] sm:$0xf] %v2514
                %v2516 = vld [vmem:[%s2498 + $0x20] sm:$0xf]
                %2517 = vst [vmem:[%s2499 + $0x20] sm:$0xf] %v2516
                %v2518 = vld [vmem:[%s2498 + $0x24] sm:$0xf]
                %2519 = vst [vmem:[%s2499 + $0x24] sm:$0xf] %v2518
                %v2520 = vld [vmem:[%s2498 + $0x28] sm:$0xf]
                %2521 = vst [vmem:[%s2499 + $0x28] sm:$0xf] %v2520
                %v2522 = vld [vmem:[%s2498 + $0x2c] sm:$0xf]
                %2523 = vst [vmem:[%s2499 + $0x2c] sm:$0xf] %v2522
                %v2524 = vld [vmem:[%s2498 + $0x30] sm:$0xf]
                %2525 = vst [vmem:[%s2499 + $0x30] sm:$0xf] %v2524
                %v2526 = vld [vmem:[%s2498 + $0x34] sm:$0xf]
                %2527 = vst [vmem:[%s2499 + $0x34] sm:$0xf] %v2526
                %v2528 = vld [vmem:[%s2498 + $0x38] sm:$0xf]
                %2529 = vst [vmem:[%s2499 + $0x38] sm:$0xf] %v2528
                %v2530 = vld [vmem:[%s2498 + $0x3c] sm:$0xf]
                %2531 = vst [vmem:[%s2499 + $0x3c] sm:$0xf] %v2530
                %v2532 = vld [vmem:[%s2498 + $0x40] sm:$0xf]
                %2533 = vst [vmem:[%s2499 + $0x40] sm:$0xf] %v2532
                %v2534 = vld [vmem:[%s2498 + $0x44] sm:$0xf]
                %2535 = vst [vmem:[%s2499 + $0x44] sm:$0xf] %v2534
                %v2536 = vld [vmem:[%s2498 + $0x48] sm:$0xf]
                %2537 = vst [vmem:[%s2499 + $0x48] sm:$0xf] %v2536
                %v2538 = vld [vmem:[%s2498 + $0x4c] sm:$0xf]
                %2539 = vst [vmem:[%s2499 + $0x4c] sm:$0xf] %v2538
                %v2540 = vld [vmem:[%s2498 + $0x50] sm:$0xf]
                %2541 = vst [vmem:[%s2499 + $0x50] sm:$0xf] %v2540
                %v2542 = vld [vmem:[%s2498 + $0x54] sm:$0xf]
                %2543 = vst [vmem:[%s2499 + $0x54] sm:$0xf] %v2542
                %v2544 = vld [vmem:[%s2498 + $0x58] sm:$0xf]
                %2545 = vst [vmem:[%s2499 + $0x58] sm:$0xf] %v2544
                %v2546 = vld [vmem:[%s2498 + $0x5c] sm:$0xf]
                %2547 = vst [vmem:[%s2499 + $0x5c] sm:$0xf] %v2546
                %v2548 = vld [vmem:[%s2498 + $0x60] sm:$0xf]
                %2549 = vst [vmem:[%s2499 + $0x60] sm:$0xf] %v2548
                %v2550 = vld [vmem:[%s2498 + $0x64] sm:$0xf]
                %2551 = vst [vmem:[%s2499 + $0x64] sm:$0xf] %v2550
                %v2552 = vld [vmem:[%s2498 + $0x68] sm:$0xf]
                %2553 = vst [vmem:[%s2499 + $0x68] sm:$0xf] %v2552
                %v2554 = vld [vmem:[%s2498 + $0x6c] sm:$0xf]
                %2555 = vst [vmem:[%s2499 + $0x6c] sm:$0xf] %v2554
                %v2556 = vld [vmem:[%s2498 + $0x70] sm:$0xf]
                %2557 = vst [vmem:[%s2499 + $0x70] sm:$0xf] %v2556
                %v2558 = vld [vmem:[%s2498 + $0x74] sm:$0xf]
                %2559 = vst [vmem:[%s2499 + $0x74] sm:$0xf] %v2558
                %v2560 = vld [vmem:[%s2498 + $0x78] sm:$0xf]
                %2561 = vst [vmem:[%s2499 + $0x78] sm:$0xf] %v2560
                %v2562 = vld [vmem:[%s2498 + $0x7c] sm:$0xf]
                %2563 = vst [vmem:[%s2499 + $0x7c] sm:$0xf] %v2562
                %v2564 = vld [vmem:[%s2498 + $0x80] sm:$0xf]
                %2565 = vst [vmem:[%s2499 + $0x80] sm:$0xf] %v2564
                %v2566 = vld [vmem:[%s2498 + $0x84] sm:$0xf]
                %2567 = vst [vmem:[%s2499 + $0x84] sm:$0xf] %v2566
                %v2568 = vld [vmem:[%s2498 + $0x88] sm:$0xf]
                %2569 = vst [vmem:[%s2499 + $0x88] sm:$0xf] %v2568
                %v2570 = vld [vmem:[%s2498 + $0x8c] sm:$0xf]
                %2571 = vst [vmem:[%s2499 + $0x8c] sm:$0xf] %v2570
                %v2572 = vld [vmem:[%s2498 + $0x90] sm:$0xf]
                %2573 = vst [vmem:[%s2499 + $0x90] sm:$0xf] %v2572
                %v2574 = vld [vmem:[%s2498 + $0x94] sm:$0xf]
                %2575 = vst [vmem:[%s2499 + $0x94] sm:$0xf] %v2574
                %v2576 = vld [vmem:[%s2498 + $0x98] sm:$0xf]
                %2577 = vst [vmem:[%s2499 + $0x98] sm:$0xf] %v2576
                %v2578 = vld [vmem:[%s2498 + $0x9c] sm:$0xf]
                %2579 = vst [vmem:[%s2499 + $0x9c] sm:$0xf] %v2578
                %v2580 = vld [vmem:[%s2498 + $0xa0] sm:$0xf]
                %2581 = vst [vmem:[%s2499 + $0xa0] sm:$0xf] %v2580
                %v2582 = vld [vmem:[%s2498 + $0xa4] sm:$0xf]
                %2583 = vst [vmem:[%s2499 + $0xa4] sm:$0xf] %v2582
                %v2584 = vld [vmem:[%s2498 + $0xa8] sm:$0xf]
                %2585 = vst [vmem:[%s2499 + $0xa8] sm:$0xf] %v2584
                %v2586 = vld [vmem:[%s2498 + $0xac] sm:$0xf]
                %2587 = vst [vmem:[%s2499 + $0xac] sm:$0xf] %v2586
                %v2588 = vld [vmem:[%s2498 + $0xb0] sm:$0xf]
                %2589 = vst [vmem:[%s2499 + $0xb0] sm:$0xf] %v2588
                %v2590 = vld [vmem:[%s2498 + $0xb4] sm:$0xf]
                %2591 = vst [vmem:[%s2499 + $0xb4] sm:$0xf] %v2590
                %v2592 = vld [vmem:[%s2498 + $0xb8] sm:$0xf]
                %2593 = vst [vmem:[%s2499 + $0xb8] sm:$0xf] %v2592
                %v2594 = vld [vmem:[%s2498 + $0xbc] sm:$0xf]
                %2595 = vst [vmem:[%s2499 + $0xbc] sm:$0xf] %v2594
                %v2596 = vld [vmem:[%s2498 + $0xc0] sm:$0xf]
                %2597 = vst [vmem:[%s2499 + $0xc0] sm:$0xf] %v2596
                %v2598 = vld [vmem:[%s2498 + $0xc4] sm:$0xf]
                %2599 = vst [vmem:[%s2499 + $0xc4] sm:$0xf] %v2598
                %v2600 = vld [vmem:[%s2498 + $0xc8] sm:$0xf]
                %2601 = vst [vmem:[%s2499 + $0xc8] sm:$0xf] %v2600
                %v2602 = vld [vmem:[%s2498 + $0xcc] sm:$0xf]
                %2603 = vst [vmem:[%s2499 + $0xcc] sm:$0xf] %v2602
                %v2604 = vld [vmem:[%s2498 + $0xd0] sm:$0xf]
                %2605 = vst [vmem:[%s2499 + $0xd0] sm:$0xf] %v2604
                %v2606 = vld [vmem:[%s2498 + $0xd4] sm:$0xf]
                %2607 = vst [vmem:[%s2499 + $0xd4] sm:$0xf] %v2606
                %v2608 = vld [vmem:[%s2498 + $0xd8] sm:$0xf]
                %2609 = vst [vmem:[%s2499 + $0xd8] sm:$0xf] %v2608
                %v2610 = vld [vmem:[%s2498 + $0xdc] sm:$0xf]
                %2611 = vst [vmem:[%s2499 + $0xdc] sm:$0xf] %v2610
                %v2612 = vld [vmem:[%s2498 + $0xe0] sm:$0xf]
                %2613 = vst [vmem:[%s2499 + $0xe0] sm:$0xf] %v2612
                %v2614 = vld [vmem:[%s2498 + $0xe4] sm:$0xf]
                %2615 = vst [vmem:[%s2499 + $0xe4] sm:$0xf] %v2614
                %v2616 = vld [vmem:[%s2498 + $0xe8] sm:$0xf]
                %2617 = vst [vmem:[%s2499 + $0xe8] sm:$0xf] %v2616
                %v2618 = vld [vmem:[%s2498 + $0xec] sm:$0xf]
                %2619 = vst [vmem:[%s2499 + $0xec] sm:$0xf] %v2618
                %v2620 = vld [vmem:[%s2498 + $0xf0] sm:$0xf]
                %2621 = vst [vmem:[%s2499 + $0xf0] sm:$0xf] %v2620
                %v2622 = vld [vmem:[%s2498 + $0xf4] sm:$0xf]
                %2623 = vst [vmem:[%s2499 + $0xf4] sm:$0xf] %v2622
                %v2624 = vld [vmem:[%s2498 + $0xf8] sm:$0xf]
                %2625 = vst [vmem:[%s2499 + $0xf8] sm:$0xf] %v2624
                %v2626 = vld [vmem:[%s2498 + $0xfc] sm:$0xf]
                %2627 = vst [vmem:[%s2499 + $0xfc] sm:$0xf] %v2626
                %s2628 = sadd.s32 1, %s2497
                %p2629 = scmp.ge.s32.totalorder %s2628, %s2490
                %s2630 = scalar_select %p2629, 0, %s2628
                %s2631 = smul.u32 %s2630, 256
                %s2632 = smul.u32 %s2630, 256
                %s2633 = scalar_lea.vmem %s2470, %s2631 [#allocation2]
                %s2634 = scalar_lea.vmem %s2481, %s2632
              $region57: #{simple_mobilenet_pallas.3} parent=51 // loop_footer
                %s2494 = sadd.s32 %s2492, 1
              $region58: #{simple_mobilenet_pallas.3} parent=51 // loop_footer_branch
                %2491 = sbr.rel target = $region54
              $region59: #{simple_mobilenet_pallas.3} parent=51 // loop_exit
                _
              %s2635 = sshrl.u32 %s2477, 6
              %s2636 = sand.u32 %s2477, 63
              %s2637 = smul.u32 %s2635, 64
              %s2638 = smul.u32 4, %s2637
              %s2639 = scalar_lea.vmem %s2470, %s2638 [#allocation2]
              %s2640 = smul.u32 4, %s2637
              %s2641 = scalar_lea.vmem %s2481, %s2640
              // While loop
              $region60: #{simple_mobilenet_pallas.3} parent=51 // loop_pre_header
                _
              $region61: #{simple_mobilenet_pallas.3} parent=51 // loop_header
                %s2643 = sphi 0, %s2645
                %p2644 = scmp.ge.s32.totalorder %s2643, %s2636
                %s2648 = sphi 0, %s2655
                %s2649 = sphi %s2639, %s2658
                %s2650 = sphi %s2641, %s2659
              $region62: #{simple_mobilenet_pallas.3} parent=51 // loop_header_branch
                %2647 = sbr.rel (%p2644) target = $region66
              $region63: #{simple_mobilenet_pallas.3} parent=51 // loop_body
                %v2651 = vld [vmem:[%s2649] sm:$0xf]
                %2652 = vst [vmem:[%s2650] sm:$0xf] %v2651
                %s2653 = sadd.s32 1, %s2648
                %p2654 = scmp.ge.s32.totalorder %s2653, %s2636
                %s2655 = scalar_select %p2654, 0, %s2653
                %s2656 = smul.u32 %s2655, 4
                %s2657 = smul.u32 %s2655, 4
                %s2658 = scalar_lea.vmem %s2639, %s2656 [#allocation2]
                %s2659 = scalar_lea.vmem %s2641, %s2657
              $region64: #{simple_mobilenet_pallas.3} parent=51 // loop_footer
                %s2645 = sadd.s32 %s2643, 1
              $region65: #{simple_mobilenet_pallas.3} parent=51 // loop_footer_branch
                %2642 = sbr.rel target = $region61
              $region66: #{simple_mobilenet_pallas.3} parent=51 // loop_exit
                _
            $region52: #{simple_mobilenet_pallas.3} parent=43 // pred_fallthru
              _
          $region44: #{simple_mobilenet_pallas.3} parent=39 // pred_fallthru
            _
          %2833 = vnop
        $region40: #{simple_mobilenet_pallas.3} parent=35 // pred_fallthru
          _
      $region36: #{simple_mobilenet_pallas.3} parent=5 // pred_fallthru
        _
      %p2834 = scmp.le.s32.totalorder 2, %s10
      // Predicated region
      $region85: #{simple_mobilenet_pallas.3} parent=5 // pred_check
        %p2835 = pneg %p2834
      $region86: #{simple_mobilenet_pallas.3} parent=5 // pred_check_branch
        %2837 = sbr.rel (%p2835) target = $region88
      $region87: #{simple_mobilenet_pallas.3} parent=5 // pred_region
        %s2838 = ssub.s32 %s10, 2
        // Predicated region
        $region89: #{simple_mobilenet_pallas.3} parent=87 // pred_check
          %p2839 = pneg %p128
        $region90: #{simple_mobilenet_pallas.3} parent=87 // pred_check_branch
          %2841 = sbr.rel (%p2839) target = $region92
        $region91: #{simple_mobilenet_pallas.3} parent=87 // pred_region
          %s2842 = sand.u32 %s113, 1
          %s2843 = sand.u32 %s113, 1
          %s2844 = smul.addr %s2843, 512
          %s2845 = scalar_lea.vmem [#allocation2], %s2844
        $region92: #{simple_mobilenet_pallas.3} parent=87 // pred_fallthru
          _
      $region88: #{simple_mobilenet_pallas.3} parent=5 // pred_fallthru
        _
    $region6: #{simple_mobilenet_pallas.3} parent=1 // loop_footer
      %s14 = sadd.s32 1, %s10
    $region7: #{simple_mobilenet_pallas.3} parent=1 // loop_footer_branch
      %9 = sbr.rel target = $region3
    $region8: #{simple_mobilenet_pallas.3} parent=1 // loop_exit
      _

// kernel: simple_mobilenet_pallas.4
$region0: #{simple_mobilenet_pallas.4}
  #allocation0 [shape = 'u32[]', space=smem, size = 0x4, offset = 0x4, fixed_abs, tag = 'smem constant byte address 0x4 - core index']
  #allocation1 [shape = 'u32[144,128]{1,0:T(1,128)}', space=vmem, size = 0x12000, scoped, tag = 'internal scratch']
  %s0 = inlined_call_operand.vmem [shape: bf16[1568,288], index: 0, kind: input, shape index: {}]
  %s1 = inlined_call_operand.vmem [shape: bf16[288,64], index: 1, kind: input, shape index: {}]
  %s2 = inlined_call_operand.vmem [shape: f32[1,64], index: 2, kind: input, shape index: {}]
  %s3 = inlined_call_operand.vmem [shape: f32[1,64], index: 3, kind: input, shape index: {}]
  %s4 = inlined_call_operand.vmem [shape: bf16[1568,64], index: 4, kind: output, shape index: {}]
  %s5 = sld [smem:[#allocation0]]
  $region93: #{simple_mobilenet_pallas.4} parent=0
    _
  %s7 = ssub.s32 1, %s5
  %s8 = scalar_select 0, %s7, %s5
  $region1: #{simple_mobilenet_pallas.4} parent=0
    #allocation2 [shape = 'u8[524288]{0}', space=vmem, size = 0x80000, scoped, tag = 'output window, operand 0']
    loop: start=0, step=1, limit=4
    $region2: #{simple_mobilenet_pallas.4} parent=1 // loop_pre_header
      _
    $region3: #{simple_mobilenet_pallas.4} parent=1 // loop_header
      %s10 = sphi 0, %s14
      %p11 = scmp.ge.s32.totalorder %s10, 4
      %s20 = sphi 0, %s22
      %s23 = sphi 0, %s20
      %s24 = sphi 0, %s23
      %s40 = sphi 0, %s24
      %s44 = sphi 0, %s44
      %s46 = sphi 0, %s44
      %s47 = sphi 0, %s46
      %s61 = sphi 0, %s47
      %s65 = sphi 0, %s65
      %s67 = sphi 0, %s65
      %s68 = sphi 0, %s67
      %s82 = sphi 0, %s68
      %s86 = sphi 0, %s86
      %s88 = sphi 0, %s86
      %s89 = sphi 0, %s88
      %s103 = sphi 0, %s89
      %s109 = sphi 0, %s111
      %s112 = sphi 0, %s109
      %s113 = sphi 0, %s112
      %s129 = sphi 0, %s113
    $region4: #{simple_mobilenet_pallas.4} parent=1 // loop_header_branch
      %13 = sbr.rel (%p11) target = $region8
    $region5: #{simple_mobilenet_pallas.4} parent=1 // loop_body
      %s15 = ssub.s32 %s10, 1
      %s16 = ssub.s32 %s10, 2
      %s17 = sadd.s32 %s10, 1
      %s18 = ssub.s32 %s10, %s17
      %p19 = scmp.eq.s32.totalorder %s18, 0
      %s21 = sadd.s32 %s20, 1
      %s22 = scalar_select %p19, %s20, %s21
      %p25 = pneg %p19
      %p26 = scmp.eq.s32.totalorder %s10, 1
      %p27 = por %p25, %p26
      %p28 = scmp.ne.s32.totalorder %s20, %s23
      %p29 = scmp.eq.s32.totalorder %s10, 0
      %p30 = por %p28, %p29
      %p31 = scmp.ne.s32.totalorder %s20, %s23
      %p32 = scmp.eq.s32.totalorder %s15, 1
      %p33 = por %p31, %p32
      %p34 = scmp.ne.s32.totalorder %s23, %s24
      %p35 = scmp.eq.s32.totalorder %s15, 0
      %p36 = por %p34, %p35
      %p37 = scmp.ne.s32.totalorder %s23, %s24
      %p38 = scmp.eq.s32.totalorder %s16, 1
      %p39 = por %p37, %p38
      %p41 = scmp.ne.s32.totalorder %s24, %s40
      %p42 = scmp.eq.s32.totalorder %s16, 0
      %p43 = por %p41, %p42
      %s45 = sadd.s32 %s44, 1
      %p48 = scmp.eq.s32.totalorder %s10, 1
      %p49 = scmp.ne.s32.totalorder %s44, %s46
      %p50 = scmp.eq.s32.totalorder %s10, 0
      %p51 = por %p49, %p50
      %p52 = scmp.ne.s32.totalorder %s44, %s46
      %p53 = scmp.eq.s32.totalorder %s15, 1
      %p54 = por %p52, %p53
      %p55 = scmp.ne.s32.totalorder %s46, %s47
      %p56 = scmp.eq.s32.totalorder %s15, 0
      %p57 = por %p55, %p56
      %p58 = scmp.ne.s32.totalorder %s46, %s47
      %p59 = scmp.eq.s32.totalorder %s16, 1
      %p60 = por %p58, %p59
      %p62 = scmp.ne.s32.totalorder %s47, %s61
      %p63 = scmp.eq.s32.totalorder %s16, 0
      %p64 = por %p62, %p63
      %s66 = sadd.s32 %s65, 1
      %p69 = scmp.eq.s32.totalorder %s10, 1
      %p70 = scmp.ne.s32.totalorder %s65, %s67
      %p71 = scmp.eq.s32.totalorder %s10, 0
      %p72 = por %p70, %p71
      %p73 = scmp.ne.s32.totalorder %s65, %s67
      %p74 = scmp.eq.s32.totalorder %s15, 1
      %p75 = por %p73, %p74
      %p76 = scmp.ne.s32.totalorder %s67, %s68
      %p77 = scmp.eq.s32.totalorder %s15, 0
      %p78 = por %p76, %p77
      %p79 = scmp.ne.s32.totalorder %s67, %s68
      %p80 = scmp.eq.s32.totalorder %s16, 1
      %p81 = por %p79, %p80
      %p83 = scmp.ne.s32.totalorder %s68, %s82
      %p84 = scmp.eq.s32.totalorder %s16, 0
      %p85 = por %p83, %p84
      %s87 = sadd.s32 %s86, 1
      %p90 = scmp.eq.s32.totalorder %s10, 1
      %p91 = scmp.ne.s32.totalorder %s86, %s88
      %p92 = scmp.eq.s32.totalorder %s10, 0
      %p93 = por %p91, %p92
      %p94 = scmp.ne.s32.totalorder %s86, %s88
      %p95 = scmp.eq.s32.totalorder %s15, 1
      %p96 = por %p94, %p95
      %p97 = scmp.ne.s32.totalorder %s88, %s89
      %p98 = scmp.eq.s32.totalorder %s15, 0
      %p99 = por %p97, %p98
      %p100 = scmp.ne.s32.totalorder %s88, %s89
      %p101 = scmp.eq.s32.totalorder %s16, 1
      %p102 = por %p100, %p101
      %p104 = scmp.ne.s32.totalorder %s89, %s103
      %p105 = scmp.eq.s32.totalorder %s16, 0
      %p106 = por %p104, %p105
      %s107 = ssub.s32 %s10, %s17
      %p108 = scmp.eq.s32.totalorder %s107, 0
      %s110 = sadd.s32 %s109, 1
      %s111 = scalar_select %p108, %s109, %s110
      %p114 = pneg %p108
      %p115 = scmp.eq.s32.totalorder %s10, 1
      %p116 = por %p114, %p115
      %p117 = scmp.ne.s32.totalorder %s109, %s112
      %p118 = scmp.eq.s32.totalorder %s10, 0
      %p119 = por %p117, %p118
      %p120 = scmp.ne.s32.totalorder %s109, %s112
      %p121 = scmp.eq.s32.totalorder %s15, 1
      %p122 = por %p120, %p121
      %p123 = scmp.ne.s32.totalorder %s112, %s113
      %p124 = scmp.eq.s32.totalorder %s15, 0
      %p125 = por %p123, %p124
      %p126 = scmp.ne.s32.totalorder %s112, %s113
      %p127 = scmp.eq.s32.totalorder %s16, 1
      %p128 = por %p126, %p127
      %p130 = scmp.ne.s32.totalorder %s113, %s129
      %p131 = scmp.eq.s32.totalorder %s16, 0
      %p132 = por %p130, %p131
      %p133 = scmp.le.s32.totalorder 1, %s10
      %p134 = scmp.lt.s32.totalorder %s10, 3
      %p135 = pnand %p133, %p134
      %p136 = pneg %p135
      // Predicated region
      $region9: #{simple_mobilenet_pallas.4} parent=5 // pred_check
        _
      $region10: #{simple_mobilenet_pallas.4} parent=5 // pred_check_branch
        %138 = sbr.rel (%p135) target = $region12
      $region11: #{simple_mobilenet_pallas.4} parent=5 // pred_region
        %s139 = ssub.s32 %s10, 1
        // Predicated region
        $region13: #{simple_mobilenet_pallas.4} parent=11 // pred_check
          %p140 = pneg %p57
        $region14: #{simple_mobilenet_pallas.4} parent=11 // pred_check_branch
          %142 = sbr.rel (%p140) target = $region16
        $region15: #{simple_mobilenet_pallas.4} parent=11 // pred_region
          _
        $region16: #{simple_mobilenet_pallas.4} parent=11 // pred_fallthru
          _
        // Predicated region
        $region17: #{simple_mobilenet_pallas.4} parent=11 // pred_check
          %p143 = pneg %p78
        $region18: #{simple_mobilenet_pallas.4} parent=11 // pred_check_branch
          %145 = sbr.rel (%p143) target = $region20
        $region19: #{simple_mobilenet_pallas.4} parent=11 // pred_region
          _
        $region20: #{simple_mobilenet_pallas.4} parent=11 // pred_fallthru
          _
        // Predicated region
        $region21: #{simple_mobilenet_pallas.4} parent=11 // pred_check
          %p146 = pneg %p99
        $region22: #{simple_mobilenet_pallas.4} parent=11 // pred_check_branch
          %148 = sbr.rel (%p146) target = $region24
        $region23: #{simple_mobilenet_pallas.4} parent=11 // pred_region
          _
        $region24: #{simple_mobilenet_pallas.4} parent=11 // pred_fallthru
          _
      $region12: #{simple_mobilenet_pallas.4} parent=5 // pred_fallthru
        _
      %p149 = scmp.lt.s32.totalorder %s10, 2
      // Predicated region
      $region25: #{simple_mobilenet_pallas.4} parent=5 // pred_check
        %p150 = pneg %p149
      $region26: #{simple_mobilenet_pallas.4} parent=5 // pred_check_branch
        %152 = sbr.rel (%p150) target = $region28
      $region27: #{simple_mobilenet_pallas.4} parent=5 // pred_region
        // Predicated region
        $region29: #{simple_mobilenet_pallas.4} parent=27 // pred_check
          %p153 = pneg %p30
        $region30: #{simple_mobilenet_pallas.4} parent=27 // pred_check_branch
          %155 = sbr.rel (%p153) target = $region32
        $region31: #{simple_mobilenet_pallas.4} parent=27 // pred_region
          %s156 = smul.u32 128, %s10
          %s157 = ssub.s32 196, %s156
          %p158 = scmp.lt.s32.totalorder %s157, 128
          %s159 = scalar_select %p158, %s157, 128
          %s160 = smul.u32 64, %s159
          %s161 = smul.u32 %s160, 3
          %p162 = scmp.lt.s32.totalorder %s156, 195
          %s163 = scalar_select %p162, %s156, 195
          %s164 = smul.addr %s163, 3
          %s165 = smul.addr %s164, 4
          %s166 = scalar_lea.vmem %s0, %s165
          %s167 = smul.u32 128, %s10
          %s168 = ssub.s32 196, %s167
          %p169 = scmp.lt.s32.totalorder %s168, 128
          %s170 = scalar_select %p169, %s168, 128
          %s171 = smul.u32 64, %s170
          %s172 = smul.u32 %s171, 3
        $region32: #{simple_mobilenet_pallas.4} parent=27 // pred_fallthru
          _
      $region28: #{simple_mobilenet_pallas.4} parent=5 // pred_fallthru
        _
      %p173 = scmp.le.s32.totalorder 1, %s10
      %p174 = scmp.lt.s32.totalorder %s10, 3
      %p175 = pnand %p173, %p174
      %p176 = pneg %p175
      // Predicated region
      $region33: #{simple_mobilenet_pallas.4} parent=5 // pred_check
        _
      $region34: #{simple_mobilenet_pallas.4} parent=5 // pred_check_branch
        %178 = sbr.rel (%p175) target = $region36
      $region35: #{simple_mobilenet_pallas.4} parent=5 // pred_region
        %s179 = ssub.s32 %s10, 1
        %s180 = smul.u32 128, %s15
        %s181 = ssub.s32 196, %s180
        %p182 = scmp.lt.s32.totalorder %s181, 128
        %s183 = scalar_select %p182, %s181, 128
        %s184 = smul.u32 64, %s183
        %s185 = smul.u32 %s184, 3
        %p186 = scmp.lt.s32.totalorder %s180, 195
        %s187 = scalar_select %p186, %s180, 195
        %s188 = smul.addr %s187, 3
        %s189 = smul.addr %s188, 4
        %s190 = scalar_lea.vmem %s0, %s189
        %p191 = pneg %p36
        %p192 = pneg %p33
        %p193 = pneg %p57
        %p194 = pneg %p54
        %p195 = pneg %p78
        %p196 = pneg %p75
        %p197 = pneg %p99
        %p198 = pneg %p96
        %p199 = pneg %p125
        %p200 = pneg %p122
        %s201 = sand.u32 %s112, 1
        %s202 = sand.u32 %s112, 1
        %s203 = smul.addr %s202, 512
        %s204 = scalar_lea.vmem [#allocation2], %s203
        %s205 = smul.u32 128, %s15
        %s206 = ssub.s32 196, %s205
        %p207 = scmp.lt.s32.totalorder %s206, 128
        %s208 = scalar_select %p207, %s206, 128
        %s209 = smul.u32 64, %s208
        %s210 = smul.u32 %s209, 3
        %p211 = scmp.lt.s32.totalorder %s205, 195
        %s212 = scalar_select %p211, %s205, 195
        %s213 = smul.addr %s212, 3
        %s214 = smul.addr %s213, 4
        %s215 = scalar_lea.vmem %s0, %s214
        %s216 = smul.u32 128, %s15
        %s217 = ssub.s32 196, %s216
        %p218 = scmp.lt.s32.totalorder %s217, 128
        %s219 = scalar_select %p218, %s217, 128
        %s220 = smul.u32 64, %s219
        %s221 = smul.u32 %s220, 3
        %s222 = smul.u32 128, %s15
        %s223 = ssub.s32 196, %s222
        %p224 = scmp.lt.s32.totalorder %s223, 128
        %s225 = scalar_select %p224, %s223, 128
        %s226 = smul.u32 64, %s225
        %v228 = vld [vmem:[%s215] sm:$0xff]
        %v229 = vld [vmem:[%s215 + $0x8] sm:$0xf]
        %v230 = vld [vmem:[%s215 + $0xc] sm:$0xff]
        %v231 = vld [vmem:[%s215 + $0x14] sm:$0xf]
        %v232 = vld [vmem:[%s215 + $0x18] sm:$0xff]
        %v233 = vld [vmem:[%s215 + $0x20] sm:$0xf]
        %v234 = vld [vmem:[%s215 + $0x24] sm:$0xff]
        %v235 = vld [vmem:[%s215 + $0x2c] sm:$0xf]
        %v236 = vld [vmem:[%s215 + $0x30] sm:$0xff]
        %v237 = vld [vmem:[%s215 + $0x38] sm:$0xf]
        %v238 = vld [vmem:[%s215 + $0x3c] sm:$0xff]
        %v239 = vld [vmem:[%s215 + $0x44] sm:$0xf]
        %v240 = vld [vmem:[%s215 + $0x48] sm:$0xff]
        %v241 = vld [vmem:[%s215 + $0x50] sm:$0xf]
        %v242 = vld [vmem:[%s215 + $0x54] sm:$0xff]
        %v243 = vld [vmem:[%s215 + $0x5c] sm:$0xf]
        %v244 = vld [vmem:[%s215 + $0x60] sm:$0xff]
        %v245 = vld [vmem:[%s215 + $0x68] sm:$0xf]
        %v246 = vld [vmem:[%s215 + $0x6c] sm:$0xff]
        %v247 = vld [vmem:[%s215 + $0x74] sm:$0xf]
        %v248 = vld [vmem:[%s215 + $0x78] sm:$0xff]
        %v249 = vld [vmem:[%s215 + $0x80] sm:$0xf]
        %v250 = vld [vmem:[%s215 + $0x84] sm:$0xff]
        %v251 = vld [vmem:[%s215 + $0x8c] sm:$0xf]
        %v252 = vld [vmem:[%s215 + $0x90] sm:$0xff]
        %v253 = vld [vmem:[%s215 + $0x98] sm:$0xf]
        %v254 = vld [vmem:[%s215 + $0x9c] sm:$0xff]
        %v255 = vld [vmem:[%s215 + $0xa4] sm:$0xf]
        %v256 = vld [vmem:[%s215 + $0xa8] sm:$0xff]
        %v257 = vld [vmem:[%s215 + $0xb0] sm:$0xf]
        %v258 = vld [vmem:[%s215 + $0xb4] sm:$0xff]
        %v259 = vld [vmem:[%s215 + $0xbc] sm:$0xf]
        %v260 = vld [vmem:[%s215 + $0xc0] sm:$0xff]
        %v261 = vld [vmem:[%s215 + $0xc8] sm:$0xf]
        %v262 = vld [vmem:[%s215 + $0xcc] sm:$0xff]
        %v263 = vld [vmem:[%s215 + $0xd4] sm:$0xf]
        %v264 = vld [vmem:[%s215 + $0xd8] sm:$0xff]
        %v265 = vld [vmem:[%s215 + $0xe0] sm:$0xf]
        %v266 = vld [vmem:[%s215 + $0xe4] sm:$0xff]
        %v267 = vld [vmem:[%s215 + $0xec] sm:$0xf]
        %v268 = vld [vmem:[%s215 + $0xf0] sm:$0xff]
        %v269 = vld [vmem:[%s215 + $0xf8] sm:$0xf]
        %v270 = vld [vmem:[%s215 + $0xfc] sm:$0xff]
        %v271 = vld [vmem:[%s215 + $0x104] sm:$0xf]
        %v272 = vld [vmem:[%s215 + $0x108] sm:$0xff]
        %v273 = vld [vmem:[%s215 + $0x110] sm:$0xf]
        %v274 = vld [vmem:[%s215 + $0x114] sm:$0xff]
        %v275 = vld [vmem:[%s215 + $0x11c] sm:$0xf]
        %v276 = vld [vmem:[%s215 + $0x120] sm:$0xff]
        %v277 = vld [vmem:[%s215 + $0x128] sm:$0xf]
        %v278 = vld [vmem:[%s215 + $0x12c] sm:$0xff]
        %v279 = vld [vmem:[%s215 + $0x134] sm:$0xf]
        %v280 = vld [vmem:[%s215 + $0x138] sm:$0xff]
        %v281 = vld [vmem:[%s215 + $0x140] sm:$0xf]
        %v282 = vld [vmem:[%s215 + $0x144] sm:$0xff]
        %v283 = vld [vmem:[%s215 + $0x14c] sm:$0xf]
        %v284 = vld [vmem:[%s215 + $0x150] sm:$0xff]
        %v285 = vld [vmem:[%s215 + $0x158] sm:$0xf]
        %v286 = vld [vmem:[%s215 + $0x15c] sm:$0xff]
        %v287 = vld [vmem:[%s215 + $0x164] sm:$0xf]
        %v288 = vld [vmem:[%s215 + $0x168] sm:$0xff]
        %v289 = vld [vmem:[%s215 + $0x170] sm:$0xf]
        %v290 = vld [vmem:[%s215 + $0x174] sm:$0xff]
        %v291 = vld [vmem:[%s215 + $0x17c] sm:$0xf]
        %v292 = vld [vmem:[%s215 + $0x180] sm:$0xff]
        %v293 = vld [vmem:[%s215 + $0x188] sm:$0xf]
        %v294 = vld [vmem:[%s215 + $0x18c] sm:$0xff]
        %v295 = vld [vmem:[%s215 + $0x194] sm:$0xf]
        %v296 = vld [vmem:[%s215 + $0x198] sm:$0xff]
        %v297 = vld [vmem:[%s215 + $0x1a0] sm:$0xf]
        %v298 = vld [vmem:[%s215 + $0x1a4] sm:$0xff]
        %v299 = vld [vmem:[%s215 + $0x1ac] sm:$0xf]
        %v300 = vld [vmem:[%s215 + $0x1b0] sm:$0xff]
        %v301 = vld [vmem:[%s215 + $0x1b8] sm:$0xf]
        %v302 = vld [vmem:[%s215 + $0x1bc] sm:$0xff]
        %v303 = vld [vmem:[%s215 + $0x1c4] sm:$0xf]
        %v304 = vld [vmem:[%s215 + $0x1c8] sm:$0xff]
        %v305 = vld [vmem:[%s215 + $0x1d0] sm:$0xf]
        %v306 = vld [vmem:[%s215 + $0x1d4] sm:$0xff]
        %v307 = vld [vmem:[%s215 + $0x1dc] sm:$0xf]
        %v308 = vld [vmem:[%s215 + $0x1e0] sm:$0xff]
        %v309 = vld [vmem:[%s215 + $0x1e8] sm:$0xf]
        %v310 = vld [vmem:[%s215 + $0x1ec] sm:$0xff]
        %v311 = vld [vmem:[%s215 + $0x1f4] sm:$0xf]
        %v312 = vld [vmem:[%s215 + $0x1f8] sm:$0xff]
        %v313 = vld [vmem:[%s215 + $0x200] sm:$0xf]
        %v314 = vld [vmem:[%s215 + $0x204] sm:$0xff]
        %v315 = vld [vmem:[%s215 + $0x20c] sm:$0xf]
        %v316 = vld [vmem:[%s215 + $0x210] sm:$0xff]
        %v317 = vld [vmem:[%s215 + $0x218] sm:$0xf]
        %v318 = vld [vmem:[%s215 + $0x21c] sm:$0xff]
        %v319 = vld [vmem:[%s215 + $0x224] sm:$0xf]
        %v320 = vld [vmem:[%s215 + $0x228] sm:$0xff]
        %v321 = vld [vmem:[%s215 + $0x230] sm:$0xf]
        %v322 = vld [vmem:[%s215 + $0x234] sm:$0xff]
        %v323 = vld [vmem:[%s215 + $0x23c] sm:$0xf]
        %v324 = vld [vmem:[%s215 + $0x240] sm:$0xff]
        %v325 = vld [vmem:[%s215 + $0x248] sm:$0xf]
        %v326 = vld [vmem:[%s215 + $0x24c] sm:$0xff]
        %v327 = vld [vmem:[%s215 + $0x254] sm:$0xf]
        %v328 = vld [vmem:[%s215 + $0x258] sm:$0xff]
        %v329 = vld [vmem:[%s215 + $0x260] sm:$0xf]
        %v330 = vld [vmem:[%s215 + $0x264] sm:$0xff]
        %v331 = vld [vmem:[%s215 + $0x26c] sm:$0xf]
        %v332 = vld [vmem:[%s215 + $0x270] sm:$0xff]
        %v333 = vld [vmem:[%s215 + $0x278] sm:$0xf]
        %v334 = vld [vmem:[%s215 + $0x27c] sm:$0xff]
        %v335 = vld [vmem:[%s215 + $0x284] sm:$0xf]
        %v336 = vld [vmem:[%s215 + $0x288] sm:$0xff]
        %v337 = vld [vmem:[%s215 + $0x290] sm:$0xf]
        %v338 = vld [vmem:[%s215 + $0x294] sm:$0xff]
        %v339 = vld [vmem:[%s215 + $0x29c] sm:$0xf]
        %v340 = vld [vmem:[%s215 + $0x2a0] sm:$0xff]
        %v341 = vld [vmem:[%s215 + $0x2a8] sm:$0xf]
        %v342 = vld [vmem:[%s215 + $0x2ac] sm:$0xff]
        %v343 = vld [vmem:[%s215 + $0x2b4] sm:$0xf]
        %v344 = vld [vmem:[%s215 + $0x2b8] sm:$0xff]
        %v345 = vld [vmem:[%s215 + $0x2c0] sm:$0xf]
        %v346 = vld [vmem:[%s215 + $0x2c4] sm:$0xff]
        %v347 = vld [vmem:[%s215 + $0x2cc] sm:$0xf]
        %v348 = vld [vmem:[%s215 + $0x2d0] sm:$0xff]
        %v349 = vld [vmem:[%s215 + $0x2d8] sm:$0xf]
        %v350 = vld [vmem:[%s215 + $0x2dc] sm:$0xff]
        %v351 = vld [vmem:[%s215 + $0x2e4] sm:$0xf]
        %v352 = vld [vmem:[%s215 + $0x2e8] sm:$0xff]
        %v353 = vld [vmem:[%s215 + $0x2f0] sm:$0xf]
        %v354 = vld [vmem:[%s215 + $0x2f4] sm:$0xff]
        %v355 = vld [vmem:[%s215 + $0x2fc] sm:$0xf]
        %v356 = vld [vmem:[%s215 + $0x300] sm:$0xff]
        %v357 = vld [vmem:[%s215 + $0x308] sm:$0xf]
        %v358 = vld [vmem:[%s215 + $0x30c] sm:$0xff]
        %v359 = vld [vmem:[%s215 + $0x314] sm:$0xf]
        %v360 = vld [vmem:[%s215 + $0x318] sm:$0xff]
        %v361 = vld [vmem:[%s215 + $0x320] sm:$0xf]
        %v362 = vld [vmem:[%s215 + $0x324] sm:$0xff]
        %v363 = vld [vmem:[%s215 + $0x32c] sm:$0xf]
        %v364 = vld [vmem:[%s215 + $0x330] sm:$0xff]
        %v365 = vld [vmem:[%s215 + $0x338] sm:$0xf]
        %v366 = vld [vmem:[%s215 + $0x33c] sm:$0xff]
        %v367 = vld [vmem:[%s215 + $0x344] sm:$0xf]
        %v368 = vld [vmem:[%s215 + $0x348] sm:$0xff]
        %v369 = vld [vmem:[%s215 + $0x350] sm:$0xf]
        %v370 = vld [vmem:[%s215 + $0x354] sm:$0xff]
        %v371 = vld [vmem:[%s215 + $0x35c] sm:$0xf]
        %v372 = vld [vmem:[%s215 + $0x360] sm:$0xff]
        %v373 = vld [vmem:[%s215 + $0x368] sm:$0xf]
        %v374 = vld [vmem:[%s215 + $0x36c] sm:$0xff]
        %v375 = vld [vmem:[%s215 + $0x374] sm:$0xf]
        %v376 = vld [vmem:[%s215 + $0x378] sm:$0xff]
        %v377 = vld [vmem:[%s215 + $0x380] sm:$0xf]
        %v378 = vld [vmem:[%s215 + $0x384] sm:$0xff]
        %v379 = vld [vmem:[%s215 + $0x38c] sm:$0xf]
        %v380 = vld [vmem:[%s215 + $0x390] sm:$0xff]
        %v381 = vld [vmem:[%s215 + $0x398] sm:$0xf]
        %v382 = vld [vmem:[%s215 + $0x39c] sm:$0xff]
        %v383 = vld [vmem:[%s215 + $0x3a4] sm:$0xf]
        %v384 = vld [vmem:[%s215 + $0x3a8] sm:$0xff]
        %v385 = vld [vmem:[%s215 + $0x3b0] sm:$0xf]
        %v386 = vld [vmem:[%s215 + $0x3b4] sm:$0xff]
        %v387 = vld [vmem:[%s215 + $0x3bc] sm:$0xf]
        %v388 = vld [vmem:[%s215 + $0x3c0] sm:$0xff]
        %v389 = vld [vmem:[%s215 + $0x3c8] sm:$0xf]
        %v390 = vld [vmem:[%s215 + $0x3cc] sm:$0xff]
        %v391 = vld [vmem:[%s215 + $0x3d4] sm:$0xf]
        %v392 = vld [vmem:[%s215 + $0x3d8] sm:$0xff]
        %v393 = vld [vmem:[%s215 + $0x3e0] sm:$0xf]
        %v394 = vld [vmem:[%s215 + $0x3e4] sm:$0xff]
        %v395 = vld [vmem:[%s215 + $0x3ec] sm:$0xf]
        %v396 = vld [vmem:[%s215 + $0x3f0] sm:$0xff]
        %v397 = vld [vmem:[%s215 + $0x3f8] sm:$0xf]
        %v398 = vld [vmem:[%s215 + $0x3fc] sm:$0xff]
        %v399 = vld [vmem:[%s215 + $0x404] sm:$0xf]
        %v400 = vld [vmem:[%s215 + $0x408] sm:$0xff]
        %v401 = vld [vmem:[%s215 + $0x410] sm:$0xf]
        %v402 = vld [vmem:[%s215 + $0x414] sm:$0xff]
        %v403 = vld [vmem:[%s215 + $0x41c] sm:$0xf]
        %v404 = vld [vmem:[%s215 + $0x420] sm:$0xff]
        %v405 = vld [vmem:[%s215 + $0x428] sm:$0xf]
        %v406 = vld [vmem:[%s215 + $0x42c] sm:$0xff]
        %v407 = vld [vmem:[%s215 + $0x434] sm:$0xf]
        %v408 = vld [vmem:[%s215 + $0x438] sm:$0xff]
        %v409 = vld [vmem:[%s215 + $0x440] sm:$0xf]
        %v410 = vld [vmem:[%s215 + $0x444] sm:$0xff]
        %v411 = vld [vmem:[%s215 + $0x44c] sm:$0xf]
        %v412 = vld [vmem:[%s215 + $0x450] sm:$0xff]
        %v413 = vld [vmem:[%s215 + $0x458] sm:$0xf]
        %v414 = vld [vmem:[%s215 + $0x45c] sm:$0xff]
        %v415 = vld [vmem:[%s215 + $0x464] sm:$0xf]
        %v416 = vld [vmem:[%s215 + $0x468] sm:$0xff]
        %v417 = vld [vmem:[%s215 + $0x470] sm:$0xf]
        %v418 = vld [vmem:[%s215 + $0x474] sm:$0xff]
        %v419 = vld [vmem:[%s215 + $0x47c] sm:$0xf]
        %v420 = vld [vmem:[%s215 + $0x480] sm:$0xff]
        %v421 = vld [vmem:[%s215 + $0x488] sm:$0xf]
        %v422 = vld [vmem:[%s215 + $0x48c] sm:$0xff]
        %v423 = vld [vmem:[%s215 + $0x494] sm:$0xf]
        %v424 = vld [vmem:[%s215 + $0x498] sm:$0xff]
        %v425 = vld [vmem:[%s215 + $0x4a0] sm:$0xf]
        %v426 = vld [vmem:[%s215 + $0x4a4] sm:$0xff]
        %v427 = vld [vmem:[%s215 + $0x4ac] sm:$0xf]
        %v428 = vld [vmem:[%s215 + $0x4b0] sm:$0xff]
        %v429 = vld [vmem:[%s215 + $0x4b8] sm:$0xf]
        %v430 = vld [vmem:[%s215 + $0x4bc] sm:$0xff]
        %v431 = vld [vmem:[%s215 + $0x4c4] sm:$0xf]
        %v432 = vld [vmem:[%s215 + $0x4c8] sm:$0xff]
        %v433 = vld [vmem:[%s215 + $0x4d0] sm:$0xf]
        %v434 = vld [vmem:[%s215 + $0x4d4] sm:$0xff]
        %v435 = vld [vmem:[%s215 + $0x4dc] sm:$0xf]
        %v436 = vld [vmem:[%s215 + $0x4e0] sm:$0xff]
        %v437 = vld [vmem:[%s215 + $0x4e8] sm:$0xf]
        %v438 = vld [vmem:[%s215 + $0x4ec] sm:$0xff]
        %v439 = vld [vmem:[%s215 + $0x4f4] sm:$0xf]
        %v440 = vld [vmem:[%s215 + $0x4f8] sm:$0xff]
        %v441 = vld [vmem:[%s215 + $0x500] sm:$0xf]
        %v442 = vld [vmem:[%s215 + $0x504] sm:$0xff]
        %v443 = vld [vmem:[%s215 + $0x50c] sm:$0xf]
        %v444 = vld [vmem:[%s215 + $0x510] sm:$0xff]
        %v445 = vld [vmem:[%s215 + $0x518] sm:$0xf]
        %v446 = vld [vmem:[%s215 + $0x51c] sm:$0xff]
        %v447 = vld [vmem:[%s215 + $0x524] sm:$0xf]
        %v448 = vld [vmem:[%s215 + $0x528] sm:$0xff]
        %v449 = vld [vmem:[%s215 + $0x530] sm:$0xf]
        %v450 = vld [vmem:[%s215 + $0x534] sm:$0xff]
        %v451 = vld [vmem:[%s215 + $0x53c] sm:$0xf]
        %v452 = vld [vmem:[%s215 + $0x540] sm:$0xff]
        %v453 = vld [vmem:[%s215 + $0x548] sm:$0xf]
        %v454 = vld [vmem:[%s215 + $0x54c] sm:$0xff]
        %v455 = vld [vmem:[%s215 + $0x554] sm:$0xf]
        %v456 = vld [vmem:[%s215 + $0x558] sm:$0xff]
        %v457 = vld [vmem:[%s215 + $0x560] sm:$0xf]
        %v458 = vld [vmem:[%s215 + $0x564] sm:$0xff]
        %v459 = vld [vmem:[%s215 + $0x56c] sm:$0xf]
        %v460 = vld [vmem:[%s215 + $0x570] sm:$0xff]
        %v461 = vld [vmem:[%s215 + $0x578] sm:$0xf]
        %v462 = vld [vmem:[%s215 + $0x57c] sm:$0xff]
        %v463 = vld [vmem:[%s215 + $0x584] sm:$0xf]
        %v464 = vld [vmem:[%s215 + $0x588] sm:$0xff]
        %v465 = vld [vmem:[%s215 + $0x590] sm:$0xf]
        %v466 = vld [vmem:[%s215 + $0x594] sm:$0xff]
        %v467 = vld [vmem:[%s215 + $0x59c] sm:$0xf]
        %v468 = vld [vmem:[%s215 + $0x5a0] sm:$0xff]
        %v469 = vld [vmem:[%s215 + $0x5a8] sm:$0xf]
        %v470 = vld [vmem:[%s215 + $0x5ac] sm:$0xff]
        %v471 = vld [vmem:[%s215 + $0x5b4] sm:$0xf]
        %v472 = vld [vmem:[%s215 + $0x5b8] sm:$0xff]
        %v473 = vld [vmem:[%s215 + $0x5c0] sm:$0xf]
        %v474 = vld [vmem:[%s215 + $0x5c4] sm:$0xff]
        %v475 = vld [vmem:[%s215 + $0x5cc] sm:$0xf]
        %v476 = vld [vmem:[%s215 + $0x5d0] sm:$0xff]
        %v477 = vld [vmem:[%s215 + $0x5d8] sm:$0xf]
        %v478 = vld [vmem:[%s215 + $0x5dc] sm:$0xff]
        %v479 = vld [vmem:[%s215 + $0x5e4] sm:$0xf]
        %v480 = vld [vmem:[%s215 + $0x5e8] sm:$0xff]
        %v481 = vld [vmem:[%s215 + $0x5f0] sm:$0xf]
        %v482 = vld [vmem:[%s215 + $0x5f4] sm:$0xff]
        %v483 = vld [vmem:[%s215 + $0x5fc] sm:$0xf]
        %v484 = vld [vmem:[%s1] sm:$0xf]
        %v485 = vld [vmem:[%s1 + $0x4] sm:$0xf]
        %v486 = vld [vmem:[%s1 + $0x8] sm:$0xf]
        %v487 = vld [vmem:[%s1 + $0xc] sm:$0xf]
        %v488 = vld [vmem:[%s1 + $0x10] sm:$0xf]
        %v489 = vld [vmem:[%s1 + $0x14] sm:$0xf]
        %v490 = vld [vmem:[%s1 + $0x18] sm:$0xf]
        %v491 = vld [vmem:[%s1 + $0x1c] sm:$0xf]
        %v492 = vld [vmem:[%s1 + $0x20] sm:$0xf]
        %v493 = vld [vmem:[%s1 + $0x24] sm:$0xf]
        %v494 = vld [vmem:[%s1 + $0x28] sm:$0xf]
        %v495 = vld [vmem:[%s1 + $0x2c] sm:$0xf]
        %v496 = vld [vmem:[%s1 + $0x30] sm:$0xf]
        %v497 = vld [vmem:[%s1 + $0x34] sm:$0xf]
        %v498 = vld [vmem:[%s1 + $0x38] sm:$0xf]
        %v499 = vld [vmem:[%s1 + $0x3c] sm:$0xf]
        %v500 = vld [vmem:[%s1 + $0x40] sm:$0xf]
        %v501 = vld [vmem:[%s1 + $0x44] sm:$0xf]
        %v502 = vld [vmem:[%s1 + $0x48] sm:$0xf]
        %v503 = vld [vmem:[%s1 + $0x4c] sm:$0xf]
        %v504 = vld [vmem:[%s1 + $0x50] sm:$0xf]
        %v505 = vld [vmem:[%s1 + $0x54] sm:$0xf]
        %v506 = vld [vmem:[%s1 + $0x58] sm:$0xf]
        %v507 = vld [vmem:[%s1 + $0x5c] sm:$0xf]
        %v508 = vld [vmem:[%s1 + $0x60] sm:$0xf]
        %v509 = vld [vmem:[%s1 + $0x64] sm:$0xf]
        %v510 = vld [vmem:[%s1 + $0x68] sm:$0xf]
        %v511 = vld [vmem:[%s1 + $0x6c] sm:$0xf]
        %v512 = vld [vmem:[%s1 + $0x70] sm:$0xf]
        %v513 = vld [vmem:[%s1 + $0x74] sm:$0xf]
        %v514 = vld [vmem:[%s1 + $0x78] sm:$0xf]
        %v515 = vld [vmem:[%s1 + $0x7c] sm:$0xf]
        %v516 = vld [vmem:[%s1 + $0x80] sm:$0xf]
        %v517 = vld [vmem:[%s1 + $0x84] sm:$0xf]
        %v518 = vld [vmem:[%s1 + $0x88] sm:$0xf]
        %v519 = vld [vmem:[%s1 + $0x8c] sm:$0xf]
        %v776 = vunpack.c.l.b16 %v228
        %v777 = vunpack.c.h.b16 %v228
        %v778 = vunpack.c.l.b16 %v229
        %v779 = vunpack.c.l.b16 %v230
        %v780 = vunpack.c.h.b16 %v230
        %v781 = vunpack.c.l.b16 %v231
        %v782 = vunpack.c.l.b16 %v232
        %v783 = vunpack.c.h.b16 %v232
        %v784 = vunpack.c.l.b16 %v233
        %v785 = vunpack.c.l.b16 %v234
        %v786 = vunpack.c.h.b16 %v234
        %v787 = vunpack.c.l.b16 %v235
        %v788 = vunpack.c.l.b16 %v236
        %v789 = vunpack.c.h.b16 %v236
        %v790 = vunpack.c.l.b16 %v237
        %v791 = vunpack.c.l.b16 %v238
        %v792 = vunpack.c.h.b16 %v238
        %v793 = vunpack.c.l.b16 %v239
        %v794 = vunpack.c.l.b16 %v240
        %v795 = vunpack.c.h.b16 %v240
        %v796 = vunpack.c.l.b16 %v241
        %v797 = vunpack.c.l.b16 %v242
        %v798 = vunpack.c.h.b16 %v242
        %v799 = vunpack.c.l.b16 %v243
        %v800 = vunpack.c.l.b16 %v244
        %v801 = vunpack.c.h.b16 %v244
        %v802 = vunpack.c.l.b16 %v245
        %v803 = vunpack.c.l.b16 %v246
        %v804 = vunpack.c.h.b16 %v246
        %v805 = vunpack.c.l.b16 %v247
        %v806 = vunpack.c.l.b16 %v248
        %v807 = vunpack.c.h.b16 %v248
        %v808 = vunpack.c.l.b16 %v249
        %v809 = vunpack.c.l.b16 %v250
        %v810 = vunpack.c.h.b16 %v250
        %v811 = vunpack.c.l.b16 %v251
        %v812 = vunpack.c.l.b16 %v252
        %v813 = vunpack.c.h.b16 %v252
        %v814 = vunpack.c.l.b16 %v253
        %v815 = vunpack.c.l.b16 %v254
        %v816 = vunpack.c.h.b16 %v254
        %v817 = vunpack.c.l.b16 %v255
        %v818 = vunpack.c.l.b16 %v256
        %v819 = vunpack.c.h.b16 %v256
        %v820 = vunpack.c.l.b16 %v257
        %v821 = vunpack.c.l.b16 %v258
        %v822 = vunpack.c.h.b16 %v258
        %v823 = vunpack.c.l.b16 %v259
        %v824 = vunpack.c.l.b16 %v260
        %v825 = vunpack.c.h.b16 %v260
        %v826 = vunpack.c.l.b16 %v261
        %v827 = vunpack.c.l.b16 %v262
        %v828 = vunpack.c.h.b16 %v262
        %v829 = vunpack.c.l.b16 %v263
        %v830 = vunpack.c.l.b16 %v264
        %v831 = vunpack.c.h.b16 %v264
        %v832 = vunpack.c.l.b16 %v265
        %v833 = vunpack.c.l.b16 %v266
        %v834 = vunpack.c.h.b16 %v266
        %v835 = vunpack.c.l.b16 %v267
        %v836 = vunpack.c.l.b16 %v268
        %v837 = vunpack.c.h.b16 %v268
        %v838 = vunpack.c.l.b16 %v269
        %v839 = vunpack.c.l.b16 %v270
        %v840 = vunpack.c.h.b16 %v270
        %v841 = vunpack.c.l.b16 %v271
        %v842 = vunpack.c.l.b16 %v272
        %v843 = vunpack.c.h.b16 %v272
        %v844 = vunpack.c.l.b16 %v273
        %v845 = vunpack.c.l.b16 %v274
        %v846 = vunpack.c.h.b16 %v274
        %v847 = vunpack.c.l.b16 %v275
        %v848 = vunpack.c.l.b16 %v276
        %v849 = vunpack.c.h.b16 %v276
        %v850 = vunpack.c.l.b16 %v277
        %v851 = vunpack.c.l.b16 %v278
        %v852 = vunpack.c.h.b16 %v278
        %v853 = vunpack.c.l.b16 %v279
        %v854 = vunpack.c.l.b16 %v280
        %v855 = vunpack.c.h.b16 %v280
        %v856 = vunpack.c.l.b16 %v281
        %v857 = vunpack.c.l.b16 %v282
        %v858 = vunpack.c.h.b16 %v282
        %v859 = vunpack.c.l.b16 %v283
        %v860 = vunpack.c.l.b16 %v284
        %v861 = vunpack.c.h.b16 %v284
        %v862 = vunpack.c.l.b16 %v285
        %v863 = vunpack.c.l.b16 %v286
        %v864 = vunpack.c.h.b16 %v286
        %v865 = vunpack.c.l.b16 %v287
        %v866 = vunpack.c.l.b16 %v288
        %v867 = vunpack.c.h.b16 %v288
        %v868 = vunpack.c.l.b16 %v289
        %v869 = vunpack.c.l.b16 %v290
        %v870 = vunpack.c.h.b16 %v290
        %v871 = vunpack.c.l.b16 %v291
        %v872 = vunpack.c.l.b16 %v292
        %v873 = vunpack.c.h.b16 %v292
        %v874 = vunpack.c.l.b16 %v293
        %v875 = vunpack.c.l.b16 %v294
        %v876 = vunpack.c.h.b16 %v294
        %v877 = vunpack.c.l.b16 %v295
        %v878 = vunpack.c.l.b16 %v296
        %v879 = vunpack.c.h.b16 %v296
        %v880 = vunpack.c.l.b16 %v297
        %v881 = vunpack.c.l.b16 %v298
        %v882 = vunpack.c.h.b16 %v298
        %v883 = vunpack.c.l.b16 %v299
        %v884 = vunpack.c.l.b16 %v300
        %v885 = vunpack.c.h.b16 %v300
        %v886 = vunpack.c.l.b16 %v301
        %v887 = vunpack.c.l.b16 %v302
        %v888 = vunpack.c.h.b16 %v302
        %v889 = vunpack.c.l.b16 %v303
        %v890 = vunpack.c.l.b16 %v304
        %v891 = vunpack.c.h.b16 %v304
        %v892 = vunpack.c.l.b16 %v305
        %v893 = vunpack.c.l.b16 %v306
        %v894 = vunpack.c.h.b16 %v306
        %v895 = vunpack.c.l.b16 %v307
        %v896 = vunpack.c.l.b16 %v308
        %v897 = vunpack.c.h.b16 %v308
        %v898 = vunpack.c.l.b16 %v309
        %v899 = vunpack.c.l.b16 %v310
        %v900 = vunpack.c.h.b16 %v310
        %v901 = vunpack.c.l.b16 %v311
        %v902 = vunpack.c.l.b16 %v312
        %v903 = vunpack.c.h.b16 %v312
        %v904 = vunpack.c.l.b16 %v313
        %v905 = vunpack.c.l.b16 %v314
        %v906 = vunpack.c.h.b16 %v314
        %v907 = vunpack.c.l.b16 %v315
        %v908 = vunpack.c.l.b16 %v316
        %v909 = vunpack.c.h.b16 %v316
        %v910 = vunpack.c.l.b16 %v317
        %v911 = vunpack.c.l.b16 %v318
        %v912 = vunpack.c.h.b16 %v318
        %v913 = vunpack.c.l.b16 %v319
        %v914 = vunpack.c.l.b16 %v320
        %v915 = vunpack.c.h.b16 %v320
        %v916 = vunpack.c.l.b16 %v321
        %v917 = vunpack.c.l.b16 %v322
        %v918 = vunpack.c.h.b16 %v322
        %v919 = vunpack.c.l.b16 %v323
        %v920 = vunpack.c.l.b16 %v324
        %v921 = vunpack.c.h.b16 %v324
        %v922 = vunpack.c.l.b16 %v325
        %v923 = vunpack.c.l.b16 %v326
        %v924 = vunpack.c.h.b16 %v326
        %v925 = vunpack.c.l.b16 %v327
        %v926 = vunpack.c.l.b16 %v328
        %v927 = vunpack.c.h.b16 %v328
        %v928 = vunpack.c.l.b16 %v329
        %v929 = vunpack.c.l.b16 %v330
        %v930 = vunpack.c.h.b16 %v330
        %v931 = vunpack.c.l.b16 %v331
        %v932 = vunpack.c.l.b16 %v332
        %v933 = vunpack.c.h.b16 %v332
        %v934 = vunpack.c.l.b16 %v333
        %v935 = vunpack.c.l.b16 %v334
        %v936 = vunpack.c.h.b16 %v334
        %v937 = vunpack.c.l.b16 %v335
        %v938 = vunpack.c.l.b16 %v336
        %v939 = vunpack.c.h.b16 %v336
        %v940 = vunpack.c.l.b16 %v337
        %v941 = vunpack.c.l.b16 %v338
        %v942 = vunpack.c.h.b16 %v338
        %v943 = vunpack.c.l.b16 %v339
        %v944 = vunpack.c.l.b16 %v340
        %v945 = vunpack.c.h.b16 %v340
        %v946 = vunpack.c.l.b16 %v341
        %v947 = vunpack.c.l.b16 %v342
        %v948 = vunpack.c.h.b16 %v342
        %v949 = vunpack.c.l.b16 %v343
        %v950 = vunpack.c.l.b16 %v344
        %v951 = vunpack.c.h.b16 %v344
        %v952 = vunpack.c.l.b16 %v345
        %v953 = vunpack.c.l.b16 %v346
        %v954 = vunpack.c.h.b16 %v346
        %v955 = vunpack.c.l.b16 %v347
        %v956 = vunpack.c.l.b16 %v348
        %v957 = vunpack.c.h.b16 %v348
        %v958 = vunpack.c.l.b16 %v349
        %v959 = vunpack.c.l.b16 %v350
        %v960 = vunpack.c.h.b16 %v350
        %v961 = vunpack.c.l.b16 %v351
        %v962 = vunpack.c.l.b16 %v352
        %v963 = vunpack.c.h.b16 %v352
        %v964 = vunpack.c.l.b16 %v353
        %v965 = vunpack.c.l.b16 %v354
        %v966 = vunpack.c.h.b16 %v354
        %v967 = vunpack.c.l.b16 %v355
        %v968 = vunpack.c.l.b16 %v356
        %v969 = vunpack.c.h.b16 %v356
        %v970 = vunpack.c.l.b16 %v357
        %v971 = vunpack.c.l.b16 %v358
        %v972 = vunpack.c.h.b16 %v358
        %v973 = vunpack.c.l.b16 %v359
        %v974 = vunpack.c.l.b16 %v360
        %v975 = vunpack.c.h.b16 %v360
        %v976 = vunpack.c.l.b16 %v361
        %v977 = vunpack.c.l.b16 %v362
        %v978 = vunpack.c.h.b16 %v362
        %v979 = vunpack.c.l.b16 %v363
        %v980 = vunpack.c.l.b16 %v364
        %v981 = vunpack.c.h.b16 %v364
        %v982 = vunpack.c.l.b16 %v365
        %v983 = vunpack.c.l.b16 %v366
        %v984 = vunpack.c.h.b16 %v366
        %v985 = vunpack.c.l.b16 %v367
        %v986 = vunpack.c.l.b16 %v368
        %v987 = vunpack.c.h.b16 %v368
        %v988 = vunpack.c.l.b16 %v369
        %v989 = vunpack.c.l.b16 %v370
        %v990 = vunpack.c.h.b16 %v370
        %v991 = vunpack.c.l.b16 %v371
        %v992 = vunpack.c.l.b16 %v372
        %v993 = vunpack.c.h.b16 %v372
        %v994 = vunpack.c.l.b16 %v373
        %v995 = vunpack.c.l.b16 %v374
        %v996 = vunpack.c.h.b16 %v374
        %v997 = vunpack.c.l.b16 %v375
        %v998 = vunpack.c.l.b16 %v376
        %v999 = vunpack.c.h.b16 %v376
        %v1000 = vunpack.c.l.b16 %v377
        %v1001 = vunpack.c.l.b16 %v378
        %v1002 = vunpack.c.h.b16 %v378
        %v1003 = vunpack.c.l.b16 %v379
        %v1004 = vunpack.c.l.b16 %v380
        %v1005 = vunpack.c.h.b16 %v380
        %v1006 = vunpack.c.l.b16 %v381
        %v1007 = vunpack.c.l.b16 %v382
        %v1008 = vunpack.c.h.b16 %v382
        %v1009 = vunpack.c.l.b16 %v383
        %v1010 = vunpack.c.l.b16 %v384
        %v1011 = vunpack.c.h.b16 %v384
        %v1012 = vunpack.c.l.b16 %v385
        %v1013 = vunpack.c.l.b16 %v386
        %v1014 = vunpack.c.h.b16 %v386
        %v1015 = vunpack.c.l.b16 %v387
        %v1016 = vunpack.c.l.b16 %v388
        %v1017 = vunpack.c.h.b16 %v388
        %v1018 = vunpack.c.l.b16 %v389
        %v1019 = vunpack.c.l.b16 %v390
        %v1020 = vunpack.c.h.b16 %v390
        %v1021 = vunpack.c.l.b16 %v391
        %v1022 = vunpack.c.l.b16 %v392
        %v1023 = vunpack.c.h.b16 %v392
        %v1024 = vunpack.c.l.b16 %v393
        %v1025 = vunpack.c.l.b16 %v394
        %v1026 = vunpack.c.h.b16 %v394
        %v1027 = vunpack.c.l.b16 %v395
        %v1028 = vunpack.c.l.b16 %v396
        %v1029 = vunpack.c.h.b16 %v396
        %v1030 = vunpack.c.l.b16 %v397
        %v1031 = vunpack.c.l.b16 %v398
        %v1032 = vunpack.c.h.b16 %v398
        %v1033 = vunpack.c.l.b16 %v399
        %v1034 = vunpack.c.l.b16 %v400
        %v1035 = vunpack.c.h.b16 %v400
        %v1036 = vunpack.c.l.b16 %v401
        %v1037 = vunpack.c.l.b16 %v402
        %v1038 = vunpack.c.h.b16 %v402
        %v1039 = vunpack.c.l.b16 %v403
        %v1040 = vunpack.c.l.b16 %v404
        %v1041 = vunpack.c.h.b16 %v404
        %v1042 = vunpack.c.l.b16 %v405
        %v1043 = vunpack.c.l.b16 %v406
        %v1044 = vunpack.c.h.b16 %v406
        %v1045 = vunpack.c.l.b16 %v407
        %v1046 = vunpack.c.l.b16 %v408
        %v1047 = vunpack.c.h.b16 %v408
        %v1048 = vunpack.c.l.b16 %v409
        %v1049 = vunpack.c.l.b16 %v410
        %v1050 = vunpack.c.h.b16 %v410
        %v1051 = vunpack.c.l.b16 %v411
        %v1052 = vunpack.c.l.b16 %v412
        %v1053 = vunpack.c.h.b16 %v412
        %v1054 = vunpack.c.l.b16 %v413
        %v1055 = vunpack.c.l.b16 %v414
        %v1056 = vunpack.c.h.b16 %v414
        %v1057 = vunpack.c.l.b16 %v415
        %v1058 = vunpack.c.l.b16 %v416
        %v1059 = vunpack.c.h.b16 %v416
        %v1060 = vunpack.c.l.b16 %v417
        %v1061 = vunpack.c.l.b16 %v418
        %v1062 = vunpack.c.h.b16 %v418
        %v1063 = vunpack.c.l.b16 %v419
        %v1064 = vunpack.c.l.b16 %v420
        %v1065 = vunpack.c.h.b16 %v420
        %v1066 = vunpack.c.l.b16 %v421
        %v1067 = vunpack.c.l.b16 %v422
        %v1068 = vunpack.c.h.b16 %v422
        %v1069 = vunpack.c.l.b16 %v423
        %v1070 = vunpack.c.l.b16 %v424
        %v1071 = vunpack.c.h.b16 %v424
        %v1072 = vunpack.c.l.b16 %v425
        %v1073 = vunpack.c.l.b16 %v426
        %v1074 = vunpack.c.h.b16 %v426
        %v1075 = vunpack.c.l.b16 %v427
        %v1076 = vunpack.c.l.b16 %v428
        %v1077 = vunpack.c.h.b16 %v428
        %v1078 = vunpack.c.l.b16 %v429
        %v1079 = vunpack.c.l.b16 %v430
        %v1080 = vunpack.c.h.b16 %v430
        %v1081 = vunpack.c.l.b16 %v431
        %v1082 = vunpack.c.l.b16 %v432
        %v1083 = vunpack.c.h.b16 %v432
        %v1084 = vunpack.c.l.b16 %v433
        %v1085 = vunpack.c.l.b16 %v434
        %v1086 = vunpack.c.h.b16 %v434
        %v1087 = vunpack.c.l.b16 %v435
        %v1088 = vunpack.c.l.b16 %v436
        %v1089 = vunpack.c.h.b16 %v436
        %v1090 = vunpack.c.l.b16 %v437
        %v1091 = vunpack.c.l.b16 %v438
        %v1092 = vunpack.c.h.b16 %v438
        %v1093 = vunpack.c.l.b16 %v439
        %v1094 = vunpack.c.l.b16 %v440
        %v1095 = vunpack.c.h.b16 %v440
        %v1096 = vunpack.c.l.b16 %v441
        %v1097 = vunpack.c.l.b16 %v442
        %v1098 = vunpack.c.h.b16 %v442
        %v1099 = vunpack.c.l.b16 %v443
        %v1100 = vunpack.c.l.b16 %v444
        %v1101 = vunpack.c.h.b16 %v444
        %v1102 = vunpack.c.l.b16 %v445
        %v1103 = vunpack.c.l.b16 %v446
        %v1104 = vunpack.c.h.b16 %v446
        %v1105 = vunpack.c.l.b16 %v447
        %v1106 = vunpack.c.l.b16 %v448
        %v1107 = vunpack.c.h.b16 %v448
        %v1108 = vunpack.c.l.b16 %v449
        %v1109 = vunpack.c.l.b16 %v450
        %v1110 = vunpack.c.h.b16 %v450
        %v1111 = vunpack.c.l.b16 %v451
        %v1112 = vunpack.c.l.b16 %v452
        %v1113 = vunpack.c.h.b16 %v452
        %v1114 = vunpack.c.l.b16 %v453
        %v1115 = vunpack.c.l.b16 %v454
        %v1116 = vunpack.c.h.b16 %v454
        %v1117 = vunpack.c.l.b16 %v455
        %v1118 = vunpack.c.l.b16 %v456
        %v1119 = vunpack.c.h.b16 %v456
        %v1120 = vunpack.c.l.b16 %v457
        %v1121 = vunpack.c.l.b16 %v458
        %v1122 = vunpack.c.h.b16 %v458
        %v1123 = vunpack.c.l.b16 %v459
        %v1124 = vunpack.c.l.b16 %v460
        %v1125 = vunpack.c.h.b16 %v460
        %v1126 = vunpack.c.l.b16 %v461
        %v1127 = vunpack.c.l.b16 %v462
        %v1128 = vunpack.c.h.b16 %v462
        %v1129 = vunpack.c.l.b16 %v463
        %v1130 = vunpack.c.l.b16 %v464
        %v1131 = vunpack.c.h.b16 %v464
        %v1132 = vunpack.c.l.b16 %v465
        %v1133 = vunpack.c.l.b16 %v466
        %v1134 = vunpack.c.h.b16 %v466
        %v1135 = vunpack.c.l.b16 %v467
        %v1136 = vunpack.c.l.b16 %v468
        %v1137 = vunpack.c.h.b16 %v468
        %v1138 = vunpack.c.l.b16 %v469
        %v1139 = vunpack.c.l.b16 %v470
        %v1140 = vunpack.c.h.b16 %v470
        %v1141 = vunpack.c.l.b16 %v471
        %v1142 = vunpack.c.l.b16 %v472
        %v1143 = vunpack.c.h.b16 %v472
        %v1144 = vunpack.c.l.b16 %v473
        %v1145 = vunpack.c.l.b16 %v474
        %v1146 = vunpack.c.h.b16 %v474
        %v1147 = vunpack.c.l.b16 %v475
        %v1148 = vunpack.c.l.b16 %v476
        %v1149 = vunpack.c.h.b16 %v476
        %v1150 = vunpack.c.l.b16 %v477
        %v1151 = vunpack.c.l.b16 %v478
        %v1152 = vunpack.c.h.b16 %v478
        %v1153 = vunpack.c.l.b16 %v479
        %v1154 = vunpack.c.l.b16 %v480
        %v1155 = vunpack.c.h.b16 %v480
        %v1156 = vunpack.c.l.b16 %v481
        %v1157 = vunpack.c.l.b16 %v482
        %v1158 = vunpack.c.h.b16 %v482
        %v1159 = vunpack.c.l.b16 %v483
        %v1160 = vpack.c.b16 %v779, %v776
        %v1161 = vpack.c.b16 %v780, %v777
        %v1162 = vpack.c.b16 %v781, %v778
        %v1163 = vpack.c.b16 %v785, %v782
        %v1164 = vpack.c.b16 %v786, %v783
        %v1165 = vpack.c.b16 %v787, %v784
        %v1166 = vpack.c.b16 %v791, %v788
        %v1167 = vpack.c.b16 %v792, %v789
        %v1168 = vpack.c.b16 %v793, %v790
        %v1169 = vpack.c.b16 %v797, %v794
        %v1170 = vpack.c.b16 %v798, %v795
        %v1171 = vpack.c.b16 %v799, %v796
        %v1172 = vpack.c.b16 %v803, %v800
        %v1173 = vpack.c.b16 %v804, %v801
        %v1174 = vpack.c.b16 %v805, %v802
        %v1175 = vpack.c.b16 %v809, %v806
        %v1176 = vpack.c.b16 %v810, %v807
        %v1177 = vpack.c.b16 %v811, %v808
        %v1178 = vpack.c.b16 %v815, %v812
        %v1179 = vpack.c.b16 %v816, %v813
        %v1180 = vpack.c.b16 %v817, %v814
        %v1181 = vpack.c.b16 %v821, %v818
        %v1182 = vpack.c.b16 %v822, %v819
        %v1183 = vpack.c.b16 %v823, %v820
        %v1184 = vpack.c.b16 %v827, %v824
        %v1185 = vpack.c.b16 %v828, %v825
        %v1186 = vpack.c.b16 %v829, %v826
        %v1187 = vpack.c.b16 %v833, %v830
        %v1188 = vpack.c.b16 %v834, %v831
        %v1189 = vpack.c.b16 %v835, %v832
        %v1190 = vpack.c.b16 %v839, %v836
        %v1191 = vpack.c.b16 %v840, %v837
        %v1192 = vpack.c.b16 %v841, %v838
        %v1193 = vpack.c.b16 %v845, %v842
        %v1194 = vpack.c.b16 %v846, %v843
        %v1195 = vpack.c.b16 %v847, %v844
        %v1196 = vpack.c.b16 %v851, %v848
        %v1197 = vpack.c.b16 %v852, %v849
        %v1198 = vpack.c.b16 %v853, %v850
        %v1199 = vpack.c.b16 %v857, %v854
        %v1200 = vpack.c.b16 %v858, %v855
        %v1201 = vpack.c.b16 %v859, %v856
        %v1202 = vpack.c.b16 %v863, %v860
        %v1203 = vpack.c.b16 %v864, %v861
        %v1204 = vpack.c.b16 %v865, %v862
        %v1205 = vpack.c.b16 %v869, %v866
        %v1206 = vpack.c.b16 %v870, %v867
        %v1207 = vpack.c.b16 %v871, %v868
        %v1208 = vpack.c.b16 %v875, %v872
        %v1209 = vpack.c.b16 %v876, %v873
        %v1210 = vpack.c.b16 %v877, %v874
        %v1211 = vpack.c.b16 %v881, %v878
        %v1212 = vpack.c.b16 %v882, %v879
        %v1213 = vpack.c.b16 %v883, %v880
        %v1214 = vpack.c.b16 %v887, %v884
        %v1215 = vpack.c.b16 %v888, %v885
        %v1216 = vpack.c.b16 %v889, %v886
        %v1217 = vpack.c.b16 %v893, %v890
        %v1218 = vpack.c.b16 %v894, %v891
        %v1219 = vpack.c.b16 %v895, %v892
        %v1220 = vpack.c.b16 %v899, %v896
        %v1221 = vpack.c.b16 %v900, %v897
        %v1222 = vpack.c.b16 %v901, %v898
        %v1223 = vpack.c.b16 %v905, %v902
        %v1224 = vpack.c.b16 %v906, %v903
        %v1225 = vpack.c.b16 %v907, %v904
        %v1226 = vpack.c.b16 %v911, %v908
        %v1227 = vpack.c.b16 %v912, %v909
        %v1228 = vpack.c.b16 %v913, %v910
        %v1229 = vpack.c.b16 %v917, %v914
        %v1230 = vpack.c.b16 %v918, %v915
        %v1231 = vpack.c.b16 %v919, %v916
        %v1232 = vpack.c.b16 %v923, %v920
        %v1233 = vpack.c.b16 %v924, %v921
        %v1234 = vpack.c.b16 %v925, %v922
        %v1235 = vpack.c.b16 %v929, %v926
        %v1236 = vpack.c.b16 %v930, %v927
        %v1237 = vpack.c.b16 %v931, %v928
        %v1238 = vpack.c.b16 %v935, %v932
        %v1239 = vpack.c.b16 %v936, %v933
        %v1240 = vpack.c.b16 %v937, %v934
        %v1241 = vpack.c.b16 %v941, %v938
        %v1242 = vpack.c.b16 %v942, %v939
        %v1243 = vpack.c.b16 %v943, %v940
        %v1244 = vpack.c.b16 %v947, %v944
        %v1245 = vpack.c.b16 %v948, %v945
        %v1246 = vpack.c.b16 %v949, %v946
        %v1247 = vpack.c.b16 %v953, %v950
        %v1248 = vpack.c.b16 %v954, %v951
        %v1249 = vpack.c.b16 %v955, %v952
        %v1250 = vpack.c.b16 %v959, %v956
        %v1251 = vpack.c.b16 %v960, %v957
        %v1252 = vpack.c.b16 %v961, %v958
        %v1253 = vpack.c.b16 %v965, %v962
        %v1254 = vpack.c.b16 %v966, %v963
        %v1255 = vpack.c.b16 %v967, %v964
        %v1256 = vpack.c.b16 %v971, %v968
        %v1257 = vpack.c.b16 %v972, %v969
        %v1258 = vpack.c.b16 %v973, %v970
        %v1259 = vpack.c.b16 %v977, %v974
        %v1260 = vpack.c.b16 %v978, %v975
        %v1261 = vpack.c.b16 %v979, %v976
        %v1262 = vpack.c.b16 %v983, %v980
        %v1263 = vpack.c.b16 %v984, %v981
        %v1264 = vpack.c.b16 %v985, %v982
        %v1265 = vpack.c.b16 %v989, %v986
        %v1266 = vpack.c.b16 %v990, %v987
        %v1267 = vpack.c.b16 %v991, %v988
        %v1268 = vpack.c.b16 %v995, %v992
        %v1269 = vpack.c.b16 %v996, %v993
        %v1270 = vpack.c.b16 %v997, %v994
        %v1271 = vpack.c.b16 %v1001, %v998
        %v1272 = vpack.c.b16 %v1002, %v999
        %v1273 = vpack.c.b16 %v1003, %v1000
        %v1274 = vpack.c.b16 %v1007, %v1004
        %v1275 = vpack.c.b16 %v1008, %v1005
        %v1276 = vpack.c.b16 %v1009, %v1006
        %v1277 = vpack.c.b16 %v1013, %v1010
        %v1278 = vpack.c.b16 %v1014, %v1011
        %v1279 = vpack.c.b16 %v1015, %v1012
        %v1280 = vpack.c.b16 %v1019, %v1016
        %v1281 = vpack.c.b16 %v1020, %v1017
        %v1282 = vpack.c.b16 %v1021, %v1018
        %v1283 = vpack.c.b16 %v1025, %v1022
        %v1284 = vpack.c.b16 %v1026, %v1023
        %v1285 = vpack.c.b16 %v1027, %v1024
        %v1286 = vpack.c.b16 %v1031, %v1028
        %v1287 = vpack.c.b16 %v1032, %v1029
        %v1288 = vpack.c.b16 %v1033, %v1030
        %v1289 = vpack.c.b16 %v1037, %v1034
        %v1290 = vpack.c.b16 %v1038, %v1035
        %v1291 = vpack.c.b16 %v1039, %v1036
        %v1292 = vpack.c.b16 %v1043, %v1040
        %v1293 = vpack.c.b16 %v1044, %v1041
        %v1294 = vpack.c.b16 %v1045, %v1042
        %v1295 = vpack.c.b16 %v1049, %v1046
        %v1296 = vpack.c.b16 %v1050, %v1047
        %v1297 = vpack.c.b16 %v1051, %v1048
        %v1298 = vpack.c.b16 %v1055, %v1052
        %v1299 = vpack.c.b16 %v1056, %v1053
        %v1300 = vpack.c.b16 %v1057, %v1054
        %v1301 = vpack.c.b16 %v1061, %v1058
        %v1302 = vpack.c.b16 %v1062, %v1059
        %v1303 = vpack.c.b16 %v1063, %v1060
        %v1304 = vpack.c.b16 %v1067, %v1064
        %v1305 = vpack.c.b16 %v1068, %v1065
        %v1306 = vpack.c.b16 %v1069, %v1066
        %v1307 = vpack.c.b16 %v1073, %v1070
        %v1308 = vpack.c.b16 %v1074, %v1071
        %v1309 = vpack.c.b16 %v1075, %v1072
        %v1310 = vpack.c.b16 %v1079, %v1076
        %v1311 = vpack.c.b16 %v1080, %v1077
        %v1312 = vpack.c.b16 %v1081, %v1078
        %v1313 = vpack.c.b16 %v1085, %v1082
        %v1314 = vpack.c.b16 %v1086, %v1083
        %v1315 = vpack.c.b16 %v1087, %v1084
        %v1316 = vpack.c.b16 %v1091, %v1088
        %v1317 = vpack.c.b16 %v1092, %v1089
        %v1318 = vpack.c.b16 %v1093, %v1090
        %v1319 = vpack.c.b16 %v1097, %v1094
        %v1320 = vpack.c.b16 %v1098, %v1095
        %v1321 = vpack.c.b16 %v1099, %v1096
        %v1322 = vpack.c.b16 %v1103, %v1100
        %v1323 = vpack.c.b16 %v1104, %v1101
        %v1324 = vpack.c.b16 %v1105, %v1102
        %v1325 = vpack.c.b16 %v1109, %v1106
        %v1326 = vpack.c.b16 %v1110, %v1107
        %v1327 = vpack.c.b16 %v1111, %v1108
        %v1328 = vpack.c.b16 %v1115, %v1112
        %v1329 = vpack.c.b16 %v1116, %v1113
        %v1330 = vpack.c.b16 %v1117, %v1114
        %v1331 = vpack.c.b16 %v1121, %v1118
        %v1332 = vpack.c.b16 %v1122, %v1119
        %v1333 = vpack.c.b16 %v1123, %v1120
        %v1334 = vpack.c.b16 %v1127, %v1124
        %v1335 = vpack.c.b16 %v1128, %v1125
        %v1336 = vpack.c.b16 %v1129, %v1126
        %v1337 = vpack.c.b16 %v1133, %v1130
        %v1338 = vpack.c.b16 %v1134, %v1131
        %v1339 = vpack.c.b16 %v1135, %v1132
        %v1340 = vpack.c.b16 %v1139, %v1136
        %v1341 = vpack.c.b16 %v1140, %v1137
        %v1342 = vpack.c.b16 %v1141, %v1138
        %v1343 = vpack.c.b16 %v1145, %v1142
        %v1344 = vpack.c.b16 %v1146, %v1143
        %v1345 = vpack.c.b16 %v1147, %v1144
        %v1346 = vpack.c.b16 %v1151, %v1148
        %v1347 = vpack.c.b16 %v1152, %v1149
        %v1348 = vpack.c.b16 %v1153, %v1150
        %v1349 = vpack.c.b16 %v1157, %v1154
        %v1350 = vpack.c.b16 %v1158, %v1155
        %v1351 = vpack.c.b16 %v1159, %v1156
        %v1516 = vunpack.c.l.b16 %v484
        %v1517 = vunpack.c.l.b16 %v485
        %v1518 = vunpack.c.l.b16 %v486
        %v1519 = vunpack.c.l.b16 %v487
        %v1520 = vunpack.c.l.b16 %v488
        %v1521 = vunpack.c.l.b16 %v489
        %v1522 = vunpack.c.l.b16 %v490
        %v1523 = vunpack.c.l.b16 %v491
        %v1524 = vunpack.c.l.b16 %v492
        %v1525 = vunpack.c.l.b16 %v493
        %v1526 = vunpack.c.l.b16 %v494
        %v1527 = vunpack.c.l.b16 %v495
        %v1528 = vunpack.c.l.b16 %v496
        %v1529 = vunpack.c.l.b16 %v497
        %v1530 = vunpack.c.l.b16 %v498
        %v1531 = vunpack.c.l.b16 %v499
        %v1532 = vunpack.c.l.b16 %v500
        %v1533 = vunpack.c.l.b16 %v501
        %v1534 = vunpack.c.l.b16 %v502
        %v1535 = vunpack.c.l.b16 %v503
        %v1536 = vunpack.c.l.b16 %v504
        %v1537 = vunpack.c.l.b16 %v505
        %v1538 = vunpack.c.l.b16 %v506
        %v1539 = vunpack.c.l.b16 %v507
        %v1540 = vunpack.c.l.b16 %v508
        %v1541 = vunpack.c.l.b16 %v509
        %v1542 = vunpack.c.l.b16 %v510
        %v1543 = vunpack.c.l.b16 %v511
        %v1544 = vunpack.c.l.b16 %v512
        %v1545 = vunpack.c.l.b16 %v513
        %v1546 = vunpack.c.l.b16 %v514
        %v1547 = vunpack.c.l.b16 %v515
        %v1548 = vunpack.c.l.b16 %v516
        %v1549 = vunpack.c.l.b16 %v517
        %v1550 = vunpack.c.l.b16 %v518
        %v1551 = vunpack.c.l.b16 %v519
        %v1552 = vpack.c.b16 %v1517, %v1516
        %v1553 = vpack.c.b16 %v1519, %v1518
        %v1554 = vpack.c.b16 %v1521, %v1520
        %v1555 = vpack.c.b16 %v1523, %v1522
        %v1556 = vpack.c.b16 %v1525, %v1524
        %v1557 = vpack.c.b16 %v1527, %v1526
        %v1558 = vpack.c.b16 %v1529, %v1528
        %v1559 = vpack.c.b16 %v1531, %v1530
        %v1560 = vpack.c.b16 %v1533, %v1532
        %v1561 = vpack.c.b16 %v1535, %v1534
        %v1562 = vpack.c.b16 %v1537, %v1536
        %v1563 = vpack.c.b16 %v1539, %v1538
        %v1564 = vpack.c.b16 %v1541, %v1540
        %v1565 = vpack.c.b16 %v1543, %v1542
        %v1566 = vpack.c.b16 %v1545, %v1544
        %v1567 = vpack.c.b16 %v1547, %v1546
        %v1568 = vpack.c.b16 %v1549, %v1548
        %v1569 = vpack.c.b16 %v1551, %v1550
        %vm1588 = vcmask 261120
        %v1590 = vsel %vm1588, %v1162, 0
        %v1593 = vsel %vm1588, %v1165, 0
        %v1596 = vsel %vm1588, %v1168, 0
        %v1599 = vsel %vm1588, %v1171, 0
        %v1602 = vsel %vm1588, %v1174, 0
        %v1605 = vsel %vm1588, %v1177, 0
        %v1608 = vsel %vm1588, %v1180, 0
        %v1611 = vsel %vm1588, %v1183, 0
        %v1614 = vsel %vm1588, %v1186, 0
        %v1617 = vsel %vm1588, %v1189, 0
        %v1620 = vsel %vm1588, %v1192, 0
        %v1623 = vsel %vm1588, %v1195, 0
        %v1626 = vsel %vm1588, %v1198, 0
        %v1629 = vsel %vm1588, %v1201, 0
        %v1632 = vsel %vm1588, %v1204, 0
        %v1635 = vsel %vm1588, %v1207, 0
        %v1638 = vsel %vm1588, %v1210, 0
        %v1641 = vsel %vm1588, %v1213, 0
        %v1644 = vsel %vm1588, %v1216, 0
        %v1647 = vsel %vm1588, %v1219, 0
        %v1650 = vsel %vm1588, %v1222, 0
        %v1653 = vsel %vm1588, %v1225, 0
        %v1656 = vsel %vm1588, %v1228, 0
        %v1659 = vsel %vm1588, %v1231, 0
        %v1662 = vsel %vm1588, %v1234, 0
        %v1665 = vsel %vm1588, %v1237, 0
        %v1668 = vsel %vm1588, %v1240, 0
        %v1671 = vsel %vm1588, %v1243, 0
        %v1674 = vsel %vm1588, %v1246, 0
        %v1677 = vsel %vm1588, %v1249, 0
        %v1680 = vsel %vm1588, %v1252, 0
        %v1683 = vsel %vm1588, %v1255, 0
        %v1686 = vsel %vm1588, %v1258, 0
        %v1689 = vsel %vm1588, %v1261, 0
        %v1692 = vsel %vm1588, %v1264, 0
        %v1695 = vsel %vm1588, %v1267, 0
        %v1698 = vsel %vm1588, %v1270, 0
        %v1701 = vsel %vm1588, %v1273, 0
        %v1704 = vsel %vm1588, %v1276, 0
        %v1707 = vsel %vm1588, %v1279, 0
        %v1710 = vsel %vm1588, %v1282, 0
        %v1713 = vsel %vm1588, %v1285, 0
        %v1716 = vsel %vm1588, %v1288, 0
        %v1719 = vsel %vm1588, %v1291, 0
        %v1722 = vsel %vm1588, %v1294, 0
        %v1725 = vsel %vm1588, %v1297, 0
        %v1728 = vsel %vm1588, %v1300, 0
        %v1731 = vsel %vm1588, %v1303, 0
        %v1734 = vsel %vm1588, %v1306, 0
        %v1737 = vsel %vm1588, %v1309, 0
        %v1740 = vsel %vm1588, %v1312, 0
        %v1743 = vsel %vm1588, %v1315, 0
        %v1746 = vsel %vm1588, %v1318, 0
        %v1749 = vsel %vm1588, %v1321, 0
        %v1752 = vsel %vm1588, %v1324, 0
        %v1755 = vsel %vm1588, %v1327, 0
        %v1758 = vsel %vm1588, %v1330, 0
        %v1761 = vsel %vm1588, %v1333, 0
        %v1764 = vsel %vm1588, %v1336, 0
        %v1767 = vsel %vm1588, %v1339, 0
        %v1770 = vsel %vm1588, %v1342, 0
        %v1773 = vsel %vm1588, %v1345, 0
        %v1776 = vsel %vm1588, %v1348, 0
        %v1779 = vsel %vm1588, %v1351, 0
        %1781 = vmatprep.subr.bf16.mxu0 0
        %1782 = vmatpush1.bf16.msra.mxu0 %v1552
        %1783 = vmatprep.subr.bf16.mxu0 0
        %1784 = vmatpush1.bf16.msra.mxu0 %v1553
        %1785 = vmatprep.subr.bf16.mxu0 0
        %1786 = vmatpush1.bf16.msra.mxu0 %v1554
        %1787 = vmatprep.subr.bf16.mxu0 0
        %1788 = vmatpush1.bf16.msra.mxu0 %v1555
        %1789 = vmatprep.subr.bf16.mxu0 0
        %1790 = vmatpush1.bf16.msra.mxu0 %v1556
        %1791 = vmatprep.subr.bf16.mxu0 0
        %1792 = vmatpush1.bf16.msra.mxu0 %v1557
        %1793 = vmatprep.subr.bf16.mxu0 0
        %1794 = vmatpush1.bf16.msra.mxu0 %v1558
        %1795 = vmatprep.subr.bf16.mxu0 0
        %1796 = vmatpush1.bf16.msra.mxu0 %v1559
        %1797 = vmatprep.subr.bf16.mxu0 0
        %1798 = vmatpush1.bf16.msra.mxu0 %v1560
        %1799 = vmatprep.subr.bf16.mxu0 0
        %1800 = vmatpush1.bf16.msra.mxu0 %v1561
        %1801 = vmatprep.subr.bf16.mxu0 0
        %1802 = vmatpush1.bf16.msra.mxu0 %v1562
        %1803 = vmatprep.subr.bf16.mxu0 0
        %1804 = vmatpush1.bf16.msra.mxu0 %v1563
        %1805 = vmatprep.subr.bf16.mxu0 0
        %1806 = vmatpush1.bf16.msra.mxu0 %v1564
        %1807 = vmatprep.subr.bf16.mxu0 0
        %1808 = vmatpush1.bf16.msra.mxu0 %v1565
        %1809 = vmatprep.subr.bf16.mxu0 0
        %1810 = vmatpush1.bf16.msra.mxu0 %v1566
        %1811 = vmatprep.subr.bf16.mxu0 0
        %1812 = vmatpush1.bf16.msra.mxu0 %v1567
        %1813 = vmatprep.mubr.bf16.mxu0 %v1161
        %1814 = vmatmul.mubr.bf16.gmra.mrb[0].mxu0 %v1160
        %v1815 = vpop.f32.mrb[0].mxu0
        %v1816 = vadd.f32 0.0, %v1815
        %v1817 = vpop.f32.mrb[0].mxu0
        %v1818 = vpop.f32.mrb[0].mxu0
        %v1819 = vadd.f32 0.0, %v1818
        %v1820 = vpop.f32.mrb[0].mxu0
        %1821 = vmatprep.mubr.bf16.mxu0 %v1164
        %1822 = vmatmul.mubr.bf16.gmra.mrb[0].mxu0 %v1163
        %v1823 = vpop.f32.mrb[0].mxu0
        %v1824 = vadd.f32 0.0, %v1823
        %v1825 = vpop.f32.mrb[0].mxu0
        %v1826 = vpop.f32.mrb[0].mxu0
        %v1827 = vadd.f32 0.0, %v1826
        %v1828 = vpop.f32.mrb[0].mxu0
        %1829 = vmatprep.mubr.bf16.mxu0 %v1167
        %1830 = vmatmul.mubr.bf16.gmra.mrb[0].mxu0 %v1166
        %v1831 = vpop.f32.mrb[0].mxu0
        %v1832 = vadd.f32 0.0, %v1831
        %v1833 = vpop.f32.mrb[0].mxu0
        %v1834 = vpop.f32.mrb[0].mxu0
        %v1835 = vadd.f32 0.0, %v1834
        %v1836 = vpop.f32.mrb[0].mxu0
        %1837 = vmatprep.mubr.bf16.mxu0 %v1170
        %1838 = vmatmul.mubr.bf16.gmra.mrb[0].mxu0 %v1169
        %v1839 = vpop.f32.mrb[0].mxu0
        %v1840 = vadd.f32 0.0, %v1839
        %v1841 = vpop.f32.mrb[0].mxu0
        %v1842 = vpop.f32.mrb[0].mxu0
        %v1843 = vadd.f32 0.0, %v1842
        %v1844 = vpop.f32.mrb[0].mxu0
        %1845 = vmatprep.mubr.bf16.mxu0 %v1173
        %1846 = vmatmul.mubr.bf16.gmra.mrb[0].mxu0 %v1172
        %v1847 = vpop.f32.mrb[0].mxu0
        %v1848 = vadd.f32 0.0, %v1847
        %v1849 = vpop.f32.mrb[0].mxu0
        %v1850 = vpop.f32.mrb[0].mxu0
        %v1851 = vadd.f32 0.0, %v1850
        %v1852 = vpop.f32.mrb[0].mxu0
        %1853 = vmatprep.mubr.bf16.mxu0 %v1176
        %1854 = vmatmul.mubr.bf16.gmra.mrb[0].mxu0 %v1175
        %v1855 = vpop.f32.mrb[0].mxu0
        %v1856 = vadd.f32 0.0, %v1855
        %v1857 = vpop.f32.mrb[0].mxu0
        %v1858 = vpop.f32.mrb[0].mxu0
        %v1859 = vadd.f32 0.0, %v1858
        %v1860 = vpop.f32.mrb[0].mxu0
        %1861 = vmatprep.mubr.bf16.mxu0 %v1179
        %1862 = vmatmul.mubr.bf16.gmra.mrb[0].mxu0 %v1178
        %v1863 = vpop.f32.mrb[0].mxu0
        %v1864 = vadd.f32 0.0, %v1863
        %v1865 = vpop.f32.mrb[0].mxu0
        %v1866 = vpop.f32.mrb[0].mxu0
        %v1867 = vadd.f32 0.0, %v1866
        %v1868 = vpop.f32.mrb[0].mxu0
        %1869 = vmatprep.mubr.bf16.mxu0 %v1182
        %1870 = vmatmul.mubr.bf16.gmra.mrb[0].mxu0 %v1181
        %v1871 = vpop.f32.mrb[0].mxu0
        %v1872 = vadd.f32 0.0, %v1871
        %v1873 = vpop.f32.mrb[0].mxu0
        %v1874 = vpop.f32.mrb[0].mxu0
        %v1875 = vadd.f32 0.0, %v1874
        %v1876 = vpop.f32.mrb[0].mxu0
        %1877 = vmatprep.mubr.bf16.mxu0 %v1185
        %1878 = vmatmul.mubr.bf16.gmra.mrb[0].mxu0 %v1184
        %v1879 = vpop.f32.mrb[0].mxu0
        %v1880 = vadd.f32 0.0, %v1879
        %v1881 = vpop.f32.mrb[0].mxu0
        %v1882 = vpop.f32.mrb[0].mxu0
        %v1883 = vadd.f32 0.0, %v1882
        %v1884 = vpop.f32.mrb[0].mxu0
        %1885 = vmatprep.mubr.bf16.mxu0 %v1188
        %1886 = vmatmul.mubr.bf16.gmra.mrb[0].mxu0 %v1187
        %v1887 = vpop.f32.mrb[0].mxu0
        %v1888 = vadd.f32 0.0, %v1887
        %v1889 = vpop.f32.mrb[0].mxu0
        %v1890 = vpop.f32.mrb[0].mxu0
        %v1891 = vadd.f32 0.0, %v1890
        %v1892 = vpop.f32.mrb[0].mxu0
        %1893 = vmatprep.mubr.bf16.mxu0 %v1191
        %1894 = vmatmul.mubr.bf16.gmra.mrb[0].mxu0 %v1190
        %v1895 = vpop.f32.mrb[0].mxu0
        %v1896 = vadd.f32 0.0, %v1895
        %v1897 = vpop.f32.mrb[0].mxu0
        %v1898 = vpop.f32.mrb[0].mxu0
        %v1899 = vadd.f32 0.0, %v1898
        %v1900 = vpop.f32.mrb[0].mxu0
        %1901 = vmatprep.mubr.bf16.mxu0 %v1194
        %1902 = vmatmul.mubr.bf16.gmra.mrb[0].mxu0 %v1193
        %v1903 = vpop.f32.mrb[0].mxu0
        %v1904 = vadd.f32 0.0, %v1903
        %v1905 = vpop.f32.mrb[0].mxu0
        %v1906 = vpop.f32.mrb[0].mxu0
        %v1907 = vadd.f32 0.0, %v1906
        %v1908 = vpop.f32.mrb[0].mxu0
        %1909 = vmatprep.mubr.bf16.mxu0 %v1197
        %1910 = vmatmul.mubr.bf16.gmra.mrb[0].mxu0 %v1196
        %v1911 = vpop.f32.mrb[0].mxu0
        %v1912 = vadd.f32 0.0, %v1911
        %v1913 = vpop.f32.mrb[0].mxu0
        %v1914 = vpop.f32.mrb[0].mxu0
        %v1915 = vadd.f32 0.0, %v1914
        %v1916 = vpop.f32.mrb[0].mxu0
        %1917 = vmatprep.mubr.bf16.mxu0 %v1200
        %1918 = vmatmul.mubr.bf16.gmra.mrb[0].mxu0 %v1199
        %v1919 = vpop.f32.mrb[0].mxu0
        %v1920 = vadd.f32 0.0, %v1919
        %v1921 = vpop.f32.mrb[0].mxu0
        %v1922 = vpop.f32.mrb[0].mxu0
        %v1923 = vadd.f32 0.0, %v1922
        %v1924 = vpop.f32.mrb[0].mxu0
        %1925 = vmatprep.mubr.bf16.mxu0 %v1203
        %1926 = vmatmul.mubr.bf16.gmra.mrb[0].mxu0 %v1202
        %v1927 = vpop.f32.mrb[0].mxu0
        %v1928 = vadd.f32 0.0, %v1927
        %v1929 = vpop.f32.mrb[0].mxu0
        %v1930 = vpop.f32.mrb[0].mxu0
        %v1931 = vadd.f32 0.0, %v1930
        %v1932 = vpop.f32.mrb[0].mxu0
        %1933 = vmatprep.mubr.bf16.mxu0 %v1206
        %1934 = vmatmul.mubr.bf16.gmra.mrb[0].mxu0 %v1205
        %v1935 = vpop.f32.mrb[0].mxu0
        %v1936 = vadd.f32 0.0, %v1935
        %v1937 = vpop.f32.mrb[0].mxu0
        %v1938 = vpop.f32.mrb[0].mxu0
        %v1939 = vadd.f32 0.0, %v1938
        %v1940 = vpop.f32.mrb[0].mxu0
        %1941 = vmatprep.mubr.bf16.mxu0 %v1209
        %1942 = vmatmul.mubr.bf16.gmra.mrb[0].mxu0 %v1208
        %v1943 = vpop.f32.mrb[0].mxu0
        %v1944 = vadd.f32 0.0, %v1943
        %v1945 = vpop.f32.mrb[0].mxu0
        %v1946 = vpop.f32.mrb[0].mxu0
        %v1947 = vadd.f32 0.0, %v1946
        %v1948 = vpop.f32.mrb[0].mxu0
        %1949 = vmatprep.mubr.bf16.mxu0 %v1212
        %1950 = vmatmul.mubr.bf16.gmra.mrb[0].mxu0 %v1211
        %v1951 = vpop.f32.mrb[0].mxu0
        %v1952 = vadd.f32 0.0, %v1951
        %v1953 = vpop.f32.mrb[0].mxu0
        %v1954 = vpop.f32.mrb[0].mxu0
        %v1955 = vadd.f32 0.0, %v1954
        %v1956 = vpop.f32.mrb[0].mxu0
        %1957 = vmatprep.mubr.bf16.mxu0 %v1215
        %1958 = vmatmul.mubr.bf16.gmra.mrb[0].mxu0 %v1214
        %v1959 = vpop.f32.mrb[0].mxu0
        %v1960 = vadd.f32 0.0, %v1959
        %v1961 = vpop.f32.mrb[0].mxu0
        %v1962 = vpop.f32.mrb[0].mxu0
        %v1963 = vadd.f32 0.0, %v1962
        %v1964 = vpop.f32.mrb[0].mxu0
        %1965 = vmatprep.mubr.bf16.mxu0 %v1218
        %1966 = vmatmul.mubr.bf16.gmra.mrb[0].mxu0 %v1217
        %v1967 = vpop.f32.mrb[0].mxu0
        %v1968 = vadd.f32 0.0, %v1967
        %v1969 = vpop.f32.mrb[0].mxu0
        %v1970 = vpop.f32.mrb[0].mxu0
        %v1971 = vadd.f32 0.0, %v1970
        %v1972 = vpop.f32.mrb[0].mxu0
        %1973 = vmatprep.mubr.bf16.mxu0 %v1221
        %1974 = vmatmul.mubr.bf16.gmra.mrb[0].mxu0 %v1220
        %v1975 = vpop.f32.mrb[0].mxu0
        %v1976 = vadd.f32 0.0, %v1975
        %v1977 = vpop.f32.mrb[0].mxu0
        %v1978 = vpop.f32.mrb[0].mxu0
        %v1979 = vadd.f32 0.0, %v1978
        %v1980 = vpop.f32.mrb[0].mxu0
        %1981 = vmatprep.mubr.bf16.mxu0 %v1224
        %1982 = vmatmul.mubr.bf16.gmra.mrb[0].mxu0 %v1223
        %v1983 = vpop.f32.mrb[0].mxu0
        %v1984 = vadd.f32 0.0, %v1983
        %v1985 = vpop.f32.mrb[0].mxu0
        %v1986 = vpop.f32.mrb[0].mxu0
        %v1987 = vadd.f32 0.0, %v1986
        %v1988 = vpop.f32.mrb[0].mxu0
        %1989 = vmatprep.mubr.bf16.mxu0 %v1227
        %1990 = vmatmul.mubr.bf16.gmra.mrb[0].mxu0 %v1226
        %v1991 = vpop.f32.mrb[0].mxu0
        %v1992 = vadd.f32 0.0, %v1991
        %v1993 = vpop.f32.mrb[0].mxu0
        %v1994 = vpop.f32.mrb[0].mxu0
        %v1995 = vadd.f32 0.0, %v1994
        %v1996 = vpop.f32.mrb[0].mxu0
        %1997 = vmatprep.mubr.bf16.mxu0 %v1230
        %1998 = vmatmul.mubr.bf16.gmra.mrb[0].mxu0 %v1229
        %v1999 = vpop.f32.mrb[0].mxu0
        %v2000 = vadd.f32 0.0, %v1999
        %v2001 = vpop.f32.mrb[0].mxu0
        %v2002 = vpop.f32.mrb[0].mxu0
        %v2003 = vadd.f32 0.0, %v2002
        %v2004 = vpop.f32.mrb[0].mxu0
        %2005 = vmatprep.mubr.bf16.mxu0 %v1233
        %2006 = vmatmul.mubr.bf16.gmra.mrb[0].mxu0 %v1232
        %v2007 = vpop.f32.mrb[0].mxu0
        %v2008 = vadd.f32 0.0, %v2007
        %v2009 = vpop.f32.mrb[0].mxu0
        %v2010 = vpop.f32.mrb[0].mxu0
        %v2011 = vadd.f32 0.0, %v2010
        %v2012 = vpop.f32.mrb[0].mxu0
        %2013 = vmatprep.mubr.bf16.mxu0 %v1236
        %2014 = vmatmul.mubr.bf16.gmra.mrb[0].mxu0 %v1235
        %v2015 = vpop.f32.mrb[0].mxu0
        %v2016 = vadd.f32 0.0, %v2015
        %v2017 = vpop.f32.mrb[0].mxu0
        %v2018 = vpop.f32.mrb[0].mxu0
        %v2019 = vadd.f32 0.0, %v2018
        %v2020 = vpop.f32.mrb[0].mxu0
        %2021 = vmatprep.mubr.bf16.mxu0 %v1239
        %2022 = vmatmul.mubr.bf16.gmra.mrb[0].mxu0 %v1238
        %v2023 = vpop.f32.mrb[0].mxu0
        %v2024 = vadd.f32 0.0, %v2023
        %v2025 = vpop.f32.mrb[0].mxu0
        %v2026 = vpop.f32.mrb[0].mxu0
        %v2027 = vadd.f32 0.0, %v2026
        %v2028 = vpop.f32.mrb[0].mxu0
        %2029 = vmatprep.mubr.bf16.mxu0 %v1242
        %2030 = vmatmul.mubr.bf16.gmra.mrb[0].mxu0 %v1241
        %v2031 = vpop.f32.mrb[0].mxu0
        %v2032 = vadd.f32 0.0, %v2031
        %v2033 = vpop.f32.mrb[0].mxu0
        %v2034 = vpop.f32.mrb[0].mxu0
        %v2035 = vadd.f32 0.0, %v2034
        %v2036 = vpop.f32.mrb[0].mxu0
        %2037 = vmatprep.mubr.bf16.mxu0 %v1245
        %2038 = vmatmul.mubr.bf16.gmra.mrb[0].mxu0 %v1244
        %v2039 = vpop.f32.mrb[0].mxu0
        %v2040 = vadd.f32 0.0, %v2039
        %v2041 = vpop.f32.mrb[0].mxu0
        %v2042 = vpop.f32.mrb[0].mxu0
        %v2043 = vadd.f32 0.0, %v2042
        %v2044 = vpop.f32.mrb[0].mxu0
        %2045 = vmatprep.mubr.bf16.mxu0 %v1248
        %2046 = vmatmul.mubr.bf16.gmra.mrb[0].mxu0 %v1247
        %v2047 = vpop.f32.mrb[0].mxu0
        %v2048 = vadd.f32 0.0, %v2047
        %v2049 = vpop.f32.mrb[0].mxu0
        %v2050 = vpop.f32.mrb[0].mxu0
        %v2051 = vadd.f32 0.0, %v2050
        %v2052 = vpop.f32.mrb[0].mxu0
        %2053 = vmatprep.mubr.bf16.mxu0 %v1251
        %2054 = vmatmul.mubr.bf16.gmra.mrb[0].mxu0 %v1250
        %v2055 = vpop.f32.mrb[0].mxu0
        %v2056 = vadd.f32 0.0, %v2055
        %v2057 = vpop.f32.mrb[0].mxu0
        %v2058 = vpop.f32.mrb[0].mxu0
        %v2059 = vadd.f32 0.0, %v2058
        %v2060 = vpop.f32.mrb[0].mxu0
        %2061 = vmatprep.mubr.bf16.mxu0 %v1254
        %2062 = vmatmul.mubr.bf16.gmra.mrb[0].mxu0 %v1253
        %v2063 = vpop.f32.mrb[0].mxu0
        %v2064 = vadd.f32 0.0, %v2063
        %v2065 = vpop.f32.mrb[0].mxu0
        %v2066 = vpop.f32.mrb[0].mxu0
        %v2067 = vadd.f32 0.0, %v2066
        %v2068 = vpop.f32.mrb[0].mxu0
        %2069 = vmatprep.mubr.bf16.mxu0 %v1257
        %2070 = vmatmul.mubr.bf16.gmra.mrb[0].mxu0 %v1256
        %v2071 = vpop.f32.mrb[0].mxu0
        %v2072 = vadd.f32 0.0, %v2071
        %v2073 = vpop.f32.mrb[0].mxu0
        %v2074 = vpop.f32.mrb[0].mxu0
        %v2075 = vadd.f32 0.0, %v2074
        %v2076 = vpop.f32.mrb[0].mxu0
        %2077 = vmatprep.mubr.bf16.mxu0 %v1260
        %2078 = vmatmul.mubr.bf16.gmra.mrb[0].mxu0 %v1259
        %v2079 = vpop.f32.mrb[0].mxu0
        %v2080 = vadd.f32 0.0, %v2079
        %v2081 = vpop.f32.mrb[0].mxu0
        %v2082 = vpop.f32.mrb[0].mxu0
        %v2083 = vadd.f32 0.0, %v2082
        %v2084 = vpop.f32.mrb[0].mxu0
        %2085 = vmatprep.mubr.bf16.mxu0 %v1263
        %2086 = vmatmul.mubr.bf16.gmra.mrb[0].mxu0 %v1262
        %v2087 = vpop.f32.mrb[0].mxu0
        %v2088 = vadd.f32 0.0, %v2087
        %v2089 = vpop.f32.mrb[0].mxu0
        %v2090 = vpop.f32.mrb[0].mxu0
        %v2091 = vadd.f32 0.0, %v2090
        %v2092 = vpop.f32.mrb[0].mxu0
        %2093 = vmatprep.mubr.bf16.mxu0 %v1266
        %2094 = vmatmul.mubr.bf16.gmra.mrb[0].mxu0 %v1265
        %v2095 = vpop.f32.mrb[0].mxu0
        %v2096 = vadd.f32 0.0, %v2095
        %v2097 = vpop.f32.mrb[0].mxu0
        %v2098 = vpop.f32.mrb[0].mxu0
        %v2099 = vadd.f32 0.0, %v2098
        %v2100 = vpop.f32.mrb[0].mxu0
        %2101 = vmatprep.mubr.bf16.mxu0 %v1269
        %2102 = vmatmul.mubr.bf16.gmra.mrb[0].mxu0 %v1268
        %v2103 = vpop.f32.mrb[0].mxu0
        %v2104 = vadd.f32 0.0, %v2103
        %v2105 = vpop.f32.mrb[0].mxu0
        %v2106 = vpop.f32.mrb[0].mxu0
        %v2107 = vadd.f32 0.0, %v2106
        %v2108 = vpop.f32.mrb[0].mxu0
        %2109 = vmatprep.mubr.bf16.mxu0 %v1272
        %2110 = vmatmul.mubr.bf16.gmra.mrb[0].mxu0 %v1271
        %v2111 = vpop.f32.mrb[0].mxu0
        %v2112 = vadd.f32 0.0, %v2111
        %v2113 = vpop.f32.mrb[0].mxu0
        %v2114 = vpop.f32.mrb[0].mxu0
        %v2115 = vadd.f32 0.0, %v2114
        %v2116 = vpop.f32.mrb[0].mxu0
        %2117 = vmatprep.mubr.bf16.mxu0 %v1275
        %2118 = vmatmul.mubr.bf16.gmra.mrb[0].mxu0 %v1274
        %v2119 = vpop.f32.mrb[0].mxu0
        %v2120 = vadd.f32 0.0, %v2119
        %v2121 = vpop.f32.mrb[0].mxu0
        %v2122 = vpop.f32.mrb[0].mxu0
        %v2123 = vadd.f32 0.0, %v2122
        %v2124 = vpop.f32.mrb[0].mxu0
        %2125 = vmatprep.mubr.bf16.mxu0 %v1278
        %2126 = vmatmul.mubr.bf16.gmra.mrb[0].mxu0 %v1277
        %v2127 = vpop.f32.mrb[0].mxu0
        %v2128 = vadd.f32 0.0, %v2127
        %v2129 = vpop.f32.mrb[0].mxu0
        %v2130 = vpop.f32.mrb[0].mxu0
        %v2131 = vadd.f32 0.0, %v2130
        %v2132 = vpop.f32.mrb[0].mxu0
        %2133 = vmatprep.mubr.bf16.mxu0 %v1281
        %2134 = vmatmul.mubr.bf16.gmra.mrb[0].mxu0 %v1280
        %v2135 = vpop.f32.mrb[0].mxu0
        %v2136 = vadd.f32 0.0, %v2135
        %v2137 = vpop.f32.mrb[0].mxu0
        %v2138 = vpop.f32.mrb[0].mxu0
        %v2139 = vadd.f32 0.0, %v2138
        %v2140 = vpop.f32.mrb[0].mxu0
        %2141 = vmatprep.mubr.bf16.mxu0 %v1284
        %2142 = vmatmul.mubr.bf16.gmra.mrb[0].mxu0 %v1283
        %v2143 = vpop.f32.mrb[0].mxu0
        %v2144 = vadd.f32 0.0, %v2143
        %v2145 = vpop.f32.mrb[0].mxu0
        %v2146 = vpop.f32.mrb[0].mxu0
        %v2147 = vadd.f32 0.0, %v2146
        %v2148 = vpop.f32.mrb[0].mxu0
        %2149 = vmatprep.mubr.bf16.mxu0 %v1287
        %2150 = vmatmul.mubr.bf16.gmra.mrb[0].mxu0 %v1286
        %v2151 = vpop.f32.mrb[0].mxu0
        %v2152 = vadd.f32 0.0, %v2151
        %v2153 = vpop.f32.mrb[0].mxu0
        %v2154 = vpop.f32.mrb[0].mxu0
        %v2155 = vadd.f32 0.0, %v2154
        %v2156 = vpop.f32.mrb[0].mxu0
        %2157 = vmatprep.mubr.bf16.mxu0 %v1290
        %2158 = vmatmul.mubr.bf16.gmra.mrb[0].mxu0 %v1289
        %v2159 = vpop.f32.mrb[0].mxu0
        %v2160 = vadd.f32 0.0, %v2159
        %v2161 = vpop.f32.mrb[0].mxu0
        %v2162 = vpop.f32.mrb[0].mxu0
        %v2163 = vadd.f32 0.0, %v2162
        %v2164 = vpop.f32.mrb[0].mxu0
        %2165 = vmatprep.mubr.bf16.mxu0 %v1293
        %2166 = vmatmul.mubr.bf16.gmra.mrb[0].mxu0 %v1292
        %v2167 = vpop.f32.mrb[0].mxu0
        %v2168 = vadd.f32 0.0, %v2167
        %v2169 = vpop.f32.mrb[0].mxu0
        %v2170 = vpop.f32.mrb[0].mxu0
        %v2171 = vadd.f32 0.0, %v2170
        %v2172 = vpop.f32.mrb[0].mxu0
        %2173 = vmatprep.mubr.bf16.mxu0 %v1296
        %2174 = vmatmul.mubr.bf16.gmra.mrb[0].mxu0 %v1295
        %v2175 = vpop.f32.mrb[0].mxu0
        %v2176 = vadd.f32 0.0, %v2175
        %v2177 = vpop.f32.mrb[0].mxu0
        %v2178 = vpop.f32.mrb[0].mxu0
        %v2179 = vadd.f32 0.0, %v2178
        %v2180 = vpop.f32.mrb[0].mxu0
        %2181 = vmatprep.mubr.bf16.mxu0 %v1299
        %2182 = vmatmul.mubr.bf16.gmra.mrb[0].mxu0 %v1298
        %v2183 = vpop.f32.mrb[0].mxu0
        %v2184 = vadd.f32 0.0, %v2183
        %v2185 = vpop.f32.mrb[0].mxu0
        %v2186 = vpop.f32.mrb[0].mxu0
        %v2187 = vadd.f32 0.0, %v2186
        %v2188 = vpop.f32.mrb[0].mxu0
        %2189 = vmatprep.mubr.bf16.mxu0 %v1302
        %2190 = vmatmul.mubr.bf16.gmra.mrb[0].mxu0 %v1301
        %v2191 = vpop.f32.mrb[0].mxu0
        %v2192 = vadd.f32 0.0, %v2191
        %v2193 = vpop.f32.mrb[0].mxu0
        %v2194 = vpop.f32.mrb[0].mxu0
        %v2195 = vadd.f32 0.0, %v2194
        %v2196 = vpop.f32.mrb[0].mxu0
        %2197 = vmatprep.mubr.bf16.mxu0 %v1305
        %2198 = vmatmul.mubr.bf16.gmra.mrb[0].mxu0 %v1304
        %v2199 = vpop.f32.mrb[0].mxu0
        %v2200 = vadd.f32 0.0, %v2199
        %v2201 = vpop.f32.mrb[0].mxu0
        %v2202 = vpop.f32.mrb[0].mxu0
        %v2203 = vadd.f32 0.0, %v2202
        %v2204 = vpop.f32.mrb[0].mxu0
        %2205 = vmatprep.mubr.bf16.mxu0 %v1308
        %2206 = vmatmul.mubr.bf16.gmra.mrb[0].mxu0 %v1307
        %v2207 = vpop.f32.mrb[0].mxu0
        %v2208 = vadd.f32 0.0, %v2207
        %v2209 = vpop.f32.mrb[0].mxu0
        %v2210 = vpop.f32.mrb[0].mxu0
        %v2211 = vadd.f32 0.0, %v2210
        %v2212 = vpop.f32.mrb[0].mxu0
        %2213 = vmatprep.mubr.bf16.mxu0 %v1311
        %2214 = vmatmul.mubr.bf16.gmra.mrb[0].mxu0 %v1310
        %v2215 = vpop.f32.mrb[0].mxu0
        %v2216 = vadd.f32 0.0, %v2215
        %v2217 = vpop.f32.mrb[0].mxu0
        %v2218 = vpop.f32.mrb[0].mxu0
        %v2219 = vadd.f32 0.0, %v2218
        %v2220 = vpop.f32.mrb[0].mxu0
        %2221 = vmatprep.mubr.bf16.mxu0 %v1314
        %2222 = vmatmul.mubr.bf16.gmra.mrb[0].mxu0 %v1313
        %v2223 = vpop.f32.mrb[0].mxu0
        %v2224 = vadd.f32 0.0, %v2223
        %v2225 = vpop.f32.mrb[0].mxu0
        %v2226 = vpop.f32.mrb[0].mxu0
        %v2227 = vadd.f32 0.0, %v2226
        %v2228 = vpop.f32.mrb[0].mxu0
        %2229 = vmatprep.mubr.bf16.mxu0 %v1317
        %2230 = vmatmul.mubr.bf16.gmra.mrb[0].mxu0 %v1316
        %v2231 = vpop.f32.mrb[0].mxu0
        %v2232 = vadd.f32 0.0, %v2231
        %v2233 = vpop.f32.mrb[0].mxu0
        %v2234 = vpop.f32.mrb[0].mxu0
        %v2235 = vadd.f32 0.0, %v2234
        %v2236 = vpop.f32.mrb[0].mxu0
        %2237 = vmatprep.mubr.bf16.mxu0 %v1320
        %2238 = vmatmul.mubr.bf16.gmra.mrb[0].mxu0 %v1319
        %v2239 = vpop.f32.mrb[0].mxu0
        %v2240 = vadd.f32 0.0, %v2239
        %v2241 = vpop.f32.mrb[0].mxu0
        %v2242 = vpop.f32.mrb[0].mxu0
        %v2243 = vadd.f32 0.0, %v2242
        %v2244 = vpop.f32.mrb[0].mxu0
        %2245 = vmatprep.mubr.bf16.mxu0 %v1323
        %2246 = vmatmul.mubr.bf16.gmra.mrb[0].mxu0 %v1322
        %v2247 = vpop.f32.mrb[0].mxu0
        %v2248 = vadd.f32 0.0, %v2247
        %v2249 = vpop.f32.mrb[0].mxu0
        %v2250 = vpop.f32.mrb[0].mxu0
        %v2251 = vadd.f32 0.0, %v2250
        %v2252 = vpop.f32.mrb[0].mxu0
        %2253 = vmatprep.mubr.bf16.mxu0 %v1326
        %2254 = vmatmul.mubr.bf16.gmra.mrb[0].mxu0 %v1325
        %v2255 = vpop.f32.mrb[0].mxu0
        %v2256 = vadd.f32 0.0, %v2255
        %v2257 = vpop.f32.mrb[0].mxu0
        %v2258 = vpop.f32.mrb[0].mxu0
        %v2259 = vadd.f32 0.0, %v2258
        %v2260 = vpop.f32.mrb[0].mxu0
        %2261 = vmatprep.mubr.bf16.mxu0 %v1329
        %2262 = vmatmul.mubr.bf16.gmra.mrb[0].mxu0 %v1328
        %v2263 = vpop.f32.mrb[0].mxu0
        %v2264 = vadd.f32 0.0, %v2263
        %v2265 = vpop.f32.mrb[0].mxu0
        %v2266 = vpop.f32.mrb[0].mxu0
        %v2267 = vadd.f32 0.0, %v2266
        %v2268 = vpop.f32.mrb[0].mxu0
        %2269 = vmatprep.mubr.bf16.mxu0 %v1332
        %2270 = vmatmul.mubr.bf16.gmra.mrb[0].mxu0 %v1331
        %v2271 = vpop.f32.mrb[0].mxu0
        %v2272 = vadd.f32 0.0, %v2271
        %v2273 = vpop.f32.mrb[0].mxu0
        %v2274 = vpop.f32.mrb[0].mxu0
        %v2275 = vadd.f32 0.0, %v2274
        %v2276 = vpop.f32.mrb[0].mxu0
        %2277 = vmatprep.mubr.bf16.mxu0 %v1335
        %2278 = vmatmul.mubr.bf16.gmra.mrb[0].mxu0 %v1334
        %v2279 = vpop.f32.mrb[0].mxu0
        %v2280 = vadd.f32 0.0, %v2279
        %v2281 = vpop.f32.mrb[0].mxu0
        %v2282 = vpop.f32.mrb[0].mxu0
        %v2283 = vadd.f32 0.0, %v2282
        %v2284 = vpop.f32.mrb[0].mxu0
        %2285 = vmatprep.mubr.bf16.mxu0 %v1338
        %2286 = vmatmul.mubr.bf16.gmra.mrb[0].mxu0 %v1337
        %v2287 = vpop.f32.mrb[0].mxu0
        %v2288 = vadd.f32 0.0, %v2287
        %v2289 = vpop.f32.mrb[0].mxu0
        %v2290 = vpop.f32.mrb[0].mxu0
        %v2291 = vadd.f32 0.0, %v2290
        %v2292 = vpop.f32.mrb[0].mxu0
        %2293 = vmatprep.mubr.bf16.mxu0 %v1341
        %2294 = vmatmul.mubr.bf16.gmra.mrb[0].mxu0 %v1340
        %v2295 = vpop.f32.mrb[0].mxu0
        %v2296 = vadd.f32 0.0, %v2295
        %v2297 = vpop.f32.mrb[0].mxu0
        %v2298 = vpop.f32.mrb[0].mxu0
        %v2299 = vadd.f32 0.0, %v2298
        %v2300 = vpop.f32.mrb[0].mxu0
        %2301 = vmatprep.mubr.bf16.mxu0 %v1344
        %2302 = vmatmul.mubr.bf16.gmra.mrb[0].mxu0 %v1343
        %v2303 = vpop.f32.mrb[0].mxu0
        %v2304 = vadd.f32 0.0, %v2303
        %v2305 = vpop.f32.mrb[0].mxu0
        %v2306 = vpop.f32.mrb[0].mxu0
        %v2307 = vadd.f32 0.0, %v2306
        %v2308 = vpop.f32.mrb[0].mxu0
        %2309 = vmatprep.mubr.bf16.mxu0 %v1347
        %2310 = vmatmul.mubr.bf16.gmra.mrb[0].mxu0 %v1346
        %v2311 = vpop.f32.mrb[0].mxu0
        %v2312 = vadd.f32 0.0, %v2311
        %v2313 = vpop.f32.mrb[0].mxu0
        %v2314 = vpop.f32.mrb[0].mxu0
        %v2315 = vadd.f32 0.0, %v2314
        %v2316 = vpop.f32.mrb[0].mxu0
        %2317 = vmatprep.mubr.bf16.mxu0 %v1350
        %2318 = vmatmul.mubr.bf16.gmra.mrb[0].mxu0 %v1349
        %v2319 = vpop.f32.mrb[0].mxu0
        %v2320 = vadd.f32 0.0, %v2319
        %v2321 = vpop.f32.mrb[0].mxu0
        %v2322 = vpop.f32.mrb[0].mxu0
        %v2323 = vadd.f32 0.0, %v2322
        %v2324 = vpop.f32.mrb[0].mxu0
        %2325 = vdwg.mxu0
        %2326 = vmatprep.subr.bf16.mxu0 0
        %2327 = vmatpush1.bf16.msra.mxu0 %v1568
        %2328 = vmatprep.subr.bf16.mxu0 0
        %2329 = vmatpush1.bf16.msra.mxu0 %v1569
        %2330 = vmatprep.subr.bf16.mxu0 0
        %2331 = vmatpush1.bf16.msra.mxu0 0
        %2332 = vmatprep.subr.bf16.mxu0 0
        %2333 = vmatpush1.bf16.msra.mxu0 0
        %2334 = vmatprep.subr.bf16.mxu0 0
        %2335 = vmatpush1.bf16.msra.mxu0 0
        %2336 = vmatprep.subr.bf16.mxu0 0
        %2337 = vmatpush1.bf16.msra.mxu0 0
        %2338 = vmatprep.subr.bf16.mxu0 0
        %2339 = vmatpush1.bf16.msra.mxu0 0
        %2340 = vmatprep.subr.bf16.mxu0 0
        %2341 = vmatpush1.bf16.msra.mxu0 0
        %2342 = vmatprep.subr.bf16.mxu0 0
        %2343 = vmatpush1.bf16.msra.mxu0 0
        %2344 = vmatprep.subr.bf16.mxu0 0
        %2345 = vmatpush1.bf16.msra.mxu0 0
        %2346 = vmatprep.subr.bf16.mxu0 0
        %2347 = vmatpush1.bf16.msra.mxu0 0
        %2348 = vmatprep.subr.bf16.mxu0 0
        %2349 = vmatpush1.bf16.msra.mxu0 0
        %2350 = vmatprep.subr.bf16.mxu0 0
        %2351 = vmatpush1.bf16.msra.mxu0 0
        %2352 = vmatprep.subr.bf16.mxu0 0
        %2353 = vmatpush1.bf16.msra.mxu0 0
        %2354 = vmatprep.subr.bf16.mxu0 0
        %2355 = vmatpush1.bf16.msra.mxu0 0
        %2356 = vmatprep.subr.bf16.mxu0 0
        %2357 = vmatpush1.bf16.msra.mxu0 0
        %2358 = vmatprep.mubr.bf16.mxu0 0
        %2359 = vmatmul.mubr.bf16.gmra.mrb[0].mxu0 %v1590
        %v2360 = vpop.f32.mrb[0].mxu0
        %v2361 = vadd.f32 %v1816, %v2360
        %v2362 = vpop.f32.mrb[0].mxu0
        %v2363 = vpop.f32.mrb[0].mxu0
        %v2364 = vadd.f32 %v1819, %v2363
        %v2365 = vpop.f32.mrb[0].mxu0
        %2366 = vmatprep.mubr.bf16.mxu0 0
        %2367 = vmatmul.mubr.bf16.gmra.mrb[0].mxu0 %v1593
        %v2368 = vpop.f32.mrb[0].mxu0
        %v2369 = vadd.f32 %v1824, %v2368
        %v2370 = vpop.f32.mrb[0].mxu0
        %v2371 = vpop.f32.mrb[0].mxu0
        %v2372 = vadd.f32 %v1827, %v2371
        %v2373 = vpop.f32.mrb[0].mxu0
        %2374 = vmatprep.mubr.bf16.mxu0 0
        %2375 = vmatmul.mubr.bf16.gmra.mrb[0].mxu0 %v1596
        %v2376 = vpop.f32.mrb[0].mxu0
        %v2377 = vadd.f32 %v1832, %v2376
        %v2378 = vpop.f32.mrb[0].mxu0
        %v2379 = vpop.f32.mrb[0].mxu0
        %v2380 = vadd.f32 %v1835, %v2379
        %v2381 = vpop.f32.mrb[0].mxu0
        %2382 = vmatprep.mubr.bf16.mxu0 0
        %2383 = vmatmul.mubr.bf16.gmra.mrb[0].mxu0 %v1599
        %v2384 = vpop.f32.mrb[0].mxu0
        %v2385 = vadd.f32 %v1840, %v2384
        %v2386 = vpop.f32.mrb[0].mxu0
        %v2387 = vpop.f32.mrb[0].mxu0
        %v2388 = vadd.f32 %v1843, %v2387
        %v2389 = vpop.f32.mrb[0].mxu0
        %2390 = vmatprep.mubr.bf16.mxu0 0
        %2391 = vmatmul.mubr.bf16.gmra.mrb[0].mxu0 %v1602
        %v2392 = vpop.f32.mrb[0].mxu0
        %v2393 = vadd.f32 %v1848, %v2392
        %v2394 = vpop.f32.mrb[0].mxu0
        %v2395 = vpop.f32.mrb[0].mxu0
        %v2396 = vadd.f32 %v1851, %v2395
        %v2397 = vpop.f32.mrb[0].mxu0
        %2398 = vmatprep.mubr.bf16.mxu0 0
        %2399 = vmatmul.mubr.bf16.gmra.mrb[0].mxu0 %v1605
        %v2400 = vpop.f32.mrb[0].mxu0
        %v2401 = vadd.f32 %v1856, %v2400
        %v2402 = vpop.f32.mrb[0].mxu0
        %v2403 = vpop.f32.mrb[0].mxu0
        %v2404 = vadd.f32 %v1859, %v2403
        %v2405 = vpop.f32.mrb[0].mxu0
        %2406 = vmatprep.mubr.bf16.mxu0 0
        %2407 = vmatmul.mubr.bf16.gmra.mrb[0].mxu0 %v1608
        %v2408 = vpop.f32.mrb[0].mxu0
        %v2409 = vadd.f32 %v1864, %v2408
        %v2410 = vpop.f32.mrb[0].mxu0
        %v2411 = vpop.f32.mrb[0].mxu0
        %v2412 = vadd.f32 %v1867, %v2411
        %v2413 = vpop.f32.mrb[0].mxu0
        %2414 = vmatprep.mubr.bf16.mxu0 0
        %2415 = vmatmul.mubr.bf16.gmra.mrb[0].mxu0 %v1611
        %v2416 = vpop.f32.mrb[0].mxu0
        %v2417 = vadd.f32 %v1872, %v2416
        %v2418 = vpop.f32.mrb[0].mxu0
        %v2419 = vpop.f32.mrb[0].mxu0
        %v2420 = vadd.f32 %v1875, %v2419
        %v2421 = vpop.f32.mrb[0].mxu0
        %2422 = vmatprep.mubr.bf16.mxu0 0
        %2423 = vmatmul.mubr.bf16.gmra.mrb[0].mxu0 %v1614
        %v2424 = vpop.f32.mrb[0].mxu0
        %v2425 = vadd.f32 %v1880, %v2424
        %v2426 = vpop.f32.mrb[0].mxu0
        %v2427 = vpop.f32.mrb[0].mxu0
        %v2428 = vadd.f32 %v1883, %v2427
        %v2429 = vpop.f32.mrb[0].mxu0
        %2430 = vmatprep.mubr.bf16.mxu0 0
        %2431 = vmatmul.mubr.bf16.gmra.mrb[0].mxu0 %v1617
        %v2432 = vpop.f32.mrb[0].mxu0
        %v2433 = vadd.f32 %v1888, %v2432
        %v2434 = vpop.f32.mrb[0].mxu0
        %v2435 = vpop.f32.mrb[0].mxu0
        %v2436 = vadd.f32 %v1891, %v2435
        %v2437 = vpop.f32.mrb[0].mxu0
        %2438 = vmatprep.mubr.bf16.mxu0 0
        %2439 = vmatmul.mubr.bf16.gmra.mrb[0].mxu0 %v1620
        %v2440 = vpop.f32.mrb[0].mxu0
        %v2441 = vadd.f32 %v1896, %v2440
        %v2442 = vpop.f32.mrb[0].mxu0
        %v2443 = vpop.f32.mrb[0].mxu0
        %v2444 = vadd.f32 %v1899, %v2443
        %v2445 = vpop.f32.mrb[0].mxu0
        %2446 = vmatprep.mubr.bf16.mxu0 0
        %2447 = vmatmul.mubr.bf16.gmra.mrb[0].mxu0 %v1623
        %v2448 = vpop.f32.mrb[0].mxu0
        %v2449 = vadd.f32 %v1904, %v2448
        %v2450 = vpop.f32.mrb[0].mxu0
        %v2451 = vpop.f32.mrb[0].mxu0
        %v2452 = vadd.f32 %v1907, %v2451
        %v2453 = vpop.f32.mrb[0].mxu0
        %2454 = vmatprep.mubr.bf16.mxu0 0
        %2455 = vmatmul.mubr.bf16.gmra.mrb[0].mxu0 %v1626
        %v2456 = vpop.f32.mrb[0].mxu0
        %v2457 = vadd.f32 %v1912, %v2456
        %v2458 = vpop.f32.mrb[0].mxu0
        %v2459 = vpop.f32.mrb[0].mxu0
        %v2460 = vadd.f32 %v1915, %v2459
        %v2461 = vpop.f32.mrb[0].mxu0
        %2462 = vmatprep.mubr.bf16.mxu0 0
        %2463 = vmatmul.mubr.bf16.gmra.mrb[0].mxu0 %v1629
        %v2464 = vpop.f32.mrb[0].mxu0
        %v2465 = vadd.f32 %v1920, %v2464
        %v2466 = vpop.f32.mrb[0].mxu0
        %v2467 = vpop.f32.mrb[0].mxu0
        %v2468 = vadd.f32 %v1923, %v2467
        %v2469 = vpop.f32.mrb[0].mxu0
        %2470 = vmatprep.mubr.bf16.mxu0 0
        %2471 = vmatmul.mubr.bf16.gmra.mrb[0].mxu0 %v1632
        %v2472 = vpop.f32.mrb[0].mxu0
        %v2473 = vadd.f32 %v1928, %v2472
        %v2474 = vpop.f32.mrb[0].mxu0
        %v2475 = vpop.f32.mrb[0].mxu0
        %v2476 = vadd.f32 %v1931, %v2475
        %v2477 = vpop.f32.mrb[0].mxu0
        %2478 = vmatprep.mubr.bf16.mxu0 0
        %2479 = vmatmul.mubr.bf16.gmra.mrb[0].mxu0 %v1635
        %v2480 = vpop.f32.mrb[0].mxu0
        %v2481 = vadd.f32 %v1936, %v2480
        %v2482 = vpop.f32.mrb[0].mxu0
        %v2483 = vpop.f32.mrb[0].mxu0
        %v2484 = vadd.f32 %v1939, %v2483
        %v2485 = vpop.f32.mrb[0].mxu0
        %2486 = vmatprep.mubr.bf16.mxu0 0
        %2487 = vmatmul.mubr.bf16.gmra.mrb[0].mxu0 %v1638
        %v2488 = vpop.f32.mrb[0].mxu0
        %v2489 = vadd.f32 %v1944, %v2488
        %v2490 = vpop.f32.mrb[0].mxu0
        %v2491 = vpop.f32.mrb[0].mxu0
        %v2492 = vadd.f32 %v1947, %v2491
        %v2493 = vpop.f32.mrb[0].mxu0
        %2494 = vmatprep.mubr.bf16.mxu0 0
        %2495 = vmatmul.mubr.bf16.gmra.mrb[0].mxu0 %v1641
        %v2496 = vpop.f32.mrb[0].mxu0
        %v2497 = vadd.f32 %v1952, %v2496
        %v2498 = vpop.f32.mrb[0].mxu0
        %v2499 = vpop.f32.mrb[0].mxu0
        %v2500 = vadd.f32 %v1955, %v2499
        %v2501 = vpop.f32.mrb[0].mxu0
        %2502 = vmatprep.mubr.bf16.mxu0 0
        %2503 = vmatmul.mubr.bf16.gmra.mrb[0].mxu0 %v1644
        %v2504 = vpop.f32.mrb[0].mxu0
        %v2505 = vadd.f32 %v1960, %v2504
        %v2506 = vpop.f32.mrb[0].mxu0
        %v2507 = vpop.f32.mrb[0].mxu0
        %v2508 = vadd.f32 %v1963, %v2507
        %v2509 = vpop.f32.mrb[0].mxu0
        %2510 = vmatprep.mubr.bf16.mxu0 0
        %2511 = vmatmul.mubr.bf16.gmra.mrb[0].mxu0 %v1647
        %v2512 = vpop.f32.mrb[0].mxu0
        %v2513 = vadd.f32 %v1968, %v2512
        %v2514 = vpop.f32.mrb[0].mxu0
        %v2515 = vpop.f32.mrb[0].mxu0
        %v2516 = vadd.f32 %v1971, %v2515
        %v2517 = vpop.f32.mrb[0].mxu0
        %2518 = vmatprep.mubr.bf16.mxu0 0
        %2519 = vmatmul.mubr.bf16.gmra.mrb[0].mxu0 %v1650
        %v2520 = vpop.f32.mrb[0].mxu0
        %v2521 = vadd.f32 %v1976, %v2520
        %v2522 = vpop.f32.mrb[0].mxu0
        %v2523 = vpop.f32.mrb[0].mxu0
        %v2524 = vadd.f32 %v1979, %v2523
        %v2525 = vpop.f32.mrb[0].mxu0
        %2526 = vmatprep.mubr.bf16.mxu0 0
        %2527 = vmatmul.mubr.bf16.gmra.mrb[0].mxu0 %v1653
        %v2528 = vpop.f32.mrb[0].mxu0
        %v2529 = vadd.f32 %v1984, %v2528
        %v2530 = vpop.f32.mrb[0].mxu0
        %v2531 = vpop.f32.mrb[0].mxu0
        %v2532 = vadd.f32 %v1987, %v2531
        %v2533 = vpop.f32.mrb[0].mxu0
        %2534 = vmatprep.mubr.bf16.mxu0 0
        %2535 = vmatmul.mubr.bf16.gmra.mrb[0].mxu0 %v1656
        %v2536 = vpop.f32.mrb[0].mxu0
        %v2537 = vadd.f32 %v1992, %v2536
        %v2538 = vpop.f32.mrb[0].mxu0
        %v2539 = vpop.f32.mrb[0].mxu0
        %v2540 = vadd.f32 %v1995, %v2539
        %v2541 = vpop.f32.mrb[0].mxu0
        %2542 = vmatprep.mubr.bf16.mxu0 0
        %2543 = vmatmul.mubr.bf16.gmra.mrb[0].mxu0 %v1659
        %v2544 = vpop.f32.mrb[0].mxu0
        %v2545 = vadd.f32 %v2000, %v2544
        %v2546 = vpop.f32.mrb[0].mxu0
        %v2547 = vpop.f32.mrb[0].mxu0
        %v2548 = vadd.f32 %v2003, %v2547
        %v2549 = vpop.f32.mrb[0].mxu0
        %2550 = vmatprep.mubr.bf16.mxu0 0
        %2551 = vmatmul.mubr.bf16.gmra.mrb[0].mxu0 %v1662
        %v2552 = vpop.f32.mrb[0].mxu0
        %v2553 = vadd.f32 %v2008, %v2552
        %v2554 = vpop.f32.mrb[0].mxu0
        %v2555 = vpop.f32.mrb[0].mxu0
        %v2556 = vadd.f32 %v2011, %v2555
        %v2557 = vpop.f32.mrb[0].mxu0
        %2558 = vmatprep.mubr.bf16.mxu0 0
        %2559 = vmatmul.mubr.bf16.gmra.mrb[0].mxu0 %v1665
        %v2560 = vpop.f32.mrb[0].mxu0
        %v2561 = vadd.f32 %v2016, %v2560
        %v2562 = vpop.f32.mrb[0].mxu0
        %v2563 = vpop.f32.mrb[0].mxu0
        %v2564 = vadd.f32 %v2019, %v2563
        %v2565 = vpop.f32.mrb[0].mxu0
        %2566 = vmatprep.mubr.bf16.mxu0 0
        %2567 = vmatmul.mubr.bf16.gmra.mrb[0].mxu0 %v1668
        %v2568 = vpop.f32.mrb[0].mxu0
        %v2569 = vadd.f32 %v2024, %v2568
        %v2570 = vpop.f32.mrb[0].mxu0
        %v2571 = vpop.f32.mrb[0].mxu0
        %v2572 = vadd.f32 %v2027, %v2571
        %v2573 = vpop.f32.mrb[0].mxu0
        %2574 = vmatprep.mubr.bf16.mxu0 0
        %2575 = vmatmul.mubr.bf16.gmra.mrb[0].mxu0 %v1671
        %v2576 = vpop.f32.mrb[0].mxu0
        %v2577 = vadd.f32 %v2032, %v2576
        %v2578 = vpop.f32.mrb[0].mxu0
        %v2579 = vpop.f32.mrb[0].mxu0
        %v2580 = vadd.f32 %v2035, %v2579
        %v2581 = vpop.f32.mrb[0].mxu0
        %2582 = vmatprep.mubr.bf16.mxu0 0
        %2583 = vmatmul.mubr.bf16.gmra.mrb[0].mxu0 %v1674
        %v2584 = vpop.f32.mrb[0].mxu0
        %v2585 = vadd.f32 %v2040, %v2584
        %v2586 = vpop.f32.mrb[0].mxu0
        %v2587 = vpop.f32.mrb[0].mxu0
        %v2588 = vadd.f32 %v2043, %v2587
        %v2589 = vpop.f32.mrb[0].mxu0
        %2590 = vmatprep.mubr.bf16.mxu0 0
        %2591 = vmatmul.mubr.bf16.gmra.mrb[0].mxu0 %v1677
        %v2592 = vpop.f32.mrb[0].mxu0
        %v2593 = vadd.f32 %v2048, %v2592
        %v2594 = vpop.f32.mrb[0].mxu0
        %v2595 = vpop.f32.mrb[0].mxu0
        %v2596 = vadd.f32 %v2051, %v2595
        %v2597 = vpop.f32.mrb[0].mxu0
        %2598 = vmatprep.mubr.bf16.mxu0 0
        %2599 = vmatmul.mubr.bf16.gmra.mrb[0].mxu0 %v1680
        %v2600 = vpop.f32.mrb[0].mxu0
        %v2601 = vadd.f32 %v2056, %v2600
        %v2602 = vpop.f32.mrb[0].mxu0
        %v2603 = vpop.f32.mrb[0].mxu0
        %v2604 = vadd.f32 %v2059, %v2603
        %v2605 = vpop.f32.mrb[0].mxu0
        %2606 = vmatprep.mubr.bf16.mxu0 0
        %2607 = vmatmul.mubr.bf16.gmra.mrb[0].mxu0 %v1683
        %v2608 = vpop.f32.mrb[0].mxu0
        %v2609 = vadd.f32 %v2064, %v2608
        %v2610 = vpop.f32.mrb[0].mxu0
        %v2611 = vpop.f32.mrb[0].mxu0
        %v2612 = vadd.f32 %v2067, %v2611
        %v2613 = vpop.f32.mrb[0].mxu0
        %2614 = vmatprep.mubr.bf16.mxu0 0
        %2615 = vmatmul.mubr.bf16.gmra.mrb[0].mxu0 %v1686
        %v2616 = vpop.f32.mrb[0].mxu0
        %v2617 = vadd.f32 %v2072, %v2616
        %v2618 = vpop.f32.mrb[0].mxu0
        %v2619 = vpop.f32.mrb[0].mxu0
        %v2620 = vadd.f32 %v2075, %v2619
        %v2621 = vpop.f32.mrb[0].mxu0
        %2622 = vmatprep.mubr.bf16.mxu0 0
        %2623 = vmatmul.mubr.bf16.gmra.mrb[0].mxu0 %v1689
        %v2624 = vpop.f32.mrb[0].mxu0
        %v2625 = vadd.f32 %v2080, %v2624
        %v2626 = vpop.f32.mrb[0].mxu0
        %v2627 = vpop.f32.mrb[0].mxu0
        %v2628 = vadd.f32 %v2083, %v2627
        %v2629 = vpop.f32.mrb[0].mxu0
        %2630 = vmatprep.mubr.bf16.mxu0 0
        %2631 = vmatmul.mubr.bf16.gmra.mrb[0].mxu0 %v1692
        %v2632 = vpop.f32.mrb[0].mxu0
        %v2633 = vadd.f32 %v2088, %v2632
        %v2634 = vpop.f32.mrb[0].mxu0
        %v2635 = vpop.f32.mrb[0].mxu0
        %v2636 = vadd.f32 %v2091, %v2635
        %v2637 = vpop.f32.mrb[0].mxu0
        %2638 = vmatprep.mubr.bf16.mxu0 0
        %2639 = vmatmul.mubr.bf16.gmra.mrb[0].mxu0 %v1695
        %v2640 = vpop.f32.mrb[0].mxu0
        %v2641 = vadd.f32 %v2096, %v2640
        %v2642 = vpop.f32.mrb[0].mxu0
        %v2643 = vpop.f32.mrb[0].mxu0
        %v2644 = vadd.f32 %v2099, %v2643
        %v2645 = vpop.f32.mrb[0].mxu0
        %2646 = vmatprep.mubr.bf16.mxu0 0
        %2647 = vmatmul.mubr.bf16.gmra.mrb[0].mxu0 %v1698
        %v2648 = vpop.f32.mrb[0].mxu0
        %v2649 = vadd.f32 %v2104, %v2648
        %v2650 = vpop.f32.mrb[0].mxu0
        %v2651 = vpop.f32.mrb[0].mxu0
        %v2652 = vadd.f32 %v2107, %v2651
        %v2653 = vpop.f32.mrb[0].mxu0
        %2654 = vmatprep.mubr.bf16.mxu0 0
        %2655 = vmatmul.mubr.bf16.gmra.mrb[0].mxu0 %v1701
        %v2656 = vpop.f32.mrb[0].mxu0
        %v2657 = vadd.f32 %v2112, %v2656
        %v2658 = vpop.f32.mrb[0].mxu0
        %v2659 = vpop.f32.mrb[0].mxu0
        %v2660 = vadd.f32 %v2115, %v2659
        %v2661 = vpop.f32.mrb[0].mxu0
        %2662 = vmatprep.mubr.bf16.mxu0 0
        %2663 = vmatmul.mubr.bf16.gmra.mrb[0].mxu0 %v1704
        %v2664 = vpop.f32.mrb[0].mxu0
        %v2665 = vadd.f32 %v2120, %v2664
        %v2666 = vpop.f32.mrb[0].mxu0
        %v2667 = vpop.f32.mrb[0].mxu0
        %v2668 = vadd.f32 %v2123, %v2667
        %v2669 = vpop.f32.mrb[0].mxu0
        %2670 = vmatprep.mubr.bf16.mxu0 0
        %2671 = vmatmul.mubr.bf16.gmra.mrb[0].mxu0 %v1707
        %v2672 = vpop.f32.mrb[0].mxu0
        %v2673 = vadd.f32 %v2128, %v2672
        %v2674 = vpop.f32.mrb[0].mxu0
        %v2675 = vpop.f32.mrb[0].mxu0
        %v2676 = vadd.f32 %v2131, %v2675
        %v2677 = vpop.f32.mrb[0].mxu0
        %2678 = vmatprep.mubr.bf16.mxu0 0
        %2679 = vmatmul.mubr.bf16.gmra.mrb[0].mxu0 %v1710
        %v2680 = vpop.f32.mrb[0].mxu0
        %v2681 = vadd.f32 %v2136, %v2680
        %v2682 = vpop.f32.mrb[0].mxu0
        %v2683 = vpop.f32.mrb[0].mxu0
        %v2684 = vadd.f32 %v2139, %v2683
        %v2685 = vpop.f32.mrb[0].mxu0
        %2686 = vmatprep.mubr.bf16.mxu0 0
        %2687 = vmatmul.mubr.bf16.gmra.mrb[0].mxu0 %v1713
        %v2688 = vpop.f32.mrb[0].mxu0
        %v2689 = vadd.f32 %v2144, %v2688
        %v2690 = vpop.f32.mrb[0].mxu0
        %v2691 = vpop.f32.mrb[0].mxu0
        %v2692 = vadd.f32 %v2147, %v2691
        %v2693 = vpop.f32.mrb[0].mxu0
        %2694 = vmatprep.mubr.bf16.mxu0 0
        %2695 = vmatmul.mubr.bf16.gmra.mrb[0].mxu0 %v1716
        %v2696 = vpop.f32.mrb[0].mxu0
        %v2697 = vadd.f32 %v2152, %v2696
        %v2698 = vpop.f32.mrb[0].mxu0
        %v2699 = vpop.f32.mrb[0].mxu0
        %v2700 = vadd.f32 %v2155, %v2699
        %v2701 = vpop.f32.mrb[0].mxu0
        %2702 = vmatprep.mubr.bf16.mxu0 0
        %2703 = vmatmul.mubr.bf16.gmra.mrb[0].mxu0 %v1719
        %v2704 = vpop.f32.mrb[0].mxu0
        %v2705 = vadd.f32 %v2160, %v2704
        %v2706 = vpop.f32.mrb[0].mxu0
        %v2707 = vpop.f32.mrb[0].mxu0
        %v2708 = vadd.f32 %v2163, %v2707
        %v2709 = vpop.f32.mrb[0].mxu0
        %2710 = vmatprep.mubr.bf16.mxu0 0
        %2711 = vmatmul.mubr.bf16.gmra.mrb[0].mxu0 %v1722
        %v2712 = vpop.f32.mrb[0].mxu0
        %v2713 = vadd.f32 %v2168, %v2712
        %v2714 = vpop.f32.mrb[0].mxu0
        %v2715 = vpop.f32.mrb[0].mxu0
        %v2716 = vadd.f32 %v2171, %v2715
        %v2717 = vpop.f32.mrb[0].mxu0
        %2718 = vmatprep.mubr.bf16.mxu0 0
        %2719 = vmatmul.mubr.bf16.gmra.mrb[0].mxu0 %v1725
        %v2720 = vpop.f32.mrb[0].mxu0
        %v2721 = vadd.f32 %v2176, %v2720
        %v2722 = vpop.f32.mrb[0].mxu0
        %v2723 = vpop.f32.mrb[0].mxu0
        %v2724 = vadd.f32 %v2179, %v2723
        %v2725 = vpop.f32.mrb[0].mxu0
        %2726 = vmatprep.mubr.bf16.mxu0 0
        %2727 = vmatmul.mubr.bf16.gmra.mrb[0].mxu0 %v1728
        %v2728 = vpop.f32.mrb[0].mxu0
        %v2729 = vadd.f32 %v2184, %v2728
        %v2730 = vpop.f32.mrb[0].mxu0
        %v2731 = vpop.f32.mrb[0].mxu0
        %v2732 = vadd.f32 %v2187, %v2731
        %v2733 = vpop.f32.mrb[0].mxu0
        %2734 = vmatprep.mubr.bf16.mxu0 0
        %2735 = vmatmul.mubr.bf16.gmra.mrb[0].mxu0 %v1731
        %v2736 = vpop.f32.mrb[0].mxu0
        %v2737 = vadd.f32 %v2192, %v2736
        %v2738 = vpop.f32.mrb[0].mxu0
        %v2739 = vpop.f32.mrb[0].mxu0
        %v2740 = vadd.f32 %v2195, %v2739
        %v2741 = vpop.f32.mrb[0].mxu0
        %2742 = vmatprep.mubr.bf16.mxu0 0
        %2743 = vmatmul.mubr.bf16.gmra.mrb[0].mxu0 %v1734
        %v2744 = vpop.f32.mrb[0].mxu0
        %v2745 = vadd.f32 %v2200, %v2744
        %v2746 = vpop.f32.mrb[0].mxu0
        %v2747 = vpop.f32.mrb[0].mxu0
        %v2748 = vadd.f32 %v2203, %v2747
        %v2749 = vpop.f32.mrb[0].mxu0
        %2750 = vmatprep.mubr.bf16.mxu0 0
        %2751 = vmatmul.mubr.bf16.gmra.mrb[0].mxu0 %v1737
        %v2752 = vpop.f32.mrb[0].mxu0
        %v2753 = vadd.f32 %v2208, %v2752
        %v2754 = vpop.f32.mrb[0].mxu0
        %v2755 = vpop.f32.mrb[0].mxu0
        %v2756 = vadd.f32 %v2211, %v2755
        %v2757 = vpop.f32.mrb[0].mxu0
        %2758 = vmatprep.mubr.bf16.mxu0 0
        %2759 = vmatmul.mubr.bf16.gmra.mrb[0].mxu0 %v1740
        %v2760 = vpop.f32.mrb[0].mxu0
        %v2761 = vadd.f32 %v2216, %v2760
        %v2762 = vpop.f32.mrb[0].mxu0
        %v2763 = vpop.f32.mrb[0].mxu0
        %v2764 = vadd.f32 %v2219, %v2763
        %v2765 = vpop.f32.mrb[0].mxu0
        %2766 = vmatprep.mubr.bf16.mxu0 0
        %2767 = vmatmul.mubr.bf16.gmra.mrb[0].mxu0 %v1743
        %v2768 = vpop.f32.mrb[0].mxu0
        %v2769 = vadd.f32 %v2224, %v2768
        %v2770 = vpop.f32.mrb[0].mxu0
        %v2771 = vpop.f32.mrb[0].mxu0
        %v2772 = vadd.f32 %v2227, %v2771
        %v2773 = vpop.f32.mrb[0].mxu0
        %2774 = vmatprep.mubr.bf16.mxu0 0
        %2775 = vmatmul.mubr.bf16.gmra.mrb[0].mxu0 %v1746
        %v2776 = vpop.f32.mrb[0].mxu0
        %v2777 = vadd.f32 %v2232, %v2776
        %v2778 = vpop.f32.mrb[0].mxu0
        %v2779 = vpop.f32.mrb[0].mxu0
        %v2780 = vadd.f32 %v2235, %v2779
        %v2781 = vpop.f32.mrb[0].mxu0
        %2782 = vmatprep.mubr.bf16.mxu0 0
        %2783 = vmatmul.mubr.bf16.gmra.mrb[0].mxu0 %v1749
        %v2784 = vpop.f32.mrb[0].mxu0
        %v2785 = vadd.f32 %v2240, %v2784
        %v2786 = vpop.f32.mrb[0].mxu0
        %v2787 = vpop.f32.mrb[0].mxu0
        %v2788 = vadd.f32 %v2243, %v2787
        %v2789 = vpop.f32.mrb[0].mxu0
        %2790 = vmatprep.mubr.bf16.mxu0 0
        %2791 = vmatmul.mubr.bf16.gmra.mrb[0].mxu0 %v1752
        %v2792 = vpop.f32.mrb[0].mxu0
        %v2793 = vadd.f32 %v2248, %v2792
        %v2794 = vpop.f32.mrb[0].mxu0
        %v2795 = vpop.f32.mrb[0].mxu0
        %v2796 = vadd.f32 %v2251, %v2795
        %v2797 = vpop.f32.mrb[0].mxu0
        %2798 = vmatprep.mubr.bf16.mxu0 0
        %2799 = vmatmul.mubr.bf16.gmra.mrb[0].mxu0 %v1755
        %v2800 = vpop.f32.mrb[0].mxu0
        %v2801 = vadd.f32 %v2256, %v2800
        %v2802 = vpop.f32.mrb[0].mxu0
        %v2803 = vpop.f32.mrb[0].mxu0
        %v2804 = vadd.f32 %v2259, %v2803
        %v2805 = vpop.f32.mrb[0].mxu0
        %2806 = vmatprep.mubr.bf16.mxu0 0
        %2807 = vmatmul.mubr.bf16.gmra.mrb[0].mxu0 %v1758
        %v2808 = vpop.f32.mrb[0].mxu0
        %v2809 = vadd.f32 %v2264, %v2808
        %v2810 = vpop.f32.mrb[0].mxu0
        %v2811 = vpop.f32.mrb[0].mxu0
        %v2812 = vadd.f32 %v2267, %v2811
        %v2813 = vpop.f32.mrb[0].mxu0
        %2814 = vmatprep.mubr.bf16.mxu0 0
        %2815 = vmatmul.mubr.bf16.gmra.mrb[0].mxu0 %v1761
        %v2816 = vpop.f32.mrb[0].mxu0
        %v2817 = vadd.f32 %v2272, %v2816
        %v2818 = vpop.f32.mrb[0].mxu0
        %v2819 = vpop.f32.mrb[0].mxu0
        %v2820 = vadd.f32 %v2275, %v2819
        %v2821 = vpop.f32.mrb[0].mxu0
        %2822 = vmatprep.mubr.bf16.mxu0 0
        %2823 = vmatmul.mubr.bf16.gmra.mrb[0].mxu0 %v1764
        %v2824 = vpop.f32.mrb[0].mxu0
        %v2825 = vadd.f32 %v2280, %v2824
        %v2826 = vpop.f32.mrb[0].mxu0
        %v2827 = vpop.f32.mrb[0].mxu0
        %v2828 = vadd.f32 %v2283, %v2827
        %v2829 = vpop.f32.mrb[0].mxu0
        %2830 = vmatprep.mubr.bf16.mxu0 0
        %2831 = vmatmul.mubr.bf16.gmra.mrb[0].mxu0 %v1767
        %v2832 = vpop.f32.mrb[0].mxu0
        %v2833 = vadd.f32 %v2288, %v2832
        %v2834 = vpop.f32.mrb[0].mxu0
        %v2835 = vpop.f32.mrb[0].mxu0
        %v2836 = vadd.f32 %v2291, %v2835
        %v2837 = vpop.f32.mrb[0].mxu0
        %2838 = vmatprep.mubr.bf16.mxu0 0
        %2839 = vmatmul.mubr.bf16.gmra.mrb[0].mxu0 %v1770
        %v2840 = vpop.f32.mrb[0].mxu0
        %v2841 = vadd.f32 %v2296, %v2840
        %v2842 = vpop.f32.mrb[0].mxu0
        %v2843 = vpop.f32.mrb[0].mxu0
        %v2844 = vadd.f32 %v2299, %v2843
        %v2845 = vpop.f32.mrb[0].mxu0
        %2846 = vmatprep.mubr.bf16.mxu0 0
        %2847 = vmatmul.mubr.bf16.gmra.mrb[0].mxu0 %v1773
        %v2848 = vpop.f32.mrb[0].mxu0
        %v2849 = vadd.f32 %v2304, %v2848
        %v2850 = vpop.f32.mrb[0].mxu0
        %v2851 = vpop.f32.mrb[0].mxu0
        %v2852 = vadd.f32 %v2307, %v2851
        %v2853 = vpop.f32.mrb[0].mxu0
        %2854 = vmatprep.mubr.bf16.mxu0 0
        %2855 = vmatmul.mubr.bf16.gmra.mrb[0].mxu0 %v1776
        %v2856 = vpop.f32.mrb[0].mxu0
        %v2857 = vadd.f32 %v2312, %v2856
        %v2858 = vpop.f32.mrb[0].mxu0
        %v2859 = vpop.f32.mrb[0].mxu0
        %v2860 = vadd.f32 %v2315, %v2859
        %v2861 = vpop.f32.mrb[0].mxu0
        %2862 = vmatprep.mubr.bf16.mxu0 0
        %2863 = vmatmul.mubr.bf16.gmra.mrb[0].mxu0 %v1779
        %v2864 = vpop.f32.mrb[0].mxu0
        %v2865 = vadd.f32 %v2320, %v2864
        %v2866 = vpop.f32.mrb[0].mxu0
        %v2867 = vpop.f32.mrb[0].mxu0
        %v2868 = vadd.f32 %v2323, %v2867
        %v2869 = vpop.f32.mrb[0].mxu0
        %2870 = vdwg.mxu0
        %v2871 = vld [vmem:[%s2] sm:$0x1]
        %v2873 = vlaneseq
        %v2874 = vshrl.u32 %v2873, 7
        %v2875 = vsub.s32 0, %v2874
        %v2876 = vrot.slane %v2871, %v2875
        %v2878 = vmul.f32 %v2361, %v2876
        %v2879 = vmul.f32 %v2364, %v2876
        %v2880 = vmul.f32 %v2369, %v2876
        %v2881 = vmul.f32 %v2372, %v2876
        %v2882 = vmul.f32 %v2377, %v2876
        %v2883 = vmul.f32 %v2380, %v2876
        %v2884 = vmul.f32 %v2385, %v2876
        %v2885 = vmul.f32 %v2388, %v2876
        %v2886 = vmul.f32 %v2393, %v2876
        %v2887 = vmul.f32 %v2396, %v2876
        %v2888 = vmul.f32 %v2401, %v2876
        %v2889 = vmul.f32 %v2404, %v2876
        %v2890 = vmul.f32 %v2409, %v2876
        %v2891 = vmul.f32 %v2412, %v2876
        %v2892 = vmul.f32 %v2417, %v2876
        %v2893 = vmul.f32 %v2420, %v2876
        %v2894 = vmul.f32 %v2425, %v2876
        %v2895 = vmul.f32 %v2428, %v2876
        %v2896 = vmul.f32 %v2433, %v2876
        %v2897 = vmul.f32 %v2436, %v2876
        %v2898 = vmul.f32 %v2441, %v2876
        %v2899 = vmul.f32 %v2444, %v2876
        %v2900 = vmul.f32 %v2449, %v2876
        %v2901 = vmul.f32 %v2452, %v2876
        %v2902 = vmul.f32 %v2457, %v2876
        %v2903 = vmul.f32 %v2460, %v2876
        %v2904 = vmul.f32 %v2465, %v2876
        %v2905 = vmul.f32 %v2468, %v2876
        %v2906 = vmul.f32 %v2473, %v2876
        %v2907 = vmul.f32 %v2476, %v2876
        %v2908 = vmul.f32 %v2481, %v2876
        %v2909 = vmul.f32 %v2484, %v2876
        %v2910 = vmul.f32 %v2489, %v2876
        %v2911 = vmul.f32 %v2492, %v2876
        %v2912 = vmul.f32 %v2497, %v2876
        %v2913 = vmul.f32 %v2500, %v2876
        %v2914 = vmul.f32 %v2505, %v2876
        %v2915 = vmul.f32 %v2508, %v2876
        %v2916 = vmul.f32 %v2513, %v2876
        %v2917 = vmul.f32 %v2516, %v2876
        %v2918 = vmul.f32 %v2521, %v2876
        %v2919 = vmul.f32 %v2524, %v2876
        %v2920 = vmul.f32 %v2529, %v2876
        %v2921 = vmul.f32 %v2532, %v2876
        %v2922 = vmul.f32 %v2537, %v2876
        %v2923 = vmul.f32 %v2540, %v2876
        %v2924 = vmul.f32 %v2545, %v2876
        %v2925 = vmul.f32 %v2548, %v2876
        %v2926 = vmul.f32 %v2553, %v2876
        %v2927 = vmul.f32 %v2556, %v2876
        %v2928 = vmul.f32 %v2561, %v2876
        %v2929 = vmul.f32 %v2564, %v2876
        %v2930 = vmul.f32 %v2569, %v2876
        %v2931 = vmul.f32 %v2572, %v2876
        %v2932 = vmul.f32 %v2577, %v2876
        %v2933 = vmul.f32 %v2580, %v2876
        %v2934 = vmul.f32 %v2585, %v2876
        %v2935 = vmul.f32 %v2588, %v2876
        %v2936 = vmul.f32 %v2593, %v2876
        %v2937 = vmul.f32 %v2596, %v2876
        %v2938 = vmul.f32 %v2601, %v2876
        %v2939 = vmul.f32 %v2604, %v2876
        %v2940 = vmul.f32 %v2609, %v2876
        %v2941 = vmul.f32 %v2612, %v2876
        %v2942 = vmul.f32 %v2617, %v2876
        %v2943 = vmul.f32 %v2620, %v2876
        %v2944 = vmul.f32 %v2625, %v2876
        %v2945 = vmul.f32 %v2628, %v2876
        %v2946 = vmul.f32 %v2633, %v2876
        %v2947 = vmul.f32 %v2636, %v2876
        %v2948 = vmul.f32 %v2641, %v2876
        %v2949 = vmul.f32 %v2644, %v2876
        %v2950 = vmul.f32 %v2649, %v2876
        %v2951 = vmul.f32 %v2652, %v2876
        %v2952 = vmul.f32 %v2657, %v2876
        %v2953 = vmul.f32 %v2660, %v2876
        %v2954 = vmul.f32 %v2665, %v2876
        %v2955 = vmul.f32 %v2668, %v2876
        %v2956 = vmul.f32 %v2673, %v2876
        %v2957 = vmul.f32 %v2676, %v2876
        %v2958 = vmul.f32 %v2681, %v2876
        %v2959 = vmul.f32 %v2684, %v2876
        %v2960 = vmul.f32 %v2689, %v2876
        %v2961 = vmul.f32 %v2692, %v2876
        %v2962 = vmul.f32 %v2697, %v2876
        %v2963 = vmul.f32 %v2700, %v2876
        %v2964 = vmul.f32 %v2705, %v2876
        %v2965 = vmul.f32 %v2708, %v2876
        %v2966 = vmul.f32 %v2713, %v2876
        %v2967 = vmul.f32 %v2716, %v2876
        %v2968 = vmul.f32 %v2721, %v2876
        %v2969 = vmul.f32 %v2724, %v2876
        %v2970 = vmul.f32 %v2729, %v2876
        %v2971 = vmul.f32 %v2732, %v2876
        %v2972 = vmul.f32 %v2737, %v2876
        %v2973 = vmul.f32 %v2740, %v2876
        %v2974 = vmul.f32 %v2745, %v2876
        %v2975 = vmul.f32 %v2748, %v2876
        %v2976 = vmul.f32 %v2753, %v2876
        %v2977 = vmul.f32 %v2756, %v2876
        %v2978 = vmul.f32 %v2761, %v2876
        %v2979 = vmul.f32 %v2764, %v2876
        %v2980 = vmul.f32 %v2769, %v2876
        %v2981 = vmul.f32 %v2772, %v2876
        %v2982 = vmul.f32 %v2777, %v2876
        %v2983 = vmul.f32 %v2780, %v2876
        %v2984 = vmul.f32 %v2785, %v2876
        %v2985 = vmul.f32 %v2788, %v2876
        %v2986 = vmul.f32 %v2793, %v2876
        %v2987 = vmul.f32 %v2796, %v2876
        %v2988 = vmul.f32 %v2801, %v2876
        %v2989 = vmul.f32 %v2804, %v2876
        %v2990 = vmul.f32 %v2809, %v2876
        %v2991 = vmul.f32 %v2812, %v2876
        %v2992 = vmul.f32 %v2817, %v2876
        %v2993 = vmul.f32 %v2820, %v2876
        %v2994 = vmul.f32 %v2825, %v2876
        %v2995 = vmul.f32 %v2828, %v2876
        %v2996 = vmul.f32 %v2833, %v2876
        %v2997 = vmul.f32 %v2836, %v2876
        %v2998 = vmul.f32 %v2841, %v2876
        %v2999 = vmul.f32 %v2844, %v2876
        %v3000 = vmul.f32 %v2849, %v2876
        %v3001 = vmul.f32 %v2852, %v2876
        %v3002 = vmul.f32 %v2857, %v2876
        %v3003 = vmul.f32 %v2860, %v2876
        %v3004 = vmul.f32 %v2865, %v2876
        %v3005 = vmul.f32 %v2868, %v2876
        %v3006 = vld [vmem:[%s3] sm:$0x1]
        %v3008 = vlaneseq
        %v3009 = vshrl.u32 %v3008, 7
        %v3010 = vsub.s32 0, %v3009
        %v3011 = vrot.slane %v3006, %v3010
        %v3013 = vadd.f32 %v2878, %v3011
        %v3014 = vadd.f32 %v2879, %v3011
        %v3015 = vadd.f32 %v2880, %v3011
        %v3016 = vadd.f32 %v2881, %v3011
        %v3017 = vadd.f32 %v2882, %v3011
        %v3018 = vadd.f32 %v2883, %v3011
        %v3019 = vadd.f32 %v2884, %v3011
        %v3020 = vadd.f32 %v2885, %v3011
        %v3021 = vadd.f32 %v2886, %v3011
        %v3022 = vadd.f32 %v2887, %v3011
        %v3023 = vadd.f32 %v2888, %v3011
        %v3024 = vadd.f32 %v2889, %v3011
        %v3025 = vadd.f32 %v2890, %v3011
        %v3026 = vadd.f32 %v2891, %v3011
        %v3027 = vadd.f32 %v2892, %v3011
        %v3028 = vadd.f32 %v2893, %v3011
        %v3029 = vadd.f32 %v2894, %v3011
        %v3030 = vadd.f32 %v2895, %v3011
        %v3031 = vadd.f32 %v2896, %v3011
        %v3032 = vadd.f32 %v2897, %v3011
        %v3033 = vadd.f32 %v2898, %v3011
        %v3034 = vadd.f32 %v2899, %v3011
        %v3035 = vadd.f32 %v2900, %v3011
        %v3036 = vadd.f32 %v2901, %v3011
        %v3037 = vadd.f32 %v2902, %v3011
        %v3038 = vadd.f32 %v2903, %v3011
        %v3039 = vadd.f32 %v2904, %v3011
        %v3040 = vadd.f32 %v2905, %v3011
        %v3041 = vadd.f32 %v2906, %v3011
        %v3042 = vadd.f32 %v2907, %v3011
        %v3043 = vadd.f32 %v2908, %v3011
        %v3044 = vadd.f32 %v2909, %v3011
        %v3045 = vadd.f32 %v2910, %v3011
        %v3046 = vadd.f32 %v2911, %v3011
        %v3047 = vadd.f32 %v2912, %v3011
        %v3048 = vadd.f32 %v2913, %v3011
        %v3049 = vadd.f32 %v2914, %v3011
        %v3050 = vadd.f32 %v2915, %v3011
        %v3051 = vadd.f32 %v2916, %v3011
        %v3052 = vadd.f32 %v2917, %v3011
        %v3053 = vadd.f32 %v2918, %v3011
        %v3054 = vadd.f32 %v2919, %v3011
        %v3055 = vadd.f32 %v2920, %v3011
        %v3056 = vadd.f32 %v2921, %v3011
        %v3057 = vadd.f32 %v2922, %v3011
        %v3058 = vadd.f32 %v2923, %v3011
        %v3059 = vadd.f32 %v2924, %v3011
        %v3060 = vadd.f32 %v2925, %v3011
        %v3061 = vadd.f32 %v2926, %v3011
        %v3062 = vadd.f32 %v2927, %v3011
        %v3063 = vadd.f32 %v2928, %v3011
        %v3064 = vadd.f32 %v2929, %v3011
        %v3065 = vadd.f32 %v2930, %v3011
        %v3066 = vadd.f32 %v2931, %v3011
        %v3067 = vadd.f32 %v2932, %v3011
        %v3068 = vadd.f32 %v2933, %v3011
        %v3069 = vadd.f32 %v2934, %v3011
        %v3070 = vadd.f32 %v2935, %v3011
        %v3071 = vadd.f32 %v2936, %v3011
        %v3072 = vadd.f32 %v2937, %v3011
        %v3073 = vadd.f32 %v2938, %v3011
        %v3074 = vadd.f32 %v2939, %v3011
        %v3075 = vadd.f32 %v2940, %v3011
        %v3076 = vadd.f32 %v2941, %v3011
        %v3077 = vadd.f32 %v2942, %v3011
        %v3078 = vadd.f32 %v2943, %v3011
        %v3079 = vadd.f32 %v2944, %v3011
        %v3080 = vadd.f32 %v2945, %v3011
        %v3081 = vadd.f32 %v2946, %v3011
        %v3082 = vadd.f32 %v2947, %v3011
        %v3083 = vadd.f32 %v2948, %v3011
        %v3084 = vadd.f32 %v2949, %v3011
        %v3085 = vadd.f32 %v2950, %v3011
        %v3086 = vadd.f32 %v2951, %v3011
        %v3087 = vadd.f32 %v2952, %v3011
        %v3088 = vadd.f32 %v2953, %v3011
        %v3089 = vadd.f32 %v2954, %v3011
        %v3090 = vadd.f32 %v2955, %v3011
        %v3091 = vadd.f32 %v2956, %v3011
        %v3092 = vadd.f32 %v2957, %v3011
        %v3093 = vadd.f32 %v2958, %v3011
        %v3094 = vadd.f32 %v2959, %v3011
        %v3095 = vadd.f32 %v2960, %v3011
        %v3096 = vadd.f32 %v2961, %v3011
        %v3097 = vadd.f32 %v2962, %v3011
        %v3098 = vadd.f32 %v2963, %v3011
        %v3099 = vadd.f32 %v2964, %v3011
        %v3100 = vadd.f32 %v2965, %v3011
        %v3101 = vadd.f32 %v2966, %v3011
        %v3102 = vadd.f32 %v2967, %v3011
        %v3103 = vadd.f32 %v2968, %v3011
        %v3104 = vadd.f32 %v2969, %v3011
        %v3105 = vadd.f32 %v2970, %v3011
        %v3106 = vadd.f32 %v2971, %v3011
        %v3107 = vadd.f32 %v2972, %v3011
        %v3108 = vadd.f32 %v2973, %v3011
        %v3109 = vadd.f32 %v2974, %v3011
        %v3110 = vadd.f32 %v2975, %v3011
        %v3111 = vadd.f32 %v2976, %v3011
        %v3112 = vadd.f32 %v2977, %v3011
        %v3113 = vadd.f32 %v2978, %v3011
        %v3114 = vadd.f32 %v2979, %v3011
        %v3115 = vadd.f32 %v2980, %v3011
        %v3116 = vadd.f32 %v2981, %v3011
        %v3117 = vadd.f32 %v2982, %v3011
        %v3118 = vadd.f32 %v2983, %v3011
        %v3119 = vadd.f32 %v2984, %v3011
        %v3120 = vadd.f32 %v2985, %v3011
        %v3121 = vadd.f32 %v2986, %v3011
        %v3122 = vadd.f32 %v2987, %v3011
        %v3123 = vadd.f32 %v2988, %v3011
        %v3124 = vadd.f32 %v2989, %v3011
        %v3125 = vadd.f32 %v2990, %v3011
        %v3126 = vadd.f32 %v2991, %v3011
        %v3127 = vadd.f32 %v2992, %v3011
        %v3128 = vadd.f32 %v2993, %v3011
        %v3129 = vadd.f32 %v2994, %v3011
        %v3130 = vadd.f32 %v2995, %v3011
        %v3131 = vadd.f32 %v2996, %v3011
        %v3132 = vadd.f32 %v2997, %v3011
        %v3133 = vadd.f32 %v2998, %v3011
        %v3134 = vadd.f32 %v2999, %v3011
        %v3135 = vadd.f32 %v3000, %v3011
        %v3136 = vadd.f32 %v3001, %v3011
        %v3137 = vadd.f32 %v3002, %v3011
        %v3138 = vadd.f32 %v3003, %v3011
        %v3139 = vadd.f32 %v3004, %v3011
        %v3140 = vadd.f32 %v3005, %v3011
        %v3141 = vmax.f32 %v3013, 0.0
        %v3142 = vmax.f32 %v3014, 0.0
        %v3143 = vmax.f32 %v3015, 0.0
        %v3144 = vmax.f32 %v3016, 0.0
        %v3145 = vmax.f32 %v3017, 0.0
        %v3146 = vmax.f32 %v3018, 0.0
        %v3147 = vmax.f32 %v3019, 0.0
        %v3148 = vmax.f32 %v3020, 0.0
        %v3149 = vmax.f32 %v3021, 0.0
        %v3150 = vmax.f32 %v3022, 0.0
        %v3151 = vmax.f32 %v3023, 0.0
        %v3152 = vmax.f32 %v3024, 0.0
        %v3153 = vmax.f32 %v3025, 0.0
        %v3154 = vmax.f32 %v3026, 0.0
        %v3155 = vmax.f32 %v3027, 0.0
        %v3156 = vmax.f32 %v3028, 0.0
        %v3157 = vmax.f32 %v3029, 0.0
        %v3158 = vmax.f32 %v3030, 0.0
        %v3159 = vmax.f32 %v3031, 0.0
        %v3160 = vmax.f32 %v3032, 0.0
        %v3161 = vmax.f32 %v3033, 0.0
        %v3162 = vmax.f32 %v3034, 0.0
        %v3163 = vmax.f32 %v3035, 0.0
        %v3164 = vmax.f32 %v3036, 0.0
        %v3165 = vmax.f32 %v3037, 0.0
        %v3166 = vmax.f32 %v3038, 0.0
        %v3167 = vmax.f32 %v3039, 0.0
        %v3168 = vmax.f32 %v3040, 0.0
        %v3169 = vmax.f32 %v3041, 0.0
        %v3170 = vmax.f32 %v3042, 0.0
        %v3171 = vmax.f32 %v3043, 0.0
        %v3172 = vmax.f32 %v3044, 0.0
        %v3173 = vmax.f32 %v3045, 0.0
        %v3174 = vmax.f32 %v3046, 0.0
        %v3175 = vmax.f32 %v3047, 0.0
        %v3176 = vmax.f32 %v3048, 0.0
        %v3177 = vmax.f32 %v3049, 0.0
        %v3178 = vmax.f32 %v3050, 0.0
        %v3179 = vmax.f32 %v3051, 0.0
        %v3180 = vmax.f32 %v3052, 0.0
        %v3181 = vmax.f32 %v3053, 0.0
        %v3182 = vmax.f32 %v3054, 0.0
        %v3183 = vmax.f32 %v3055, 0.0
        %v3184 = vmax.f32 %v3056, 0.0
        %v3185 = vmax.f32 %v3057, 0.0
        %v3186 = vmax.f32 %v3058, 0.0
        %v3187 = vmax.f32 %v3059, 0.0
        %v3188 = vmax.f32 %v3060, 0.0
        %v3189 = vmax.f32 %v3061, 0.0
        %v3190 = vmax.f32 %v3062, 0.0
        %v3191 = vmax.f32 %v3063, 0.0
        %v3192 = vmax.f32 %v3064, 0.0
        %v3193 = vmax.f32 %v3065, 0.0
        %v3194 = vmax.f32 %v3066, 0.0
        %v3195 = vmax.f32 %v3067, 0.0
        %v3196 = vmax.f32 %v3068, 0.0
        %v3197 = vmax.f32 %v3069, 0.0
        %v3198 = vmax.f32 %v3070, 0.0
        %v3199 = vmax.f32 %v3071, 0.0
        %v3200 = vmax.f32 %v3072, 0.0
        %v3201 = vmax.f32 %v3073, 0.0
        %v3202 = vmax.f32 %v3074, 0.0
        %v3203 = vmax.f32 %v3075, 0.0
        %v3204 = vmax.f32 %v3076, 0.0
        %v3205 = vmax.f32 %v3077, 0.0
        %v3206 = vmax.f32 %v3078, 0.0
        %v3207 = vmax.f32 %v3079, 0.0
        %v3208 = vmax.f32 %v3080, 0.0
        %v3209 = vmax.f32 %v3081, 0.0
        %v3210 = vmax.f32 %v3082, 0.0
        %v3211 = vmax.f32 %v3083, 0.0
        %v3212 = vmax.f32 %v3084, 0.0
        %v3213 = vmax.f32 %v3085, 0.0
        %v3214 = vmax.f32 %v3086, 0.0
        %v3215 = vmax.f32 %v3087, 0.0
        %v3216 = vmax.f32 %v3088, 0.0
        %v3217 = vmax.f32 %v3089, 0.0
        %v3218 = vmax.f32 %v3090, 0.0
        %v3219 = vmax.f32 %v3091, 0.0
        %v3220 = vmax.f32 %v3092, 0.0
        %v3221 = vmax.f32 %v3093, 0.0
        %v3222 = vmax.f32 %v3094, 0.0
        %v3223 = vmax.f32 %v3095, 0.0
        %v3224 = vmax.f32 %v3096, 0.0
        %v3225 = vmax.f32 %v3097, 0.0
        %v3226 = vmax.f32 %v3098, 0.0
        %v3227 = vmax.f32 %v3099, 0.0
        %v3228 = vmax.f32 %v3100, 0.0
        %v3229 = vmax.f32 %v3101, 0.0
        %v3230 = vmax.f32 %v3102, 0.0
        %v3231 = vmax.f32 %v3103, 0.0
        %v3232 = vmax.f32 %v3104, 0.0
        %v3233 = vmax.f32 %v3105, 0.0
        %v3234 = vmax.f32 %v3106, 0.0
        %v3235 = vmax.f32 %v3107, 0.0
        %v3236 = vmax.f32 %v3108, 0.0
        %v3237 = vmax.f32 %v3109, 0.0
        %v3238 = vmax.f32 %v3110, 0.0
        %v3239 = vmax.f32 %v3111, 0.0
        %v3240 = vmax.f32 %v3112, 0.0
        %v3241 = vmax.f32 %v3113, 0.0
        %v3242 = vmax.f32 %v3114, 0.0
        %v3243 = vmax.f32 %v3115, 0.0
        %v3244 = vmax.f32 %v3116, 0.0
        %v3245 = vmax.f32 %v3117, 0.0
        %v3246 = vmax.f32 %v3118, 0.0
        %v3247 = vmax.f32 %v3119, 0.0
        %v3248 = vmax.f32 %v3120, 0.0
        %v3249 = vmax.f32 %v3121, 0.0
        %v3250 = vmax.f32 %v3122, 0.0
        %v3251 = vmax.f32 %v3123, 0.0
        %v3252 = vmax.f32 %v3124, 0.0
        %v3253 = vmax.f32 %v3125, 0.0
        %v3254 = vmax.f32 %v3126, 0.0
        %v3255 = vmax.f32 %v3127, 0.0
        %v3256 = vmax.f32 %v3128, 0.0
        %v3257 = vmax.f32 %v3129, 0.0
        %v3258 = vmax.f32 %v3130, 0.0
        %v3259 = vmax.f32 %v3131, 0.0
        %v3260 = vmax.f32 %v3132, 0.0
        %v3261 = vmax.f32 %v3133, 0.0
        %v3262 = vmax.f32 %v3134, 0.0
        %v3263 = vmax.f32 %v3135, 0.0
        %v3264 = vmax.f32 %v3136, 0.0
        %v3265 = vmax.f32 %v3137, 0.0
        %v3266 = vmax.f32 %v3138, 0.0
        %v3267 = vmax.f32 %v3139, 0.0
        %v3268 = vmax.f32 %v3140, 0.0
        %v3269 = vpack.c.bf16 %v3142, %v3141
        %v3270 = vpack.c.bf16 %v3144, %v3143
        %v3271 = vpack.c.bf16 %v3146, %v3145
        %v3272 = vpack.c.bf16 %v3148, %v3147
        %v3273 = vpack.c.bf16 %v3150, %v3149
        %v3274 = vpack.c.bf16 %v3152, %v3151
        %v3275 = vpack.c.bf16 %v3154, %v3153
        %v3276 = vpack.c.bf16 %v3156, %v3155
        %v3277 = vpack.c.bf16 %v3158, %v3157
        %v3278 = vpack.c.bf16 %v3160, %v3159
        %v3279 = vpack.c.bf16 %v3162, %v3161
        %v3280 = vpack.c.bf16 %v3164, %v3163
        %v3281 = vpack.c.bf16 %v3166, %v3165
        %v3282 = vpack.c.bf16 %v3168, %v3167
        %v3283 = vpack.c.bf16 %v3170, %v3169
        %v3284 = vpack.c.bf16 %v3172, %v3171
        %v3285 = vpack.c.bf16 %v3174, %v3173
        %v3286 = vpack.c.bf16 %v3176, %v3175
        %v3287 = vpack.c.bf16 %v3178, %v3177
        %v3288 = vpack.c.bf16 %v3180, %v3179
        %v3289 = vpack.c.bf16 %v3182, %v3181
        %v3290 = vpack.c.bf16 %v3184, %v3183
        %v3291 = vpack.c.bf16 %v3186, %v3185
        %v3292 = vpack.c.bf16 %v3188, %v3187
        %v3293 = vpack.c.bf16 %v3190, %v3189
        %v3294 = vpack.c.bf16 %v3192, %v3191
        %v3295 = vpack.c.bf16 %v3194, %v3193
        %v3296 = vpack.c.bf16 %v3196, %v3195
        %v3297 = vpack.c.bf16 %v3198, %v3197
        %v3298 = vpack.c.bf16 %v3200, %v3199
        %v3299 = vpack.c.bf16 %v3202, %v3201
        %v3300 = vpack.c.bf16 %v3204, %v3203
        %v3301 = vpack.c.bf16 %v3206, %v3205
        %v3302 = vpack.c.bf16 %v3208, %v3207
        %v3303 = vpack.c.bf16 %v3210, %v3209
        %v3304 = vpack.c.bf16 %v3212, %v3211
        %v3305 = vpack.c.bf16 %v3214, %v3213
        %v3306 = vpack.c.bf16 %v3216, %v3215
        %v3307 = vpack.c.bf16 %v3218, %v3217
        %v3308 = vpack.c.bf16 %v3220, %v3219
        %v3309 = vpack.c.bf16 %v3222, %v3221
        %v3310 = vpack.c.bf16 %v3224, %v3223
        %v3311 = vpack.c.bf16 %v3226, %v3225
        %v3312 = vpack.c.bf16 %v3228, %v3227
        %v3313 = vpack.c.bf16 %v3230, %v3229
        %v3314 = vpack.c.bf16 %v3232, %v3231
        %v3315 = vpack.c.bf16 %v3234, %v3233
        %v3316 = vpack.c.bf16 %v3236, %v3235
        %v3317 = vpack.c.bf16 %v3238, %v3237
        %v3318 = vpack.c.bf16 %v3240, %v3239
        %v3319 = vpack.c.bf16 %v3242, %v3241
        %v3320 = vpack.c.bf16 %v3244, %v3243
        %v3321 = vpack.c.bf16 %v3246, %v3245
        %v3322 = vpack.c.bf16 %v3248, %v3247
        %v3323 = vpack.c.bf16 %v3250, %v3249
        %v3324 = vpack.c.bf16 %v3252, %v3251
        %v3325 = vpack.c.bf16 %v3254, %v3253
        %v3326 = vpack.c.bf16 %v3256, %v3255
        %v3327 = vpack.c.bf16 %v3258, %v3257
        %v3328 = vpack.c.bf16 %v3260, %v3259
        %v3329 = vpack.c.bf16 %v3262, %v3261
        %v3330 = vpack.c.bf16 %v3264, %v3263
        %v3331 = vpack.c.bf16 %v3266, %v3265
        %v3332 = vpack.c.bf16 %v3268, %v3267
        %v3397 = vunpack.c.l.b16 %v3269
        %v3398 = vunpack.c.h.b16 %v3269
        %v3399 = vunpack.c.l.b16 %v3270
        %v3400 = vunpack.c.h.b16 %v3270
        %v3401 = vunpack.c.l.b16 %v3271
        %v3402 = vunpack.c.h.b16 %v3271
        %v3403 = vunpack.c.l.b16 %v3272
        %v3404 = vunpack.c.h.b16 %v3272
        %v3405 = vunpack.c.l.b16 %v3273
        %v3406 = vunpack.c.h.b16 %v3273
        %v3407 = vunpack.c.l.b16 %v3274
        %v3408 = vunpack.c.h.b16 %v3274
        %v3409 = vunpack.c.l.b16 %v3275
        %v3410 = vunpack.c.h.b16 %v3275
        %v3411 = vunpack.c.l.b16 %v3276
        %v3412 = vunpack.c.h.b16 %v3276
        %v3413 = vunpack.c.l.b16 %v3277
        %v3414 = vunpack.c.h.b16 %v3277
        %v3415 = vunpack.c.l.b16 %v3278
        %v3416 = vunpack.c.h.b16 %v3278
        %v3417 = vunpack.c.l.b16 %v3279
        %v3418 = vunpack.c.h.b16 %v3279
        %v3419 = vunpack.c.l.b16 %v3280
        %v3420 = vunpack.c.h.b16 %v3280
        %v3421 = vunpack.c.l.b16 %v3281
        %v3422 = vunpack.c.h.b16 %v3281
        %v3423 = vunpack.c.l.b16 %v3282
        %v3424 = vunpack.c.h.b16 %v3282
        %v3425 = vunpack.c.l.b16 %v3283
        %v3426 = vunpack.c.h.b16 %v3283
        %v3427 = vunpack.c.l.b16 %v3284
        %v3428 = vunpack.c.h.b16 %v3284
        %v3429 = vunpack.c.l.b16 %v3285
        %v3430 = vunpack.c.h.b16 %v3285
        %v3431 = vunpack.c.l.b16 %v3286
        %v3432 = vunpack.c.h.b16 %v3286
        %v3433 = vunpack.c.l.b16 %v3287
        %v3434 = vunpack.c.h.b16 %v3287
        %v3435 = vunpack.c.l.b16 %v3288
        %v3436 = vunpack.c.h.b16 %v3288
        %v3437 = vunpack.c.l.b16 %v3289
        %v3438 = vunpack.c.h.b16 %v3289
        %v3439 = vunpack.c.l.b16 %v3290
        %v3440 = vunpack.c.h.b16 %v3290
        %v3441 = vunpack.c.l.b16 %v3291
        %v3442 = vunpack.c.h.b16 %v3291
        %v3443 = vunpack.c.l.b16 %v3292
        %v3444 = vunpack.c.h.b16 %v3292
        %v3445 = vunpack.c.l.b16 %v3293
        %v3446 = vunpack.c.h.b16 %v3293
        %v3447 = vunpack.c.l.b16 %v3294
        %v3448 = vunpack.c.h.b16 %v3294
        %v3449 = vunpack.c.l.b16 %v3295
        %v3450 = vunpack.c.h.b16 %v3295
        %v3451 = vunpack.c.l.b16 %v3296
        %v3452 = vunpack.c.h.b16 %v3296
        %v3453 = vunpack.c.l.b16 %v3297
        %v3454 = vunpack.c.h.b16 %v3297
        %v3455 = vunpack.c.l.b16 %v3298
        %v3456 = vunpack.c.h.b16 %v3298
        %v3457 = vunpack.c.l.b16 %v3299
        %v3458 = vunpack.c.h.b16 %v3299
        %v3459 = vunpack.c.l.b16 %v3300
        %v3460 = vunpack.c.h.b16 %v3300
        %v3461 = vunpack.c.l.b16 %v3301
        %v3462 = vunpack.c.h.b16 %v3301
        %v3463 = vunpack.c.l.b16 %v3302
        %v3464 = vunpack.c.h.b16 %v3302
        %v3465 = vunpack.c.l.b16 %v3303
        %v3466 = vunpack.c.h.b16 %v3303
        %v3467 = vunpack.c.l.b16 %v3304
        %v3468 = vunpack.c.h.b16 %v3304
        %v3469 = vunpack.c.l.b16 %v3305
        %v3470 = vunpack.c.h.b16 %v3305
        %v3471 = vunpack.c.l.b16 %v3306
        %v3472 = vunpack.c.h.b16 %v3306
        %v3473 = vunpack.c.l.b16 %v3307
        %v3474 = vunpack.c.h.b16 %v3307
        %v3475 = vunpack.c.l.b16 %v3308
        %v3476 = vunpack.c.h.b16 %v3308
        %v3477 = vunpack.c.l.b16 %v3309
        %v3478 = vunpack.c.h.b16 %v3309
        %v3479 = vunpack.c.l.b16 %v3310
        %v3480 = vunpack.c.h.b16 %v3310
        %v3481 = vunpack.c.l.b16 %v3311
        %v3482 = vunpack.c.h.b16 %v3311
        %v3483 = vunpack.c.l.b16 %v3312
        %v3484 = vunpack.c.h.b16 %v3312
        %v3485 = vunpack.c.l.b16 %v3313
        %v3486 = vunpack.c.h.b16 %v3313
        %v3487 = vunpack.c.l.b16 %v3314
        %v3488 = vunpack.c.h.b16 %v3314
        %v3489 = vunpack.c.l.b16 %v3315
        %v3490 = vunpack.c.h.b16 %v3315
        %v3491 = vunpack.c.l.b16 %v3316
        %v3492 = vunpack.c.h.b16 %v3316
        %v3493 = vunpack.c.l.b16 %v3317
        %v3494 = vunpack.c.h.b16 %v3317
        %v3495 = vunpack.c.l.b16 %v3318
        %v3496 = vunpack.c.h.b16 %v3318
        %v3497 = vunpack.c.l.b16 %v3319
        %v3498 = vunpack.c.h.b16 %v3319
        %v3499 = vunpack.c.l.b16 %v3320
        %v3500 = vunpack.c.h.b16 %v3320
        %v3501 = vunpack.c.l.b16 %v3321
        %v3502 = vunpack.c.h.b16 %v3321
        %v3503 = vunpack.c.l.b16 %v3322
        %v3504 = vunpack.c.h.b16 %v3322
        %v3505 = vunpack.c.l.b16 %v3323
        %v3506 = vunpack.c.h.b16 %v3323
        %v3507 = vunpack.c.l.b16 %v3324
        %v3508 = vunpack.c.h.b16 %v3324
        %v3509 = vunpack.c.l.b16 %v3325
        %v3510 = vunpack.c.h.b16 %v3325
        %v3511 = vunpack.c.l.b16 %v3326
        %v3512 = vunpack.c.h.b16 %v3326
        %v3513 = vunpack.c.l.b16 %v3327
        %v3514 = vunpack.c.h.b16 %v3327
        %v3515 = vunpack.c.l.b16 %v3328
        %v3516 = vunpack.c.h.b16 %v3328
        %v3517 = vunpack.c.l.b16 %v3329
        %v3518 = vunpack.c.h.b16 %v3329
        %v3519 = vunpack.c.l.b16 %v3330
        %v3520 = vunpack.c.h.b16 %v3330
        %v3521 = vunpack.c.l.b16 %v3331
        %v3522 = vunpack.c.h.b16 %v3331
        %v3523 = vunpack.c.l.b16 %v3332
        %v3524 = vunpack.c.h.b16 %v3332
        %v3525 = vpack.c.b16 %v3397, %v3397
        %v3526 = vpack.c.b16 %v3398, %v3398
        %v3527 = vpack.c.b16 %v3399, %v3399
        %v3528 = vpack.c.b16 %v3400, %v3400
        %v3529 = vpack.c.b16 %v3401, %v3401
        %v3530 = vpack.c.b16 %v3402, %v3402
        %v3531 = vpack.c.b16 %v3403, %v3403
        %v3532 = vpack.c.b16 %v3404, %v3404
        %v3533 = vpack.c.b16 %v3405, %v3405
        %v3534 = vpack.c.b16 %v3406, %v3406
        %v3535 = vpack.c.b16 %v3407, %v3407
        %v3536 = vpack.c.b16 %v3408, %v3408
        %v3537 = vpack.c.b16 %v3409, %v3409
        %v3538 = vpack.c.b16 %v3410, %v3410
        %v3539 = vpack.c.b16 %v3411, %v3411
        %v3540 = vpack.c.b16 %v3412, %v3412
        %v3541 = vpack.c.b16 %v3413, %v3413
        %v3542 = vpack.c.b16 %v3414, %v3414
        %v3543 = vpack.c.b16 %v3415, %v3415
        %v3544 = vpack.c.b16 %v3416, %v3416
        %v3545 = vpack.c.b16 %v3417, %v3417
        %v3546 = vpack.c.b16 %v3418, %v3418
        %v3547 = vpack.c.b16 %v3419, %v3419
        %v3548 = vpack.c.b16 %v3420, %v3420
        %v3549 = vpack.c.b16 %v3421, %v3421
        %v3550 = vpack.c.b16 %v3422, %v3422
        %v3551 = vpack.c.b16 %v3423, %v3423
        %v3552 = vpack.c.b16 %v3424, %v3424
        %v3553 = vpack.c.b16 %v3425, %v3425
        %v3554 = vpack.c.b16 %v3426, %v3426
        %v3555 = vpack.c.b16 %v3427, %v3427
        %v3556 = vpack.c.b16 %v3428, %v3428
        %v3557 = vpack.c.b16 %v3429, %v3429
        %v3558 = vpack.c.b16 %v3430, %v3430
        %v3559 = vpack.c.b16 %v3431, %v3431
        %v3560 = vpack.c.b16 %v3432, %v3432
        %v3561 = vpack.c.b16 %v3433, %v3433
        %v3562 = vpack.c.b16 %v3434, %v3434
        %v3563 = vpack.c.b16 %v3435, %v3435
        %v3564 = vpack.c.b16 %v3436, %v3436
        %v3565 = vpack.c.b16 %v3437, %v3437
        %v3566 = vpack.c.b16 %v3438, %v3438
        %v3567 = vpack.c.b16 %v3439, %v3439
        %v3568 = vpack.c.b16 %v3440, %v3440
        %v3569 = vpack.c.b16 %v3441, %v3441
        %v3570 = vpack.c.b16 %v3442, %v3442
        %v3571 = vpack.c.b16 %v3443, %v3443
        %v3572 = vpack.c.b16 %v3444, %v3444
        %v3573 = vpack.c.b16 %v3445, %v3445
        %v3574 = vpack.c.b16 %v3446, %v3446
        %v3575 = vpack.c.b16 %v3447, %v3447
        %v3576 = vpack.c.b16 %v3448, %v3448
        %v3577 = vpack.c.b16 %v3449, %v3449
        %v3578 = vpack.c.b16 %v3450, %v3450
        %v3579 = vpack.c.b16 %v3451, %v3451
        %v3580 = vpack.c.b16 %v3452, %v3452
        %v3581 = vpack.c.b16 %v3453, %v3453
        %v3582 = vpack.c.b16 %v3454, %v3454
        %v3583 = vpack.c.b16 %v3455, %v3455
        %v3584 = vpack.c.b16 %v3456, %v3456
        %v3585 = vpack.c.b16 %v3457, %v3457
        %v3586 = vpack.c.b16 %v3458, %v3458
        %v3587 = vpack.c.b16 %v3459, %v3459
        %v3588 = vpack.c.b16 %v3460, %v3460
        %v3589 = vpack.c.b16 %v3461, %v3461
        %v3590 = vpack.c.b16 %v3462, %v3462
        %v3591 = vpack.c.b16 %v3463, %v3463
        %v3592 = vpack.c.b16 %v3464, %v3464
        %v3593 = vpack.c.b16 %v3465, %v3465
        %v3594 = vpack.c.b16 %v3466, %v3466
        %v3595 = vpack.c.b16 %v3467, %v3467
        %v3596 = vpack.c.b16 %v3468, %v3468
        %v3597 = vpack.c.b16 %v3469, %v3469
        %v3598 = vpack.c.b16 %v3470, %v3470
        %v3599 = vpack.c.b16 %v3471, %v3471
        %v3600 = vpack.c.b16 %v3472, %v3472
        %v3601 = vpack.c.b16 %v3473, %v3473
        %v3602 = vpack.c.b16 %v3474, %v3474
        %v3603 = vpack.c.b16 %v3475, %v3475
        %v3604 = vpack.c.b16 %v3476, %v3476
        %v3605 = vpack.c.b16 %v3477, %v3477
        %v3606 = vpack.c.b16 %v3478, %v3478
        %v3607 = vpack.c.b16 %v3479, %v3479
        %v3608 = vpack.c.b16 %v3480, %v3480
        %v3609 = vpack.c.b16 %v3481, %v3481
        %v3610 = vpack.c.b16 %v3482, %v3482
        %v3611 = vpack.c.b16 %v3483, %v3483
        %v3612 = vpack.c.b16 %v3484, %v3484
        %v3613 = vpack.c.b16 %v3485, %v3485
        %v3614 = vpack.c.b16 %v3486, %v3486
        %v3615 = vpack.c.b16 %v3487, %v3487
        %v3616 = vpack.c.b16 %v3488, %v3488
        %v3617 = vpack.c.b16 %v3489, %v3489
        %v3618 = vpack.c.b16 %v3490, %v3490
        %v3619 = vpack.c.b16 %v3491, %v3491
        %v3620 = vpack.c.b16 %v3492, %v3492
        %v3621 = vpack.c.b16 %v3493, %v3493
        %v3622 = vpack.c.b16 %v3494, %v3494
        %v3623 = vpack.c.b16 %v3495, %v3495
        %v3624 = vpack.c.b16 %v3496, %v3496
        %v3625 = vpack.c.b16 %v3497, %v3497
        %v3626 = vpack.c.b16 %v3498, %v3498
        %v3627 = vpack.c.b16 %v3499, %v3499
        %v3628 = vpack.c.b16 %v3500, %v3500
        %v3629 = vpack.c.b16 %v3501, %v3501
        %v3630 = vpack.c.b16 %v3502, %v3502
        %v3631 = vpack.c.b16 %v3503, %v3503
        %v3632 = vpack.c.b16 %v3504, %v3504
        %v3633 = vpack.c.b16 %v3505, %v3505
        %v3634 = vpack.c.b16 %v3506, %v3506
        %v3635 = vpack.c.b16 %v3507, %v3507
        %v3636 = vpack.c.b16 %v3508, %v3508
        %v3637 = vpack.c.b16 %v3509, %v3509
        %v3638 = vpack.c.b16 %v3510, %v3510
        %v3639 = vpack.c.b16 %v3511, %v3511
        %v3640 = vpack.c.b16 %v3512, %v3512
        %v3641 = vpack.c.b16 %v3513, %v3513
        %v3642 = vpack.c.b16 %v3514, %v3514
        %v3643 = vpack.c.b16 %v3515, %v3515
        %v3644 = vpack.c.b16 %v3516, %v3516
        %v3645 = vpack.c.b16 %v3517, %v3517
        %v3646 = vpack.c.b16 %v3518, %v3518
        %v3647 = vpack.c.b16 %v3519, %v3519
        %v3648 = vpack.c.b16 %v3520, %v3520
        %v3649 = vpack.c.b16 %v3521, %v3521
        %v3650 = vpack.c.b16 %v3522, %v3522
        %v3651 = vpack.c.b16 %v3523, %v3523
        %v3652 = vpack.c.b16 %v3524, %v3524
        %vm3781 = vcmask 519168
        %3782 = vst.msk [vmem:[%s204] sm:$0xf] %vm3781, %v3525
        %3783 = vst.msk [vmem:[%s204 + $0x4] sm:$0xf] %vm3781, %v3526
        %3784 = vst.msk [vmem:[%s204 + $0x8] sm:$0xf] %vm3781, %v3527
        %3785 = vst.msk [vmem:[%s204 + $0xc] sm:$0xf] %vm3781, %v3528
        %3786 = vst.msk [vmem:[%s204 + $0x10] sm:$0xf] %vm3781, %v3529
        %3787 = vst.msk [vmem:[%s204 + $0x14] sm:$0xf] %vm3781, %v3530
        %3788 = vst.msk [vmem:[%s204 + $0x18] sm:$0xf] %vm3781, %v3531
        %3789 = vst.msk [vmem:[%s204 + $0x1c] sm:$0xf] %vm3781, %v3532
        %3790 = vst.msk [vmem:[%s204 + $0x20] sm:$0xf] %vm3781, %v3533
        %3791 = vst.msk [vmem:[%s204 + $0x24] sm:$0xf] %vm3781, %v3534
        %3792 = vst.msk [vmem:[%s204 + $0x28] sm:$0xf] %vm3781, %v3535
        %3793 = vst.msk [vmem:[%s204 + $0x2c] sm:$0xf] %vm3781, %v3536
        %3794 = vst.msk [vmem:[%s204 + $0x30] sm:$0xf] %vm3781, %v3537
        %3795 = vst.msk [vmem:[%s204 + $0x34] sm:$0xf] %vm3781, %v3538
        %3796 = vst.msk [vmem:[%s204 + $0x38] sm:$0xf] %vm3781, %v3539
        %3797 = vst.msk [vmem:[%s204 + $0x3c] sm:$0xf] %vm3781, %v3540
        %3798 = vst.msk [vmem:[%s204 + $0x40] sm:$0xf] %vm3781, %v3541
        %3799 = vst.msk [vmem:[%s204 + $0x44] sm:$0xf] %vm3781, %v3542
        %3800 = vst.msk [vmem:[%s204 + $0x48] sm:$0xf] %vm3781, %v3543
        %3801 = vst.msk [vmem:[%s204 + $0x4c] sm:$0xf] %vm3781, %v3544
        %3802 = vst.msk [vmem:[%s204 + $0x50] sm:$0xf] %vm3781, %v3545
        %3803 = vst.msk [vmem:[%s204 + $0x54] sm:$0xf] %vm3781, %v3546
        %3804 = vst.msk [vmem:[%s204 + $0x58] sm:$0xf] %vm3781, %v3547
        %3805 = vst.msk [vmem:[%s204 + $0x5c] sm:$0xf] %vm3781, %v3548
        %3806 = vst.msk [vmem:[%s204 + $0x60] sm:$0xf] %vm3781, %v3549
        %3807 = vst.msk [vmem:[%s204 + $0x64] sm:$0xf] %vm3781, %v3550
        %3808 = vst.msk [vmem:[%s204 + $0x68] sm:$0xf] %vm3781, %v3551
        %3809 = vst.msk [vmem:[%s204 + $0x6c] sm:$0xf] %vm3781, %v3552
        %3810 = vst.msk [vmem:[%s204 + $0x70] sm:$0xf] %vm3781, %v3553
        %3811 = vst.msk [vmem:[%s204 + $0x74] sm:$0xf] %vm3781, %v3554
        %3812 = vst.msk [vmem:[%s204 + $0x78] sm:$0xf] %vm3781, %v3555
        %3813 = vst.msk [vmem:[%s204 + $0x7c] sm:$0xf] %vm3781, %v3556
        %3814 = vst.msk [vmem:[%s204 + $0x80] sm:$0xf] %vm3781, %v3557
        %3815 = vst.msk [vmem:[%s204 + $0x84] sm:$0xf] %vm3781, %v3558
        %3816 = vst.msk [vmem:[%s204 + $0x88] sm:$0xf] %vm3781, %v3559
        %3817 = vst.msk [vmem:[%s204 + $0x8c] sm:$0xf] %vm3781, %v3560
        %3818 = vst.msk [vmem:[%s204 + $0x90] sm:$0xf] %vm3781, %v3561
        %3819 = vst.msk [vmem:[%s204 + $0x94] sm:$0xf] %vm3781, %v3562
        %3820 = vst.msk [vmem:[%s204 + $0x98] sm:$0xf] %vm3781, %v3563
        %3821 = vst.msk [vmem:[%s204 + $0x9c] sm:$0xf] %vm3781, %v3564
        %3822 = vst.msk [vmem:[%s204 + $0xa0] sm:$0xf] %vm3781, %v3565
        %3823 = vst.msk [vmem:[%s204 + $0xa4] sm:$0xf] %vm3781, %v3566
        %3824 = vst.msk [vmem:[%s204 + $0xa8] sm:$0xf] %vm3781, %v3567
        %3825 = vst.msk [vmem:[%s204 + $0xac] sm:$0xf] %vm3781, %v3568
        %3826 = vst.msk [vmem:[%s204 + $0xb0] sm:$0xf] %vm3781, %v3569
        %3827 = vst.msk [vmem:[%s204 + $0xb4] sm:$0xf] %vm3781, %v3570
        %3828 = vst.msk [vmem:[%s204 + $0xb8] sm:$0xf] %vm3781, %v3571
        %3829 = vst.msk [vmem:[%s204 + $0xbc] sm:$0xf] %vm3781, %v3572
        %3830 = vst.msk [vmem:[%s204 + $0xc0] sm:$0xf] %vm3781, %v3573
        %3831 = vst.msk [vmem:[%s204 + $0xc4] sm:$0xf] %vm3781, %v3574
        %3832 = vst.msk [vmem:[%s204 + $0xc8] sm:$0xf] %vm3781, %v3575
        %3833 = vst.msk [vmem:[%s204 + $0xcc] sm:$0xf] %vm3781, %v3576
        %3834 = vst.msk [vmem:[%s204 + $0xd0] sm:$0xf] %vm3781, %v3577
        %3835 = vst.msk [vmem:[%s204 + $0xd4] sm:$0xf] %vm3781, %v3578
        %3836 = vst.msk [vmem:[%s204 + $0xd8] sm:$0xf] %vm3781, %v3579
        %3837 = vst.msk [vmem:[%s204 + $0xdc] sm:$0xf] %vm3781, %v3580
        %3838 = vst.msk [vmem:[%s204 + $0xe0] sm:$0xf] %vm3781, %v3581
        %3839 = vst.msk [vmem:[%s204 + $0xe4] sm:$0xf] %vm3781, %v3582
        %3840 = vst.msk [vmem:[%s204 + $0xe8] sm:$0xf] %vm3781, %v3583
        %3841 = vst.msk [vmem:[%s204 + $0xec] sm:$0xf] %vm3781, %v3584
        %3842 = vst.msk [vmem:[%s204 + $0xf0] sm:$0xf] %vm3781, %v3585
        %3843 = vst.msk [vmem:[%s204 + $0xf4] sm:$0xf] %vm3781, %v3586
        %3844 = vst.msk [vmem:[%s204 + $0xf8] sm:$0xf] %vm3781, %v3587
        %3845 = vst.msk [vmem:[%s204 + $0xfc] sm:$0xf] %vm3781, %v3588
        %3846 = vst.msk [vmem:[%s204 + $0x100] sm:$0xf] %vm3781, %v3589
        %3847 = vst.msk [vmem:[%s204 + $0x104] sm:$0xf] %vm3781, %v3590
        %3848 = vst.msk [vmem:[%s204 + $0x108] sm:$0xf] %vm3781, %v3591
        %3849 = vst.msk [vmem:[%s204 + $0x10c] sm:$0xf] %vm3781, %v3592
        %3850 = vst.msk [vmem:[%s204 + $0x110] sm:$0xf] %vm3781, %v3593
        %3851 = vst.msk [vmem:[%s204 + $0x114] sm:$0xf] %vm3781, %v3594
        %3852 = vst.msk [vmem:[%s204 + $0x118] sm:$0xf] %vm3781, %v3595
        %3853 = vst.msk [vmem:[%s204 + $0x11c] sm:$0xf] %vm3781, %v3596
        %3854 = vst.msk [vmem:[%s204 + $0x120] sm:$0xf] %vm3781, %v3597
        %3855 = vst.msk [vmem:[%s204 + $0x124] sm:$0xf] %vm3781, %v3598
        %3856 = vst.msk [vmem:[%s204 + $0x128] sm:$0xf] %vm3781, %v3599
        %3857 = vst.msk [vmem:[%s204 + $0x12c] sm:$0xf] %vm3781, %v3600
        %3858 = vst.msk [vmem:[%s204 + $0x130] sm:$0xf] %vm3781, %v3601
        %3859 = vst.msk [vmem:[%s204 + $0x134] sm:$0xf] %vm3781, %v3602
        %3860 = vst.msk [vmem:[%s204 + $0x138] sm:$0xf] %vm3781, %v3603
        %3861 = vst.msk [vmem:[%s204 + $0x13c] sm:$0xf] %vm3781, %v3604
        %3862 = vst.msk [vmem:[%s204 + $0x140] sm:$0xf] %vm3781, %v3605
        %3863 = vst.msk [vmem:[%s204 + $0x144] sm:$0xf] %vm3781, %v3606
        %3864 = vst.msk [vmem:[%s204 + $0x148] sm:$0xf] %vm3781, %v3607
        %3865 = vst.msk [vmem:[%s204 + $0x14c] sm:$0xf] %vm3781, %v3608
        %3866 = vst.msk [vmem:[%s204 + $0x150] sm:$0xf] %vm3781, %v3609
        %3867 = vst.msk [vmem:[%s204 + $0x154] sm:$0xf] %vm3781, %v3610
        %3868 = vst.msk [vmem:[%s204 + $0x158] sm:$0xf] %vm3781, %v3611
        %3869 = vst.msk [vmem:[%s204 + $0x15c] sm:$0xf] %vm3781, %v3612
        %3870 = vst.msk [vmem:[%s204 + $0x160] sm:$0xf] %vm3781, %v3613
        %3871 = vst.msk [vmem:[%s204 + $0x164] sm:$0xf] %vm3781, %v3614
        %3872 = vst.msk [vmem:[%s204 + $0x168] sm:$0xf] %vm3781, %v3615
        %3873 = vst.msk [vmem:[%s204 + $0x16c] sm:$0xf] %vm3781, %v3616
        %3874 = vst.msk [vmem:[%s204 + $0x170] sm:$0xf] %vm3781, %v3617
        %3875 = vst.msk [vmem:[%s204 + $0x174] sm:$0xf] %vm3781, %v3618
        %3876 = vst.msk [vmem:[%s204 + $0x178] sm:$0xf] %vm3781, %v3619
        %3877 = vst.msk [vmem:[%s204 + $0x17c] sm:$0xf] %vm3781, %v3620
        %3878 = vst.msk [vmem:[%s204 + $0x180] sm:$0xf] %vm3781, %v3621
        %3879 = vst.msk [vmem:[%s204 + $0x184] sm:$0xf] %vm3781, %v3622
        %3880 = vst.msk [vmem:[%s204 + $0x188] sm:$0xf] %vm3781, %v3623
        %3881 = vst.msk [vmem:[%s204 + $0x18c] sm:$0xf] %vm3781, %v3624
        %3882 = vst.msk [vmem:[%s204 + $0x190] sm:$0xf] %vm3781, %v3625
        %3883 = vst.msk [vmem:[%s204 + $0x194] sm:$0xf] %vm3781, %v3626
        %3884 = vst.msk [vmem:[%s204 + $0x198] sm:$0xf] %vm3781, %v3627
        %3885 = vst.msk [vmem:[%s204 + $0x19c] sm:$0xf] %vm3781, %v3628
        %3886 = vst.msk [vmem:[%s204 + $0x1a0] sm:$0xf] %vm3781, %v3629
        %3887 = vst.msk [vmem:[%s204 + $0x1a4] sm:$0xf] %vm3781, %v3630
        %3888 = vst.msk [vmem:[%s204 + $0x1a8] sm:$0xf] %vm3781, %v3631
        %3889 = vst.msk [vmem:[%s204 + $0x1ac] sm:$0xf] %vm3781, %v3632
        %3890 = vst.msk [vmem:[%s204 + $0x1b0] sm:$0xf] %vm3781, %v3633
        %3891 = vst.msk [vmem:[%s204 + $0x1b4] sm:$0xf] %vm3781, %v3634
        %3892 = vst.msk [vmem:[%s204 + $0x1b8] sm:$0xf] %vm3781, %v3635
        %3893 = vst.msk [vmem:[%s204 + $0x1bc] sm:$0xf] %vm3781, %v3636
        %3894 = vst.msk [vmem:[%s204 + $0x1c0] sm:$0xf] %vm3781, %v3637
        %3895 = vst.msk [vmem:[%s204 + $0x1c4] sm:$0xf] %vm3781, %v3638
        %3896 = vst.msk [vmem:[%s204 + $0x1c8] sm:$0xf] %vm3781, %v3639
        %3897 = vst.msk [vmem:[%s204 + $0x1cc] sm:$0xf] %vm3781, %v3640
        %3898 = vst.msk [vmem:[%s204 + $0x1d0] sm:$0xf] %vm3781, %v3641
        %3899 = vst.msk [vmem:[%s204 + $0x1d4] sm:$0xf] %vm3781, %v3642
        %3900 = vst.msk [vmem:[%s204 + $0x1d8] sm:$0xf] %vm3781, %v3643
        %3901 = vst.msk [vmem:[%s204 + $0x1dc] sm:$0xf] %vm3781, %v3644
        %3902 = vst.msk [vmem:[%s204 + $0x1e0] sm:$0xf] %vm3781, %v3645
        %3903 = vst.msk [vmem:[%s204 + $0x1e4] sm:$0xf] %vm3781, %v3646
        %3904 = vst.msk [vmem:[%s204 + $0x1e8] sm:$0xf] %vm3781, %v3647
        %3905 = vst.msk [vmem:[%s204 + $0x1ec] sm:$0xf] %vm3781, %v3648
        %3906 = vst.msk [vmem:[%s204 + $0x1f0] sm:$0xf] %vm3781, %v3649
        %3907 = vst.msk [vmem:[%s204 + $0x1f4] sm:$0xf] %vm3781, %v3650
        %3908 = vst.msk [vmem:[%s204 + $0x1f8] sm:$0xf] %vm3781, %v3651
        %3909 = vst.msk [vmem:[%s204 + $0x1fc] sm:$0xf] %vm3781, %v3652
        %s3910 = sand.u32 %s112, 1
        %s3911 = sand.u32 %s112, 1
        %s3912 = smul.addr %s3911, 512
        %s3913 = scalar_lea.vmem [#allocation2], %s3912
        // Predicated region
        $region37: #{simple_mobilenet_pallas.4} parent=35 // pred_check
          %p3914 = pneg %p122
        $region38: #{simple_mobilenet_pallas.4} parent=35 // pred_check_branch
          %3916 = sbr.rel (%p3914) target = $region40
        $region39: #{simple_mobilenet_pallas.4} parent=35 // pred_region
          %s3917 = smul.u32 128, %s15
          %s3918 = ssub.s32 196, %s3917
          %p3919 = scmp.lt.s32.totalorder %s3918, 128
          %s3920 = scalar_select %p3919, %s3918, 128
          %s3921 = smul.u32 64, %s3920
          %p3922 = scmp.ne.s32.totalorder 0, %s3921
          %s3923 = smul.addr %s3917, 4
          %s3924 = scalar_lea.vmem %s4, %s3923
          // Predicated region
          $region41: #{simple_mobilenet_pallas.4} parent=39 // pred_check
            %p3925 = pneg %p3922
          $region42: #{simple_mobilenet_pallas.4} parent=39 // pred_check_branch
            %3927 = sbr.rel (%p3925) target = $region44
          $region43: #{simple_mobilenet_pallas.4} parent=39 // pred_region
            // Predicated region
            $region45: #{simple_mobilenet_pallas.4} parent=43 // pred_check
              _
            $region46: #{simple_mobilenet_pallas.4} parent=43 // pred_check_branch
              %3929 = sbr.rel target = $region48
            $region47: #{simple_mobilenet_pallas.4} parent=43 // pred_region
              // Predicated region
              $region67: #{simple_mobilenet_pallas.4} parent=47 // pred_check
                _
              $region68: #{simple_mobilenet_pallas.4} parent=47 // pred_check_branch
                %4104 = sbr.rel (0) target = $region70
              $region69: #{simple_mobilenet_pallas.4} parent=47 // pred_region
                %s4106 = sshrl.u32 %s3920, 6
                // While loop
                $region71: #{simple_mobilenet_pallas.4} parent=69 // loop_pre_header
                  _
                $region72: #{simple_mobilenet_pallas.4} parent=69 // loop_header
                  %s4108 = sphi 0, %s4110
                  %p4109 = scmp.ge.s32.totalorder %s4108, %s4106
                  %s4113 = sphi 0, %s4246
                  %s4114 = sphi %s3913, %s4249
                  %s4115 = sphi %s3924, %s4250
                $region73: #{simple_mobilenet_pallas.4} parent=69 // loop_header_branch
                  %4112 = sbr.rel (%p4109) target = $region77
                $region74: #{simple_mobilenet_pallas.4} parent=69 // loop_body
                  %v4116 = vld [vmem:[%s4114] sm:$0xf]
                  %4117 = vst [vmem:[%s4115] sm:$0xf] %v4116
                  %v4118 = vld [vmem:[%s4114 + $0x4] sm:$0xf]
                  %4119 = vst [vmem:[%s4115 + $0x4] sm:$0xf] %v4118
                  %v4120 = vld [vmem:[%s4114 + $0x8] sm:$0xf]
                  %4121 = vst [vmem:[%s4115 + $0x8] sm:$0xf] %v4120
                  %v4122 = vld [vmem:[%s4114 + $0xc] sm:$0xf]
                  %4123 = vst [vmem:[%s4115 + $0xc] sm:$0xf] %v4122
                  %v4124 = vld [vmem:[%s4114 + $0x10] sm:$0xf]
                  %4125 = vst [vmem:[%s4115 + $0x10] sm:$0xf] %v4124
                  %v4126 = vld [vmem:[%s4114 + $0x14] sm:$0xf]
                  %4127 = vst [vmem:[%s4115 + $0x14] sm:$0xf] %v4126
                  %v4128 = vld [vmem:[%s4114 + $0x18] sm:$0xf]
                  %4129 = vst [vmem:[%s4115 + $0x18] sm:$0xf] %v4128
                  %v4130 = vld [vmem:[%s4114 + $0x1c] sm:$0xf]
                  %4131 = vst [vmem:[%s4115 + $0x1c] sm:$0xf] %v4130
                  %v4132 = vld [vmem:[%s4114 + $0x20] sm:$0xf]
                  %4133 = vst [vmem:[%s4115 + $0x20] sm:$0xf] %v4132
                  %v4134 = vld [vmem:[%s4114 + $0x24] sm:$0xf]
                  %4135 = vst [vmem:[%s4115 + $0x24] sm:$0xf] %v4134
                  %v4136 = vld [vmem:[%s4114 + $0x28] sm:$0xf]
                  %4137 = vst [vmem:[%s4115 + $0x28] sm:$0xf] %v4136
                  %v4138 = vld [vmem:[%s4114 + $0x2c] sm:$0xf]
                  %4139 = vst [vmem:[%s4115 + $0x2c] sm:$0xf] %v4138
                  %v4140 = vld [vmem:[%s4114 + $0x30] sm:$0xf]
                  %4141 = vst [vmem:[%s4115 + $0x30] sm:$0xf] %v4140
                  %v4142 = vld [vmem:[%s4114 + $0x34] sm:$0xf]
                  %4143 = vst [vmem:[%s4115 + $0x34] sm:$0xf] %v4142
                  %v4144 = vld [vmem:[%s4114 + $0x38] sm:$0xf]
                  %4145 = vst [vmem:[%s4115 + $0x38] sm:$0xf] %v4144
                  %v4146 = vld [vmem:[%s4114 + $0x3c] sm:$0xf]
                  %4147 = vst [vmem:[%s4115 + $0x3c] sm:$0xf] %v4146
                  %v4148 = vld [vmem:[%s4114 + $0x40] sm:$0xf]
                  %4149 = vst [vmem:[%s4115 + $0x40] sm:$0xf] %v4148
                  %v4150 = vld [vmem:[%s4114 + $0x44] sm:$0xf]
                  %4151 = vst [vmem:[%s4115 + $0x44] sm:$0xf] %v4150
                  %v4152 = vld [vmem:[%s4114 + $0x48] sm:$0xf]
                  %4153 = vst [vmem:[%s4115 + $0x48] sm:$0xf] %v4152
                  %v4154 = vld [vmem:[%s4114 + $0x4c] sm:$0xf]
                  %4155 = vst [vmem:[%s4115 + $0x4c] sm:$0xf] %v4154
                  %v4156 = vld [vmem:[%s4114 + $0x50] sm:$0xf]
                  %4157 = vst [vmem:[%s4115 + $0x50] sm:$0xf] %v4156
                  %v4158 = vld [vmem:[%s4114 + $0x54] sm:$0xf]
                  %4159 = vst [vmem:[%s4115 + $0x54] sm:$0xf] %v4158
                  %v4160 = vld [vmem:[%s4114 + $0x58] sm:$0xf]
                  %4161 = vst [vmem:[%s4115 + $0x58] sm:$0xf] %v4160
                  %v4162 = vld [vmem:[%s4114 + $0x5c] sm:$0xf]
                  %4163 = vst [vmem:[%s4115 + $0x5c] sm:$0xf] %v4162
                  %v4164 = vld [vmem:[%s4114 + $0x60] sm:$0xf]
                  %4165 = vst [vmem:[%s4115 + $0x60] sm:$0xf] %v4164
                  %v4166 = vld [vmem:[%s4114 + $0x64] sm:$0xf]
                  %4167 = vst [vmem:[%s4115 + $0x64] sm:$0xf] %v4166
                  %v4168 = vld [vmem:[%s4114 + $0x68] sm:$0xf]
                  %4169 = vst [vmem:[%s4115 + $0x68] sm:$0xf] %v4168
                  %v4170 = vld [vmem:[%s4114 + $0x6c] sm:$0xf]
                  %4171 = vst [vmem:[%s4115 + $0x6c] sm:$0xf] %v4170
                  %v4172 = vld [vmem:[%s4114 + $0x70] sm:$0xf]
                  %4173 = vst [vmem:[%s4115 + $0x70] sm:$0xf] %v4172
                  %v4174 = vld [vmem:[%s4114 + $0x74] sm:$0xf]
                  %4175 = vst [vmem:[%s4115 + $0x74] sm:$0xf] %v4174
                  %v4176 = vld [vmem:[%s4114 + $0x78] sm:$0xf]
                  %4177 = vst [vmem:[%s4115 + $0x78] sm:$0xf] %v4176
                  %v4178 = vld [vmem:[%s4114 + $0x7c] sm:$0xf]
                  %4179 = vst [vmem:[%s4115 + $0x7c] sm:$0xf] %v4178
                  %v4180 = vld [vmem:[%s4114 + $0x80] sm:$0xf]
                  %4181 = vst [vmem:[%s4115 + $0x80] sm:$0xf] %v4180
                  %v4182 = vld [vmem:[%s4114 + $0x84] sm:$0xf]
                  %4183 = vst [vmem:[%s4115 + $0x84] sm:$0xf] %v4182
                  %v4184 = vld [vmem:[%s4114 + $0x88] sm:$0xf]
                  %4185 = vst [vmem:[%s4115 + $0x88] sm:$0xf] %v4184
                  %v4186 = vld [vmem:[%s4114 + $0x8c] sm:$0xf]
                  %4187 = vst [vmem:[%s4115 + $0x8c] sm:$0xf] %v4186
                  %v4188 = vld [vmem:[%s4114 + $0x90] sm:$0xf]
                  %4189 = vst [vmem:[%s4115 + $0x90] sm:$0xf] %v4188
                  %v4190 = vld [vmem:[%s4114 + $0x94] sm:$0xf]
                  %4191 = vst [vmem:[%s4115 + $0x94] sm:$0xf] %v4190
                  %v4192 = vld [vmem:[%s4114 + $0x98] sm:$0xf]
                  %4193 = vst [vmem:[%s4115 + $0x98] sm:$0xf] %v4192
                  %v4194 = vld [vmem:[%s4114 + $0x9c] sm:$0xf]
                  %4195 = vst [vmem:[%s4115 + $0x9c] sm:$0xf] %v4194
                  %v4196 = vld [vmem:[%s4114 + $0xa0] sm:$0xf]
                  %4197 = vst [vmem:[%s4115 + $0xa0] sm:$0xf] %v4196
                  %v4198 = vld [vmem:[%s4114 + $0xa4] sm:$0xf]
                  %4199 = vst [vmem:[%s4115 + $0xa4] sm:$0xf] %v4198
                  %v4200 = vld [vmem:[%s4114 + $0xa8] sm:$0xf]
                  %4201 = vst [vmem:[%s4115 + $0xa8] sm:$0xf] %v4200
                  %v4202 = vld [vmem:[%s4114 + $0xac] sm:$0xf]
                  %4203 = vst [vmem:[%s4115 + $0xac] sm:$0xf] %v4202
                  %v4204 = vld [vmem:[%s4114 + $0xb0] sm:$0xf]
                  %4205 = vst [vmem:[%s4115 + $0xb0] sm:$0xf] %v4204
                  %v4206 = vld [vmem:[%s4114 + $0xb4] sm:$0xf]
                  %4207 = vst [vmem:[%s4115 + $0xb4] sm:$0xf] %v4206
                  %v4208 = vld [vmem:[%s4114 + $0xb8] sm:$0xf]
                  %4209 = vst [vmem:[%s4115 + $0xb8] sm:$0xf] %v4208
                  %v4210 = vld [vmem:[%s4114 + $0xbc] sm:$0xf]
                  %4211 = vst [vmem:[%s4115 + $0xbc] sm:$0xf] %v4210
                  %v4212 = vld [vmem:[%s4114 + $0xc0] sm:$0xf]
                  %4213 = vst [vmem:[%s4115 + $0xc0] sm:$0xf] %v4212
                  %v4214 = vld [vmem:[%s4114 + $0xc4] sm:$0xf]
                  %4215 = vst [vmem:[%s4115 + $0xc4] sm:$0xf] %v4214
                  %v4216 = vld [vmem:[%s4114 + $0xc8] sm:$0xf]
                  %4217 = vst [vmem:[%s4115 + $0xc8] sm:$0xf] %v4216
                  %v4218 = vld [vmem:[%s4114 + $0xcc] sm:$0xf]
                  %4219 = vst [vmem:[%s4115 + $0xcc] sm:$0xf] %v4218
                  %v4220 = vld [vmem:[%s4114 + $0xd0] sm:$0xf]
                  %4221 = vst [vmem:[%s4115 + $0xd0] sm:$0xf] %v4220
                  %v4222 = vld [vmem:[%s4114 + $0xd4] sm:$0xf]
                  %4223 = vst [vmem:[%s4115 + $0xd4] sm:$0xf] %v4222
                  %v4224 = vld [vmem:[%s4114 + $0xd8] sm:$0xf]
                  %4225 = vst [vmem:[%s4115 + $0xd8] sm:$0xf] %v4224
                  %v4226 = vld [vmem:[%s4114 + $0xdc] sm:$0xf]
                  %4227 = vst [vmem:[%s4115 + $0xdc] sm:$0xf] %v4226
                  %v4228 = vld [vmem:[%s4114 + $0xe0] sm:$0xf]
                  %4229 = vst [vmem:[%s4115 + $0xe0] sm:$0xf] %v4228
                  %v4230 = vld [vmem:[%s4114 + $0xe4] sm:$0xf]
                  %4231 = vst [vmem:[%s4115 + $0xe4] sm:$0xf] %v4230
                  %v4232 = vld [vmem:[%s4114 + $0xe8] sm:$0xf]
                  %4233 = vst [vmem:[%s4115 + $0xe8] sm:$0xf] %v4232
                  %v4234 = vld [vmem:[%s4114 + $0xec] sm:$0xf]
                  %4235 = vst [vmem:[%s4115 + $0xec] sm:$0xf] %v4234
                  %v4236 = vld [vmem:[%s4114 + $0xf0] sm:$0xf]
                  %4237 = vst [vmem:[%s4115 + $0xf0] sm:$0xf] %v4236
                  %v4238 = vld [vmem:[%s4114 + $0xf4] sm:$0xf]
                  %4239 = vst [vmem:[%s4115 + $0xf4] sm:$0xf] %v4238
                  %v4240 = vld [vmem:[%s4114 + $0xf8] sm:$0xf]
                  %4241 = vst [vmem:[%s4115 + $0xf8] sm:$0xf] %v4240
                  %v4242 = vld [vmem:[%s4114 + $0xfc] sm:$0xf]
                  %4243 = vst [vmem:[%s4115 + $0xfc] sm:$0xf] %v4242
                  %s4244 = sadd.s32 1, %s4113
                  %p4245 = scmp.ge.s32.totalorder %s4244, %s4106
                  %s4246 = scalar_select %p4245, 0, %s4244
                  %s4247 = smul.u32 %s4246, 256
                  %s4248 = smul.u32 %s4246, 256
                  %s4249 = scalar_lea.vmem %s3913, %s4247 [#allocation2]
                  %s4250 = scalar_lea.vmem %s3924, %s4248
                $region75: #{simple_mobilenet_pallas.4} parent=69 // loop_footer
                  %s4110 = sadd.s32 %s4108, 1
                $region76: #{simple_mobilenet_pallas.4} parent=69 // loop_footer_branch
                  %4107 = sbr.rel target = $region72
                $region77: #{simple_mobilenet_pallas.4} parent=69 // loop_exit
                  _
                %s4251 = sshrl.u32 %s3920, 6
                %s4252 = sand.u32 %s3920, 63
                %s4253 = smul.u32 %s4251, 64
                %s4254 = smul.u32 4, %s4253
                %s4255 = scalar_lea.vmem %s3913, %s4254 [#allocation2]
                %s4256 = smul.u32 4, %s4253
                %s4257 = scalar_lea.vmem %s3924, %s4256
                // While loop
                $region78: #{simple_mobilenet_pallas.4} parent=69 // loop_pre_header
                  _
                $region79: #{simple_mobilenet_pallas.4} parent=69 // loop_header
                  %s4259 = sphi 0, %s4261
                  %p4260 = scmp.ge.s32.totalorder %s4259, %s4252
                  %s4264 = sphi 0, %s4271
                  %s4265 = sphi %s4255, %s4274
                  %s4266 = sphi %s4257, %s4275
                $region80: #{simple_mobilenet_pallas.4} parent=69 // loop_header_branch
                  %4263 = sbr.rel (%p4260) target = $region84
                $region81: #{simple_mobilenet_pallas.4} parent=69 // loop_body
                  %v4267 = vld [vmem:[%s4265] sm:$0xf]
                  %4268 = vst [vmem:[%s4266] sm:$0xf] %v4267
                  %s4269 = sadd.s32 1, %s4264
                  %p4270 = scmp.ge.s32.totalorder %s4269, %s4252
                  %s4271 = scalar_select %p4270, 0, %s4269
                  %s4272 = smul.u32 %s4271, 4
                  %s4273 = smul.u32 %s4271, 4
                  %s4274 = scalar_lea.vmem %s4255, %s4272 [#allocation2]
                  %s4275 = scalar_lea.vmem %s4257, %s4273
                $region82: #{simple_mobilenet_pallas.4} parent=69 // loop_footer
                  %s4261 = sadd.s32 %s4259, 1
                $region83: #{simple_mobilenet_pallas.4} parent=69 // loop_footer_branch
                  %4258 = sbr.rel target = $region79
                $region84: #{simple_mobilenet_pallas.4} parent=69 // loop_exit
                  _
              $region70: #{simple_mobilenet_pallas.4} parent=47 // pred_fallthru
                _
            $region48: #{simple_mobilenet_pallas.4} parent=43 // pred_fallthru
              _
            // Predicated region
            $region49: #{simple_mobilenet_pallas.4} parent=43 // pred_check
              _
            $region50: #{simple_mobilenet_pallas.4} parent=43 // pred_check_branch
              %3931 = sbr.rel (0) target = $region52
            $region51: #{simple_mobilenet_pallas.4} parent=43 // pred_region
              %s3933 = sshrl.u32 %s3920, 6
              // While loop
              $region53: #{simple_mobilenet_pallas.4} parent=51 // loop_pre_header
                _
              $region54: #{simple_mobilenet_pallas.4} parent=51 // loop_header
                %s3935 = sphi 0, %s3937
                %p3936 = scmp.ge.s32.totalorder %s3935, %s3933
                %s3940 = sphi 0, %s4073
                %s3941 = sphi %s3913, %s4076
                %s3942 = sphi %s3924, %s4077
              $region55: #{simple_mobilenet_pallas.4} parent=51 // loop_header_branch
                %3939 = sbr.rel (%p3936) target = $region59
              $region56: #{simple_mobilenet_pallas.4} parent=51 // loop_body
                %v3943 = vld [vmem:[%s3941] sm:$0xf]
                %3944 = vst [vmem:[%s3942] sm:$0xf] %v3943
                %v3945 = vld [vmem:[%s3941 + $0x4] sm:$0xf]
                %3946 = vst [vmem:[%s3942 + $0x4] sm:$0xf] %v3945
                %v3947 = vld [vmem:[%s3941 + $0x8] sm:$0xf]
                %3948 = vst [vmem:[%s3942 + $0x8] sm:$0xf] %v3947
                %v3949 = vld [vmem:[%s3941 + $0xc] sm:$0xf]
                %3950 = vst [vmem:[%s3942 + $0xc] sm:$0xf] %v3949
                %v3951 = vld [vmem:[%s3941 + $0x10] sm:$0xf]
                %3952 = vst [vmem:[%s3942 + $0x10] sm:$0xf] %v3951
                %v3953 = vld [vmem:[%s3941 + $0x14] sm:$0xf]
                %3954 = vst [vmem:[%s3942 + $0x14] sm:$0xf] %v3953
                %v3955 = vld [vmem:[%s3941 + $0x18] sm:$0xf]
                %3956 = vst [vmem:[%s3942 + $0x18] sm:$0xf] %v3955
                %v3957 = vld [vmem:[%s3941 + $0x1c] sm:$0xf]
                %3958 = vst [vmem:[%s3942 + $0x1c] sm:$0xf] %v3957
                %v3959 = vld [vmem:[%s3941 + $0x20] sm:$0xf]
                %3960 = vst [vmem:[%s3942 + $0x20] sm:$0xf] %v3959
                %v3961 = vld [vmem:[%s3941 + $0x24] sm:$0xf]
                %3962 = vst [vmem:[%s3942 + $0x24] sm:$0xf] %v3961
                %v3963 = vld [vmem:[%s3941 + $0x28] sm:$0xf]
                %3964 = vst [vmem:[%s3942 + $0x28] sm:$0xf] %v3963
                %v3965 = vld [vmem:[%s3941 + $0x2c] sm:$0xf]
                %3966 = vst [vmem:[%s3942 + $0x2c] sm:$0xf] %v3965
                %v3967 = vld [vmem:[%s3941 + $0x30] sm:$0xf]
                %3968 = vst [vmem:[%s3942 + $0x30] sm:$0xf] %v3967
                %v3969 = vld [vmem:[%s3941 + $0x34] sm:$0xf]
                %3970 = vst [vmem:[%s3942 + $0x34] sm:$0xf] %v3969
                %v3971 = vld [vmem:[%s3941 + $0x38] sm:$0xf]
                %3972 = vst [vmem:[%s3942 + $0x38] sm:$0xf] %v3971
                %v3973 = vld [vmem:[%s3941 + $0x3c] sm:$0xf]
                %3974 = vst [vmem:[%s3942 + $0x3c] sm:$0xf] %v3973
                %v3975 = vld [vmem:[%s3941 + $0x40] sm:$0xf]
                %3976 = vst [vmem:[%s3942 + $0x40] sm:$0xf] %v3975
                %v3977 = vld [vmem:[%s3941 + $0x44] sm:$0xf]
                %3978 = vst [vmem:[%s3942 + $0x44] sm:$0xf] %v3977
                %v3979 = vld [vmem:[%s3941 + $0x48] sm:$0xf]
                %3980 = vst [vmem:[%s3942 + $0x48] sm:$0xf] %v3979
                %v3981 = vld [vmem:[%s3941 + $0x4c] sm:$0xf]
                %3982 = vst [vmem:[%s3942 + $0x4c] sm:$0xf] %v3981
                %v3983 = vld [vmem:[%s3941 + $0x50] sm:$0xf]
                %3984 = vst [vmem:[%s3942 + $0x50] sm:$0xf] %v3983
                %v3985 = vld [vmem:[%s3941 + $0x54] sm:$0xf]
                %3986 = vst [vmem:[%s3942 + $0x54] sm:$0xf] %v3985
                %v3987 = vld [vmem:[%s3941 + $0x58] sm:$0xf]
                %3988 = vst [vmem:[%s3942 + $0x58] sm:$0xf] %v3987
                %v3989 = vld [vmem:[%s3941 + $0x5c] sm:$0xf]
                %3990 = vst [vmem:[%s3942 + $0x5c] sm:$0xf] %v3989
                %v3991 = vld [vmem:[%s3941 + $0x60] sm:$0xf]
                %3992 = vst [vmem:[%s3942 + $0x60] sm:$0xf] %v3991
                %v3993 = vld [vmem:[%s3941 + $0x64] sm:$0xf]
                %3994 = vst [vmem:[%s3942 + $0x64] sm:$0xf] %v3993
                %v3995 = vld [vmem:[%s3941 + $0x68] sm:$0xf]
                %3996 = vst [vmem:[%s3942 + $0x68] sm:$0xf] %v3995
                %v3997 = vld [vmem:[%s3941 + $0x6c] sm:$0xf]
                %3998 = vst [vmem:[%s3942 + $0x6c] sm:$0xf] %v3997
                %v3999 = vld [vmem:[%s3941 + $0x70] sm:$0xf]
                %4000 = vst [vmem:[%s3942 + $0x70] sm:$0xf] %v3999
                %v4001 = vld [vmem:[%s3941 + $0x74] sm:$0xf]
                %4002 = vst [vmem:[%s3942 + $0x74] sm:$0xf] %v4001
                %v4003 = vld [vmem:[%s3941 + $0x78] sm:$0xf]
                %4004 = vst [vmem:[%s3942 + $0x78] sm:$0xf] %v4003
                %v4005 = vld [vmem:[%s3941 + $0x7c] sm:$0xf]
                %4006 = vst [vmem:[%s3942 + $0x7c] sm:$0xf] %v4005
                %v4007 = vld [vmem:[%s3941 + $0x80] sm:$0xf]
                %4008 = vst [vmem:[%s3942 + $0x80] sm:$0xf] %v4007
                %v4009 = vld [vmem:[%s3941 + $0x84] sm:$0xf]
                %4010 = vst [vmem:[%s3942 + $0x84] sm:$0xf] %v4009
                %v4011 = vld [vmem:[%s3941 + $0x88] sm:$0xf]
                %4012 = vst [vmem:[%s3942 + $0x88] sm:$0xf] %v4011
                %v4013 = vld [vmem:[%s3941 + $0x8c] sm:$0xf]
                %4014 = vst [vmem:[%s3942 + $0x8c] sm:$0xf] %v4013
                %v4015 = vld [vmem:[%s3941 + $0x90] sm:$0xf]
                %4016 = vst [vmem:[%s3942 + $0x90] sm:$0xf] %v4015
                %v4017 = vld [vmem:[%s3941 + $0x94] sm:$0xf]
                %4018 = vst [vmem:[%s3942 + $0x94] sm:$0xf] %v4017
                %v4019 = vld [vmem:[%s3941 + $0x98] sm:$0xf]
                %4020 = vst [vmem:[%s3942 + $0x98] sm:$0xf] %v4019
                %v4021 = vld [vmem:[%s3941 + $0x9c] sm:$0xf]
                %4022 = vst [vmem:[%s3942 + $0x9c] sm:$0xf] %v4021
                %v4023 = vld [vmem:[%s3941 + $0xa0] sm:$0xf]
                %4024 = vst [vmem:[%s3942 + $0xa0] sm:$0xf] %v4023
                %v4025 = vld [vmem:[%s3941 + $0xa4] sm:$0xf]
                %4026 = vst [vmem:[%s3942 + $0xa4] sm:$0xf] %v4025
                %v4027 = vld [vmem:[%s3941 + $0xa8] sm:$0xf]
                %4028 = vst [vmem:[%s3942 + $0xa8] sm:$0xf] %v4027
                %v4029 = vld [vmem:[%s3941 + $0xac] sm:$0xf]
                %4030 = vst [vmem:[%s3942 + $0xac] sm:$0xf] %v4029
                %v4031 = vld [vmem:[%s3941 + $0xb0] sm:$0xf]
                %4032 = vst [vmem:[%s3942 + $0xb0] sm:$0xf] %v4031
                %v4033 = vld [vmem:[%s3941 + $0xb4] sm:$0xf]
                %4034 = vst [vmem:[%s3942 + $0xb4] sm:$0xf] %v4033
                %v4035 = vld [vmem:[%s3941 + $0xb8] sm:$0xf]
                %4036 = vst [vmem:[%s3942 + $0xb8] sm:$0xf] %v4035
                %v4037 = vld [vmem:[%s3941 + $0xbc] sm:$0xf]
                %4038 = vst [vmem:[%s3942 + $0xbc] sm:$0xf] %v4037
                %v4039 = vld [vmem:[%s3941 + $0xc0] sm:$0xf]
                %4040 = vst [vmem:[%s3942 + $0xc0] sm:$0xf] %v4039
                %v4041 = vld [vmem:[%s3941 + $0xc4] sm:$0xf]
                %4042 = vst [vmem:[%s3942 + $0xc4] sm:$0xf] %v4041
                %v4043 = vld [vmem:[%s3941 + $0xc8] sm:$0xf]
                %4044 = vst [vmem:[%s3942 + $0xc8] sm:$0xf] %v4043
                %v4045 = vld [vmem:[%s3941 + $0xcc] sm:$0xf]
                %4046 = vst [vmem:[%s3942 + $0xcc] sm:$0xf] %v4045
                %v4047 = vld [vmem:[%s3941 + $0xd0] sm:$0xf]
                %4048 = vst [vmem:[%s3942 + $0xd0] sm:$0xf] %v4047
                %v4049 = vld [vmem:[%s3941 + $0xd4] sm:$0xf]
                %4050 = vst [vmem:[%s3942 + $0xd4] sm:$0xf] %v4049
                %v4051 = vld [vmem:[%s3941 + $0xd8] sm:$0xf]
                %4052 = vst [vmem:[%s3942 + $0xd8] sm:$0xf] %v4051
                %v4053 = vld [vmem:[%s3941 + $0xdc] sm:$0xf]
                %4054 = vst [vmem:[%s3942 + $0xdc] sm:$0xf] %v4053
                %v4055 = vld [vmem:[%s3941 + $0xe0] sm:$0xf]
                %4056 = vst [vmem:[%s3942 + $0xe0] sm:$0xf] %v4055
                %v4057 = vld [vmem:[%s3941 + $0xe4] sm:$0xf]
                %4058 = vst [vmem:[%s3942 + $0xe4] sm:$0xf] %v4057
                %v4059 = vld [vmem:[%s3941 + $0xe8] sm:$0xf]
                %4060 = vst [vmem:[%s3942 + $0xe8] sm:$0xf] %v4059
                %v4061 = vld [vmem:[%s3941 + $0xec] sm:$0xf]
                %4062 = vst [vmem:[%s3942 + $0xec] sm:$0xf] %v4061
                %v4063 = vld [vmem:[%s3941 + $0xf0] sm:$0xf]
                %4064 = vst [vmem:[%s3942 + $0xf0] sm:$0xf] %v4063
                %v4065 = vld [vmem:[%s3941 + $0xf4] sm:$0xf]
                %4066 = vst [vmem:[%s3942 + $0xf4] sm:$0xf] %v4065
                %v4067 = vld [vmem:[%s3941 + $0xf8] sm:$0xf]
                %4068 = vst [vmem:[%s3942 + $0xf8] sm:$0xf] %v4067
                %v4069 = vld [vmem:[%s3941 + $0xfc] sm:$0xf]
                %4070 = vst [vmem:[%s3942 + $0xfc] sm:$0xf] %v4069
                %s4071 = sadd.s32 1, %s3940
                %p4072 = scmp.ge.s32.totalorder %s4071, %s3933
                %s4073 = scalar_select %p4072, 0, %s4071
                %s4074 = smul.u32 %s4073, 256
                %s4075 = smul.u32 %s4073, 256
                %s4076 = scalar_lea.vmem %s3913, %s4074 [#allocation2]
                %s4077 = scalar_lea.vmem %s3924, %s4075
              $region57: #{simple_mobilenet_pallas.4} parent=51 // loop_footer
                %s3937 = sadd.s32 %s3935, 1
              $region58: #{simple_mobilenet_pallas.4} parent=51 // loop_footer_branch
                %3934 = sbr.rel target = $region54
              $region59: #{simple_mobilenet_pallas.4} parent=51 // loop_exit
                _
              %s4078 = sshrl.u32 %s3920, 6
              %s4079 = sand.u32 %s3920, 63
              %s4080 = smul.u32 %s4078, 64
              %s4081 = smul.u32 4, %s4080
              %s4082 = scalar_lea.vmem %s3913, %s4081 [#allocation2]
              %s4083 = smul.u32 4, %s4080
              %s4084 = scalar_lea.vmem %s3924, %s4083
              // While loop
              $region60: #{simple_mobilenet_pallas.4} parent=51 // loop_pre_header
                _
              $region61: #{simple_mobilenet_pallas.4} parent=51 // loop_header
                %s4086 = sphi 0, %s4088
                %p4087 = scmp.ge.s32.totalorder %s4086, %s4079
                %s4091 = sphi 0, %s4098
                %s4092 = sphi %s4082, %s4101
                %s4093 = sphi %s4084, %s4102
              $region62: #{simple_mobilenet_pallas.4} parent=51 // loop_header_branch
                %4090 = sbr.rel (%p4087) target = $region66
              $region63: #{simple_mobilenet_pallas.4} parent=51 // loop_body
                %v4094 = vld [vmem:[%s4092] sm:$0xf]
                %4095 = vst [vmem:[%s4093] sm:$0xf] %v4094
                %s4096 = sadd.s32 1, %s4091
                %p4097 = scmp.ge.s32.totalorder %s4096, %s4079
                %s4098 = scalar_select %p4097, 0, %s4096
                %s4099 = smul.u32 %s4098, 4
                %s4100 = smul.u32 %s4098, 4
                %s4101 = scalar_lea.vmem %s4082, %s4099 [#allocation2]
                %s4102 = scalar_lea.vmem %s4084, %s4100
              $region64: #{simple_mobilenet_pallas.4} parent=51 // loop_footer
                %s4088 = sadd.s32 %s4086, 1
              $region65: #{simple_mobilenet_pallas.4} parent=51 // loop_footer_branch
                %4085 = sbr.rel target = $region61
              $region66: #{simple_mobilenet_pallas.4} parent=51 // loop_exit
                _
            $region52: #{simple_mobilenet_pallas.4} parent=43 // pred_fallthru
              _
          $region44: #{simple_mobilenet_pallas.4} parent=39 // pred_fallthru
            _
          %4276 = vnop
        $region40: #{simple_mobilenet_pallas.4} parent=35 // pred_fallthru
          _
      $region36: #{simple_mobilenet_pallas.4} parent=5 // pred_fallthru
        _
      %p4277 = scmp.le.s32.totalorder 2, %s10
      // Predicated region
      $region85: #{simple_mobilenet_pallas.4} parent=5 // pred_check
        %p4278 = pneg %p4277
      $region86: #{simple_mobilenet_pallas.4} parent=5 // pred_check_branch
        %4280 = sbr.rel (%p4278) target = $region88
      $region87: #{simple_mobilenet_pallas.4} parent=5 // pred_region
        %s4281 = ssub.s32 %s10, 2
        // Predicated region
        $region89: #{simple_mobilenet_pallas.4} parent=87 // pred_check
          %p4282 = pneg %p128
        $region90: #{simple_mobilenet_pallas.4} parent=87 // pred_check_branch
          %4284 = sbr.rel (%p4282) target = $region92
        $region91: #{simple_mobilenet_pallas.4} parent=87 // pred_region
          %s4285 = sand.u32 %s113, 1
          %s4286 = sand.u32 %s113, 1
          %s4287 = smul.addr %s4286, 512
          %s4288 = scalar_lea.vmem [#allocation2], %s4287
        $region92: #{simple_mobilenet_pallas.4} parent=87 // pred_fallthru
          _
      $region88: #{simple_mobilenet_pallas.4} parent=5 // pred_fallthru
        _
    $region6: #{simple_mobilenet_pallas.4} parent=1 // loop_footer
      %s14 = sadd.s32 1, %s10
    $region7: #{simple_mobilenet_pallas.4} parent=1 // loop_footer_branch
      %9 = sbr.rel target = $region3
    $region8: #{simple_mobilenet_pallas.4} parent=1 // loop_exit
      _

// kernel: simple_mobilenet_pallas.5
$region0: #{simple_mobilenet_pallas.5}
  #allocation0 [shape = 'u32[]', space=smem, size = 0x4, offset = 0x4, fixed_abs, tag = 'smem constant byte address 0x4 - core index']
  #allocation1 [shape = 'u32[144,128]{1,0:T(1,128)}', space=vmem, size = 0x12000, scoped, tag = 'internal scratch']
  %s0 = inlined_call_operand.vmem [shape: bf16[392,576], index: 0, kind: input, shape index: {}]
  %s1 = inlined_call_operand.vmem [shape: bf16[576,128], index: 1, kind: input, shape index: {}]
  %s2 = inlined_call_operand.vmem [shape: f32[1,128], index: 2, kind: input, shape index: {}]
  %s3 = inlined_call_operand.vmem [shape: f32[1,128], index: 3, kind: input, shape index: {}]
  %s4 = inlined_call_operand.vmem [shape: bf16[98,392], index: 4, kind: input, shape index: {}]
  %s5 = inlined_call_operand.vmem [shape: bf16[128,21], index: 5, kind: input, shape index: {}]
  %s6 = inlined_call_operand.vmem [shape: f32[1,21], index: 6, kind: input, shape index: {}]
  %s7 = inlined_call_operand.vmem [shape: f32[98,21], index: 7, kind: output, shape index: {}]
  %s8 = sld [smem:[#allocation0]]
  $region38: #{simple_mobilenet_pallas.5} parent=0
    _
  %s10 = ssub.s32 1, %s8
  %s11 = scalar_select 0, %s10, %s8
  // Predicated region
  $region2: #{simple_mobilenet_pallas.5} parent=0 // pred_check
    _
  $region3: #{simple_mobilenet_pallas.5} parent=0 // pred_check_branch
    %13 = sbr.rel (0) target = $region5
  $region4: #{simple_mobilenet_pallas.5} parent=0 // pred_region
    _
  $region5: #{simple_mobilenet_pallas.5} parent=0 // pred_fallthru
    _
  // Predicated region
  $region6: #{simple_mobilenet_pallas.5} parent=0 // pred_check
    _
  $region7: #{simple_mobilenet_pallas.5} parent=0 // pred_check_branch
    %15 = sbr.rel (0) target = $region9
  $region8: #{simple_mobilenet_pallas.5} parent=0 // pred_region
    _
  $region9: #{simple_mobilenet_pallas.5} parent=0 // pred_fallthru
    _
  // Predicated region
  $region10: #{simple_mobilenet_pallas.5} parent=0 // pred_check
    _
  $region11: #{simple_mobilenet_pallas.5} parent=0 // pred_check_branch
    %17 = sbr.rel (0) target = $region13
  $region12: #{simple_mobilenet_pallas.5} parent=0 // pred_region
    _
  $region13: #{simple_mobilenet_pallas.5} parent=0 // pred_fallthru
    _
  // Predicated region
  $region14: #{simple_mobilenet_pallas.5} parent=0 // pred_check
    _
  $region15: #{simple_mobilenet_pallas.5} parent=0 // pred_check_branch
    %19 = sbr.rel (0) target = $region17
  $region16: #{simple_mobilenet_pallas.5} parent=0 // pred_region
    _
  $region17: #{simple_mobilenet_pallas.5} parent=0 // pred_fallthru
    _
  // Predicated region
  $region18: #{simple_mobilenet_pallas.5} parent=0 // pred_check
    _
  $region19: #{simple_mobilenet_pallas.5} parent=0 // pred_check_branch
    %21 = sbr.rel (0) target = $region21
  $region20: #{simple_mobilenet_pallas.5} parent=0 // pred_region
    _
  $region21: #{simple_mobilenet_pallas.5} parent=0 // pred_fallthru
    _
  // Predicated region
  $region22: #{simple_mobilenet_pallas.5} parent=0 // pred_check
    _
  $region23: #{simple_mobilenet_pallas.5} parent=0 // pred_check_branch
    %23 = sbr.rel (0) target = $region25
  $region24: #{simple_mobilenet_pallas.5} parent=0 // pred_region
    _
  $region25: #{simple_mobilenet_pallas.5} parent=0 // pred_fallthru
    _
  // Predicated region
  $region26: #{simple_mobilenet_pallas.5} parent=0 // pred_check
    _
  $region27: #{simple_mobilenet_pallas.5} parent=0 // pred_check_branch
    %25 = sbr.rel (0) target = $region29
  $region28: #{simple_mobilenet_pallas.5} parent=0 // pred_region
    _
  $region29: #{simple_mobilenet_pallas.5} parent=0 // pred_fallthru
    _
  %v27 = vld [vmem:[%s0] sm:$0xff]
  %v28 = vld [vmem:[%s0 + $0x8] sm:$0xff]
  %v29 = vld [vmem:[%s0 + $0x10] sm:$0xf]
  %v30 = vld [vmem:[%s0 + $0x14] sm:$0xff]
  %v31 = vld [vmem:[%s0 + $0x1c] sm:$0xff]
  %v32 = vld [vmem:[%s0 + $0x24] sm:$0xf]
  %v33 = vld [vmem:[%s0 + $0x28] sm:$0xff]
  %v34 = vld [vmem:[%s0 + $0x30] sm:$0xff]
  %v35 = vld [vmem:[%s0 + $0x38] sm:$0xf]
  %v36 = vld [vmem:[%s0 + $0x3c] sm:$0xff]
  %v37 = vld [vmem:[%s0 + $0x44] sm:$0xff]
  %v38 = vld [vmem:[%s0 + $0x4c] sm:$0xf]
  %v39 = vld [vmem:[%s0 + $0x50] sm:$0xff]
  %v40 = vld [vmem:[%s0 + $0x58] sm:$0xff]
  %v41 = vld [vmem:[%s0 + $0x60] sm:$0xf]
  %v42 = vld [vmem:[%s0 + $0x64] sm:$0xff]
  %v43 = vld [vmem:[%s0 + $0x6c] sm:$0xff]
  %v44 = vld [vmem:[%s0 + $0x74] sm:$0xf]
  %v45 = vld [vmem:[%s0 + $0x78] sm:$0xff]
  %v46 = vld [vmem:[%s0 + $0x80] sm:$0xff]
  %v47 = vld [vmem:[%s0 + $0x88] sm:$0xf]
  %v48 = vld [vmem:[%s0 + $0x8c] sm:$0xff]
  %v49 = vld [vmem:[%s0 + $0x94] sm:$0xff]
  %v50 = vld [vmem:[%s0 + $0x9c] sm:$0xf]
  %v51 = vld [vmem:[%s0 + $0xa0] sm:$0xff]
  %v52 = vld [vmem:[%s0 + $0xa8] sm:$0xff]
  %v53 = vld [vmem:[%s0 + $0xb0] sm:$0xf]
  %v54 = vld [vmem:[%s0 + $0xb4] sm:$0xff]
  %v55 = vld [vmem:[%s0 + $0xbc] sm:$0xff]
  %v56 = vld [vmem:[%s0 + $0xc4] sm:$0xf]
  %v57 = vld [vmem:[%s0 + $0xc8] sm:$0xff]
  %v58 = vld [vmem:[%s0 + $0xd0] sm:$0xff]
  %v59 = vld [vmem:[%s0 + $0xd8] sm:$0xf]
  %v60 = vld [vmem:[%s0 + $0xdc] sm:$0xff]
  %v61 = vld [vmem:[%s0 + $0xe4] sm:$0xff]
  %v62 = vld [vmem:[%s0 + $0xec] sm:$0xf]
  %v63 = vld [vmem:[%s0 + $0xf0] sm:$0xff]
  %v64 = vld [vmem:[%s0 + $0xf8] sm:$0xff]
  %v65 = vld [vmem:[%s0 + $0x100] sm:$0xf]
  %v66 = vld [vmem:[%s0 + $0x104] sm:$0xff]
  %v67 = vld [vmem:[%s0 + $0x10c] sm:$0xff]
  %v68 = vld [vmem:[%s0 + $0x114] sm:$0xf]
  %v69 = vld [vmem:[%s0 + $0x118] sm:$0xff]
  %v70 = vld [vmem:[%s0 + $0x120] sm:$0xff]
  %v71 = vld [vmem:[%s0 + $0x128] sm:$0xf]
  %v72 = vld [vmem:[%s0 + $0x12c] sm:$0xff]
  %v73 = vld [vmem:[%s0 + $0x134] sm:$0xff]
  %v74 = vld [vmem:[%s0 + $0x13c] sm:$0xf]
  %v75 = vld [vmem:[%s0 + $0x140] sm:$0xff]
  %v76 = vld [vmem:[%s0 + $0x148] sm:$0xff]
  %v77 = vld [vmem:[%s0 + $0x150] sm:$0xf]
  %v78 = vld [vmem:[%s0 + $0x154] sm:$0xff]
  %v79 = vld [vmem:[%s0 + $0x15c] sm:$0xff]
  %v80 = vld [vmem:[%s0 + $0x164] sm:$0xf]
  %v81 = vld [vmem:[%s0 + $0x168] sm:$0xff]
  %v82 = vld [vmem:[%s0 + $0x170] sm:$0xff]
  %v83 = vld [vmem:[%s0 + $0x178] sm:$0xf]
  %v84 = vld [vmem:[%s0 + $0x17c] sm:$0xff]
  %v85 = vld [vmem:[%s0 + $0x184] sm:$0xff]
  %v86 = vld [vmem:[%s0 + $0x18c] sm:$0xf]
  %v87 = vld [vmem:[%s0 + $0x190] sm:$0xff]
  %v88 = vld [vmem:[%s0 + $0x198] sm:$0xff]
  %v89 = vld [vmem:[%s0 + $0x1a0] sm:$0xf]
  %v90 = vld [vmem:[%s0 + $0x1a4] sm:$0xff]
  %v91 = vld [vmem:[%s0 + $0x1ac] sm:$0xff]
  %v92 = vld [vmem:[%s0 + $0x1b4] sm:$0xf]
  %v93 = vld [vmem:[%s0 + $0x1b8] sm:$0xff]
  %v94 = vld [vmem:[%s0 + $0x1c0] sm:$0xff]
  %v95 = vld [vmem:[%s0 + $0x1c8] sm:$0xf]
  %v96 = vld [vmem:[%s0 + $0x1cc] sm:$0xff]
  %v97 = vld [vmem:[%s0 + $0x1d4] sm:$0xff]
  %v98 = vld [vmem:[%s0 + $0x1dc] sm:$0xf]
  %v99 = vld [vmem:[%s0 + $0x1e0] sm:$0xff]
  %v100 = vld [vmem:[%s0 + $0x1e8] sm:$0xff]
  %v101 = vld [vmem:[%s0 + $0x1f0] sm:$0xf]
  %v102 = vld [vmem:[%s0 + $0x1f4] sm:$0xff]
  %v103 = vld [vmem:[%s0 + $0x1fc] sm:$0xff]
  %v104 = vld [vmem:[%s0 + $0x204] sm:$0xf]
  %v105 = vld [vmem:[%s0 + $0x208] sm:$0xff]
  %v106 = vld [vmem:[%s0 + $0x210] sm:$0xff]
  %v107 = vld [vmem:[%s0 + $0x218] sm:$0xf]
  %v108 = vld [vmem:[%s0 + $0x21c] sm:$0xff]
  %v109 = vld [vmem:[%s0 + $0x224] sm:$0xff]
  %v110 = vld [vmem:[%s0 + $0x22c] sm:$0xf]
  %v111 = vld [vmem:[%s0 + $0x230] sm:$0xff]
  %v112 = vld [vmem:[%s0 + $0x238] sm:$0xff]
  %v113 = vld [vmem:[%s0 + $0x240] sm:$0xf]
  %v114 = vld [vmem:[%s0 + $0x244] sm:$0xff]
  %v115 = vld [vmem:[%s0 + $0x24c] sm:$0xff]
  %v116 = vld [vmem:[%s0 + $0x254] sm:$0xf]
  %v117 = vld [vmem:[%s0 + $0x258] sm:$0xff]
  %v118 = vld [vmem:[%s0 + $0x260] sm:$0xff]
  %v119 = vld [vmem:[%s0 + $0x268] sm:$0xf]
  %v120 = vld [vmem:[%s0 + $0x26c] sm:$0xff]
  %v121 = vld [vmem:[%s0 + $0x274] sm:$0xff]
  %v122 = vld [vmem:[%s0 + $0x27c] sm:$0xf]
  %v123 = vld [vmem:[%s0 + $0x280] sm:$0xff]
  %v124 = vld [vmem:[%s0 + $0x288] sm:$0xff]
  %v125 = vld [vmem:[%s0 + $0x290] sm:$0xf]
  %v126 = vld [vmem:[%s0 + $0x294] sm:$0xff]
  %v127 = vld [vmem:[%s0 + $0x29c] sm:$0xff]
  %v128 = vld [vmem:[%s0 + $0x2a4] sm:$0xf]
  %v129 = vld [vmem:[%s0 + $0x2a8] sm:$0xff]
  %v130 = vld [vmem:[%s0 + $0x2b0] sm:$0xff]
  %v131 = vld [vmem:[%s0 + $0x2b8] sm:$0xf]
  %v132 = vld [vmem:[%s0 + $0x2bc] sm:$0xff]
  %v133 = vld [vmem:[%s0 + $0x2c4] sm:$0xff]
  %v134 = vld [vmem:[%s0 + $0x2cc] sm:$0xf]
  %v135 = vld [vmem:[%s0 + $0x2d0] sm:$0xff]
  %v136 = vld [vmem:[%s0 + $0x2d8] sm:$0xff]
  %v137 = vld [vmem:[%s0 + $0x2e0] sm:$0xf]
  %v138 = vld [vmem:[%s0 + $0x2e4] sm:$0xff]
  %v139 = vld [vmem:[%s0 + $0x2ec] sm:$0xff]
  %v140 = vld [vmem:[%s0 + $0x2f4] sm:$0xf]
  %v141 = vld [vmem:[%s0 + $0x2f8] sm:$0xff]
  %v142 = vld [vmem:[%s0 + $0x300] sm:$0xff]
  %v143 = vld [vmem:[%s0 + $0x308] sm:$0xf]
  %v144 = vld [vmem:[%s0 + $0x30c] sm:$0xff]
  %v145 = vld [vmem:[%s0 + $0x314] sm:$0xff]
  %v146 = vld [vmem:[%s0 + $0x31c] sm:$0xf]
  %v147 = vld [vmem:[%s0 + $0x320] sm:$0xff]
  %v148 = vld [vmem:[%s0 + $0x328] sm:$0xff]
  %v149 = vld [vmem:[%s0 + $0x330] sm:$0xf]
  %v150 = vld [vmem:[%s0 + $0x334] sm:$0xff]
  %v151 = vld [vmem:[%s0 + $0x33c] sm:$0xff]
  %v152 = vld [vmem:[%s0 + $0x344] sm:$0xf]
  %v153 = vld [vmem:[%s0 + $0x348] sm:$0xff]
  %v154 = vld [vmem:[%s0 + $0x350] sm:$0xff]
  %v155 = vld [vmem:[%s0 + $0x358] sm:$0xf]
  %v156 = vld [vmem:[%s0 + $0x35c] sm:$0xff]
  %v157 = vld [vmem:[%s0 + $0x364] sm:$0xff]
  %v158 = vld [vmem:[%s0 + $0x36c] sm:$0xf]
  %v159 = vld [vmem:[%s0 + $0x370] sm:$0xff]
  %v160 = vld [vmem:[%s0 + $0x378] sm:$0xff]
  %v161 = vld [vmem:[%s0 + $0x380] sm:$0xf]
  %v162 = vld [vmem:[%s0 + $0x384] sm:$0xff]
  %v163 = vld [vmem:[%s0 + $0x38c] sm:$0xff]
  %v164 = vld [vmem:[%s0 + $0x394] sm:$0xf]
  %v165 = vld [vmem:[%s0 + $0x398] sm:$0xff]
  %v166 = vld [vmem:[%s0 + $0x3a0] sm:$0xff]
  %v167 = vld [vmem:[%s0 + $0x3a8] sm:$0xf]
  %v168 = vld [vmem:[%s0 + $0x3ac] sm:$0xff]
  %v169 = vld [vmem:[%s0 + $0x3b4] sm:$0xff]
  %v170 = vld [vmem:[%s0 + $0x3bc] sm:$0xf]
  %v171 = vld [vmem:[%s0 + $0x3c0] sm:$0xff]
  %v172 = vld [vmem:[%s0 + $0x3c8] sm:$0xff]
  %v173 = vld [vmem:[%s0 + $0x3d0] sm:$0xf]
  %v174 = vld [vmem:[%s1] sm:$0xf]
  %v175 = vld [vmem:[%s1 + $0x4] sm:$0xf]
  %v176 = vld [vmem:[%s1 + $0x8] sm:$0xf]
  %v177 = vld [vmem:[%s1 + $0xc] sm:$0xf]
  %v178 = vld [vmem:[%s1 + $0x10] sm:$0xf]
  %v179 = vld [vmem:[%s1 + $0x14] sm:$0xf]
  %v180 = vld [vmem:[%s1 + $0x18] sm:$0xf]
  %v181 = vld [vmem:[%s1 + $0x1c] sm:$0xf]
  %v182 = vld [vmem:[%s1 + $0x20] sm:$0xf]
  %v183 = vld [vmem:[%s1 + $0x24] sm:$0xf]
  %v184 = vld [vmem:[%s1 + $0x28] sm:$0xf]
  %v185 = vld [vmem:[%s1 + $0x2c] sm:$0xf]
  %v186 = vld [vmem:[%s1 + $0x30] sm:$0xf]
  %v187 = vld [vmem:[%s1 + $0x34] sm:$0xf]
  %v188 = vld [vmem:[%s1 + $0x38] sm:$0xf]
  %v189 = vld [vmem:[%s1 + $0x3c] sm:$0xf]
  %v190 = vld [vmem:[%s1 + $0x40] sm:$0xf]
  %v191 = vld [vmem:[%s1 + $0x44] sm:$0xf]
  %v192 = vld [vmem:[%s1 + $0x48] sm:$0xf]
  %v193 = vld [vmem:[%s1 + $0x4c] sm:$0xf]
  %v194 = vld [vmem:[%s1 + $0x50] sm:$0xf]
  %v195 = vld [vmem:[%s1 + $0x54] sm:$0xf]
  %v196 = vld [vmem:[%s1 + $0x58] sm:$0xf]
  %v197 = vld [vmem:[%s1 + $0x5c] sm:$0xf]
  %v198 = vld [vmem:[%s1 + $0x60] sm:$0xf]
  %v199 = vld [vmem:[%s1 + $0x64] sm:$0xf]
  %v200 = vld [vmem:[%s1 + $0x68] sm:$0xf]
  %v201 = vld [vmem:[%s1 + $0x6c] sm:$0xf]
  %v202 = vld [vmem:[%s1 + $0x70] sm:$0xf]
  %v203 = vld [vmem:[%s1 + $0x74] sm:$0xf]
  %v204 = vld [vmem:[%s1 + $0x78] sm:$0xf]
  %v205 = vld [vmem:[%s1 + $0x7c] sm:$0xf]
  %v206 = vld [vmem:[%s1 + $0x80] sm:$0xf]
  %v207 = vld [vmem:[%s1 + $0x84] sm:$0xf]
  %v208 = vld [vmem:[%s1 + $0x88] sm:$0xf]
  %v209 = vld [vmem:[%s1 + $0x8c] sm:$0xf]
  %v210 = vld [vmem:[%s1 + $0x90] sm:$0xf]
  %v211 = vld [vmem:[%s1 + $0x94] sm:$0xf]
  %v212 = vld [vmem:[%s1 + $0x98] sm:$0xf]
  %v213 = vld [vmem:[%s1 + $0x9c] sm:$0xf]
  %v214 = vld [vmem:[%s1 + $0xa0] sm:$0xf]
  %v215 = vld [vmem:[%s1 + $0xa4] sm:$0xf]
  %v216 = vld [vmem:[%s1 + $0xa8] sm:$0xf]
  %v217 = vld [vmem:[%s1 + $0xac] sm:$0xf]
  %v218 = vld [vmem:[%s1 + $0xb0] sm:$0xf]
  %v219 = vld [vmem:[%s1 + $0xb4] sm:$0xf]
  %v220 = vld [vmem:[%s1 + $0xb8] sm:$0xf]
  %v221 = vld [vmem:[%s1 + $0xbc] sm:$0xf]
  %v222 = vld [vmem:[%s1 + $0xc0] sm:$0xf]
  %v223 = vld [vmem:[%s1 + $0xc4] sm:$0xf]
  %v224 = vld [vmem:[%s1 + $0xc8] sm:$0xf]
  %v225 = vld [vmem:[%s1 + $0xcc] sm:$0xf]
  %v226 = vld [vmem:[%s1 + $0xd0] sm:$0xf]
  %v227 = vld [vmem:[%s1 + $0xd4] sm:$0xf]
  %v228 = vld [vmem:[%s1 + $0xd8] sm:$0xf]
  %v229 = vld [vmem:[%s1 + $0xdc] sm:$0xf]
  %v230 = vld [vmem:[%s1 + $0xe0] sm:$0xf]
  %v231 = vld [vmem:[%s1 + $0xe4] sm:$0xf]
  %v232 = vld [vmem:[%s1 + $0xe8] sm:$0xf]
  %v233 = vld [vmem:[%s1 + $0xec] sm:$0xf]
  %v234 = vld [vmem:[%s1 + $0xf0] sm:$0xf]
  %v235 = vld [vmem:[%s1 + $0xf4] sm:$0xf]
  %v236 = vld [vmem:[%s1 + $0xf8] sm:$0xf]
  %v237 = vld [vmem:[%s1 + $0xfc] sm:$0xf]
  %v238 = vld [vmem:[%s1 + $0x100] sm:$0xf]
  %v239 = vld [vmem:[%s1 + $0x104] sm:$0xf]
  %v240 = vld [vmem:[%s1 + $0x108] sm:$0xf]
  %v241 = vld [vmem:[%s1 + $0x10c] sm:$0xf]
  %v242 = vld [vmem:[%s1 + $0x110] sm:$0xf]
  %v243 = vld [vmem:[%s1 + $0x114] sm:$0xf]
  %v244 = vld [vmem:[%s1 + $0x118] sm:$0xf]
  %v245 = vld [vmem:[%s1 + $0x11c] sm:$0xf]
  %v393 = vunpack.c.l.b16 %v27
  %v394 = vunpack.c.h.b16 %v27
  %v395 = vunpack.c.l.b16 %v28
  %v396 = vunpack.c.h.b16 %v28
  %v397 = vunpack.c.l.b16 %v29
  %v398 = vunpack.c.l.b16 %v30
  %v399 = vunpack.c.h.b16 %v30
  %v400 = vunpack.c.l.b16 %v31
  %v401 = vunpack.c.h.b16 %v31
  %v402 = vunpack.c.l.b16 %v32
  %v403 = vunpack.c.l.b16 %v33
  %v404 = vunpack.c.h.b16 %v33
  %v405 = vunpack.c.l.b16 %v34
  %v406 = vunpack.c.h.b16 %v34
  %v407 = vunpack.c.l.b16 %v35
  %v408 = vunpack.c.l.b16 %v36
  %v409 = vunpack.c.h.b16 %v36
  %v410 = vunpack.c.l.b16 %v37
  %v411 = vunpack.c.h.b16 %v37
  %v412 = vunpack.c.l.b16 %v38
  %v413 = vunpack.c.l.b16 %v39
  %v414 = vunpack.c.h.b16 %v39
  %v415 = vunpack.c.l.b16 %v40
  %v416 = vunpack.c.h.b16 %v40
  %v417 = vunpack.c.l.b16 %v41
  %v418 = vunpack.c.l.b16 %v42
  %v419 = vunpack.c.h.b16 %v42
  %v420 = vunpack.c.l.b16 %v43
  %v421 = vunpack.c.h.b16 %v43
  %v422 = vunpack.c.l.b16 %v44
  %v423 = vunpack.c.l.b16 %v45
  %v424 = vunpack.c.h.b16 %v45
  %v425 = vunpack.c.l.b16 %v46
  %v426 = vunpack.c.h.b16 %v46
  %v427 = vunpack.c.l.b16 %v47
  %v428 = vunpack.c.l.b16 %v48
  %v429 = vunpack.c.h.b16 %v48
  %v430 = vunpack.c.l.b16 %v49
  %v431 = vunpack.c.h.b16 %v49
  %v432 = vunpack.c.l.b16 %v50
  %v433 = vunpack.c.l.b16 %v51
  %v434 = vunpack.c.h.b16 %v51
  %v435 = vunpack.c.l.b16 %v52
  %v436 = vunpack.c.h.b16 %v52
  %v437 = vunpack.c.l.b16 %v53
  %v438 = vunpack.c.l.b16 %v54
  %v439 = vunpack.c.h.b16 %v54
  %v440 = vunpack.c.l.b16 %v55
  %v441 = vunpack.c.h.b16 %v55
  %v442 = vunpack.c.l.b16 %v56
  %v443 = vunpack.c.l.b16 %v57
  %v444 = vunpack.c.h.b16 %v57
  %v445 = vunpack.c.l.b16 %v58
  %v446 = vunpack.c.h.b16 %v58
  %v447 = vunpack.c.l.b16 %v59
  %v448 = vunpack.c.l.b16 %v60
  %v449 = vunpack.c.h.b16 %v60
  %v450 = vunpack.c.l.b16 %v61
  %v451 = vunpack.c.h.b16 %v61
  %v452 = vunpack.c.l.b16 %v62
  %v453 = vunpack.c.l.b16 %v63
  %v454 = vunpack.c.h.b16 %v63
  %v455 = vunpack.c.l.b16 %v64
  %v456 = vunpack.c.h.b16 %v64
  %v457 = vunpack.c.l.b16 %v65
  %v458 = vunpack.c.l.b16 %v66
  %v459 = vunpack.c.h.b16 %v66
  %v460 = vunpack.c.l.b16 %v67
  %v461 = vunpack.c.h.b16 %v67
  %v462 = vunpack.c.l.b16 %v68
  %v463 = vunpack.c.l.b16 %v69
  %v464 = vunpack.c.h.b16 %v69
  %v465 = vunpack.c.l.b16 %v70
  %v466 = vunpack.c.h.b16 %v70
  %v467 = vunpack.c.l.b16 %v71
  %v468 = vunpack.c.l.b16 %v72
  %v469 = vunpack.c.h.b16 %v72
  %v470 = vunpack.c.l.b16 %v73
  %v471 = vunpack.c.h.b16 %v73
  %v472 = vunpack.c.l.b16 %v74
  %v473 = vunpack.c.l.b16 %v75
  %v474 = vunpack.c.h.b16 %v75
  %v475 = vunpack.c.l.b16 %v76
  %v476 = vunpack.c.h.b16 %v76
  %v477 = vunpack.c.l.b16 %v77
  %v478 = vunpack.c.l.b16 %v78
  %v479 = vunpack.c.h.b16 %v78
  %v480 = vunpack.c.l.b16 %v79
  %v481 = vunpack.c.h.b16 %v79
  %v482 = vunpack.c.l.b16 %v80
  %v483 = vunpack.c.l.b16 %v81
  %v484 = vunpack.c.h.b16 %v81
  %v485 = vunpack.c.l.b16 %v82
  %v486 = vunpack.c.h.b16 %v82
  %v487 = vunpack.c.l.b16 %v83
  %v488 = vunpack.c.l.b16 %v84
  %v489 = vunpack.c.h.b16 %v84
  %v490 = vunpack.c.l.b16 %v85
  %v491 = vunpack.c.h.b16 %v85
  %v492 = vunpack.c.l.b16 %v86
  %v493 = vunpack.c.l.b16 %v87
  %v494 = vunpack.c.h.b16 %v87
  %v495 = vunpack.c.l.b16 %v88
  %v496 = vunpack.c.h.b16 %v88
  %v497 = vunpack.c.l.b16 %v89
  %v498 = vunpack.c.l.b16 %v90
  %v499 = vunpack.c.h.b16 %v90
  %v500 = vunpack.c.l.b16 %v91
  %v501 = vunpack.c.h.b16 %v91
  %v502 = vunpack.c.l.b16 %v92
  %v503 = vunpack.c.l.b16 %v93
  %v504 = vunpack.c.h.b16 %v93
  %v505 = vunpack.c.l.b16 %v94
  %v506 = vunpack.c.h.b16 %v94
  %v507 = vunpack.c.l.b16 %v95
  %v508 = vunpack.c.l.b16 %v96
  %v509 = vunpack.c.h.b16 %v96
  %v510 = vunpack.c.l.b16 %v97
  %v511 = vunpack.c.h.b16 %v97
  %v512 = vunpack.c.l.b16 %v98
  %v513 = vunpack.c.l.b16 %v99
  %v514 = vunpack.c.h.b16 %v99
  %v515 = vunpack.c.l.b16 %v100
  %v516 = vunpack.c.h.b16 %v100
  %v517 = vunpack.c.l.b16 %v101
  %v518 = vunpack.c.l.b16 %v102
  %v519 = vunpack.c.h.b16 %v102
  %v520 = vunpack.c.l.b16 %v103
  %v521 = vunpack.c.h.b16 %v103
  %v522 = vunpack.c.l.b16 %v104
  %v523 = vunpack.c.l.b16 %v105
  %v524 = vunpack.c.h.b16 %v105
  %v525 = vunpack.c.l.b16 %v106
  %v526 = vunpack.c.h.b16 %v106
  %v527 = vunpack.c.l.b16 %v107
  %v528 = vunpack.c.l.b16 %v108
  %v529 = vunpack.c.h.b16 %v108
  %v530 = vunpack.c.l.b16 %v109
  %v531 = vunpack.c.h.b16 %v109
  %v532 = vunpack.c.l.b16 %v110
  %v533 = vunpack.c.l.b16 %v111
  %v534 = vunpack.c.h.b16 %v111
  %v535 = vunpack.c.l.b16 %v112
  %v536 = vunpack.c.h.b16 %v112
  %v537 = vunpack.c.l.b16 %v113
  %v538 = vunpack.c.l.b16 %v114
  %v539 = vunpack.c.h.b16 %v114
  %v540 = vunpack.c.l.b16 %v115
  %v541 = vunpack.c.h.b16 %v115
  %v542 = vunpack.c.l.b16 %v116
  %v543 = vunpack.c.l.b16 %v117
  %v544 = vunpack.c.h.b16 %v117
  %v545 = vunpack.c.l.b16 %v118
  %v546 = vunpack.c.h.b16 %v118
  %v547 = vunpack.c.l.b16 %v119
  %v548 = vunpack.c.l.b16 %v120
  %v549 = vunpack.c.h.b16 %v120
  %v550 = vunpack.c.l.b16 %v121
  %v551 = vunpack.c.h.b16 %v121
  %v552 = vunpack.c.l.b16 %v122
  %v553 = vunpack.c.l.b16 %v123
  %v554 = vunpack.c.h.b16 %v123
  %v555 = vunpack.c.l.b16 %v124
  %v556 = vunpack.c.h.b16 %v124
  %v557 = vunpack.c.l.b16 %v125
  %v558 = vunpack.c.l.b16 %v126
  %v559 = vunpack.c.h.b16 %v126
  %v560 = vunpack.c.l.b16 %v127
  %v561 = vunpack.c.h.b16 %v127
  %v562 = vunpack.c.l.b16 %v128
  %v563 = vunpack.c.l.b16 %v129
  %v564 = vunpack.c.h.b16 %v129
  %v565 = vunpack.c.l.b16 %v130
  %v566 = vunpack.c.h.b16 %v130
  %v567 = vunpack.c.l.b16 %v131
  %v568 = vunpack.c.l.b16 %v132
  %v569 = vunpack.c.h.b16 %v132
  %v570 = vunpack.c.l.b16 %v133
  %v571 = vunpack.c.h.b16 %v133
  %v572 = vunpack.c.l.b16 %v134
  %v573 = vunpack.c.l.b16 %v135
  %v574 = vunpack.c.h.b16 %v135
  %v575 = vunpack.c.l.b16 %v136
  %v576 = vunpack.c.h.b16 %v136
  %v577 = vunpack.c.l.b16 %v137
  %v578 = vunpack.c.l.b16 %v138
  %v579 = vunpack.c.h.b16 %v138
  %v580 = vunpack.c.l.b16 %v139
  %v581 = vunpack.c.h.b16 %v139
  %v582 = vunpack.c.l.b16 %v140
  %v583 = vunpack.c.l.b16 %v141
  %v584 = vunpack.c.h.b16 %v141
  %v585 = vunpack.c.l.b16 %v142
  %v586 = vunpack.c.h.b16 %v142
  %v587 = vunpack.c.l.b16 %v143
  %v588 = vunpack.c.l.b16 %v144
  %v589 = vunpack.c.h.b16 %v144
  %v590 = vunpack.c.l.b16 %v145
  %v591 = vunpack.c.h.b16 %v145
  %v592 = vunpack.c.l.b16 %v146
  %v593 = vunpack.c.l.b16 %v147
  %v594 = vunpack.c.h.b16 %v147
  %v595 = vunpack.c.l.b16 %v148
  %v596 = vunpack.c.h.b16 %v148
  %v597 = vunpack.c.l.b16 %v149
  %v598 = vunpack.c.l.b16 %v150
  %v599 = vunpack.c.h.b16 %v150
  %v600 = vunpack.c.l.b16 %v151
  %v601 = vunpack.c.h.b16 %v151
  %v602 = vunpack.c.l.b16 %v152
  %v603 = vunpack.c.l.b16 %v153
  %v604 = vunpack.c.h.b16 %v153
  %v605 = vunpack.c.l.b16 %v154
  %v606 = vunpack.c.h.b16 %v154
  %v607 = vunpack.c.l.b16 %v155
  %v608 = vunpack.c.l.b16 %v156
  %v609 = vunpack.c.h.b16 %v156
  %v610 = vunpack.c.l.b16 %v157
  %v611 = vunpack.c.h.b16 %v157
  %v612 = vunpack.c.l.b16 %v158
  %v613 = vunpack.c.l.b16 %v159
  %v614 = vunpack.c.h.b16 %v159
  %v615 = vunpack.c.l.b16 %v160
  %v616 = vunpack.c.h.b16 %v160
  %v617 = vunpack.c.l.b16 %v161
  %v618 = vunpack.c.l.b16 %v162
  %v619 = vunpack.c.h.b16 %v162
  %v620 = vunpack.c.l.b16 %v163
  %v621 = vunpack.c.h.b16 %v163
  %v622 = vunpack.c.l.b16 %v164
  %v623 = vunpack.c.l.b16 %v165
  %v624 = vunpack.c.h.b16 %v165
  %v625 = vunpack.c.l.b16 %v166
  %v626 = vunpack.c.h.b16 %v166
  %v627 = vunpack.c.l.b16 %v167
  %v628 = vunpack.c.l.b16 %v168
  %v629 = vunpack.c.h.b16 %v168
  %v630 = vunpack.c.l.b16 %v169
  %v631 = vunpack.c.h.b16 %v169
  %v632 = vunpack.c.l.b16 %v170
  %v633 = vunpack.c.l.b16 %v171
  %v634 = vunpack.c.h.b16 %v171
  %v635 = vunpack.c.l.b16 %v172
  %v636 = vunpack.c.h.b16 %v172
  %v637 = vunpack.c.l.b16 %v173
  %v638 = vpack.c.b16 %v398, %v393
  %v639 = vpack.c.b16 %v399, %v394
  %v640 = vpack.c.b16 %v400, %v395
  %v641 = vpack.c.b16 %v401, %v396
  %v642 = vpack.c.b16 %v402, %v397
  %v643 = vpack.c.b16 %v408, %v403
  %v644 = vpack.c.b16 %v409, %v404
  %v645 = vpack.c.b16 %v410, %v405
  %v646 = vpack.c.b16 %v411, %v406
  %v647 = vpack.c.b16 %v412, %v407
  %v648 = vpack.c.b16 %v418, %v413
  %v649 = vpack.c.b16 %v419, %v414
  %v650 = vpack.c.b16 %v420, %v415
  %v651 = vpack.c.b16 %v421, %v416
  %v652 = vpack.c.b16 %v422, %v417
  %v653 = vpack.c.b16 %v428, %v423
  %v654 = vpack.c.b16 %v429, %v424
  %v655 = vpack.c.b16 %v430, %v425
  %v656 = vpack.c.b16 %v431, %v426
  %v657 = vpack.c.b16 %v432, %v427
  %v658 = vpack.c.b16 %v438, %v433
  %v659 = vpack.c.b16 %v439, %v434
  %v660 = vpack.c.b16 %v440, %v435
  %v661 = vpack.c.b16 %v441, %v436
  %v662 = vpack.c.b16 %v442, %v437
  %v663 = vpack.c.b16 %v448, %v443
  %v664 = vpack.c.b16 %v449, %v444
  %v665 = vpack.c.b16 %v450, %v445
  %v666 = vpack.c.b16 %v451, %v446
  %v667 = vpack.c.b16 %v452, %v447
  %v668 = vpack.c.b16 %v458, %v453
  %v669 = vpack.c.b16 %v459, %v454
  %v670 = vpack.c.b16 %v460, %v455
  %v671 = vpack.c.b16 %v461, %v456
  %v672 = vpack.c.b16 %v462, %v457
  %v673 = vpack.c.b16 %v468, %v463
  %v674 = vpack.c.b16 %v469, %v464
  %v675 = vpack.c.b16 %v470, %v465
  %v676 = vpack.c.b16 %v471, %v466
  %v677 = vpack.c.b16 %v472, %v467
  %v678 = vpack.c.b16 %v478, %v473
  %v679 = vpack.c.b16 %v479, %v474
  %v680 = vpack.c.b16 %v480, %v475
  %v681 = vpack.c.b16 %v481, %v476
  %v682 = vpack.c.b16 %v482, %v477
  %v683 = vpack.c.b16 %v488, %v483
  %v684 = vpack.c.b16 %v489, %v484
  %v685 = vpack.c.b16 %v490, %v485
  %v686 = vpack.c.b16 %v491, %v486
  %v687 = vpack.c.b16 %v492, %v487
  %v688 = vpack.c.b16 %v498, %v493
  %v689 = vpack.c.b16 %v499, %v494
  %v690 = vpack.c.b16 %v500, %v495
  %v691 = vpack.c.b16 %v501, %v496
  %v692 = vpack.c.b16 %v502, %v497
  %v693 = vpack.c.b16 %v508, %v503
  %v694 = vpack.c.b16 %v509, %v504
  %v695 = vpack.c.b16 %v510, %v505
  %v696 = vpack.c.b16 %v511, %v506
  %v697 = vpack.c.b16 %v512, %v507
  %v698 = vpack.c.b16 %v518, %v513
  %v699 = vpack.c.b16 %v519, %v514
  %v700 = vpack.c.b16 %v520, %v515
  %v701 = vpack.c.b16 %v521, %v516
  %v702 = vpack.c.b16 %v522, %v517
  %v703 = vpack.c.b16 %v528, %v523
  %v704 = vpack.c.b16 %v529, %v524
  %v705 = vpack.c.b16 %v530, %v525
  %v706 = vpack.c.b16 %v531, %v526
  %v707 = vpack.c.b16 %v532, %v527
  %v708 = vpack.c.b16 %v538, %v533
  %v709 = vpack.c.b16 %v539, %v534
  %v710 = vpack.c.b16 %v540, %v535
  %v711 = vpack.c.b16 %v541, %v536
  %v712 = vpack.c.b16 %v542, %v537
  %v713 = vpack.c.b16 %v548, %v543
  %v714 = vpack.c.b16 %v549, %v544
  %v715 = vpack.c.b16 %v550, %v545
  %v716 = vpack.c.b16 %v551, %v546
  %v717 = vpack.c.b16 %v552, %v547
  %v718 = vpack.c.b16 %v558, %v553
  %v719 = vpack.c.b16 %v559, %v554
  %v720 = vpack.c.b16 %v560, %v555
  %v721 = vpack.c.b16 %v561, %v556
  %v722 = vpack.c.b16 %v562, %v557
  %v723 = vpack.c.b16 %v568, %v563
  %v724 = vpack.c.b16 %v569, %v564
  %v725 = vpack.c.b16 %v570, %v565
  %v726 = vpack.c.b16 %v571, %v566
  %v727 = vpack.c.b16 %v572, %v567
  %v728 = vpack.c.b16 %v578, %v573
  %v729 = vpack.c.b16 %v579, %v574
  %v730 = vpack.c.b16 %v580, %v575
  %v731 = vpack.c.b16 %v581, %v576
  %v732 = vpack.c.b16 %v582, %v577
  %v733 = vpack.c.b16 %v588, %v583
  %v734 = vpack.c.b16 %v589, %v584
  %v735 = vpack.c.b16 %v590, %v585
  %v736 = vpack.c.b16 %v591, %v586
  %v737 = vpack.c.b16 %v592, %v587
  %v738 = vpack.c.b16 %v598, %v593
  %v739 = vpack.c.b16 %v599, %v594
  %v740 = vpack.c.b16 %v600, %v595
  %v741 = vpack.c.b16 %v601, %v596
  %v742 = vpack.c.b16 %v602, %v597
  %v743 = vpack.c.b16 %v608, %v603
  %v744 = vpack.c.b16 %v609, %v604
  %v745 = vpack.c.b16 %v610, %v605
  %v746 = vpack.c.b16 %v611, %v606
  %v747 = vpack.c.b16 %v612, %v607
  %v748 = vpack.c.b16 %v618, %v613
  %v749 = vpack.c.b16 %v619, %v614
  %v750 = vpack.c.b16 %v620, %v615
  %v751 = vpack.c.b16 %v621, %v616
  %v752 = vpack.c.b16 %v622, %v617
  %v753 = vpack.c.b16 %v628, %v623
  %v754 = vpack.c.b16 %v629, %v624
  %v755 = vpack.c.b16 %v630, %v625
  %v756 = vpack.c.b16 %v631, %v626
  %v757 = vpack.c.b16 %v632, %v627
  %v758 = vpack.c.b16 %v633, %v633
  %v759 = vpack.c.b16 %v634, %v634
  %v760 = vpack.c.b16 %v635, %v635
  %v761 = vpack.c.b16 %v636, %v636
  %v762 = vpack.c.b16 %v637, %v637
  %v935 = vunpack.c.l.b16 %v174
  %v936 = vunpack.c.l.b16 %v175
  %v937 = vunpack.c.l.b16 %v176
  %v938 = vunpack.c.l.b16 %v177
  %v939 = vunpack.c.l.b16 %v178
  %v940 = vunpack.c.l.b16 %v179
  %v941 = vunpack.c.l.b16 %v180
  %v942 = vunpack.c.l.b16 %v181
  %v943 = vunpack.c.l.b16 %v182
  %v944 = vunpack.c.l.b16 %v183
  %v945 = vunpack.c.l.b16 %v184
  %v946 = vunpack.c.l.b16 %v185
  %v947 = vunpack.c.l.b16 %v186
  %v948 = vunpack.c.l.b16 %v187
  %v949 = vunpack.c.l.b16 %v188
  %v950 = vunpack.c.l.b16 %v189
  %v951 = vunpack.c.l.b16 %v190
  %v952 = vunpack.c.l.b16 %v191
  %v953 = vunpack.c.l.b16 %v192
  %v954 = vunpack.c.l.b16 %v193
  %v955 = vunpack.c.l.b16 %v194
  %v956 = vunpack.c.l.b16 %v195
  %v957 = vunpack.c.l.b16 %v196
  %v958 = vunpack.c.l.b16 %v197
  %v959 = vunpack.c.l.b16 %v198
  %v960 = vunpack.c.l.b16 %v199
  %v961 = vunpack.c.l.b16 %v200
  %v962 = vunpack.c.l.b16 %v201
  %v963 = vunpack.c.l.b16 %v202
  %v964 = vunpack.c.l.b16 %v203
  %v965 = vunpack.c.l.b16 %v204
  %v966 = vunpack.c.l.b16 %v205
  %v967 = vunpack.c.l.b16 %v206
  %v968 = vunpack.c.l.b16 %v207
  %v969 = vunpack.c.l.b16 %v208
  %v970 = vunpack.c.l.b16 %v209
  %v971 = vunpack.c.l.b16 %v210
  %v972 = vunpack.c.l.b16 %v211
  %v973 = vunpack.c.l.b16 %v212
  %v974 = vunpack.c.l.b16 %v213
  %v975 = vunpack.c.l.b16 %v214
  %v976 = vunpack.c.l.b16 %v215
  %v977 = vunpack.c.l.b16 %v216
  %v978 = vunpack.c.l.b16 %v217
  %v979 = vunpack.c.l.b16 %v218
  %v980 = vunpack.c.l.b16 %v219
  %v981 = vunpack.c.l.b16 %v220
  %v982 = vunpack.c.l.b16 %v221
  %v983 = vunpack.c.l.b16 %v222
  %v984 = vunpack.c.l.b16 %v223
  %v985 = vunpack.c.l.b16 %v224
  %v986 = vunpack.c.l.b16 %v225
  %v987 = vunpack.c.l.b16 %v226
  %v988 = vunpack.c.l.b16 %v227
  %v989 = vunpack.c.l.b16 %v228
  %v990 = vunpack.c.l.b16 %v229
  %v991 = vunpack.c.l.b16 %v230
  %v992 = vunpack.c.l.b16 %v231
  %v993 = vunpack.c.l.b16 %v232
  %v994 = vunpack.c.l.b16 %v233
  %v995 = vunpack.c.l.b16 %v234
  %v996 = vunpack.c.l.b16 %v235
  %v997 = vunpack.c.l.b16 %v236
  %v998 = vunpack.c.l.b16 %v237
  %v999 = vunpack.c.l.b16 %v238
  %v1000 = vunpack.c.l.b16 %v239
  %v1001 = vunpack.c.l.b16 %v240
  %v1002 = vunpack.c.l.b16 %v241
  %v1003 = vunpack.c.l.b16 %v242
  %v1004 = vunpack.c.l.b16 %v243
  %v1005 = vunpack.c.l.b16 %v244
  %v1006 = vunpack.c.l.b16 %v245
  %v1007 = vpack.c.b16 %v936, %v935
  %v1008 = vpack.c.b16 %v938, %v937
  %v1009 = vpack.c.b16 %v940, %v939
  %v1010 = vpack.c.b16 %v942, %v941
  %v1011 = vpack.c.b16 %v944, %v943
  %v1012 = vpack.c.b16 %v946, %v945
  %v1013 = vpack.c.b16 %v948, %v947
  %v1014 = vpack.c.b16 %v950, %v949
  %v1015 = vpack.c.b16 %v952, %v951
  %v1016 = vpack.c.b16 %v954, %v953
  %v1017 = vpack.c.b16 %v956, %v955
  %v1018 = vpack.c.b16 %v958, %v957
  %v1019 = vpack.c.b16 %v960, %v959
  %v1020 = vpack.c.b16 %v962, %v961
  %v1021 = vpack.c.b16 %v964, %v963
  %v1022 = vpack.c.b16 %v966, %v965
  %v1023 = vpack.c.b16 %v968, %v967
  %v1024 = vpack.c.b16 %v970, %v969
  %v1025 = vpack.c.b16 %v972, %v971
  %v1026 = vpack.c.b16 %v974, %v973
  %v1027 = vpack.c.b16 %v976, %v975
  %v1028 = vpack.c.b16 %v978, %v977
  %v1029 = vpack.c.b16 %v980, %v979
  %v1030 = vpack.c.b16 %v982, %v981
  %v1031 = vpack.c.b16 %v984, %v983
  %v1032 = vpack.c.b16 %v986, %v985
  %v1033 = vpack.c.b16 %v988, %v987
  %v1034 = vpack.c.b16 %v990, %v989
  %v1035 = vpack.c.b16 %v992, %v991
  %v1036 = vpack.c.b16 %v994, %v993
  %v1037 = vpack.c.b16 %v996, %v995
  %v1038 = vpack.c.b16 %v998, %v997
  %v1039 = vpack.c.b16 %v1000, %v999
  %v1040 = vpack.c.b16 %v1002, %v1001
  %v1041 = vpack.c.b16 %v1004, %v1003
  %v1042 = vpack.c.b16 %v1006, %v1005
  %vm1079 = vcmask 523264
  %v1081 = vsel %vm1079, %v642, 0
  %v1084 = vsel %vm1079, %v647, 0
  %v1087 = vsel %vm1079, %v652, 0
  %v1090 = vsel %vm1079, %v657, 0
  %v1093 = vsel %vm1079, %v662, 0
  %v1096 = vsel %vm1079, %v667, 0
  %v1099 = vsel %vm1079, %v672, 0
  %v1102 = vsel %vm1079, %v677, 0
  %v1105 = vsel %vm1079, %v682, 0
  %v1108 = vsel %vm1079, %v687, 0
  %v1111 = vsel %vm1079, %v692, 0
  %v1114 = vsel %vm1079, %v697, 0
  %v1117 = vsel %vm1079, %v702, 0
  %v1120 = vsel %vm1079, %v707, 0
  %v1123 = vsel %vm1079, %v712, 0
  %v1126 = vsel %vm1079, %v717, 0
  %v1129 = vsel %vm1079, %v722, 0
  %v1132 = vsel %vm1079, %v727, 0
  %v1135 = vsel %vm1079, %v732, 0
  %v1138 = vsel %vm1079, %v737, 0
  %v1141 = vsel %vm1079, %v742, 0
  %v1144 = vsel %vm1079, %v747, 0
  %v1147 = vsel %vm1079, %v752, 0
  %v1150 = vsel %vm1079, %v757, 0
  %v1153 = vsel %vm1079, %v762, 0
  %1155 = vmatprep.subr.bf16.mxu0 0
  %1156 = vmatpush1.bf16.msra.mxu0 %v1007
  %1157 = vmatprep.subr.bf16.mxu0 0
  %1158 = vmatpush1.bf16.msra.mxu0 %v1008
  %1159 = vmatprep.subr.bf16.mxu0 0
  %1160 = vmatpush1.bf16.msra.mxu0 %v1009
  %1161 = vmatprep.subr.bf16.mxu0 0
  %1162 = vmatpush1.bf16.msra.mxu0 %v1010
  %1163 = vmatprep.subr.bf16.mxu0 0
  %1164 = vmatpush1.bf16.msra.mxu0 %v1011
  %1165 = vmatprep.subr.bf16.mxu0 0
  %1166 = vmatpush1.bf16.msra.mxu0 %v1012
  %1167 = vmatprep.subr.bf16.mxu0 0
  %1168 = vmatpush1.bf16.msra.mxu0 %v1013
  %1169 = vmatprep.subr.bf16.mxu0 0
  %1170 = vmatpush1.bf16.msra.mxu0 %v1014
  %1171 = vmatprep.subr.bf16.mxu0 0
  %1172 = vmatpush1.bf16.msra.mxu0 %v1015
  %1173 = vmatprep.subr.bf16.mxu0 0
  %1174 = vmatpush1.bf16.msra.mxu0 %v1016
  %1175 = vmatprep.subr.bf16.mxu0 0
  %1176 = vmatpush1.bf16.msra.mxu0 %v1017
  %1177 = vmatprep.subr.bf16.mxu0 0
  %1178 = vmatpush1.bf16.msra.mxu0 %v1018
  %1179 = vmatprep.subr.bf16.mxu0 0
  %1180 = vmatpush1.bf16.msra.mxu0 %v1019
  %1181 = vmatprep.subr.bf16.mxu0 0
  %1182 = vmatpush1.bf16.msra.mxu0 %v1020
  %1183 = vmatprep.subr.bf16.mxu0 0
  %1184 = vmatpush1.bf16.msra.mxu0 %v1021
  %1185 = vmatprep.subr.bf16.mxu0 0
  %1186 = vmatpush1.bf16.msra.mxu0 %v1022
  %1187 = vmatprep.mubr.bf16.mxu0 %v639
  %1188 = vmatmul.mubr.bf16.gmra.mrb[0].mxu0 %v638
  %v1189 = vpop.f32.mrb[0].mxu0
  %v1190 = vadd.f32 0.0, %v1189
  %v1191 = vpop.f32.mrb[0].mxu0
  %v1192 = vpop.f32.mrb[0].mxu0
  %v1193 = vadd.f32 0.0, %v1192
  %v1194 = vpop.f32.mrb[0].mxu0
  %1195 = vmatprep.mubr.bf16.mxu0 %v644
  %1196 = vmatmul.mubr.bf16.gmra.mrb[0].mxu0 %v643
  %v1197 = vpop.f32.mrb[0].mxu0
  %v1198 = vadd.f32 0.0, %v1197
  %v1199 = vpop.f32.mrb[0].mxu0
  %v1200 = vpop.f32.mrb[0].mxu0
  %v1201 = vadd.f32 0.0, %v1200
  %v1202 = vpop.f32.mrb[0].mxu0
  %1203 = vmatprep.mubr.bf16.mxu0 %v649
  %1204 = vmatmul.mubr.bf16.gmra.mrb[0].mxu0 %v648
  %v1205 = vpop.f32.mrb[0].mxu0
  %v1206 = vadd.f32 0.0, %v1205
  %v1207 = vpop.f32.mrb[0].mxu0
  %v1208 = vpop.f32.mrb[0].mxu0
  %v1209 = vadd.f32 0.0, %v1208
  %v1210 = vpop.f32.mrb[0].mxu0
  %1211 = vmatprep.mubr.bf16.mxu0 %v654
  %1212 = vmatmul.mubr.bf16.gmra.mrb[0].mxu0 %v653
  %v1213 = vpop.f32.mrb[0].mxu0
  %v1214 = vadd.f32 0.0, %v1213
  %v1215 = vpop.f32.mrb[0].mxu0
  %v1216 = vpop.f32.mrb[0].mxu0
  %v1217 = vadd.f32 0.0, %v1216
  %v1218 = vpop.f32.mrb[0].mxu0
  %1219 = vmatprep.mubr.bf16.mxu0 %v659
  %1220 = vmatmul.mubr.bf16.gmra.mrb[0].mxu0 %v658
  %v1221 = vpop.f32.mrb[0].mxu0
  %v1222 = vadd.f32 0.0, %v1221
  %v1223 = vpop.f32.mrb[0].mxu0
  %v1224 = vpop.f32.mrb[0].mxu0
  %v1225 = vadd.f32 0.0, %v1224
  %v1226 = vpop.f32.mrb[0].mxu0
  %1227 = vmatprep.mubr.bf16.mxu0 %v664
  %1228 = vmatmul.mubr.bf16.gmra.mrb[0].mxu0 %v663
  %v1229 = vpop.f32.mrb[0].mxu0
  %v1230 = vadd.f32 0.0, %v1229
  %v1231 = vpop.f32.mrb[0].mxu0
  %v1232 = vpop.f32.mrb[0].mxu0
  %v1233 = vadd.f32 0.0, %v1232
  %v1234 = vpop.f32.mrb[0].mxu0
  %1235 = vmatprep.mubr.bf16.mxu0 %v669
  %1236 = vmatmul.mubr.bf16.gmra.mrb[0].mxu0 %v668
  %v1237 = vpop.f32.mrb[0].mxu0
  %v1238 = vadd.f32 0.0, %v1237
  %v1239 = vpop.f32.mrb[0].mxu0
  %v1240 = vpop.f32.mrb[0].mxu0
  %v1241 = vadd.f32 0.0, %v1240
  %v1242 = vpop.f32.mrb[0].mxu0
  %1243 = vmatprep.mubr.bf16.mxu0 %v674
  %1244 = vmatmul.mubr.bf16.gmra.mrb[0].mxu0 %v673
  %v1245 = vpop.f32.mrb[0].mxu0
  %v1246 = vadd.f32 0.0, %v1245
  %v1247 = vpop.f32.mrb[0].mxu0
  %v1248 = vpop.f32.mrb[0].mxu0
  %v1249 = vadd.f32 0.0, %v1248
  %v1250 = vpop.f32.mrb[0].mxu0
  %1251 = vmatprep.mubr.bf16.mxu0 %v679
  %1252 = vmatmul.mubr.bf16.gmra.mrb[0].mxu0 %v678
  %v1253 = vpop.f32.mrb[0].mxu0
  %v1254 = vadd.f32 0.0, %v1253
  %v1255 = vpop.f32.mrb[0].mxu0
  %v1256 = vpop.f32.mrb[0].mxu0
  %v1257 = vadd.f32 0.0, %v1256
  %v1258 = vpop.f32.mrb[0].mxu0
  %1259 = vmatprep.mubr.bf16.mxu0 %v684
  %1260 = vmatmul.mubr.bf16.gmra.mrb[0].mxu0 %v683
  %v1261 = vpop.f32.mrb[0].mxu0
  %v1262 = vadd.f32 0.0, %v1261
  %v1263 = vpop.f32.mrb[0].mxu0
  %v1264 = vpop.f32.mrb[0].mxu0
  %v1265 = vadd.f32 0.0, %v1264
  %v1266 = vpop.f32.mrb[0].mxu0
  %1267 = vmatprep.mubr.bf16.mxu0 %v689
  %1268 = vmatmul.mubr.bf16.gmra.mrb[0].mxu0 %v688
  %v1269 = vpop.f32.mrb[0].mxu0
  %v1270 = vadd.f32 0.0, %v1269
  %v1271 = vpop.f32.mrb[0].mxu0
  %v1272 = vpop.f32.mrb[0].mxu0
  %v1273 = vadd.f32 0.0, %v1272
  %v1274 = vpop.f32.mrb[0].mxu0
  %1275 = vmatprep.mubr.bf16.mxu0 %v694
  %1276 = vmatmul.mubr.bf16.gmra.mrb[0].mxu0 %v693
  %v1277 = vpop.f32.mrb[0].mxu0
  %v1278 = vadd.f32 0.0, %v1277
  %v1279 = vpop.f32.mrb[0].mxu0
  %v1280 = vpop.f32.mrb[0].mxu0
  %v1281 = vadd.f32 0.0, %v1280
  %v1282 = vpop.f32.mrb[0].mxu0
  %1283 = vmatprep.mubr.bf16.mxu0 %v699
  %1284 = vmatmul.mubr.bf16.gmra.mrb[0].mxu0 %v698
  %v1285 = vpop.f32.mrb[0].mxu0
  %v1286 = vadd.f32 0.0, %v1285
  %v1287 = vpop.f32.mrb[0].mxu0
  %v1288 = vpop.f32.mrb[0].mxu0
  %v1289 = vadd.f32 0.0, %v1288
  %v1290 = vpop.f32.mrb[0].mxu0
  %1291 = vmatprep.mubr.bf16.mxu0 %v704
  %1292 = vmatmul.mubr.bf16.gmra.mrb[0].mxu0 %v703
  %v1293 = vpop.f32.mrb[0].mxu0
  %v1294 = vadd.f32 0.0, %v1293
  %v1295 = vpop.f32.mrb[0].mxu0
  %v1296 = vpop.f32.mrb[0].mxu0
  %v1297 = vadd.f32 0.0, %v1296
  %v1298 = vpop.f32.mrb[0].mxu0
  %1299 = vmatprep.mubr.bf16.mxu0 %v709
  %1300 = vmatmul.mubr.bf16.gmra.mrb[0].mxu0 %v708
  %v1301 = vpop.f32.mrb[0].mxu0
  %v1302 = vadd.f32 0.0, %v1301
  %v1303 = vpop.f32.mrb[0].mxu0
  %v1304 = vpop.f32.mrb[0].mxu0
  %v1305 = vadd.f32 0.0, %v1304
  %v1306 = vpop.f32.mrb[0].mxu0
  %1307 = vmatprep.mubr.bf16.mxu0 %v714
  %1308 = vmatmul.mubr.bf16.gmra.mrb[0].mxu0 %v713
  %v1309 = vpop.f32.mrb[0].mxu0
  %v1310 = vadd.f32 0.0, %v1309
  %v1311 = vpop.f32.mrb[0].mxu0
  %v1312 = vpop.f32.mrb[0].mxu0
  %v1313 = vadd.f32 0.0, %v1312
  %v1314 = vpop.f32.mrb[0].mxu0
  %1315 = vmatprep.mubr.bf16.mxu0 %v719
  %1316 = vmatmul.mubr.bf16.gmra.mrb[0].mxu0 %v718
  %v1317 = vpop.f32.mrb[0].mxu0
  %v1318 = vadd.f32 0.0, %v1317
  %v1319 = vpop.f32.mrb[0].mxu0
  %v1320 = vpop.f32.mrb[0].mxu0
  %v1321 = vadd.f32 0.0, %v1320
  %v1322 = vpop.f32.mrb[0].mxu0
  %1323 = vmatprep.mubr.bf16.mxu0 %v724
  %1324 = vmatmul.mubr.bf16.gmra.mrb[0].mxu0 %v723
  %v1325 = vpop.f32.mrb[0].mxu0
  %v1326 = vadd.f32 0.0, %v1325
  %v1327 = vpop.f32.mrb[0].mxu0
  %v1328 = vpop.f32.mrb[0].mxu0
  %v1329 = vadd.f32 0.0, %v1328
  %v1330 = vpop.f32.mrb[0].mxu0
  %1331 = vmatprep.mubr.bf16.mxu0 %v729
  %1332 = vmatmul.mubr.bf16.gmra.mrb[0].mxu0 %v728
  %v1333 = vpop.f32.mrb[0].mxu0
  %v1334 = vadd.f32 0.0, %v1333
  %v1335 = vpop.f32.mrb[0].mxu0
  %v1336 = vpop.f32.mrb[0].mxu0
  %v1337 = vadd.f32 0.0, %v1336
  %v1338 = vpop.f32.mrb[0].mxu0
  %1339 = vmatprep.mubr.bf16.mxu0 %v734
  %1340 = vmatmul.mubr.bf16.gmra.mrb[0].mxu0 %v733
  %v1341 = vpop.f32.mrb[0].mxu0
  %v1342 = vadd.f32 0.0, %v1341
  %v1343 = vpop.f32.mrb[0].mxu0
  %v1344 = vpop.f32.mrb[0].mxu0
  %v1345 = vadd.f32 0.0, %v1344
  %v1346 = vpop.f32.mrb[0].mxu0
  %1347 = vmatprep.mubr.bf16.mxu0 %v739
  %1348 = vmatmul.mubr.bf16.gmra.mrb[0].mxu0 %v738
  %v1349 = vpop.f32.mrb[0].mxu0
  %v1350 = vadd.f32 0.0, %v1349
  %v1351 = vpop.f32.mrb[0].mxu0
  %v1352 = vpop.f32.mrb[0].mxu0
  %v1353 = vadd.f32 0.0, %v1352
  %v1354 = vpop.f32.mrb[0].mxu0
  %1355 = vmatprep.mubr.bf16.mxu0 %v744
  %1356 = vmatmul.mubr.bf16.gmra.mrb[0].mxu0 %v743
  %v1357 = vpop.f32.mrb[0].mxu0
  %v1358 = vadd.f32 0.0, %v1357
  %v1359 = vpop.f32.mrb[0].mxu0
  %v1360 = vpop.f32.mrb[0].mxu0
  %v1361 = vadd.f32 0.0, %v1360
  %v1362 = vpop.f32.mrb[0].mxu0
  %1363 = vmatprep.mubr.bf16.mxu0 %v749
  %1364 = vmatmul.mubr.bf16.gmra.mrb[0].mxu0 %v748
  %v1365 = vpop.f32.mrb[0].mxu0
  %v1366 = vadd.f32 0.0, %v1365
  %v1367 = vpop.f32.mrb[0].mxu0
  %v1368 = vpop.f32.mrb[0].mxu0
  %v1369 = vadd.f32 0.0, %v1368
  %v1370 = vpop.f32.mrb[0].mxu0
  %1371 = vmatprep.mubr.bf16.mxu0 %v754
  %1372 = vmatmul.mubr.bf16.gmra.mrb[0].mxu0 %v753
  %v1373 = vpop.f32.mrb[0].mxu0
  %v1374 = vadd.f32 0.0, %v1373
  %v1375 = vpop.f32.mrb[0].mxu0
  %v1376 = vpop.f32.mrb[0].mxu0
  %v1377 = vadd.f32 0.0, %v1376
  %v1378 = vpop.f32.mrb[0].mxu0
  %1379 = vmatprep.mubr.bf16.mxu0 %v759
  %1380 = vmatmul.mubr.bf16.gmra.mrb[0].mxu0 %v758
  %v1381 = vpop.f32.mrb[0].mxu0
  %v1382 = vadd.f32 0.0, %v1381
  %v1383 = vpop.f32.mrb[0].mxu0
  %v1384 = vpop.f32.mrb[0].mxu0
  %v1385 = vpop.f32.mrb[0].mxu0
  %1386 = vdwg.mxu0
  %1387 = vmatprep.subr.bf16.mxu0 0
  %1388 = vmatpush1.bf16.msra.mxu0 %v1023
  %1389 = vmatprep.subr.bf16.mxu0 0
  %1390 = vmatpush1.bf16.msra.mxu0 %v1024
  %1391 = vmatprep.subr.bf16.mxu0 0
  %1392 = vmatpush1.bf16.msra.mxu0 %v1025
  %1393 = vmatprep.subr.bf16.mxu0 0
  %1394 = vmatpush1.bf16.msra.mxu0 %v1026
  %1395 = vmatprep.subr.bf16.mxu0 0
  %1396 = vmatpush1.bf16.msra.mxu0 %v1027
  %1397 = vmatprep.subr.bf16.mxu0 0
  %1398 = vmatpush1.bf16.msra.mxu0 %v1028
  %1399 = vmatprep.subr.bf16.mxu0 0
  %1400 = vmatpush1.bf16.msra.mxu0 %v1029
  %1401 = vmatprep.subr.bf16.mxu0 0
  %1402 = vmatpush1.bf16.msra.mxu0 %v1030
  %1403 = vmatprep.subr.bf16.mxu0 0
  %1404 = vmatpush1.bf16.msra.mxu0 %v1031
  %1405 = vmatprep.subr.bf16.mxu0 0
  %1406 = vmatpush1.bf16.msra.mxu0 %v1032
  %1407 = vmatprep.subr.bf16.mxu0 0
  %1408 = vmatpush1.bf16.msra.mxu0 %v1033
  %1409 = vmatprep.subr.bf16.mxu0 0
  %1410 = vmatpush1.bf16.msra.mxu0 %v1034
  %1411 = vmatprep.subr.bf16.mxu0 0
  %1412 = vmatpush1.bf16.msra.mxu0 %v1035
  %1413 = vmatprep.subr.bf16.mxu0 0
  %1414 = vmatpush1.bf16.msra.mxu0 %v1036
  %1415 = vmatprep.subr.bf16.mxu0 0
  %1416 = vmatpush1.bf16.msra.mxu0 %v1037
  %1417 = vmatprep.subr.bf16.mxu0 0
  %1418 = vmatpush1.bf16.msra.mxu0 %v1038
  %1419 = vmatprep.mubr.bf16.mxu0 %v641
  %1420 = vmatmul.mubr.bf16.gmra.mrb[0].mxu0 %v640
  %v1421 = vpop.f32.mrb[0].mxu0
  %v1422 = vadd.f32 %v1190, %v1421
  %v1423 = vpop.f32.mrb[0].mxu0
  %v1424 = vpop.f32.mrb[0].mxu0
  %v1425 = vadd.f32 %v1193, %v1424
  %v1426 = vpop.f32.mrb[0].mxu0
  %1427 = vmatprep.mubr.bf16.mxu0 %v646
  %1428 = vmatmul.mubr.bf16.gmra.mrb[0].mxu0 %v645
  %v1429 = vpop.f32.mrb[0].mxu0
  %v1430 = vadd.f32 %v1198, %v1429
  %v1431 = vpop.f32.mrb[0].mxu0
  %v1432 = vpop.f32.mrb[0].mxu0
  %v1433 = vadd.f32 %v1201, %v1432
  %v1434 = vpop.f32.mrb[0].mxu0
  %1435 = vmatprep.mubr.bf16.mxu0 %v651
  %1436 = vmatmul.mubr.bf16.gmra.mrb[0].mxu0 %v650
  %v1437 = vpop.f32.mrb[0].mxu0
  %v1438 = vadd.f32 %v1206, %v1437
  %v1439 = vpop.f32.mrb[0].mxu0
  %v1440 = vpop.f32.mrb[0].mxu0
  %v1441 = vadd.f32 %v1209, %v1440
  %v1442 = vpop.f32.mrb[0].mxu0
  %1443 = vmatprep.mubr.bf16.mxu0 %v656
  %1444 = vmatmul.mubr.bf16.gmra.mrb[0].mxu0 %v655
  %v1445 = vpop.f32.mrb[0].mxu0
  %v1446 = vadd.f32 %v1214, %v1445
  %v1447 = vpop.f32.mrb[0].mxu0
  %v1448 = vpop.f32.mrb[0].mxu0
  %v1449 = vadd.f32 %v1217, %v1448
  %v1450 = vpop.f32.mrb[0].mxu0
  %1451 = vmatprep.mubr.bf16.mxu0 %v661
  %1452 = vmatmul.mubr.bf16.gmra.mrb[0].mxu0 %v660
  %v1453 = vpop.f32.mrb[0].mxu0
  %v1454 = vadd.f32 %v1222, %v1453
  %v1455 = vpop.f32.mrb[0].mxu0
  %v1456 = vpop.f32.mrb[0].mxu0
  %v1457 = vadd.f32 %v1225, %v1456
  %v1458 = vpop.f32.mrb[0].mxu0
  %1459 = vmatprep.mubr.bf16.mxu0 %v666
  %1460 = vmatmul.mubr.bf16.gmra.mrb[0].mxu0 %v665
  %v1461 = vpop.f32.mrb[0].mxu0
  %v1462 = vadd.f32 %v1230, %v1461
  %v1463 = vpop.f32.mrb[0].mxu0
  %v1464 = vpop.f32.mrb[0].mxu0
  %v1465 = vadd.f32 %v1233, %v1464
  %v1466 = vpop.f32.mrb[0].mxu0
  %1467 = vmatprep.mubr.bf16.mxu0 %v671
  %1468 = vmatmul.mubr.bf16.gmra.mrb[0].mxu0 %v670
  %v1469 = vpop.f32.mrb[0].mxu0
  %v1470 = vadd.f32 %v1238, %v1469
  %v1471 = vpop.f32.mrb[0].mxu0
  %v1472 = vpop.f32.mrb[0].mxu0
  %v1473 = vadd.f32 %v1241, %v1472
  %v1474 = vpop.f32.mrb[0].mxu0
  %1475 = vmatprep.mubr.bf16.mxu0 %v676
  %1476 = vmatmul.mubr.bf16.gmra.mrb[0].mxu0 %v675
  %v1477 = vpop.f32.mrb[0].mxu0
  %v1478 = vadd.f32 %v1246, %v1477
  %v1479 = vpop.f32.mrb[0].mxu0
  %v1480 = vpop.f32.mrb[0].mxu0
  %v1481 = vadd.f32 %v1249, %v1480
  %v1482 = vpop.f32.mrb[0].mxu0
  %1483 = vmatprep.mubr.bf16.mxu0 %v681
  %1484 = vmatmul.mubr.bf16.gmra.mrb[0].mxu0 %v680
  %v1485 = vpop.f32.mrb[0].mxu0
  %v1486 = vadd.f32 %v1254, %v1485
  %v1487 = vpop.f32.mrb[0].mxu0
  %v1488 = vpop.f32.mrb[0].mxu0
  %v1489 = vadd.f32 %v1257, %v1488
  %v1490 = vpop.f32.mrb[0].mxu0
  %1491 = vmatprep.mubr.bf16.mxu0 %v686
  %1492 = vmatmul.mubr.bf16.gmra.mrb[0].mxu0 %v685
  %v1493 = vpop.f32.mrb[0].mxu0
  %v1494 = vadd.f32 %v1262, %v1493
  %v1495 = vpop.f32.mrb[0].mxu0
  %v1496 = vpop.f32.mrb[0].mxu0
  %v1497 = vadd.f32 %v1265, %v1496
  %v1498 = vpop.f32.mrb[0].mxu0
  %1499 = vmatprep.mubr.bf16.mxu0 %v691
  %1500 = vmatmul.mubr.bf16.gmra.mrb[0].mxu0 %v690
  %v1501 = vpop.f32.mrb[0].mxu0
  %v1502 = vadd.f32 %v1270, %v1501
  %v1503 = vpop.f32.mrb[0].mxu0
  %v1504 = vpop.f32.mrb[0].mxu0
  %v1505 = vadd.f32 %v1273, %v1504
  %v1506 = vpop.f32.mrb[0].mxu0
  %1507 = vmatprep.mubr.bf16.mxu0 %v696
  %1508 = vmatmul.mubr.bf16.gmra.mrb[0].mxu0 %v695
  %v1509 = vpop.f32.mrb[0].mxu0
  %v1510 = vadd.f32 %v1278, %v1509
  %v1511 = vpop.f32.mrb[0].mxu0
  %v1512 = vpop.f32.mrb[0].mxu0
  %v1513 = vadd.f32 %v1281, %v1512
  %v1514 = vpop.f32.mrb[0].mxu0
  %1515 = vmatprep.mubr.bf16.mxu0 %v701
  %1516 = vmatmul.mubr.bf16.gmra.mrb[0].mxu0 %v700
  %v1517 = vpop.f32.mrb[0].mxu0
  %v1518 = vadd.f32 %v1286, %v1517
  %v1519 = vpop.f32.mrb[0].mxu0
  %v1520 = vpop.f32.mrb[0].mxu0
  %v1521 = vadd.f32 %v1289, %v1520
  %v1522 = vpop.f32.mrb[0].mxu0
  %1523 = vmatprep.mubr.bf16.mxu0 %v706
  %1524 = vmatmul.mubr.bf16.gmra.mrb[0].mxu0 %v705
  %v1525 = vpop.f32.mrb[0].mxu0
  %v1526 = vadd.f32 %v1294, %v1525
  %v1527 = vpop.f32.mrb[0].mxu0
  %v1528 = vpop.f32.mrb[0].mxu0
  %v1529 = vadd.f32 %v1297, %v1528
  %v1530 = vpop.f32.mrb[0].mxu0
  %1531 = vmatprep.mubr.bf16.mxu0 %v711
  %1532 = vmatmul.mubr.bf16.gmra.mrb[0].mxu0 %v710
  %v1533 = vpop.f32.mrb[0].mxu0
  %v1534 = vadd.f32 %v1302, %v1533
  %v1535 = vpop.f32.mrb[0].mxu0
  %v1536 = vpop.f32.mrb[0].mxu0
  %v1537 = vadd.f32 %v1305, %v1536
  %v1538 = vpop.f32.mrb[0].mxu0
  %1539 = vmatprep.mubr.bf16.mxu0 %v716
  %1540 = vmatmul.mubr.bf16.gmra.mrb[0].mxu0 %v715
  %v1541 = vpop.f32.mrb[0].mxu0
  %v1542 = vadd.f32 %v1310, %v1541
  %v1543 = vpop.f32.mrb[0].mxu0
  %v1544 = vpop.f32.mrb[0].mxu0
  %v1545 = vadd.f32 %v1313, %v1544
  %v1546 = vpop.f32.mrb[0].mxu0
  %1547 = vmatprep.mubr.bf16.mxu0 %v721
  %1548 = vmatmul.mubr.bf16.gmra.mrb[0].mxu0 %v720
  %v1549 = vpop.f32.mrb[0].mxu0
  %v1550 = vadd.f32 %v1318, %v1549
  %v1551 = vpop.f32.mrb[0].mxu0
  %v1552 = vpop.f32.mrb[0].mxu0
  %v1553 = vadd.f32 %v1321, %v1552
  %v1554 = vpop.f32.mrb[0].mxu0
  %1555 = vmatprep.mubr.bf16.mxu0 %v726
  %1556 = vmatmul.mubr.bf16.gmra.mrb[0].mxu0 %v725
  %v1557 = vpop.f32.mrb[0].mxu0
  %v1558 = vadd.f32 %v1326, %v1557
  %v1559 = vpop.f32.mrb[0].mxu0
  %v1560 = vpop.f32.mrb[0].mxu0
  %v1561 = vadd.f32 %v1329, %v1560
  %v1562 = vpop.f32.mrb[0].mxu0
  %1563 = vmatprep.mubr.bf16.mxu0 %v731
  %1564 = vmatmul.mubr.bf16.gmra.mrb[0].mxu0 %v730
  %v1565 = vpop.f32.mrb[0].mxu0
  %v1566 = vadd.f32 %v1334, %v1565
  %v1567 = vpop.f32.mrb[0].mxu0
  %v1568 = vpop.f32.mrb[0].mxu0
  %v1569 = vadd.f32 %v1337, %v1568
  %v1570 = vpop.f32.mrb[0].mxu0
  %1571 = vmatprep.mubr.bf16.mxu0 %v736
  %1572 = vmatmul.mubr.bf16.gmra.mrb[0].mxu0 %v735
  %v1573 = vpop.f32.mrb[0].mxu0
  %v1574 = vadd.f32 %v1342, %v1573
  %v1575 = vpop.f32.mrb[0].mxu0
  %v1576 = vpop.f32.mrb[0].mxu0
  %v1577 = vadd.f32 %v1345, %v1576
  %v1578 = vpop.f32.mrb[0].mxu0
  %1579 = vmatprep.mubr.bf16.mxu0 %v741
  %1580 = vmatmul.mubr.bf16.gmra.mrb[0].mxu0 %v740
  %v1581 = vpop.f32.mrb[0].mxu0
  %v1582 = vadd.f32 %v1350, %v1581
  %v1583 = vpop.f32.mrb[0].mxu0
  %v1584 = vpop.f32.mrb[0].mxu0
  %v1585 = vadd.f32 %v1353, %v1584
  %v1586 = vpop.f32.mrb[0].mxu0
  %1587 = vmatprep.mubr.bf16.mxu0 %v746
  %1588 = vmatmul.mubr.bf16.gmra.mrb[0].mxu0 %v745
  %v1589 = vpop.f32.mrb[0].mxu0
  %v1590 = vadd.f32 %v1358, %v1589
  %v1591 = vpop.f32.mrb[0].mxu0
  %v1592 = vpop.f32.mrb[0].mxu0
  %v1593 = vadd.f32 %v1361, %v1592
  %v1594 = vpop.f32.mrb[0].mxu0
  %1595 = vmatprep.mubr.bf16.mxu0 %v751
  %1596 = vmatmul.mubr.bf16.gmra.mrb[0].mxu0 %v750
  %v1597 = vpop.f32.mrb[0].mxu0
  %v1598 = vadd.f32 %v1366, %v1597
  %v1599 = vpop.f32.mrb[0].mxu0
  %v1600 = vpop.f32.mrb[0].mxu0
  %v1601 = vadd.f32 %v1369, %v1600
  %v1602 = vpop.f32.mrb[0].mxu0
  %1603 = vmatprep.mubr.bf16.mxu0 %v756
  %1604 = vmatmul.mubr.bf16.gmra.mrb[0].mxu0 %v755
  %v1605 = vpop.f32.mrb[0].mxu0
  %v1606 = vadd.f32 %v1374, %v1605
  %v1607 = vpop.f32.mrb[0].mxu0
  %v1608 = vpop.f32.mrb[0].mxu0
  %v1609 = vadd.f32 %v1377, %v1608
  %v1610 = vpop.f32.mrb[0].mxu0
  %1611 = vmatprep.mubr.bf16.mxu0 %v761
  %1612 = vmatmul.mubr.bf16.gmra.mrb[0].mxu0 %v760
  %v1613 = vpop.f32.mrb[0].mxu0
  %v1614 = vadd.f32 %v1382, %v1613
  %v1615 = vpop.f32.mrb[0].mxu0
  %v1616 = vpop.f32.mrb[0].mxu0
  %v1617 = vpop.f32.mrb[0].mxu0
  %1618 = vdwg.mxu0
  %1619 = vmatprep.subr.bf16.mxu0 0
  %1620 = vmatpush1.bf16.msra.mxu0 %v1039
  %1621 = vmatprep.subr.bf16.mxu0 0
  %1622 = vmatpush1.bf16.msra.mxu0 %v1040
  %1623 = vmatprep.subr.bf16.mxu0 0
  %1624 = vmatpush1.bf16.msra.mxu0 %v1041
  %1625 = vmatprep.subr.bf16.mxu0 0
  %1626 = vmatpush1.bf16.msra.mxu0 %v1042
  %1627 = vmatprep.subr.bf16.mxu0 0
  %1628 = vmatpush1.bf16.msra.mxu0 0
  %1629 = vmatprep.subr.bf16.mxu0 0
  %1630 = vmatpush1.bf16.msra.mxu0 0
  %1631 = vmatprep.subr.bf16.mxu0 0
  %1632 = vmatpush1.bf16.msra.mxu0 0
  %1633 = vmatprep.subr.bf16.mxu0 0
  %1634 = vmatpush1.bf16.msra.mxu0 0
  %1635 = vmatprep.subr.bf16.mxu0 0
  %1636 = vmatpush1.bf16.msra.mxu0 0
  %1637 = vmatprep.subr.bf16.mxu0 0
  %1638 = vmatpush1.bf16.msra.mxu0 0
  %1639 = vmatprep.subr.bf16.mxu0 0
  %1640 = vmatpush1.bf16.msra.mxu0 0
  %1641 = vmatprep.subr.bf16.mxu0 0
  %1642 = vmatpush1.bf16.msra.mxu0 0
  %1643 = vmatprep.subr.bf16.mxu0 0
  %1644 = vmatpush1.bf16.msra.mxu0 0
  %1645 = vmatprep.subr.bf16.mxu0 0
  %1646 = vmatpush1.bf16.msra.mxu0 0
  %1647 = vmatprep.subr.bf16.mxu0 0
  %1648 = vmatpush1.bf16.msra.mxu0 0
  %1649 = vmatprep.subr.bf16.mxu0 0
  %1650 = vmatpush1.bf16.msra.mxu0 0
  %1651 = vmatprep.mubr.bf16.mxu0 0
  %1652 = vmatmul.mubr.bf16.gmra.mrb[0].mxu0 %v1081
  %v1653 = vpop.f32.mrb[0].mxu0
  %v1654 = vadd.f32 %v1422, %v1653
  %v1655 = vpop.f32.mrb[0].mxu0
  %v1656 = vpop.f32.mrb[0].mxu0
  %v1657 = vadd.f32 %v1425, %v1656
  %v1658 = vpop.f32.mrb[0].mxu0
  %1659 = vmatprep.mubr.bf16.mxu0 0
  %1660 = vmatmul.mubr.bf16.gmra.mrb[0].mxu0 %v1084
  %v1661 = vpop.f32.mrb[0].mxu0
  %v1662 = vadd.f32 %v1430, %v1661
  %v1663 = vpop.f32.mrb[0].mxu0
  %v1664 = vpop.f32.mrb[0].mxu0
  %v1665 = vadd.f32 %v1433, %v1664
  %v1666 = vpop.f32.mrb[0].mxu0
  %1667 = vmatprep.mubr.bf16.mxu0 0
  %1668 = vmatmul.mubr.bf16.gmra.mrb[0].mxu0 %v1087
  %v1669 = vpop.f32.mrb[0].mxu0
  %v1670 = vadd.f32 %v1438, %v1669
  %v1671 = vpop.f32.mrb[0].mxu0
  %v1672 = vpop.f32.mrb[0].mxu0
  %v1673 = vadd.f32 %v1441, %v1672
  %v1674 = vpop.f32.mrb[0].mxu0
  %1675 = vmatprep.mubr.bf16.mxu0 0
  %1676 = vmatmul.mubr.bf16.gmra.mrb[0].mxu0 %v1090
  %v1677 = vpop.f32.mrb[0].mxu0
  %v1678 = vadd.f32 %v1446, %v1677
  %v1679 = vpop.f32.mrb[0].mxu0
  %v1680 = vpop.f32.mrb[0].mxu0
  %v1681 = vadd.f32 %v1449, %v1680
  %v1682 = vpop.f32.mrb[0].mxu0
  %1683 = vmatprep.mubr.bf16.mxu0 0
  %1684 = vmatmul.mubr.bf16.gmra.mrb[0].mxu0 %v1093
  %v1685 = vpop.f32.mrb[0].mxu0
  %v1686 = vadd.f32 %v1454, %v1685
  %v1687 = vpop.f32.mrb[0].mxu0
  %v1688 = vpop.f32.mrb[0].mxu0
  %v1689 = vadd.f32 %v1457, %v1688
  %v1690 = vpop.f32.mrb[0].mxu0
  %1691 = vmatprep.mubr.bf16.mxu0 0
  %1692 = vmatmul.mubr.bf16.gmra.mrb[0].mxu0 %v1096
  %v1693 = vpop.f32.mrb[0].mxu0
  %v1694 = vadd.f32 %v1462, %v1693
  %v1695 = vpop.f32.mrb[0].mxu0
  %v1696 = vpop.f32.mrb[0].mxu0
  %v1697 = vadd.f32 %v1465, %v1696
  %v1698 = vpop.f32.mrb[0].mxu0
  %1699 = vmatprep.mubr.bf16.mxu0 0
  %1700 = vmatmul.mubr.bf16.gmra.mrb[0].mxu0 %v1099
  %v1701 = vpop.f32.mrb[0].mxu0
  %v1702 = vadd.f32 %v1470, %v1701
  %v1703 = vpop.f32.mrb[0].mxu0
  %v1704 = vpop.f32.mrb[0].mxu0
  %v1705 = vadd.f32 %v1473, %v1704
  %v1706 = vpop.f32.mrb[0].mxu0
  %1707 = vmatprep.mubr.bf16.mxu0 0
  %1708 = vmatmul.mubr.bf16.gmra.mrb[0].mxu0 %v1102
  %v1709 = vpop.f32.mrb[0].mxu0
  %v1710 = vadd.f32 %v1478, %v1709
  %v1711 = vpop.f32.mrb[0].mxu0
  %v1712 = vpop.f32.mrb[0].mxu0
  %v1713 = vadd.f32 %v1481, %v1712
  %v1714 = vpop.f32.mrb[0].mxu0
  %1715 = vmatprep.mubr.bf16.mxu0 0
  %1716 = vmatmul.mubr.bf16.gmra.mrb[0].mxu0 %v1105
  %v1717 = vpop.f32.mrb[0].mxu0
  %v1718 = vadd.f32 %v1486, %v1717
  %v1719 = vpop.f32.mrb[0].mxu0
  %v1720 = vpop.f32.mrb[0].mxu0
  %v1721 = vadd.f32 %v1489, %v1720
  %v1722 = vpop.f32.mrb[0].mxu0
  %1723 = vmatprep.mubr.bf16.mxu0 0
  %1724 = vmatmul.mubr.bf16.gmra.mrb[0].mxu0 %v1108
  %v1725 = vpop.f32.mrb[0].mxu0
  %v1726 = vadd.f32 %v1494, %v1725
  %v1727 = vpop.f32.mrb[0].mxu0
  %v1728 = vpop.f32.mrb[0].mxu0
  %v1729 = vadd.f32 %v1497, %v1728
  %v1730 = vpop.f32.mrb[0].mxu0
  %1731 = vmatprep.mubr.bf16.mxu0 0
  %1732 = vmatmul.mubr.bf16.gmra.mrb[0].mxu0 %v1111
  %v1733 = vpop.f32.mrb[0].mxu0
  %v1734 = vadd.f32 %v1502, %v1733
  %v1735 = vpop.f32.mrb[0].mxu0
  %v1736 = vpop.f32.mrb[0].mxu0
  %v1737 = vadd.f32 %v1505, %v1736
  %v1738 = vpop.f32.mrb[0].mxu0
  %1739 = vmatprep.mubr.bf16.mxu0 0
  %1740 = vmatmul.mubr.bf16.gmra.mrb[0].mxu0 %v1114
  %v1741 = vpop.f32.mrb[0].mxu0
  %v1742 = vadd.f32 %v1510, %v1741
  %v1743 = vpop.f32.mrb[0].mxu0
  %v1744 = vpop.f32.mrb[0].mxu0
  %v1745 = vadd.f32 %v1513, %v1744
  %v1746 = vpop.f32.mrb[0].mxu0
  %1747 = vmatprep.mubr.bf16.mxu0 0
  %1748 = vmatmul.mubr.bf16.gmra.mrb[0].mxu0 %v1117
  %v1749 = vpop.f32.mrb[0].mxu0
  %v1750 = vadd.f32 %v1518, %v1749
  %v1751 = vpop.f32.mrb[0].mxu0
  %v1752 = vpop.f32.mrb[0].mxu0
  %v1753 = vadd.f32 %v1521, %v1752
  %v1754 = vpop.f32.mrb[0].mxu0
  %1755 = vmatprep.mubr.bf16.mxu0 0
  %1756 = vmatmul.mubr.bf16.gmra.mrb[0].mxu0 %v1120
  %v1757 = vpop.f32.mrb[0].mxu0
  %v1758 = vadd.f32 %v1526, %v1757
  %v1759 = vpop.f32.mrb[0].mxu0
  %v1760 = vpop.f32.mrb[0].mxu0
  %v1761 = vadd.f32 %v1529, %v1760
  %v1762 = vpop.f32.mrb[0].mxu0
  %1763 = vmatprep.mubr.bf16.mxu0 0
  %1764 = vmatmul.mubr.bf16.gmra.mrb[0].mxu0 %v1123
  %v1765 = vpop.f32.mrb[0].mxu0
  %v1766 = vadd.f32 %v1534, %v1765
  %v1767 = vpop.f32.mrb[0].mxu0
  %v1768 = vpop.f32.mrb[0].mxu0
  %v1769 = vadd.f32 %v1537, %v1768
  %v1770 = vpop.f32.mrb[0].mxu0
  %1771 = vmatprep.mubr.bf16.mxu0 0
  %1772 = vmatmul.mubr.bf16.gmra.mrb[0].mxu0 %v1126
  %v1773 = vpop.f32.mrb[0].mxu0
  %v1774 = vadd.f32 %v1542, %v1773
  %v1775 = vpop.f32.mrb[0].mxu0
  %v1776 = vpop.f32.mrb[0].mxu0
  %v1777 = vadd.f32 %v1545, %v1776
  %v1778 = vpop.f32.mrb[0].mxu0
  %1779 = vmatprep.mubr.bf16.mxu0 0
  %1780 = vmatmul.mubr.bf16.gmra.mrb[0].mxu0 %v1129
  %v1781 = vpop.f32.mrb[0].mxu0
  %v1782 = vadd.f32 %v1550, %v1781
  %v1783 = vpop.f32.mrb[0].mxu0
  %v1784 = vpop.f32.mrb[0].mxu0
  %v1785 = vadd.f32 %v1553, %v1784
  %v1786 = vpop.f32.mrb[0].mxu0
  %1787 = vmatprep.mubr.bf16.mxu0 0
  %1788 = vmatmul.mubr.bf16.gmra.mrb[0].mxu0 %v1132
  %v1789 = vpop.f32.mrb[0].mxu0
  %v1790 = vadd.f32 %v1558, %v1789
  %v1791 = vpop.f32.mrb[0].mxu0
  %v1792 = vpop.f32.mrb[0].mxu0
  %v1793 = vadd.f32 %v1561, %v1792
  %v1794 = vpop.f32.mrb[0].mxu0
  %1795 = vmatprep.mubr.bf16.mxu0 0
  %1796 = vmatmul.mubr.bf16.gmra.mrb[0].mxu0 %v1135
  %v1797 = vpop.f32.mrb[0].mxu0
  %v1798 = vadd.f32 %v1566, %v1797
  %v1799 = vpop.f32.mrb[0].mxu0
  %v1800 = vpop.f32.mrb[0].mxu0
  %v1801 = vadd.f32 %v1569, %v1800
  %v1802 = vpop.f32.mrb[0].mxu0
  %1803 = vmatprep.mubr.bf16.mxu0 0
  %1804 = vmatmul.mubr.bf16.gmra.mrb[0].mxu0 %v1138
  %v1805 = vpop.f32.mrb[0].mxu0
  %v1806 = vadd.f32 %v1574, %v1805
  %v1807 = vpop.f32.mrb[0].mxu0
  %v1808 = vpop.f32.mrb[0].mxu0
  %v1809 = vadd.f32 %v1577, %v1808
  %v1810 = vpop.f32.mrb[0].mxu0
  %1811 = vmatprep.mubr.bf16.mxu0 0
  %1812 = vmatmul.mubr.bf16.gmra.mrb[0].mxu0 %v1141
  %v1813 = vpop.f32.mrb[0].mxu0
  %v1814 = vadd.f32 %v1582, %v1813
  %v1815 = vpop.f32.mrb[0].mxu0
  %v1816 = vpop.f32.mrb[0].mxu0
  %v1817 = vadd.f32 %v1585, %v1816
  %v1818 = vpop.f32.mrb[0].mxu0
  %1819 = vmatprep.mubr.bf16.mxu0 0
  %1820 = vmatmul.mubr.bf16.gmra.mrb[0].mxu0 %v1144
  %v1821 = vpop.f32.mrb[0].mxu0
  %v1822 = vadd.f32 %v1590, %v1821
  %v1823 = vpop.f32.mrb[0].mxu0
  %v1824 = vpop.f32.mrb[0].mxu0
  %v1825 = vadd.f32 %v1593, %v1824
  %v1826 = vpop.f32.mrb[0].mxu0
  %1827 = vmatprep.mubr.bf16.mxu0 0
  %1828 = vmatmul.mubr.bf16.gmra.mrb[0].mxu0 %v1147
  %v1829 = vpop.f32.mrb[0].mxu0
  %v1830 = vadd.f32 %v1598, %v1829
  %v1831 = vpop.f32.mrb[0].mxu0
  %v1832 = vpop.f32.mrb[0].mxu0
  %v1833 = vadd.f32 %v1601, %v1832
  %v1834 = vpop.f32.mrb[0].mxu0
  %1835 = vmatprep.mubr.bf16.mxu0 0
  %1836 = vmatmul.mubr.bf16.gmra.mrb[0].mxu0 %v1150
  %v1837 = vpop.f32.mrb[0].mxu0
  %v1838 = vadd.f32 %v1606, %v1837
  %v1839 = vpop.f32.mrb[0].mxu0
  %v1840 = vpop.f32.mrb[0].mxu0
  %v1841 = vadd.f32 %v1609, %v1840
  %v1842 = vpop.f32.mrb[0].mxu0
  %1843 = vmatprep.mubr.bf16.mxu0 0
  %1844 = vmatmul.mubr.bf16.gmra.mrb[0].mxu0 %v1153
  %v1845 = vpop.f32.mrb[0].mxu0
  %v1846 = vadd.f32 %v1614, %v1845
  %v1847 = vpop.f32.mrb[0].mxu0
  %v1848 = vpop.f32.mrb[0].mxu0
  %v1849 = vpop.f32.mrb[0].mxu0
  %1850 = vdwg.mxu0
  %v1851 = vld [vmem:[%s2] sm:$0x1]
  %v1853 = vlaneseq
  %v1854 = vshrl.u32 %v1853, 7
  %v1855 = vsub.s32 0, %v1854
  %v1856 = vrot.slane %v1851, %v1855
  %v1858 = vmul.f32 %v1654, %v1856
  %v1859 = vmul.f32 %v1657, %v1856
  %v1860 = vmul.f32 %v1662, %v1856
  %v1861 = vmul.f32 %v1665, %v1856
  %v1862 = vmul.f32 %v1670, %v1856
  %v1863 = vmul.f32 %v1673, %v1856
  %v1864 = vmul.f32 %v1678, %v1856
  %v1865 = vmul.f32 %v1681, %v1856
  %v1866 = vmul.f32 %v1686, %v1856
  %v1867 = vmul.f32 %v1689, %v1856
  %v1868 = vmul.f32 %v1694, %v1856
  %v1869 = vmul.f32 %v1697, %v1856
  %v1870 = vmul.f32 %v1702, %v1856
  %v1871 = vmul.f32 %v1705, %v1856
  %v1872 = vmul.f32 %v1710, %v1856
  %v1873 = vmul.f32 %v1713, %v1856
  %v1874 = vmul.f32 %v1718, %v1856
  %v1875 = vmul.f32 %v1721, %v1856
  %v1876 = vmul.f32 %v1726, %v1856
  %v1877 = vmul.f32 %v1729, %v1856
  %v1878 = vmul.f32 %v1734, %v1856
  %v1879 = vmul.f32 %v1737, %v1856
  %v1880 = vmul.f32 %v1742, %v1856
  %v1881 = vmul.f32 %v1745, %v1856
  %v1882 = vmul.f32 %v1750, %v1856
  %v1883 = vmul.f32 %v1753, %v1856
  %v1884 = vmul.f32 %v1758, %v1856
  %v1885 = vmul.f32 %v1761, %v1856
  %v1886 = vmul.f32 %v1766, %v1856
  %v1887 = vmul.f32 %v1769, %v1856
  %v1888 = vmul.f32 %v1774, %v1856
  %v1889 = vmul.f32 %v1777, %v1856
  %v1890 = vmul.f32 %v1782, %v1856
  %v1891 = vmul.f32 %v1785, %v1856
  %v1892 = vmul.f32 %v1790, %v1856
  %v1893 = vmul.f32 %v1793, %v1856
  %v1894 = vmul.f32 %v1798, %v1856
  %v1895 = vmul.f32 %v1801, %v1856
  %v1896 = vmul.f32 %v1806, %v1856
  %v1897 = vmul.f32 %v1809, %v1856
  %v1898 = vmul.f32 %v1814, %v1856
  %v1899 = vmul.f32 %v1817, %v1856
  %v1900 = vmul.f32 %v1822, %v1856
  %v1901 = vmul.f32 %v1825, %v1856
  %v1902 = vmul.f32 %v1830, %v1856
  %v1903 = vmul.f32 %v1833, %v1856
  %v1904 = vmul.f32 %v1838, %v1856
  %v1905 = vmul.f32 %v1841, %v1856
  %v1906 = vmul.f32 %v1846, %v1856
  %v1907 = vld [vmem:[%s3] sm:$0x1]
  %v1909 = vlaneseq
  %v1910 = vshrl.u32 %v1909, 7
  %v1911 = vsub.s32 0, %v1910
  %v1912 = vrot.slane %v1907, %v1911
  %v1914 = vadd.f32 %v1858, %v1912
  %v1915 = vadd.f32 %v1859, %v1912
  %v1916 = vadd.f32 %v1860, %v1912
  %v1917 = vadd.f32 %v1861, %v1912
  %v1918 = vadd.f32 %v1862, %v1912
  %v1919 = vadd.f32 %v1863, %v1912
  %v1920 = vadd.f32 %v1864, %v1912
  %v1921 = vadd.f32 %v1865, %v1912
  %v1922 = vadd.f32 %v1866, %v1912
  %v1923 = vadd.f32 %v1867, %v1912
  %v1924 = vadd.f32 %v1868, %v1912
  %v1925 = vadd.f32 %v1869, %v1912
  %v1926 = vadd.f32 %v1870, %v1912
  %v1927 = vadd.f32 %v1871, %v1912
  %v1928 = vadd.f32 %v1872, %v1912
  %v1929 = vadd.f32 %v1873, %v1912
  %v1930 = vadd.f32 %v1874, %v1912
  %v1931 = vadd.f32 %v1875, %v1912
  %v1932 = vadd.f32 %v1876, %v1912
  %v1933 = vadd.f32 %v1877, %v1912
  %v1934 = vadd.f32 %v1878, %v1912
  %v1935 = vadd.f32 %v1879, %v1912
  %v1936 = vadd.f32 %v1880, %v1912
  %v1937 = vadd.f32 %v1881, %v1912
  %v1938 = vadd.f32 %v1882, %v1912
  %v1939 = vadd.f32 %v1883, %v1912
  %v1940 = vadd.f32 %v1884, %v1912
  %v1941 = vadd.f32 %v1885, %v1912
  %v1942 = vadd.f32 %v1886, %v1912
  %v1943 = vadd.f32 %v1887, %v1912
  %v1944 = vadd.f32 %v1888, %v1912
  %v1945 = vadd.f32 %v1889, %v1912
  %v1946 = vadd.f32 %v1890, %v1912
  %v1947 = vadd.f32 %v1891, %v1912
  %v1948 = vadd.f32 %v1892, %v1912
  %v1949 = vadd.f32 %v1893, %v1912
  %v1950 = vadd.f32 %v1894, %v1912
  %v1951 = vadd.f32 %v1895, %v1912
  %v1952 = vadd.f32 %v1896, %v1912
  %v1953 = vadd.f32 %v1897, %v1912
  %v1954 = vadd.f32 %v1898, %v1912
  %v1955 = vadd.f32 %v1899, %v1912
  %v1956 = vadd.f32 %v1900, %v1912
  %v1957 = vadd.f32 %v1901, %v1912
  %v1958 = vadd.f32 %v1902, %v1912
  %v1959 = vadd.f32 %v1903, %v1912
  %v1960 = vadd.f32 %v1904, %v1912
  %v1961 = vadd.f32 %v1905, %v1912
  %v1962 = vadd.f32 %v1906, %v1912
  %v1963 = vmax.f32 %v1914, 0.0
  %v1964 = vmax.f32 %v1915, 0.0
  %v1965 = vmax.f32 %v1916, 0.0
  %v1966 = vmax.f32 %v1917, 0.0
  %v1967 = vmax.f32 %v1918, 0.0
  %v1968 = vmax.f32 %v1919, 0.0
  %v1969 = vmax.f32 %v1920, 0.0
  %v1970 = vmax.f32 %v1921, 0.0
  %v1971 = vmax.f32 %v1922, 0.0
  %v1972 = vmax.f32 %v1923, 0.0
  %v1973 = vmax.f32 %v1924, 0.0
  %v1974 = vmax.f32 %v1925, 0.0
  %v1975 = vmax.f32 %v1926, 0.0
  %v1976 = vmax.f32 %v1927, 0.0
  %v1977 = vmax.f32 %v1928, 0.0
  %v1978 = vmax.f32 %v1929, 0.0
  %v1979 = vmax.f32 %v1930, 0.0
  %v1980 = vmax.f32 %v1931, 0.0
  %v1981 = vmax.f32 %v1932, 0.0
  %v1982 = vmax.f32 %v1933, 0.0
  %v1983 = vmax.f32 %v1934, 0.0
  %v1984 = vmax.f32 %v1935, 0.0
  %v1985 = vmax.f32 %v1936, 0.0
  %v1986 = vmax.f32 %v1937, 0.0
  %v1987 = vmax.f32 %v1938, 0.0
  %v1988 = vmax.f32 %v1939, 0.0
  %v1989 = vmax.f32 %v1940, 0.0
  %v1990 = vmax.f32 %v1941, 0.0
  %v1991 = vmax.f32 %v1942, 0.0
  %v1992 = vmax.f32 %v1943, 0.0
  %v1993 = vmax.f32 %v1944, 0.0
  %v1994 = vmax.f32 %v1945, 0.0
  %v1995 = vmax.f32 %v1946, 0.0
  %v1996 = vmax.f32 %v1947, 0.0
  %v1997 = vmax.f32 %v1948, 0.0
  %v1998 = vmax.f32 %v1949, 0.0
  %v1999 = vmax.f32 %v1950, 0.0
  %v2000 = vmax.f32 %v1951, 0.0
  %v2001 = vmax.f32 %v1952, 0.0
  %v2002 = vmax.f32 %v1953, 0.0
  %v2003 = vmax.f32 %v1954, 0.0
  %v2004 = vmax.f32 %v1955, 0.0
  %v2005 = vmax.f32 %v1956, 0.0
  %v2006 = vmax.f32 %v1957, 0.0
  %v2007 = vmax.f32 %v1958, 0.0
  %v2008 = vmax.f32 %v1959, 0.0
  %v2009 = vmax.f32 %v1960, 0.0
  %v2010 = vmax.f32 %v1961, 0.0
  %v2011 = vmax.f32 %v1962, 0.0
  %v2012 = vld [vmem:[%s4] sm:$0xff]
  %v2013 = vld [vmem:[%s4 + $0x8] sm:$0xff]
  %v2014 = vld [vmem:[%s4 + $0x10] sm:$0xff]
  %v2015 = vld [vmem:[%s4 + $0x18] sm:$0xff]
  %v2016 = vld [vmem:[%s4 + $0x20] sm:$0xff]
  %v2017 = vld [vmem:[%s4 + $0x28] sm:$0xff]
  %v2018 = vld [vmem:[%s4 + $0x30] sm:$0xff]
  %v2019 = vld [vmem:[%s4 + $0x38] sm:$0xff]
  %v2020 = vld [vmem:[%s4 + $0x40] sm:$0xff]
  %v2021 = vld [vmem:[%s4 + $0x48] sm:$0xff]
  %v2022 = vld [vmem:[%s4 + $0x50] sm:$0xff]
  %v2023 = vld [vmem:[%s4 + $0x58] sm:$0xff]
  %v2024 = vld [vmem:[%s4 + $0x60] sm:$0xff]
  %v2025 = vld [vmem:[%s4 + $0x68] sm:$0xff]
  %v2026 = vld [vmem:[%s4 + $0x70] sm:$0xff]
  %v2027 = vld [vmem:[%s4 + $0x78] sm:$0xff]
  %v2028 = vld [vmem:[%s4 + $0x80] sm:$0xff]
  %v2029 = vld [vmem:[%s4 + $0x88] sm:$0xff]
  %v2030 = vld [vmem:[%s4 + $0x90] sm:$0xff]
  %v2031 = vld [vmem:[%s4 + $0x98] sm:$0xff]
  %v2032 = vld [vmem:[%s4 + $0xa0] sm:$0xff]
  %v2033 = vld [vmem:[%s4 + $0xa8] sm:$0xff]
  %v2034 = vld [vmem:[%s4 + $0xb0] sm:$0xff]
  %v2035 = vld [vmem:[%s4 + $0xb8] sm:$0xff]
  %v2036 = vld [vmem:[%s4 + $0xc0] sm:$0x11]
  %v2037 = vld [vmem:[%s4 + $0xc8] sm:$0x11]
  %v2038 = vpack.c.bf16 %v1964, %v1963
  %v2039 = vpack.c.bf16 %v1966, %v1965
  %v2040 = vpack.c.bf16 %v1968, %v1967
  %v2041 = vpack.c.bf16 %v1970, %v1969
  %v2042 = vpack.c.bf16 %v1972, %v1971
  %v2043 = vpack.c.bf16 %v1974, %v1973
  %v2044 = vpack.c.bf16 %v1976, %v1975
  %v2045 = vpack.c.bf16 %v1978, %v1977
  %v2046 = vpack.c.bf16 %v1980, %v1979
  %v2047 = vpack.c.bf16 %v1982, %v1981
  %v2048 = vpack.c.bf16 %v1984, %v1983
  %v2049 = vpack.c.bf16 %v1986, %v1985
  %v2050 = vpack.c.bf16 %v1988, %v1987
  %v2051 = vpack.c.bf16 %v1990, %v1989
  %v2052 = vpack.c.bf16 %v1992, %v1991
  %v2053 = vpack.c.bf16 %v1994, %v1993
  %v2054 = vpack.c.bf16 %v1996, %v1995
  %v2055 = vpack.c.bf16 %v1998, %v1997
  %v2056 = vpack.c.bf16 %v2000, %v1999
  %v2057 = vpack.c.bf16 %v2002, %v2001
  %v2058 = vpack.c.bf16 %v2004, %v2003
  %v2059 = vpack.c.bf16 %v2006, %v2005
  %v2060 = vpack.c.bf16 %v2008, %v2007
  %v2061 = vpack.c.bf16 %v2010, %v2009
  %v2062 = vpack.c.bf16 %v2011, %v2011
  %v2089 = vunpack.c.l.b16 %v2012
  %v2090 = vunpack.c.h.b16 %v2012
  %v2091 = vunpack.c.l.b16 %v2013
  %v2092 = vunpack.c.h.b16 %v2013
  %v2093 = vunpack.c.l.b16 %v2014
  %v2094 = vunpack.c.h.b16 %v2014
  %v2095 = vunpack.c.l.b16 %v2015
  %v2096 = vunpack.c.h.b16 %v2015
  %v2097 = vunpack.c.l.b16 %v2016
  %v2098 = vunpack.c.h.b16 %v2016
  %v2099 = vunpack.c.l.b16 %v2017
  %v2100 = vunpack.c.h.b16 %v2017
  %v2101 = vunpack.c.l.b16 %v2018
  %v2102 = vunpack.c.h.b16 %v2018
  %v2103 = vunpack.c.l.b16 %v2019
  %v2104 = vunpack.c.h.b16 %v2019
  %v2105 = vunpack.c.l.b16 %v2020
  %v2106 = vunpack.c.h.b16 %v2020
  %v2107 = vunpack.c.l.b16 %v2021
  %v2108 = vunpack.c.h.b16 %v2021
  %v2109 = vunpack.c.l.b16 %v2022
  %v2110 = vunpack.c.h.b16 %v2022
  %v2111 = vunpack.c.l.b16 %v2023
  %v2112 = vunpack.c.h.b16 %v2023
  %v2113 = vunpack.c.l.b16 %v2024
  %v2114 = vunpack.c.h.b16 %v2024
  %v2115 = vunpack.c.l.b16 %v2025
  %v2116 = vunpack.c.h.b16 %v2025
  %v2117 = vunpack.c.l.b16 %v2026
  %v2118 = vunpack.c.h.b16 %v2026
  %v2119 = vunpack.c.l.b16 %v2027
  %v2120 = vunpack.c.h.b16 %v2027
  %v2121 = vunpack.c.l.b16 %v2028
  %v2122 = vunpack.c.h.b16 %v2028
  %v2123 = vunpack.c.l.b16 %v2029
  %v2124 = vunpack.c.h.b16 %v2029
  %v2125 = vunpack.c.l.b16 %v2030
  %v2126 = vunpack.c.h.b16 %v2030
  %v2127 = vunpack.c.l.b16 %v2031
  %v2128 = vunpack.c.h.b16 %v2031
  %v2129 = vunpack.c.l.b16 %v2032
  %v2130 = vunpack.c.h.b16 %v2032
  %v2131 = vunpack.c.l.b16 %v2033
  %v2132 = vunpack.c.h.b16 %v2033
  %v2133 = vunpack.c.l.b16 %v2034
  %v2134 = vunpack.c.h.b16 %v2034
  %v2135 = vunpack.c.l.b16 %v2035
  %v2136 = vunpack.c.h.b16 %v2035
  %v2137 = vunpack.c.l.b16 %v2036
  %v2138 = vunpack.c.h.b16 %v2036
  %v2139 = vunpack.c.l.b16 %v2037
  %v2140 = vunpack.c.h.b16 %v2037
  %v2141 = vpack.c.b16 %v2093, %v2089
  %v2142 = vpack.c.b16 %v2094, %v2090
  %v2143 = vpack.c.b16 %v2095, %v2091
  %v2144 = vpack.c.b16 %v2096, %v2092
  %v2145 = vpack.c.b16 %v2101, %v2097
  %v2146 = vpack.c.b16 %v2102, %v2098
  %v2147 = vpack.c.b16 %v2103, %v2099
  %v2148 = vpack.c.b16 %v2104, %v2100
  %v2149 = vpack.c.b16 %v2109, %v2105
  %v2150 = vpack.c.b16 %v2110, %v2106
  %v2151 = vpack.c.b16 %v2111, %v2107
  %v2152 = vpack.c.b16 %v2112, %v2108
  %v2153 = vpack.c.b16 %v2117, %v2113
  %v2154 = vpack.c.b16 %v2118, %v2114
  %v2155 = vpack.c.b16 %v2119, %v2115
  %v2156 = vpack.c.b16 %v2120, %v2116
  %v2157 = vpack.c.b16 %v2125, %v2121
  %v2158 = vpack.c.b16 %v2126, %v2122
  %v2159 = vpack.c.b16 %v2127, %v2123
  %v2160 = vpack.c.b16 %v2128, %v2124
  %v2161 = vpack.c.b16 %v2133, %v2129
  %v2162 = vpack.c.b16 %v2134, %v2130
  %v2163 = vpack.c.b16 %v2135, %v2131
  %v2164 = vpack.c.b16 %v2136, %v2132
  %v2165 = vpack.c.b16 %v2137, %v2137
  %v2166 = vpack.c.b16 %v2138, %v2138
  %v2167 = vpack.c.b16 %v2139, %v2139
  %v2168 = vpack.c.b16 %v2140, %v2140
  %vm2190 = vcmask 64512
  %v2192 = vsel %vm2190, %v2144, 0
  %v2195 = vsel %vm2190, %v2148, 0
  %v2198 = vsel %vm2190, %v2152, 0
  %v2201 = vsel %vm2190, %v2156, 0
  %v2204 = vsel %vm2190, %v2160, 0
  %v2207 = vsel %vm2190, %v2164, 0
  %v2210 = vsel %vm2190, %v2168, 0
  %vm2212 = vcmask 1043456
  %v2214 = vsel %vm2212, %v2062, 0
  %2216 = vmatprep.subr.bf16.mxu0 0
  %2217 = vmatpush1.bf16.msra.mxu0 %v2038
  %2218 = vmatprep.subr.bf16.mxu0 0
  %2219 = vmatpush1.bf16.msra.mxu0 %v2039
  %2220 = vmatprep.subr.bf16.mxu0 0
  %2221 = vmatpush1.bf16.msra.mxu0 %v2040
  %2222 = vmatprep.subr.bf16.mxu0 0
  %2223 = vmatpush1.bf16.msra.mxu0 %v2041
  %2224 = vmatprep.subr.bf16.mxu0 0
  %2225 = vmatpush1.bf16.msra.mxu0 %v2042
  %2226 = vmatprep.subr.bf16.mxu0 0
  %2227 = vmatpush1.bf16.msra.mxu0 %v2043
  %2228 = vmatprep.subr.bf16.mxu0 0
  %2229 = vmatpush1.bf16.msra.mxu0 %v2044
  %2230 = vmatprep.subr.bf16.mxu0 0
  %2231 = vmatpush1.bf16.msra.mxu0 %v2045
  %2232 = vmatprep.subr.bf16.mxu0 0
  %2233 = vmatpush1.bf16.msra.mxu0 %v2046
  %2234 = vmatprep.subr.bf16.mxu0 0
  %2235 = vmatpush1.bf16.msra.mxu0 %v2047
  %2236 = vmatprep.subr.bf16.mxu0 0
  %2237 = vmatpush1.bf16.msra.mxu0 %v2048
  %2238 = vmatprep.subr.bf16.mxu0 0
  %2239 = vmatpush1.bf16.msra.mxu0 %v2049
  %2240 = vmatprep.subr.bf16.mxu0 0
  %2241 = vmatpush1.bf16.msra.mxu0 %v2050
  %2242 = vmatprep.subr.bf16.mxu0 0
  %2243 = vmatpush1.bf16.msra.mxu0 %v2051
  %2244 = vmatprep.subr.bf16.mxu0 0
  %2245 = vmatpush1.bf16.msra.mxu0 %v2052
  %2246 = vmatprep.subr.bf16.mxu0 0
  %2247 = vmatpush1.bf16.msra.mxu0 %v2053
  %2248 = vmatprep.mubr.bf16.mxu0 %v2142
  %2249 = vmatmul.mubr.bf16.gmra.mrb[0].mxu0 %v2141
  %v2250 = vpop.f32.mrb[0].mxu0
  %v2251 = vadd.f32 0.0, %v2250
  %v2252 = vpop.f32.mrb[0].mxu0
  %v2253 = vpop.f32.mrb[0].mxu0
  %v2254 = vadd.f32 0.0, %v2253
  %v2255 = vpop.f32.mrb[0].mxu0
  %2256 = vmatprep.mubr.bf16.mxu0 %v2146
  %2257 = vmatmul.mubr.bf16.gmra.mrb[0].mxu0 %v2145
  %v2258 = vpop.f32.mrb[0].mxu0
  %v2259 = vadd.f32 0.0, %v2258
  %v2260 = vpop.f32.mrb[0].mxu0
  %v2261 = vpop.f32.mrb[0].mxu0
  %v2262 = vadd.f32 0.0, %v2261
  %v2263 = vpop.f32.mrb[0].mxu0
  %2264 = vmatprep.mubr.bf16.mxu0 %v2150
  %2265 = vmatmul.mubr.bf16.gmra.mrb[0].mxu0 %v2149
  %v2266 = vpop.f32.mrb[0].mxu0
  %v2267 = vadd.f32 0.0, %v2266
  %v2268 = vpop.f32.mrb[0].mxu0
  %v2269 = vpop.f32.mrb[0].mxu0
  %v2270 = vadd.f32 0.0, %v2269
  %v2271 = vpop.f32.mrb[0].mxu0
  %2272 = vmatprep.mubr.bf16.mxu0 %v2154
  %2273 = vmatmul.mubr.bf16.gmra.mrb[0].mxu0 %v2153
  %v2274 = vpop.f32.mrb[0].mxu0
  %v2275 = vadd.f32 0.0, %v2274
  %v2276 = vpop.f32.mrb[0].mxu0
  %v2277 = vpop.f32.mrb[0].mxu0
  %v2278 = vadd.f32 0.0, %v2277
  %v2279 = vpop.f32.mrb[0].mxu0
  %2280 = vmatprep.mubr.bf16.mxu0 %v2158
  %2281 = vmatmul.mubr.bf16.gmra.mrb[0].mxu0 %v2157
  %v2282 = vpop.f32.mrb[0].mxu0
  %v2283 = vadd.f32 0.0, %v2282
  %v2284 = vpop.f32.mrb[0].mxu0
  %v2285 = vpop.f32.mrb[0].mxu0
  %v2286 = vadd.f32 0.0, %v2285
  %v2287 = vpop.f32.mrb[0].mxu0
  %2288 = vmatprep.mubr.bf16.mxu0 %v2162
  %2289 = vmatmul.mubr.bf16.gmra.mrb[0].mxu0 %v2161
  %v2290 = vpop.f32.mrb[0].mxu0
  %v2291 = vadd.f32 0.0, %v2290
  %v2292 = vpop.f32.mrb[0].mxu0
  %v2293 = vpop.f32.mrb[0].mxu0
  %v2294 = vadd.f32 0.0, %v2293
  %v2295 = vpop.f32.mrb[0].mxu0
  %2296 = vmatprep.mubr.bf16.mxu0 %v2166
  %2297 = vmatmul.mubr.bf16.gmra.mrb[0].mxu0 %v2165
  %v2298 = vpop.f32.mrb[0].mxu0
  %v2299 = vadd.f32 0.0, %v2298
  %v2300 = vpop.f32.mrb[0].mxu0
  %v2301 = vpop.f32.mrb[0].mxu0
  %v2302 = vpop.f32.mrb[0].mxu0
  %2303 = vdwg.mxu0
  %2304 = vmatprep.subr.bf16.mxu0 0
  %2305 = vmatpush1.bf16.msra.mxu0 %v2054
  %2306 = vmatprep.subr.bf16.mxu0 0
  %2307 = vmatpush1.bf16.msra.mxu0 %v2055
  %2308 = vmatprep.subr.bf16.mxu0 0
  %2309 = vmatpush1.bf16.msra.mxu0 %v2056
  %2310 = vmatprep.subr.bf16.mxu0 0
  %2311 = vmatpush1.bf16.msra.mxu0 %v2057
  %2312 = vmatprep.subr.bf16.mxu0 0
  %2313 = vmatpush1.bf16.msra.mxu0 %v2058
  %2314 = vmatprep.subr.bf16.mxu0 0
  %2315 = vmatpush1.bf16.msra.mxu0 %v2059
  %2316 = vmatprep.subr.bf16.mxu0 0
  %2317 = vmatpush1.bf16.msra.mxu0 %v2060
  %2318 = vmatprep.subr.bf16.mxu0 0
  %2319 = vmatpush1.bf16.msra.mxu0 %v2061
  %2320 = vmatprep.subr.bf16.mxu0 0
  %2321 = vmatpush1.bf16.msra.mxu0 %v2214
  %2322 = vmatprep.subr.bf16.mxu0 0
  %2323 = vmatpush1.bf16.msra.mxu0 0
  %2324 = vmatprep.subr.bf16.mxu0 0
  %2325 = vmatpush1.bf16.msra.mxu0 0
  %2326 = vmatprep.subr.bf16.mxu0 0
  %2327 = vmatpush1.bf16.msra.mxu0 0
  %2328 = vmatprep.subr.bf16.mxu0 0
  %2329 = vmatpush1.bf16.msra.mxu0 0
  %2330 = vmatprep.subr.bf16.mxu0 0
  %2331 = vmatpush1.bf16.msra.mxu0 0
  %2332 = vmatprep.subr.bf16.mxu0 0
  %2333 = vmatpush1.bf16.msra.mxu0 0
  %2334 = vmatprep.subr.bf16.mxu0 0
  %2335 = vmatpush1.bf16.msra.mxu0 0
  %2336 = vmatprep.mubr.bf16.mxu0 %v2192
  %2337 = vmatmul.mubr.bf16.gmra.mrb[0].mxu0 %v2143
  %v2338 = vpop.f32.mrb[0].mxu0
  %v2339 = vadd.f32 %v2251, %v2338
  %v2340 = vpop.f32.mrb[0].mxu0
  %v2341 = vpop.f32.mrb[0].mxu0
  %v2342 = vadd.f32 %v2254, %v2341
  %v2343 = vpop.f32.mrb[0].mxu0
  %2344 = vmatprep.mubr.bf16.mxu0 %v2195
  %2345 = vmatmul.mubr.bf16.gmra.mrb[0].mxu0 %v2147
  %v2346 = vpop.f32.mrb[0].mxu0
  %v2347 = vadd.f32 %v2259, %v2346
  %v2348 = vpop.f32.mrb[0].mxu0
  %v2349 = vpop.f32.mrb[0].mxu0
  %v2350 = vadd.f32 %v2262, %v2349
  %v2351 = vpop.f32.mrb[0].mxu0
  %2352 = vmatprep.mubr.bf16.mxu0 %v2198
  %2353 = vmatmul.mubr.bf16.gmra.mrb[0].mxu0 %v2151
  %v2354 = vpop.f32.mrb[0].mxu0
  %v2355 = vadd.f32 %v2267, %v2354
  %v2356 = vpop.f32.mrb[0].mxu0
  %v2357 = vpop.f32.mrb[0].mxu0
  %v2358 = vadd.f32 %v2270, %v2357
  %v2359 = vpop.f32.mrb[0].mxu0
  %2360 = vmatprep.mubr.bf16.mxu0 %v2201
  %2361 = vmatmul.mubr.bf16.gmra.mrb[0].mxu0 %v2155
  %v2362 = vpop.f32.mrb[0].mxu0
  %v2363 = vadd.f32 %v2275, %v2362
  %v2364 = vpop.f32.mrb[0].mxu0
  %v2365 = vpop.f32.mrb[0].mxu0
  %v2366 = vadd.f32 %v2278, %v2365
  %v2367 = vpop.f32.mrb[0].mxu0
  %2368 = vmatprep.mubr.bf16.mxu0 %v2204
  %2369 = vmatmul.mubr.bf16.gmra.mrb[0].mxu0 %v2159
  %v2370 = vpop.f32.mrb[0].mxu0
  %v2371 = vadd.f32 %v2283, %v2370
  %v2372 = vpop.f32.mrb[0].mxu0
  %v2373 = vpop.f32.mrb[0].mxu0
  %v2374 = vadd.f32 %v2286, %v2373
  %v2375 = vpop.f32.mrb[0].mxu0
  %2376 = vmatprep.mubr.bf16.mxu0 %v2207
  %2377 = vmatmul.mubr.bf16.gmra.mrb[0].mxu0 %v2163
  %v2378 = vpop.f32.mrb[0].mxu0
  %v2379 = vadd.f32 %v2291, %v2378
  %v2380 = vpop.f32.mrb[0].mxu0
  %v2381 = vpop.f32.mrb[0].mxu0
  %v2382 = vadd.f32 %v2294, %v2381
  %v2383 = vpop.f32.mrb[0].mxu0
  %2384 = vmatprep.mubr.bf16.mxu0 %v2210
  %2385 = vmatmul.mubr.bf16.gmra.mrb[0].mxu0 %v2167
  %v2386 = vpop.f32.mrb[0].mxu0
  %v2387 = vadd.f32 %v2299, %v2386
  %v2388 = vpop.f32.mrb[0].mxu0
  %v2389 = vpop.f32.mrb[0].mxu0
  %v2390 = vpop.f32.mrb[0].mxu0
  %2391 = vdwg.mxu0
  %v2392 = vpack.c.bf16 %v2342, %v2339
  %v2393 = vpack.c.bf16 %v2350, %v2347
  %v2394 = vpack.c.bf16 %v2358, %v2355
  %v2395 = vpack.c.bf16 %v2366, %v2363
  %v2396 = vpack.c.bf16 %v2374, %v2371
  %v2397 = vpack.c.bf16 %v2382, %v2379
  %v2398 = vpack.c.bf16 %v2387, %v2387
  %v2399 = vld [vmem:[%s5] sm:$0xf]
  %v2400 = vld [vmem:[%s5 + $0x4] sm:$0xf]
  %v2401 = vld [vmem:[%s5 + $0x8] sm:$0xf]
  %v2402 = vld [vmem:[%s5 + $0xc] sm:$0xf]
  %v2403 = vld [vmem:[%s5 + $0x10] sm:$0xf]
  %v2404 = vld [vmem:[%s5 + $0x14] sm:$0xf]
  %v2405 = vld [vmem:[%s5 + $0x18] sm:$0xf]
  %v2406 = vld [vmem:[%s5 + $0x1c] sm:$0xf]
  %v2407 = vld [vmem:[%s5 + $0x20] sm:$0xf]
  %v2408 = vld [vmem:[%s5 + $0x24] sm:$0xf]
  %v2409 = vld [vmem:[%s5 + $0x28] sm:$0xf]
  %v2410 = vld [vmem:[%s5 + $0x2c] sm:$0xf]
  %v2411 = vld [vmem:[%s5 + $0x30] sm:$0xf]
  %v2412 = vld [vmem:[%s5 + $0x34] sm:$0xf]
  %v2413 = vld [vmem:[%s5 + $0x38] sm:$0xf]
  %v2414 = vld [vmem:[%s5 + $0x3c] sm:$0xf]
  %v2415 = vld [vmem:[%s6] sm:$0x1]
  %v2417 = vlaneseq
  %v2418 = vshrl.u32 %v2417, 7
  %v2419 = vsub.s32 0, %v2418
  %v2420 = vrot.slane %v2415, %v2419
  %v2438 = vunpack.c.l.b16 %v2399
  %v2439 = vunpack.c.l.b16 %v2400
  %v2440 = vunpack.c.l.b16 %v2401
  %v2441 = vunpack.c.l.b16 %v2402
  %v2442 = vunpack.c.l.b16 %v2403
  %v2443 = vunpack.c.l.b16 %v2404
  %v2444 = vunpack.c.l.b16 %v2405
  %v2445 = vunpack.c.l.b16 %v2406
  %v2446 = vunpack.c.l.b16 %v2407
  %v2447 = vunpack.c.l.b16 %v2408
  %v2448 = vunpack.c.l.b16 %v2409
  %v2449 = vunpack.c.l.b16 %v2410
  %v2450 = vunpack.c.l.b16 %v2411
  %v2451 = vunpack.c.l.b16 %v2412
  %v2452 = vunpack.c.l.b16 %v2413
  %v2453 = vunpack.c.l.b16 %v2414
  %v2454 = vpack.c.b16 %v2439, %v2438
  %v2455 = vpack.c.b16 %v2441, %v2440
  %v2456 = vpack.c.b16 %v2443, %v2442
  %v2457 = vpack.c.b16 %v2445, %v2444
  %v2458 = vpack.c.b16 %v2447, %v2446
  %v2459 = vpack.c.b16 %v2449, %v2448
  %v2460 = vpack.c.b16 %v2451, %v2450
  %v2461 = vpack.c.b16 %v2453, %v2452
  %2470 = vmatprep.subr.bf16.mxu0 0
  %2471 = vmatpush1.bf16.msra.mxu0 %v2454
  %2472 = vmatprep.subr.bf16.mxu0 0
  %2473 = vmatpush1.bf16.msra.mxu0 %v2455
  %2474 = vmatprep.subr.bf16.mxu0 0
  %2475 = vmatpush1.bf16.msra.mxu0 %v2456
  %2476 = vmatprep.subr.bf16.mxu0 0
  %2477 = vmatpush1.bf16.msra.mxu0 %v2457
  %2478 = vmatprep.subr.bf16.mxu0 0
  %2479 = vmatpush1.bf16.msra.mxu0 %v2458
  %2480 = vmatprep.subr.bf16.mxu0 0
  %2481 = vmatpush1.bf16.msra.mxu0 %v2459
  %2482 = vmatprep.subr.bf16.mxu0 0
  %2483 = vmatpush1.bf16.msra.mxu0 %v2460
  %2484 = vmatprep.subr.bf16.mxu0 0
  %2485 = vmatpush1.bf16.msra.mxu0 %v2461
  %2486 = vmatprep.subr.bf16.mxu0 0
  %2487 = vmatpush1.bf16.msra.mxu0 0
  %2488 = vmatprep.subr.bf16.mxu0 0
  %2489 = vmatpush1.bf16.msra.mxu0 0
  %2490 = vmatprep.subr.bf16.mxu0 0
  %2491 = vmatpush1.bf16.msra.mxu0 0
  %2492 = vmatprep.subr.bf16.mxu0 0
  %2493 = vmatpush1.bf16.msra.mxu0 0
  %2494 = vmatprep.subr.bf16.mxu0 0
  %2495 = vmatpush1.bf16.msra.mxu0 0
  %2496 = vmatprep.subr.bf16.mxu0 0
  %2497 = vmatpush1.bf16.msra.mxu0 0
  %2498 = vmatprep.subr.bf16.mxu0 0
  %2499 = vmatpush1.bf16.msra.mxu0 0
  %2500 = vmatprep.subr.bf16.mxu0 0
  %2501 = vmatpush1.bf16.msra.mxu0 0
  %2502 = vmatprep.mubr.bf16.mxu0 0
  %2503 = vmatmul.mubr.bf16.gmra.mrb[0].mxu0 %v2392
  %v2504 = vpop.f32.mrb[0].mxu0
  %v2505 = vadd.f32 %v2420, %v2504
  %v2506 = vpop.f32.mrb[0].mxu0
  %v2507 = vpop.f32.mrb[0].mxu0
  %v2508 = vadd.f32 %v2420, %v2507
  %v2509 = vpop.f32.mrb[0].mxu0
  %2510 = vmatprep.mubr.bf16.mxu0 0
  %2511 = vmatmul.mubr.bf16.gmra.mrb[0].mxu0 %v2393
  %v2512 = vpop.f32.mrb[0].mxu0
  %v2513 = vadd.f32 %v2420, %v2512
  %v2514 = vpop.f32.mrb[0].mxu0
  %v2515 = vpop.f32.mrb[0].mxu0
  %v2516 = vadd.f32 %v2420, %v2515
  %v2517 = vpop.f32.mrb[0].mxu0
  %2518 = vmatprep.mubr.bf16.mxu0 0
  %2519 = vmatmul.mubr.bf16.gmra.mrb[0].mxu0 %v2394
  %v2520 = vpop.f32.mrb[0].mxu0
  %v2521 = vadd.f32 %v2420, %v2520
  %v2522 = vpop.f32.mrb[0].mxu0
  %v2523 = vpop.f32.mrb[0].mxu0
  %v2524 = vadd.f32 %v2420, %v2523
  %v2525 = vpop.f32.mrb[0].mxu0
  %2526 = vmatprep.mubr.bf16.mxu0 0
  %2527 = vmatmul.mubr.bf16.gmra.mrb[0].mxu0 %v2395
  %v2528 = vpop.f32.mrb[0].mxu0
  %v2529 = vadd.f32 %v2420, %v2528
  %v2530 = vpop.f32.mrb[0].mxu0
  %v2531 = vpop.f32.mrb[0].mxu0
  %v2532 = vadd.f32 %v2420, %v2531
  %v2533 = vpop.f32.mrb[0].mxu0
  %2534 = vmatprep.mubr.bf16.mxu0 0
  %2535 = vmatmul.mubr.bf16.gmra.mrb[0].mxu0 %v2396
  %v2536 = vpop.f32.mrb[0].mxu0
  %v2537 = vadd.f32 %v2420, %v2536
  %v2538 = vpop.f32.mrb[0].mxu0
  %v2539 = vpop.f32.mrb[0].mxu0
  %v2540 = vadd.f32 %v2420, %v2539
  %v2541 = vpop.f32.mrb[0].mxu0
  %2542 = vmatprep.mubr.bf16.mxu0 0
  %2543 = vmatmul.mubr.bf16.gmra.mrb[0].mxu0 %v2397
  %v2544 = vpop.f32.mrb[0].mxu0
  %v2545 = vadd.f32 %v2420, %v2544
  %v2546 = vpop.f32.mrb[0].mxu0
  %v2547 = vpop.f32.mrb[0].mxu0
  %v2548 = vadd.f32 %v2420, %v2547
  %v2549 = vpop.f32.mrb[0].mxu0
  %2550 = vmatprep.mubr.bf16.mxu0 0
  %2551 = vmatmul.mubr.bf16.gmra.mrb[0].mxu0 %v2398
  %v2552 = vpop.f32.mrb[0].mxu0
  %v2553 = vadd.f32 %v2420, %v2552
  %v2554 = vpop.f32.mrb[0].mxu0
  %v2555 = vpop.f32.mrb[0].mxu0
  %v2556 = vpop.f32.mrb[0].mxu0
  %2557 = vdwg.mxu0
  %vm2558 = vcmask 171008
  %2559 = vst.msk [vmem:[%s7] sm:$0xff] %vm2558, %v2505
  %2560 = vst.msk [vmem:[%s7 + $0x8] sm:$0xff] %vm2558, %v2508
  %2561 = vst.msk [vmem:[%s7 + $0x10] sm:$0xff] %vm2558, %v2513
  %2562 = vst.msk [vmem:[%s7 + $0x18] sm:$0xff] %vm2558, %v2516
  %2563 = vst.msk [vmem:[%s7 + $0x20] sm:$0xff] %vm2558, %v2521
  %2564 = vst.msk [vmem:[%s7 + $0x28] sm:$0xff] %vm2558, %v2524
  %2565 = vst.msk [vmem:[%s7 + $0x30] sm:$0xff] %vm2558, %v2529
  %2566 = vst.msk [vmem:[%s7 + $0x38] sm:$0xff] %vm2558, %v2532
  %2567 = vst.msk [vmem:[%s7 + $0x40] sm:$0xff] %vm2558, %v2537
  %2568 = vst.msk [vmem:[%s7 + $0x48] sm:$0xff] %vm2558, %v2540
  %2569 = vst.msk [vmem:[%s7 + $0x50] sm:$0xff] %vm2558, %v2545
  %2570 = vst.msk [vmem:[%s7 + $0x58] sm:$0xff] %vm2558, %v2548
  %vm2571 = vcmask 164864
  %2572 = vst.msk [vmem:[%s7 + $0x60] sm:$0x3] %vm2571, %v2553
  // Predicated region
  $region30: #{simple_mobilenet_pallas.5} parent=0 // pred_check
    _
  $region31: #{simple_mobilenet_pallas.5} parent=0 // pred_check_branch
    %2574 = sbr.rel (0) target = $region33
  $region32: #{simple_mobilenet_pallas.5} parent=0 // pred_region
    _
  $region33: #{simple_mobilenet_pallas.5} parent=0 // pred_fallthru
    _
  // Predicated region
  $region34: #{simple_mobilenet_pallas.5} parent=0 // pred_check
    _
  $region35: #{simple_mobilenet_pallas.5} parent=0 // pred_check_branch
    %2576 = sbr.rel (0) target = $region37
  $region36: #{simple_mobilenet_pallas.5} parent=0 // pred_region
    _
  $region37: #{simple_mobilenet_pallas.5} parent=0 // pred_fallthru
    _

</llo_original>
